<compile_context>
chip_gen: v7x
topology: tpu7x:2x2x1
jax: 0.10.0
libtpu: 0.0.40
codegen_flags: <defaults>
</compile_context>

<pallas_src>
import functools

import jax
import jax.numpy as jnp
from jax.experimental import pallas as pl
from jax.experimental.pallas import tpu as pltpu


Z_DIM = 16
H_DIM = 256
H_CH = 32
KSIZE = 4
OUT_CH = 3


# --------------------- fused matmul + bias + activation -----------------------

def _matmul_bias_act_kernel(a_ref, w_ref, b_ref, o_ref, *, activation):
    acc = jnp.dot(a_ref[...], w_ref[...], preferred_element_type=jnp.float32)
    acc = acc + b_ref[...].astype(jnp.float32)          # (1, N) broadcast
    if activation == "relu":
        acc = jnp.maximum(acc, 0.0)
    elif activation == "sigmoid":
        acc = jax.nn.sigmoid(acc)
    o_ref[...] = acc.astype(o_ref.dtype)


def matmul_bias_act(a, w, b, activation="none", out_dtype=None, tm_max=1024):
    """o = act(a @ w + b) via one Pallas kernel, tiled over rows of `a`."""
    M, K = a.shape
    K2, N = w.shape
    assert K == K2
    out_dtype = out_dtype or a.dtype
    if M <= tm_max:
        tm, Mp = M, M
    else:
        tm = tm_max
        Mp = pl.cdiv(M, tm) * tm
        if Mp != M:                                      # no hard assert: pad ragged M
            a = jnp.pad(a, ((0, Mp - M), (0, 0)))
    out = pl.pallas_call(
        functools.partial(_matmul_bias_act_kernel, activation=activation),
        out_shape=jax.ShapeDtypeStruct((Mp, N), out_dtype),
        grid_spec=pltpu.PrefetchScalarGridSpec(
            num_scalar_prefetch=0,
            grid=(Mp // tm,),
            in_specs=[
                pl.BlockSpec((tm, K), lambda i: (i, 0)),
                pl.BlockSpec((K, N), lambda i: (0, 0)),
                pl.BlockSpec((1, N), lambda i: (0, 0)),
            ],
            out_specs=pl.BlockSpec((tm, N), lambda i: (i, 0)),
        ),
        compiler_params=pltpu.CompilerParams(dimension_semantics=("parallel",)),
    )(a, w, b.reshape(1, N))
    return out if Mp == M else out[:M]


# ----------------------- fused FC block (fc1 -> fc2 -> fc3) -------------------

def _fc_block_kernel(z_ref, w1_ref, b1_ref, w2_ref, b2_ref, w3_ref, b3_ref, o_ref):
    h = jnp.dot(z_ref[...], w1_ref[...], preferred_element_type=jnp.float32) + b1_ref[...]
    h = jnp.maximum(h, 0.0)
    h = jnp.dot(h, w2_ref[...], preferred_element_type=jnp.float32) + b2_ref[...]
    h = jnp.maximum(h, 0.0)
    h = jnp.dot(h, w3_ref[...], preferred_element_type=jnp.float32) + b3_ref[...]
    h = jnp.maximum(h, 0.0)
    o_ref[...] = h.astype(o_ref.dtype)


def fc_block(z, w1, b1, w2, b2, w3, b3):
    """relu(relu(relu(z@w1+b1)@w2+b2)@w3+b3) in a single Pallas launch (f32)."""
    B = z.shape[0]
    N = w3.shape[1]

    def spec(shape):
        return pl.BlockSpec(shape, lambda i, _s=len(shape): (0,) * _s)

    args = (z, w1, b1.reshape(1, -1), w2, b2.reshape(1, -1), w3, b3.reshape(1, -1))
    return pl.pallas_call(
        _fc_block_kernel,
        out_shape=jax.ShapeDtypeStruct((B, N), jnp.float32),
        grid_spec=pltpu.PrefetchScalarGridSpec(
            num_scalar_prefetch=0,
            grid=(1,),
            in_specs=[spec(a.shape) for a in args],
            out_specs=spec((B, N)),
        ),
        compiler_params=pltpu.CompilerParams(dimension_semantics=("arbitrary",)),
    )(*args)


# --------------- ConvTranspose2d (k=4, s=2, p=1) via phase decomposition -------
#
# out[b, 2y+py, 2x+px, co] = bias[co]
#   + sum_{ci, (wy,ky) in T(py), (wx,kx) in T(px)} xpad[b, y+wy, x+wx, ci] * W[ci, co, ky, kx]
# with T(0) = {(0,3),(1,1)}, T(1) = {(1,2),(2,0)}  (xpad = x zero-padded by 1).
# => one matmul: P (B*H*W, 9*C_in)  @  Wp (9*C_in, 4*C_out), phases on the lanes.

_TAPS = ((0, 0, 3), (0, 1, 1), (1, 1, 2), (1, 2, 0))    # (phase, window offset, kernel idx)


def pack_tconv_weight(w, b):
    """w: (C_in, C_out, 4, 4), b: (C_out,) -> (9*C_in, 4*C_out) bf16, (4*C_out,) f32."""
    c_in, c_out = w.shape[0], w.shape[1]
    wp = jnp.zeros((9 * c_in, 4 * c_out), jnp.float32)
    for py, wy, ky in _TAPS:
        for px, wx, kx in _TAPS:
            r = (wy * 3 + wx) * c_in
            c = (py * 2 + px) * c_out
            wp = wp.at[r:r + c_in, c:c + c_out].set(w[:, :, ky, kx])
    return wp.astype(jnp.bfloat16), jnp.tile(b, 4).astype(jnp.float32)


def tconv_phase(x, wp, bp, *, activation, out_dtype):
    """Phase-decomposed ConvTranspose2d.  x: (B, H, W, C_in) NHWC -> (B, 2H, 2W, C_out)."""
    B, H, W, C_in = x.shape
    N = wp.shape[1]
    C_out = N // 4
    xp = jnp.pad(x, ((0, 0), (1, 1), (1, 1), (0, 0)))
    # compact 3x3-halo patches: (B*H*W, 9*C_in), no structural zeros, bf16.
    cols = [xp[:, wy:wy + H, wx:wx + W, :] for wy in range(3) for wx in range(3)]
    p = jnp.concatenate(cols, axis=-1).reshape(B * H * W, 9 * C_in)
    o = matmul_bias_act(p, wp, bp, activation=activation, out_dtype=out_dtype)
    # phase-stacked (B, H, W, py, px, C_out) -> depth-to-space -> (B, 2H, 2W, C_out)
    o = o.reshape(B, H, W, 2, 2, C_out).transpose(0, 1, 3, 2, 4, 5)
    return o.reshape(B, 2 * H, 2 * W, C_out)


# ------------------------------- parameters ------------------------------------

def init_raw_params(key):
    """PyTorch-default-style init, kept in f32 as the 'master' parameters."""
    def lin(k_, fan_in, fan_out):
        k1, k2 = jax.random.split(k_)
        bound = 1.0 / jnp.sqrt(fan_in)
        w = jax.random.uniform(k1, (fan_in, fan_out), jnp.float32, -bound, bound)
        b = jax.random.uniform(k2, (fan_out,), jnp.float32, -bound, bound)
        return w, b

    def tconv(k_, c_in, c_out):
        k1, k2 = jax.random.split(k_)
        bound = 1.0 / jnp.sqrt(c_in * KSIZE * KSIZE)
        w = jax.random.uniform(k1, (c_in, c_out, KSIZE, KSIZE), jnp.float32, -bound, bound)
        b = jax.random.uniform(k2, (c_out,), jnp.float32, -bound, bound)
        return w, b

    keys = jax.random.split(key, 7)
    return {
        "fc1": lin(keys[0], Z_DIM, H_DIM),
        "fc2": lin(keys[1], H_DIM, H_DIM),
        "fc3": lin(keys[2], H_DIM, H_CH * KSIZE * KSIZE),
        "tconv1": tconv(keys[3], H_CH, H_CH),
        "tconv2": tconv(keys[4], H_CH, H_CH),
        "tconv3": tconv(keys[5], H_CH, H_CH),
        "tconv4": tconv(keys[6], H_CH, OUT_CH),
    }


def prepare_params(raw):
    """One-time packing into kernel-ready matrices (done outside the forward pass)."""
    w1, b1 = raw["fc1"]
    w2, b2 = raw["fc2"]
    w3, b3 = raw["fc3"]
    # Permute fc3 columns from PyTorch's (c, h, w) .view order to (h, w, c) so the
    # FC output reshapes directly to NHWC (no per-call transpose).
    w3p = w3.reshape(H_DIM, H_CH, KSIZE, KSIZE).transpose(0, 2, 3, 1).reshape(H_DIM, -1)
    b3p = b3.reshape(H_CH, KSIZE, KSIZE).transpose(1, 2, 0).reshape(-1)
    packed = {"fc": (w1, b1, w2, b2, w3p, b3p)}
    for name in ("tconv1", "tconv2", "tconv3", "tconv4"):
        packed[name] = pack_tconv_weight(*raw[name])
    return packed


# ------------------------------- forward pass -----------------------------------

def conv_decoder_forward(params, z):
    B = z.shape[0]
    h = fc_block(z, *params["fc"])                                   # (B, 512) f32, (h,w,c) order
    x = h.reshape(B, KSIZE, KSIZE, H_CH).astype(jnp.bfloat16)        # (B, 4, 4, 32) NHWC
    x = tconv_phase(x, *params["tconv1"], activation="relu", out_dtype=jnp.bfloat16)   # (B, 8, 8, 32)
    x = tconv_phase(x, *params["tconv2"], activation="relu", out_dtype=jnp.bfloat16)   # (B,16,16, 32)
    x = tconv_phase(x, *params["tconv3"], activation="relu", out_dtype=jnp.bfloat16)   # (B,32,32, 32)
    x = tconv_phase(x, *params["tconv4"], activation="sigmoid", out_dtype=jnp.float32) # (B,64,64, 3)
    return x.transpose(0, 3, 1, 2)                                   # NCHW for PyTorch parity


# ------------------------------- references -------------------------------------

def _ref_tconv(x_, w, b, precision=None, preferred=None):
    rhs = jnp.flip(w, (2, 3)).transpose(1, 0, 2, 3)                  # (C_out, C_in, k, k)
    if preferred is not None:
        rhs = rhs.astype(x_.dtype)
    y = jax.lax.conv_general_dilated(
        x_, rhs, window_strides=(1, 1), padding=((2, 2), (2, 2)),
        lhs_dilation=(2, 2), dimension_numbers=("NCHW", "OIHW", "NCHW"),
        precision=precision, preferred_element_type=preferred)
    return y + b.reshape(1, -1, 1, 1)


def reference_forward_f32(raw, z):
    """Pure-JAX, full-f32 semantic ground truth (matches PyTorch ConvTranspose2d)."""
    x = jax.nn.relu(z @ raw["fc1"][0] + raw["fc1"][1])
    x = jax.nn.relu(x @ raw["fc2"][0] + raw["fc2"][1])
    x = jax.nn.relu(x @ raw["fc3"][0] + raw["fc3"][1])
    x = x.reshape(z.shape[0], H_CH, KSIZE, KSIZE)
    hi = jax.lax.Precision.HIGHEST
    x = jax.nn.relu(_ref_tconv(x, *raw["tconv1"], precision=hi))
    x = jax.nn.relu(_ref_tconv(x, *raw["tconv2"], precision=hi))
    x = jax.nn.relu(_ref_tconv(x, *raw["tconv3"], precision=hi))
    return jax.nn.sigmoid(_ref_tconv(x, *raw["tconv4"], precision=hi))


def reference_forward_bf16(raw, z):
    """Pure-JAX reference mirroring the kernel's bf16 storage / f32 accumulation."""
    x = jax.nn.relu(z @ raw["fc1"][0] + raw["fc1"][1])
    x = jax.nn.relu(x @ raw["fc2"][0] + raw["fc2"][1])
    x = jax.nn.relu(x @ raw["fc3"][0] + raw["fc3"][1])
    x = x.reshape(z.shape[0], H_CH, KSIZE, KSIZE).astype(jnp.bfloat16)
    f32 = jnp.float32
    x = jax.nn.relu(_ref_tconv(x, *raw["tconv1"], preferred=f32)).astype(jnp.bfloat16)
    x = jax.nn.relu(_ref_tconv(x, *raw["tconv2"], preferred=f32)).astype(jnp.bfloat16)
    x = jax.nn.relu(_ref_tconv(x, *raw["tconv3"], preferred=f32)).astype(jnp.bfloat16)
    return jax.nn.sigmoid(_ref_tconv(x, *raw["tconv4"], preferred=f32))


# ----------------------------------- main ---------------------------------------

if __name__ == "__main__":
    batch = 2
    key = jax.random.PRNGKey(0)
    pkey, zkey = jax.random.split(key)
    raw = init_raw_params(pkey)
    params = prepare_params(raw)
    z = jax.random.normal(zkey, (batch, Z_DIM), jnp.float32)

    fwd = jax.jit(conv_decoder_forward)
    out = jax.block_until_ready(fwd(params, z))
    assert out.shape == (batch, OUT_CH, 64, 64), out.shape
    assert bool(jnp.all(jnp.isfinite(out)))

    # Precision-matched reference (catches any packing / phase-ordering bug).
    ref_bf16 = reference_forward_bf16(raw, z)
    err_bf16 = float(jnp.max(jnp.abs(out - ref_bf16)))
    assert err_bf16 < 1e-2, ("bf16-matched reference mismatch", err_bf16)

    # Full-f32 semantic ground truth (loose tolerance for the bf16 conv path).
    ref_f32 = reference_forward_f32(raw, z)
    err_f32 = float(jnp.max(jnp.abs(out - ref_f32)))
    assert err_f32 < 3e-2, ("f32 reference mismatch", err_f32)

    print("KERNEL_OK")
</pallas_src>

<mosaic_0001>
module attributes {stable_mosaic.version = 11 : i64} {
  func.func @_fc_block_kernel(%arg0: i32, %arg1: memref<2x16xf32, #tpu.memory_space<vmem>>, %arg2: memref<16x256xf32, #tpu.memory_space<vmem>>, %arg3: memref<1x256xf32, #tpu.memory_space<vmem>>, %arg4: memref<256x256xf32, #tpu.memory_space<vmem>>, %arg5: memref<1x256xf32, #tpu.memory_space<vmem>>, %arg6: memref<256x512xf32, #tpu.memory_space<vmem>>, %arg7: memref<1x512xf32, #tpu.memory_space<vmem>>, %arg8: memref<2x512xf32, #tpu.memory_space<vmem>>) attributes {dimension_semantics = [#tpu.dimension_semantics<arbitrary>], iteration_bounds = array<i64: 1>, scalar_prefetch = 0 : i64, scratch_operands = 0 : i64, tpu.core_type = #tpu.core_type<tc>, window_params = [{pipeline_mode = #tpu.pipeline_mode<synchronous>, transform_indices = @transform_0, window_bounds = array<i64: 2, 16>}, {pipeline_mode = #tpu.pipeline_mode<synchronous>, transform_indices = @transform_1, window_bounds = array<i64: 16, 256>}, {pipeline_mode = #tpu.pipeline_mode<synchronous>, transform_indices = @transform_2, window_bounds = array<i64: 1, 256>}, {pipeline_mode = #tpu.pipeline_mode<synchronous>, transform_indices = @transform_3, window_bounds = array<i64: 256, 256>}, {pipeline_mode = #tpu.pipeline_mode<synchronous>, transform_indices = @transform_4, window_bounds = array<i64: 1, 256>}, {pipeline_mode = #tpu.pipeline_mode<synchronous>, transform_indices = @transform_5, window_bounds = array<i64: 256, 512>}, {pipeline_mode = #tpu.pipeline_mode<synchronous>, transform_indices = @transform_6, window_bounds = array<i64: 1, 512>}, {pipeline_mode = #tpu.pipeline_mode<synchronous>, transform_indices = @transform_7, window_bounds = array<i64: 2, 512>}]} {
    %c0 = arith.constant 0 : index
    %c0_0 = arith.constant 0 : index
    %0 = vector.load %arg1[%c0, %c0_0] : memref<2x16xf32, #tpu.memory_space<vmem>>, vector<2x16xf32>
    %c0_1 = arith.constant 0 : index
    %c0_2 = arith.constant 0 : index
    %1 = vector.load %arg2[%c0_1, %c0_2] : memref<16x256xf32, #tpu.memory_space<vmem>>, vector<16x256xf32>
    %cst = arith.constant dense<0.000000e+00> : vector<2x256xf32>
    %2 = tpu.matmul %0, %1, %cst {dimension_numbers = #tpu.dot_dimension_numbers<[1], [0], [0], [1], [0, 0, 1, 1], [], []>} : vector<2x16xf32>, vector<16x256xf32>, vector<2x256xf32> -> vector<2x256xf32>
    %c0_3 = arith.constant 0 : index
    %c0_4 = arith.constant 0 : index
    %3 = vector.load %arg3[%c0_3, %c0_4] : memref<1x256xf32, #tpu.memory_space<vmem>>, vector<1x256xf32>
    %4 = vector.broadcast %3 : vector<1x256xf32> to vector<2x256xf32>
    %5 = arith.addf %2, %4 : vector<2x256xf32>
    %cst_5 = arith.constant 0.000000e+00 : f32
    %6 = vector.broadcast %cst_5 : f32 to vector<2x256xf32>
    %7 = arith.maximumf %5, %6 : vector<2x256xf32>
    %c0_6 = arith.constant 0 : index
    %c0_7 = arith.constant 0 : index
    %8 = vector.load %arg4[%c0_6, %c0_7] : memref<256x256xf32, #tpu.memory_space<vmem>>, vector<256x256xf32>
    %cst_8 = arith.constant dense<0.000000e+00> : vector<2x256xf32>
    %9 = tpu.matmul %7, %8, %cst_8 {dimension_numbers = #tpu.dot_dimension_numbers<[1], [0], [0], [1], [0, 0, 1, 1], [], []>} : vector<2x256xf32>, vector<256x256xf32>, vector<2x256xf32> -> vector<2x256xf32>
    %c0_9 = arith.constant 0 : index
    %c0_10 = arith.constant 0 : index
    %10 = vector.load %arg5[%c0_9, %c0_10] : memref<1x256xf32, #tpu.memory_space<vmem>>, vector<1x256xf32>
    %11 = vector.broadcast %10 : vector<1x256xf32> to vector<2x256xf32>
    %12 = arith.addf %9, %11 : vector<2x256xf32>
    %cst_11 = arith.constant 0.000000e+00 : f32
    %13 = vector.broadcast %cst_11 : f32 to vector<2x256xf32>
    %14 = arith.maximumf %12, %13 : vector<2x256xf32>
    %c0_12 = arith.constant 0 : index
    %c0_13 = arith.constant 0 : index
    %15 = vector.load %arg6[%c0_12, %c0_13] : memref<256x512xf32, #tpu.memory_space<vmem>>, vector<256x512xf32>
    %cst_14 = arith.constant dense<0.000000e+00> : vector<2x512xf32>
    %16 = tpu.matmul %14, %15, %cst_14 {dimension_numbers = #tpu.dot_dimension_numbers<[1], [0], [0], [1], [0, 0, 1, 1], [], []>} : vector<2x256xf32>, vector<256x512xf32>, vector<2x512xf32> -> vector<2x512xf32>
    %c0_15 = arith.constant 0 : index
    %c0_16 = arith.constant 0 : index
    %17 = vector.load %arg7[%c0_15, %c0_16] : memref<1x512xf32, #tpu.memory_space<vmem>>, vector<1x512xf32>
    %18 = vector.broadcast %17 : vector<1x512xf32> to vector<2x512xf32>
    %19 = arith.addf %16, %18 : vector<2x512xf32>
    %cst_17 = arith.constant 0.000000e+00 : f32
    %20 = vector.broadcast %cst_17 : f32 to vector<2x512xf32>
    %21 = arith.maximumf %19, %20 : vector<2x512xf32>
    %c0_18 = arith.constant 0 : index
    %c0_19 = arith.constant 0 : index
    %22 = vector.load %arg8[%c0_18, %c0_19] : memref<2x512xf32, #tpu.memory_space<vmem>>, vector<2x512xf32>
    tpu.vector_store %arg8[%c0_18, %c0_19], %21 {strides = array<i32>} : memref<2x512xf32, #tpu.memory_space<vmem>>, vector<2x512xf32>,
    return
  }
  func.func @transform_0(%arg0: i32) -> (i32, i32) {
    %c0_i32 = arith.constant 0 : i32
    %c0_i32_0 = arith.constant 0 : i32
    %c0_i32_1 = arith.constant 0 : i32
    return %c0_i32, %c0_i32_0 : i32, i32
  }
  func.func @transform_1(%arg0: i32) -> (i32, i32) {
    %c0_i32 = arith.constant 0 : i32
    %c0_i32_0 = arith.constant 0 : i32
    %c0_i32_1 = arith.constant 0 : i32
    return %c0_i32, %c0_i32_0 : i32, i32
  }
  func.func @transform_2(%arg0: i32) -> (i32, i32) {
    %c0_i32 = arith.constant 0 : i32
    %c0_i32_0 = arith.constant 0 : i32
    %c0_i32_1 = arith.constant 0 : i32
    return %c0_i32, %c0_i32_0 : i32, i32
  }
  func.func @transform_3(%arg0: i32) -> (i32, i32) {
    %c0_i32 = arith.constant 0 : i32
    %c0_i32_0 = arith.constant 0 : i32
    %c0_i32_1 = arith.constant 0 : i32
    return %c0_i32, %c0_i32_0 : i32, i32
  }
  func.func @transform_4(%arg0: i32) -> (i32, i32) {
    %c0_i32 = arith.constant 0 : i32
    %c0_i32_0 = arith.constant 0 : i32
    %c0_i32_1 = arith.constant 0 : i32
    return %c0_i32, %c0_i32_0 : i32, i32
  }
  func.func @transform_5(%arg0: i32) -> (i32, i32) {
    %c0_i32 = arith.constant 0 : i32
    %c0_i32_0 = arith.constant 0 : i32
    %c0_i32_1 = arith.constant 0 : i32
    return %c0_i32, %c0_i32_0 : i32, i32
  }
  func.func @transform_6(%arg0: i32) -> (i32, i32) {
    %c0_i32 = arith.constant 0 : i32
    %c0_i32_0 = arith.constant 0 : i32
    %c0_i32_1 = arith.constant 0 : i32
    return %c0_i32, %c0_i32_0 : i32, i32
  }
  func.func @transform_7(%arg0: i32) -> (i32, i32) {
    %c0_i32 = arith.constant 0 : i32
    %c0_i32_0 = arith.constant 0 : i32
    %c0_i32_1 = arith.constant 0 : i32
    return %c0_i32, %c0_i32_0 : i32, i32
  }
}

module attributes {stable_mosaic.version = 11 : i64} {
  func.func @_matmul_bias_act_kernel(%arg0: i32, %arg1: memref<32x288xbf16, #tpu.memory_space<vmem>>, %arg2: memref<288x128xbf16, #tpu.memory_space<vmem>>, %arg3: memref<1x128xf32, #tpu.memory_space<vmem>>, %arg4: memref<32x128xbf16, #tpu.memory_space<vmem>>) attributes {dimension_semantics = [#tpu.dimension_semantics<parallel>], iteration_bounds = array<i64: 1>, scalar_prefetch = 0 : i64, scratch_operands = 0 : i64, tpu.core_type = #tpu.core_type<tc>, window_params = [{transform_indices = @transform_0, window_bounds = array<i64: 32, 288>}, {pipeline_mode = #tpu.pipeline_mode<synchronous>, transform_indices = @transform_1, window_bounds = array<i64: 288, 128>}, {pipeline_mode = #tpu.pipeline_mode<synchronous>, transform_indices = @transform_2, window_bounds = array<i64: 1, 128>}, {transform_indices = @transform_3, window_bounds = array<i64: 32, 128>}]} {
    %c0 = arith.constant 0 : index
    %c0_0 = arith.constant 0 : index
    %0 = vector.load %arg1[%c0, %c0_0] : memref<32x288xbf16, #tpu.memory_space<vmem>>, vector<32x288xbf16>
    %c0_1 = arith.constant 0 : index
    %c0_2 = arith.constant 0 : index
    %1 = vector.load %arg2[%c0_1, %c0_2] : memref<288x128xbf16, #tpu.memory_space<vmem>>, vector<288x128xbf16>
    %cst = arith.constant dense<0.000000e+00> : vector<32x128xf32>
    %2 = tpu.matmul %0, %1, %cst {dimension_numbers = #tpu.dot_dimension_numbers<[1], [0], [0], [1], [0, 0, 1, 1], [], []>} : vector<32x288xbf16>, vector<288x128xbf16>, vector<32x128xf32> -> vector<32x128xf32>
    %c0_3 = arith.constant 0 : index
    %c0_4 = arith.constant 0 : index
    %3 = vector.load %arg3[%c0_3, %c0_4] : memref<1x128xf32, #tpu.memory_space<vmem>>, vector<1x128xf32>
    %4 = vector.broadcast %3 : vector<1x128xf32> to vector<32x128xf32>
    %5 = arith.addf %2, %4 : vector<32x128xf32>
    %cst_5 = arith.constant 0.000000e+00 : f32
    %6 = vector.broadcast %cst_5 : f32 to vector<32x128xf32>
    %7 = arith.maximumf %5, %6 : vector<32x128xf32>
    %8 = arith.truncf %7 : vector<32x128xf32> to vector<32x128xbf16>
    %c0_6 = arith.constant 0 : index
    %c0_7 = arith.constant 0 : index
    %9 = vector.load %arg4[%c0_6, %c0_7] : memref<32x128xbf16, #tpu.memory_space<vmem>>, vector<32x128xbf16>
    tpu.vector_store %arg4[%c0_6, %c0_7], %8 {strides = array<i32>} : memref<32x128xbf16, #tpu.memory_space<vmem>>, vector<32x128xbf16>,
    return
  }
  func.func @transform_0(%arg0: i32) -> (i32, i32) {
    %c0_i32 = arith.constant 0 : i32
    %c0_i32_0 = arith.constant 0 : i32
    return %arg0, %c0_i32 : i32, i32
  }
  func.func @transform_1(%arg0: i32) -> (i32, i32) {
    %c0_i32 = arith.constant 0 : i32
    %c0_i32_0 = arith.constant 0 : i32
    %c0_i32_1 = arith.constant 0 : i32
    return %c0_i32, %c0_i32_0 : i32, i32
  }
  func.func @transform_2(%arg0: i32) -> (i32, i32) {
    %c0_i32 = arith.constant 0 : i32
    %c0_i32_0 = arith.constant 0 : i32
    %c0_i32_1 = arith.constant 0 : i32
    return %c0_i32, %c0_i32_0 : i32, i32
  }
  func.func @transform_3(%arg0: i32) -> (i32, i32) {
    %c0_i32 = arith.constant 0 : i32
    %c0_i32_0 = arith.constant 0 : i32
    return %arg0, %c0_i32 : i32, i32
  }
}

module attributes {stable_mosaic.version = 11 : i64} {
  func.func @_matmul_bias_act_kernel(%arg0: i32, %arg1: memref<128x288xbf16, #tpu.memory_space<vmem>>, %arg2: memref<288x128xbf16, #tpu.memory_space<vmem>>, %arg3: memref<1x128xf32, #tpu.memory_space<vmem>>, %arg4: memref<128x128xbf16, #tpu.memory_space<vmem>>) attributes {dimension_semantics = [#tpu.dimension_semantics<parallel>], iteration_bounds = array<i64: 1>, scalar_prefetch = 0 : i64, scratch_operands = 0 : i64, tpu.core_type = #tpu.core_type<tc>, window_params = [{transform_indices = @transform_0, window_bounds = array<i64: 128, 288>}, {pipeline_mode = #tpu.pipeline_mode<synchronous>, transform_indices = @transform_1, window_bounds = array<i64: 288, 128>}, {pipeline_mode = #tpu.pipeline_mode<synchronous>, transform_indices = @transform_2, window_bounds = array<i64: 1, 128>}, {transform_indices = @transform_3, window_bounds = array<i64: 128, 128>}]} {
    %c0 = arith.constant 0 : index
    %c0_0 = arith.constant 0 : index
    %0 = vector.load %arg1[%c0, %c0_0] : memref<128x288xbf16, #tpu.memory_space<vmem>>, vector<128x288xbf16>
    %c0_1 = arith.constant 0 : index
    %c0_2 = arith.constant 0 : index
    %1 = vector.load %arg2[%c0_1, %c0_2] : memref<288x128xbf16, #tpu.memory_space<vmem>>, vector<288x128xbf16>
    %cst = arith.constant dense<0.000000e+00> : vector<128x128xf32>
    %2 = tpu.matmul %0, %1, %cst {dimension_numbers = #tpu.dot_dimension_numbers<[1], [0], [0], [1], [0, 0, 1, 1], [], []>} : vector<128x288xbf16>, vector<288x128xbf16>, vector<128x128xf32> -> vector<128x128xf32>
    %c0_3 = arith.constant 0 : index
    %c0_4 = arith.constant 0 : index
    %3 = vector.load %arg3[%c0_3, %c0_4] : memref<1x128xf32, #tpu.memory_space<vmem>>, vector<1x128xf32>
    %4 = vector.broadcast %3 : vector<1x128xf32> to vector<128x128xf32>
    %5 = arith.addf %2, %4 : vector<128x128xf32>
    %cst_5 = arith.constant 0.000000e+00 : f32
    %6 = vector.broadcast %cst_5 : f32 to vector<128x128xf32>
    %7 = arith.maximumf %5, %6 : vector<128x128xf32>
    %8 = arith.truncf %7 : vector<128x128xf32> to vector<128x128xbf16>
    %c0_6 = arith.constant 0 : index
    %c0_7 = arith.constant 0 : index
    %9 = vector.load %arg4[%c0_6, %c0_7] : memref<128x128xbf16, #tpu.memory_space<vmem>>, vector<128x128xbf16>
    tpu.vector_store %arg4[%c0_6, %c0_7], %8 {strides = array<i32>} : memref<128x128xbf16, #tpu.memory_space<vmem>>, vector<128x128xbf16>,
    return
  }
  func.func @transform_0(%arg0: i32) -> (i32, i32) {
    %c0_i32 = arith.constant 0 : i32
    %c0_i32_0 = arith.constant 0 : i32
    return %arg0, %c0_i32 : i32, i32
  }
  func.func @transform_1(%arg0: i32) -> (i32, i32) {
    %c0_i32 = arith.constant 0 : i32
    %c0_i32_0 = arith.constant 0 : i32
    %c0_i32_1 = arith.constant 0 : i32
    return %c0_i32, %c0_i32_0 : i32, i32
  }
  func.func @transform_2(%arg0: i32) -> (i32, i32) {
    %c0_i32 = arith.constant 0 : i32
    %c0_i32_0 = arith.constant 0 : i32
    %c0_i32_1 = arith.constant 0 : i32
    return %c0_i32, %c0_i32_0 : i32, i32
  }
  func.func @transform_3(%arg0: i32) -> (i32, i32) {
    %c0_i32 = arith.constant 0 : i32
    %c0_i32_0 = arith.constant 0 : i32
    return %arg0, %c0_i32 : i32, i32
  }
}

module attributes {stable_mosaic.version = 11 : i64} {
  func.func @_matmul_bias_act_kernel(%arg0: i32, %arg1: memref<512x288xbf16, #tpu.memory_space<vmem>>, %arg2: memref<288x128xbf16, #tpu.memory_space<vmem>>, %arg3: memref<1x128xf32, #tpu.memory_space<vmem>>, %arg4: memref<512x128xbf16, #tpu.memory_space<vmem>>) attributes {dimension_semantics = [#tpu.dimension_semantics<parallel>], iteration_bounds = array<i64: 1>, scalar_prefetch = 0 : i64, scratch_operands = 0 : i64, tpu.core_type = #tpu.core_type<tc>, window_params = [{transform_indices = @transform_0, window_bounds = array<i64: 512, 288>}, {pipeline_mode = #tpu.pipeline_mode<synchronous>, transform_indices = @transform_1, window_bounds = array<i64: 288, 128>}, {pipeline_mode = #tpu.pipeline_mode<synchronous>, transform_indices = @transform_2, window_bounds = array<i64: 1, 128>}, {transform_indices = @transform_3, window_bounds = array<i64: 512, 128>}]} {
    %c0 = arith.constant 0 : index
    %c0_0 = arith.constant 0 : index
    %0 = vector.load %arg1[%c0, %c0_0] : memref<512x288xbf16, #tpu.memory_space<vmem>>, vector<512x288xbf16>
    %c0_1 = arith.constant 0 : index
    %c0_2 = arith.constant 0 : index
    %1 = vector.load %arg2[%c0_1, %c0_2] : memref<288x128xbf16, #tpu.memory_space<vmem>>, vector<288x128xbf16>
    %cst = arith.constant dense<0.000000e+00> : vector<512x128xf32>
    %2 = tpu.matmul %0, %1, %cst {dimension_numbers = #tpu.dot_dimension_numbers<[1], [0], [0], [1], [0, 0, 1, 1], [], []>} : vector<512x288xbf16>, vector<288x128xbf16>, vector<512x128xf32> -> vector<512x128xf32>
    %c0_3 = arith.constant 0 : index
    %c0_4 = arith.constant 0 : index
    %3 = vector.load %arg3[%c0_3, %c0_4] : memref<1x128xf32, #tpu.memory_space<vmem>>, vector<1x128xf32>
    %4 = vector.broadcast %3 : vector<1x128xf32> to vector<512x128xf32>
    %5 = arith.addf %2, %4 : vector<512x128xf32>
    %cst_5 = arith.constant 0.000000e+00 : f32
    %6 = vector.broadcast %cst_5 : f32 to vector<512x128xf32>
    %7 = arith.maximumf %5, %6 : vector<512x128xf32>
    %8 = arith.truncf %7 : vector<512x128xf32> to vector<512x128xbf16>
    %c0_6 = arith.constant 0 : index
    %c0_7 = arith.constant 0 : index
    %9 = vector.load %arg4[%c0_6, %c0_7] : memref<512x128xbf16, #tpu.memory_space<vmem>>, vector<512x128xbf16>
    tpu.vector_store %arg4[%c0_6, %c0_7], %8 {strides = array<i32>} : memref<512x128xbf16, #tpu.memory_space<vmem>>, vector<512x128xbf16>,
    return
  }
  func.func @transform_0(%arg0: i32) -> (i32, i32) {
    %c0_i32 = arith.constant 0 : i32
    %c0_i32_0 = arith.constant 0 : i32
    return %arg0, %c0_i32 : i32, i32
  }
  func.func @transform_1(%arg0: i32) -> (i32, i32) {
    %c0_i32 = arith.constant 0 : i32
    %c0_i32_0 = arith.constant 0 : i32
    %c0_i32_1 = arith.constant 0 : i32
    return %c0_i32, %c0_i32_0 : i32, i32
  }
  func.func @transform_2(%arg0: i32) -> (i32, i32) {
    %c0_i32 = arith.constant 0 : i32
    %c0_i32_0 = arith.constant 0 : i32
    %c0_i32_1 = arith.constant 0 : i32
    return %c0_i32, %c0_i32_0 : i32, i32
  }
  func.func @transform_3(%arg0: i32) -> (i32, i32) {
    %c0_i32 = arith.constant 0 : i32
    %c0_i32_0 = arith.constant 0 : i32
    return %arg0, %c0_i32 : i32, i32
  }
}

module attributes {stable_mosaic.version = 11 : i64} {
  func.func @_matmul_bias_act_kernel(%arg0: i32, %arg1: memref<1024x288xbf16, #tpu.memory_space<vmem>>, %arg2: memref<288x12xbf16, #tpu.memory_space<vmem>>, %arg3: memref<1x12xf32, #tpu.memory_space<vmem>>, %arg4: memref<1024x12xf32, #tpu.memory_space<vmem>>) attributes {dimension_semantics = [#tpu.dimension_semantics<parallel>], iteration_bounds = array<i64: 2>, scalar_prefetch = 0 : i64, scratch_operands = 0 : i64, tpu.core_type = #tpu.core_type<tc>, window_params = [{transform_indices = @transform_0, window_bounds = array<i64: 1024, 288>}, {pipeline_mode = #tpu.pipeline_mode<synchronous>, transform_indices = @transform_1, window_bounds = array<i64: 288, 12>}, {pipeline_mode = #tpu.pipeline_mode<synchronous>, transform_indices = @transform_2, window_bounds = array<i64: 1, 12>}, {transform_indices = @transform_3, window_bounds = array<i64: 1024, 12>}]} {
    %c0 = arith.constant 0 : index
    %c0_0 = arith.constant 0 : index
    %0 = vector.load %arg1[%c0, %c0_0] : memref<1024x288xbf16, #tpu.memory_space<vmem>>, vector<1024x288xbf16>
    %c0_1 = arith.constant 0 : index
    %c0_2 = arith.constant 0 : index
    %1 = vector.load %arg2[%c0_1, %c0_2] : memref<288x12xbf16, #tpu.memory_space<vmem>>, vector<288x12xbf16>
    %cst = arith.constant dense<0.000000e+00> : vector<1024x12xf32>
    %2 = tpu.matmul %0, %1, %cst {dimension_numbers = #tpu.dot_dimension_numbers<[1], [0], [0], [1], [0, 0, 1, 1], [], []>} : vector<1024x288xbf16>, vector<288x12xbf16>, vector<1024x12xf32> -> vector<1024x12xf32>
    %c0_3 = arith.constant 0 : index
    %c0_4 = arith.constant 0 : index
    %3 = vector.load %arg3[%c0_3, %c0_4] : memref<1x12xf32, #tpu.memory_space<vmem>>, vector<1x12xf32>
    %4 = vector.broadcast %3 : vector<1x12xf32> to vector<1024x12xf32>
    %5 = arith.addf %2, %4 : vector<1024x12xf32>
    %6 = arith.negf %5 : vector<1024x12xf32>
    %7 = math.exp %6 : vector<1024x12xf32>
    %cst_5 = arith.constant 1.000000e+00 : f32
    %8 = vector.broadcast %cst_5 : f32 to vector<1024x12xf32>
    %9 = arith.addf %8, %7 : vector<1024x12xf32>
    %10 = arith.divf %8, %9 : vector<1024x12xf32>
    %c0_6 = arith.constant 0 : index
    %c0_7 = arith.constant 0 : index
    %11 = vector.load %arg4[%c0_6, %c0_7] : memref<1024x12xf32, #tpu.memory_space<vmem>>, vector<1024x12xf32>
    tpu.vector_store %arg4[%c0_6, %c0_7], %10 {strides = array<i32>} : memref<1024x12xf32, #tpu.memory_space<vmem>>, vector<1024x12xf32>,
    return
  }
  func.func @transform_0(%arg0: i32) -> (i32, i32) {
    %c0_i32 = arith.constant 0 : i32
    %c0_i32_0 = arith.constant 0 : i32
    return %arg0, %c0_i32 : i32, i32
  }
  func.func @transform_1(%arg0: i32) -> (i32, i32) {
    %c0_i32 = arith.constant 0 : i32
    %c0_i32_0 = arith.constant 0 : i32
    %c0_i32_1 = arith.constant 0 : i32
    return %c0_i32, %c0_i32_0 : i32, i32
  }
  func.func @transform_2(%arg0: i32) -> (i32, i32) {
    %c0_i32 = arith.constant 0 : i32
    %c0_i32_0 = arith.constant 0 : i32
    %c0_i32_1 = arith.constant 0 : i32
    return %c0_i32, %c0_i32_0 : i32, i32
  }
  func.func @transform_3(%arg0: i32) -> (i32, i32) {
    %c0_i32 = arith.constant 0 : i32
    %c0_i32_0 = arith.constant 0 : i32
    return %arg0, %c0_i32 : i32, i32
  }
}

</mosaic_0001>

<llo_original>
// kernel: conv_decoder_forward.6
$region0: #{conv_decoder_forward.6}
  #allocation0 [shape = 'u32[]', space=smem, size = 0x4, offset = 0x4, fixed_abs, tag = 'smem constant byte address 0x4 - core index']
  #allocation1 [shape = 'u32[144,128]{1,0:T(1,128)}', space=vmem, size = 0x12000, scoped, tag = 'internal scratch']
  %s0 = inlined_call_operand.vmem [shape: bf16[32,288], index: 0, kind: input, shape index: {}]
  %s1 = inlined_call_operand.hbm [shape: bf16[288,128], index: 1, kind: input, shape index: {}]
  %s2 = inlined_call_operand.hbm [shape: f32[1,128], index: 2, kind: input, shape index: {}]
  %s3 = inlined_call_operand.vmem [shape: bf16[32,128], index: 3, kind: output, shape index: {}]
  %s4 = sld [smem:[#allocation0]]
  $region30: #{conv_decoder_forward.6} parent=0
    _
  %s6 = ssub.s32 1, %s4
  %s7 = scalar_select 0, %s6, %s4
  $region1: #{conv_decoder_forward.6} parent=0
    #allocation2 [shape = 'u8[73728]{0}', space=vmem, size = 0x12000, scoped, tag = 'input window, operand 1, single buffered']
    #allocation3 [shape = 's32[1]{0}', space=sflag, size = 0x4, scoped, tag = 'scoped memory for conv_decoder_forward.6']
    #allocation4 [shape = 'u8[512]{0}', space=vmem, size = 0x400, scoped, tag = 'input window, operand 2, single buffered']
    #allocation5 [shape = 's32[1]{0}', space=sflag, size = 0x4, scoped, tag = 'scoped memory for conv_decoder_forward.6']
    %8 = vsyncpa [#allocation3], 0
    %9 = vsyncpa [#allocation5], 0
    // Predicated region
    $region2: #{conv_decoder_forward.6} parent=1 // pred_check
      _
    $region3: #{conv_decoder_forward.6} parent=1 // pred_check_branch
      %11 = sbr.rel (0) target = $region5
    $region4: #{conv_decoder_forward.6} parent=1 // pred_region
      _
    $region5: #{conv_decoder_forward.6} parent=1 // pred_fallthru
      _
    // Predicated region
    $region6: #{conv_decoder_forward.6} parent=1 // pred_check
      _
    $region7: #{conv_decoder_forward.6} parent=1 // pred_check_branch
      %13 = sbr.rel (0) target = $region9
    $region8: #{conv_decoder_forward.6} parent=1 // pred_region
      %s15 = ssub.s32 2304, 2304
      %16 = vsyncadd [#allocation3], %s15
      %s17 = sshll.u32 [#allocation2], 4
      %s18 = int_to_ptr.vmem [resolvable:$true] %s17
      %23 = dma.hbm_to_vmem [thread:$0]  %s1, 2304, %s18, [#allocation3], 64, 64, 4
    $region9: #{conv_decoder_forward.6} parent=1 // pred_fallthru
      _
    // Predicated region
    $region10: #{conv_decoder_forward.6} parent=1 // pred_check
      _
    $region11: #{conv_decoder_forward.6} parent=1 // pred_check_branch
      %25 = sbr.rel (0) target = $region13
    $region12: #{conv_decoder_forward.6} parent=1 // pred_region
      %s27 = ssub.s32 16, 16
      %28 = vsyncadd [#allocation5], %s27
      %s30 = sshll.u32 [#allocation4], 4
      %s31 = int_to_ptr.vmem [resolvable:$true] %s30
      %33 = dma.hbm_to_vmem [thread:$0]  %s2, 16, %s31, [#allocation5]
    $region13: #{conv_decoder_forward.6} parent=1 // pred_fallthru
      _
    // Predicated region
    $region14: #{conv_decoder_forward.6} parent=1 // pred_check
      _
    $region15: #{conv_decoder_forward.6} parent=1 // pred_check_branch
      %35 = sbr.rel (0) target = $region17
    $region16: #{conv_decoder_forward.6} parent=1 // pred_region
      %36 = dma.done [#allocation3], 2304
    $region17: #{conv_decoder_forward.6} parent=1 // pred_fallthru
      _
    // Predicated region
    $region18: #{conv_decoder_forward.6} parent=1 // pred_check
      _
    $region19: #{conv_decoder_forward.6} parent=1 // pred_check_branch
      %38 = sbr.rel (0) target = $region21
    $region20: #{conv_decoder_forward.6} parent=1 // pred_region
      %39 = dma.done [#allocation5], 16
    $region21: #{conv_decoder_forward.6} parent=1 // pred_fallthru
      _
    %v41 = vld [vmem:[%s0] sm:$0xff]
    %v42 = vld [vmem:[%s0 + $0x8] sm:$0xf]
    %v43 = vld [vmem:[%s0 + $0xc] sm:$0xff]
    %v44 = vld [vmem:[%s0 + $0x14] sm:$0xf]
    %v45 = vld [vmem:[%s0 + $0x18] sm:$0xff]
    %v46 = vld [vmem:[%s0 + $0x20] sm:$0xf]
    %v47 = vld [vmem:[%s0 + $0x24] sm:$0xff]
    %v48 = vld [vmem:[%s0 + $0x2c] sm:$0xf]
    %v49 = vld [vmem:[#allocation2] sm:$0xf]
    %v50 = vld [vmem:[#allocation2 + $0x4] sm:$0xf]
    %v51 = vld [vmem:[#allocation2 + $0x8] sm:$0xf]
    %v52 = vld [vmem:[#allocation2 + $0xc] sm:$0xf]
    %v53 = vld [vmem:[#allocation2 + $0x10] sm:$0xf]
    %v54 = vld [vmem:[#allocation2 + $0x14] sm:$0xf]
    %v55 = vld [vmem:[#allocation2 + $0x18] sm:$0xf]
    %v56 = vld [vmem:[#allocation2 + $0x1c] sm:$0xf]
    %v57 = vld [vmem:[#allocation2 + $0x20] sm:$0xf]
    %v58 = vld [vmem:[#allocation2 + $0x24] sm:$0xf]
    %v59 = vld [vmem:[#allocation2 + $0x28] sm:$0xf]
    %v60 = vld [vmem:[#allocation2 + $0x2c] sm:$0xf]
    %v61 = vld [vmem:[#allocation2 + $0x30] sm:$0xf]
    %v62 = vld [vmem:[#allocation2 + $0x34] sm:$0xf]
    %v63 = vld [vmem:[#allocation2 + $0x38] sm:$0xf]
    %v64 = vld [vmem:[#allocation2 + $0x3c] sm:$0xf]
    %v65 = vld [vmem:[#allocation2 + $0x40] sm:$0xf]
    %v66 = vld [vmem:[#allocation2 + $0x44] sm:$0xf]
    %v67 = vld [vmem:[#allocation2 + $0x48] sm:$0xf]
    %v68 = vld [vmem:[#allocation2 + $0x4c] sm:$0xf]
    %v69 = vld [vmem:[#allocation2 + $0x50] sm:$0xf]
    %v70 = vld [vmem:[#allocation2 + $0x54] sm:$0xf]
    %v71 = vld [vmem:[#allocation2 + $0x58] sm:$0xf]
    %v72 = vld [vmem:[#allocation2 + $0x5c] sm:$0xf]
    %v73 = vld [vmem:[#allocation2 + $0x60] sm:$0xf]
    %v74 = vld [vmem:[#allocation2 + $0x64] sm:$0xf]
    %v75 = vld [vmem:[#allocation2 + $0x68] sm:$0xf]
    %v76 = vld [vmem:[#allocation2 + $0x6c] sm:$0xf]
    %v77 = vld [vmem:[#allocation2 + $0x70] sm:$0xf]
    %v78 = vld [vmem:[#allocation2 + $0x74] sm:$0xf]
    %v79 = vld [vmem:[#allocation2 + $0x78] sm:$0xf]
    %v80 = vld [vmem:[#allocation2 + $0x7c] sm:$0xf]
    %v81 = vld [vmem:[#allocation2 + $0x80] sm:$0xf]
    %v82 = vld [vmem:[#allocation2 + $0x84] sm:$0xf]
    %v83 = vld [vmem:[#allocation2 + $0x88] sm:$0xf]
    %v84 = vld [vmem:[#allocation2 + $0x8c] sm:$0xf]
    %v85 = vld [vmem:[#allocation4] sm:$0x1]
    %v87 = vlaneseq
    %v88 = vshrl.u32 %v87, 7
    %v89 = vsub.s32 0, %v88
    %v90 = vrot.slane %v85, %v89
    %v100 = vunpack.c.l.b16 %v41
    %v101 = vunpack.c.h.b16 %v41
    %v102 = vunpack.c.l.b16 %v42
    %v103 = vunpack.c.l.b16 %v43
    %v104 = vunpack.c.h.b16 %v43
    %v105 = vunpack.c.l.b16 %v44
    %v106 = vunpack.c.l.b16 %v45
    %v107 = vunpack.c.h.b16 %v45
    %v108 = vunpack.c.l.b16 %v46
    %v109 = vunpack.c.l.b16 %v47
    %v110 = vunpack.c.h.b16 %v47
    %v111 = vunpack.c.l.b16 %v48
    %v112 = vpack.c.b16 %v103, %v100
    %v113 = vpack.c.b16 %v104, %v101
    %v114 = vpack.c.b16 %v105, %v102
    %v115 = vpack.c.b16 %v109, %v106
    %v116 = vpack.c.b16 %v110, %v107
    %v117 = vpack.c.b16 %v111, %v108
    %v158 = vunpack.c.l.b16 %v49
    %v159 = vunpack.c.l.b16 %v50
    %v160 = vunpack.c.l.b16 %v51
    %v161 = vunpack.c.l.b16 %v52
    %v162 = vunpack.c.l.b16 %v53
    %v163 = vunpack.c.l.b16 %v54
    %v164 = vunpack.c.l.b16 %v55
    %v165 = vunpack.c.l.b16 %v56
    %v166 = vunpack.c.l.b16 %v57
    %v167 = vunpack.c.l.b16 %v58
    %v168 = vunpack.c.l.b16 %v59
    %v169 = vunpack.c.l.b16 %v60
    %v170 = vunpack.c.l.b16 %v61
    %v171 = vunpack.c.l.b16 %v62
    %v172 = vunpack.c.l.b16 %v63
    %v173 = vunpack.c.l.b16 %v64
    %v174 = vunpack.c.l.b16 %v65
    %v175 = vunpack.c.l.b16 %v66
    %v176 = vunpack.c.l.b16 %v67
    %v177 = vunpack.c.l.b16 %v68
    %v178 = vunpack.c.l.b16 %v69
    %v179 = vunpack.c.l.b16 %v70
    %v180 = vunpack.c.l.b16 %v71
    %v181 = vunpack.c.l.b16 %v72
    %v182 = vunpack.c.l.b16 %v73
    %v183 = vunpack.c.l.b16 %v74
    %v184 = vunpack.c.l.b16 %v75
    %v185 = vunpack.c.l.b16 %v76
    %v186 = vunpack.c.l.b16 %v77
    %v187 = vunpack.c.l.b16 %v78
    %v188 = vunpack.c.l.b16 %v79
    %v189 = vunpack.c.l.b16 %v80
    %v190 = vunpack.c.l.b16 %v81
    %v191 = vunpack.c.l.b16 %v82
    %v192 = vunpack.c.l.b16 %v83
    %v193 = vunpack.c.l.b16 %v84
    %v194 = vpack.c.b16 %v159, %v158
    %v195 = vpack.c.b16 %v161, %v160
    %v196 = vpack.c.b16 %v163, %v162
    %v197 = vpack.c.b16 %v165, %v164
    %v198 = vpack.c.b16 %v167, %v166
    %v199 = vpack.c.b16 %v169, %v168
    %v200 = vpack.c.b16 %v171, %v170
    %v201 = vpack.c.b16 %v173, %v172
    %v202 = vpack.c.b16 %v175, %v174
    %v203 = vpack.c.b16 %v177, %v176
    %v204 = vpack.c.b16 %v179, %v178
    %v205 = vpack.c.b16 %v181, %v180
    %v206 = vpack.c.b16 %v183, %v182
    %v207 = vpack.c.b16 %v185, %v184
    %v208 = vpack.c.b16 %v187, %v186
    %v209 = vpack.c.b16 %v189, %v188
    %v210 = vpack.c.b16 %v191, %v190
    %v211 = vpack.c.b16 %v193, %v192
    %vm230 = vcmask 261120
    %v232 = vsel %vm230, %v114, 0
    %v235 = vsel %vm230, %v117, 0
    %237 = vmatprep.subr.bf16.mxu0 0
    %238 = vmatpush1.bf16.msra.mxu0 %v194
    %239 = vmatprep.subr.bf16.mxu0 0
    %240 = vmatpush1.bf16.msra.mxu0 %v195
    %241 = vmatprep.subr.bf16.mxu0 0
    %242 = vmatpush1.bf16.msra.mxu0 %v196
    %243 = vmatprep.subr.bf16.mxu0 0
    %244 = vmatpush1.bf16.msra.mxu0 %v197
    %245 = vmatprep.subr.bf16.mxu0 0
    %246 = vmatpush1.bf16.msra.mxu0 %v198
    %247 = vmatprep.subr.bf16.mxu0 0
    %248 = vmatpush1.bf16.msra.mxu0 %v199
    %249 = vmatprep.subr.bf16.mxu0 0
    %250 = vmatpush1.bf16.msra.mxu0 %v200
    %251 = vmatprep.subr.bf16.mxu0 0
    %252 = vmatpush1.bf16.msra.mxu0 %v201
    %253 = vmatprep.subr.bf16.mxu0 0
    %254 = vmatpush1.bf16.msra.mxu0 %v202
    %255 = vmatprep.subr.bf16.mxu0 0
    %256 = vmatpush1.bf16.msra.mxu0 %v203
    %257 = vmatprep.subr.bf16.mxu0 0
    %258 = vmatpush1.bf16.msra.mxu0 %v204
    %259 = vmatprep.subr.bf16.mxu0 0
    %260 = vmatpush1.bf16.msra.mxu0 %v205
    %261 = vmatprep.subr.bf16.mxu0 0
    %262 = vmatpush1.bf16.msra.mxu0 %v206
    %263 = vmatprep.subr.bf16.mxu0 0
    %264 = vmatpush1.bf16.msra.mxu0 %v207
    %265 = vmatprep.subr.bf16.mxu0 0
    %266 = vmatpush1.bf16.msra.mxu0 %v208
    %267 = vmatprep.subr.bf16.mxu0 0
    %268 = vmatpush1.bf16.msra.mxu0 %v209
    %269 = vmatprep.mubr.bf16.mxu0 %v113
    %270 = vmatmul.mubr.bf16.gmra.mrb[0].mxu0 %v112
    %v271 = vpop.f32.mrb[0].mxu0
    %v272 = vadd.f32 %v90, %v271
    %v273 = vpop.f32.mrb[0].mxu0
    %v274 = vpop.f32.mrb[0].mxu0
    %v275 = vadd.f32 %v90, %v274
    %v276 = vpop.f32.mrb[0].mxu0
    %277 = vmatprep.mubr.bf16.mxu0 %v116
    %278 = vmatmul.mubr.bf16.gmra.mrb[0].mxu0 %v115
    %v279 = vpop.f32.mrb[0].mxu0
    %v280 = vadd.f32 %v90, %v279
    %v281 = vpop.f32.mrb[0].mxu0
    %v282 = vpop.f32.mrb[0].mxu0
    %v283 = vadd.f32 %v90, %v282
    %v284 = vpop.f32.mrb[0].mxu0
    %285 = vdwg.mxu0
    %286 = vmatprep.subr.bf16.mxu0 0
    %287 = vmatpush1.bf16.msra.mxu0 %v210
    %288 = vmatprep.subr.bf16.mxu0 0
    %289 = vmatpush1.bf16.msra.mxu0 %v211
    %290 = vmatprep.subr.bf16.mxu0 0
    %291 = vmatpush1.bf16.msra.mxu0 0
    %292 = vmatprep.subr.bf16.mxu0 0
    %293 = vmatpush1.bf16.msra.mxu0 0
    %294 = vmatprep.subr.bf16.mxu0 0
    %295 = vmatpush1.bf16.msra.mxu0 0
    %296 = vmatprep.subr.bf16.mxu0 0
    %297 = vmatpush1.bf16.msra.mxu0 0
    %298 = vmatprep.subr.bf16.mxu0 0
    %299 = vmatpush1.bf16.msra.mxu0 0
    %300 = vmatprep.subr.bf16.mxu0 0
    %301 = vmatpush1.bf16.msra.mxu0 0
    %302 = vmatprep.subr.bf16.mxu0 0
    %303 = vmatpush1.bf16.msra.mxu0 0
    %304 = vmatprep.subr.bf16.mxu0 0
    %305 = vmatpush1.bf16.msra.mxu0 0
    %306 = vmatprep.subr.bf16.mxu0 0
    %307 = vmatpush1.bf16.msra.mxu0 0
    %308 = vmatprep.subr.bf16.mxu0 0
    %309 = vmatpush1.bf16.msra.mxu0 0
    %310 = vmatprep.subr.bf16.mxu0 0
    %311 = vmatpush1.bf16.msra.mxu0 0
    %312 = vmatprep.subr.bf16.mxu0 0
    %313 = vmatpush1.bf16.msra.mxu0 0
    %314 = vmatprep.subr.bf16.mxu0 0
    %315 = vmatpush1.bf16.msra.mxu0 0
    %316 = vmatprep.subr.bf16.mxu0 0
    %317 = vmatpush1.bf16.msra.mxu0 0
    %318 = vmatprep.mubr.bf16.mxu0 0
    %319 = vmatmul.mubr.bf16.gmra.mrb[0].mxu0 %v232
    %v320 = vpop.f32.mrb[0].mxu0
    %v321 = vadd.f32 %v272, %v320
    %v322 = vpop.f32.mrb[0].mxu0
    %v323 = vpop.f32.mrb[0].mxu0
    %v324 = vadd.f32 %v275, %v323
    %v325 = vpop.f32.mrb[0].mxu0
    %326 = vmatprep.mubr.bf16.mxu0 0
    %327 = vmatmul.mubr.bf16.gmra.mrb[0].mxu0 %v235
    %v328 = vpop.f32.mrb[0].mxu0
    %v329 = vadd.f32 %v280, %v328
    %v330 = vpop.f32.mrb[0].mxu0
    %v331 = vpop.f32.mrb[0].mxu0
    %v332 = vadd.f32 %v283, %v331
    %v333 = vpop.f32.mrb[0].mxu0
    %334 = vdwg.mxu0
    %v335 = vmax.f32 %v321, 0.0
    %v336 = vmax.f32 %v324, 0.0
    %v337 = vmax.f32 %v329, 0.0
    %v338 = vmax.f32 %v332, 0.0
    %v339 = vpack.c.bf16 %v336, %v335
    %v340 = vpack.c.bf16 %v338, %v337
    %v343 = vunpack.c.l.b16 %v339
    %v344 = vunpack.c.h.b16 %v339
    %v345 = vunpack.c.l.b16 %v340
    %v346 = vunpack.c.h.b16 %v340
    %v347 = vpack.c.b16 %v343, %v343
    %v348 = vpack.c.b16 %v344, %v344
    %v349 = vpack.c.b16 %v345, %v345
    %v350 = vpack.c.b16 %v346, %v346
    %355 = vst [vmem:[%s3] sm:$0xf] %v347
    %356 = vst [vmem:[%s3 + $0x4] sm:$0xf] %v348
    %357 = vst [vmem:[%s3 + $0x8] sm:$0xf] %v349
    %358 = vst [vmem:[%s3 + $0xc] sm:$0xf] %v350
    // Predicated region
    $region22: #{conv_decoder_forward.6} parent=1 // pred_check
      _
    $region23: #{conv_decoder_forward.6} parent=1 // pred_check_branch
      %360 = sbr.rel (0) target = $region25
    $region24: #{conv_decoder_forward.6} parent=1 // pred_region
      _
    $region25: #{conv_decoder_forward.6} parent=1 // pred_fallthru
      _
    // Predicated region
    $region26: #{conv_decoder_forward.6} parent=1 // pred_check
      _
    $region27: #{conv_decoder_forward.6} parent=1 // pred_check_branch
      %362 = sbr.rel (0) target = $region29
    $region28: #{conv_decoder_forward.6} parent=1 // pred_region
      _
    $region29: #{conv_decoder_forward.6} parent=1 // pred_fallthru
      _
    %363 = vsyncpa [#allocation3], 1
    %364 = vsyncpa [#allocation5], 1

// kernel: conv_decoder_forward.5
$region0: #{conv_decoder_forward.5}
  #allocation0 [shape = 'u32[]', space=smem, size = 0x4, offset = 0x4, fixed_abs, tag = 'smem constant byte address 0x4 - core index']
  #allocation1 [shape = 'u32[144,128]{1,0:T(1,128)}', space=vmem, size = 0x12000, scoped, tag = 'internal scratch']
  %s0 = inlined_call_operand.hbm [shape: f32[2,16], index: 0, kind: input, shape index: {}]
  %s1 = inlined_call_operand.hbm [shape: f32[16,256], index: 1, kind: input, shape index: {}]
  %s2 = inlined_call_operand.hbm [shape: f32[1,256], index: 2, kind: input, shape index: {}]
  %s3 = inlined_call_operand.hbm [shape: f32[256,256], index: 3, kind: input, shape index: {}]
  %s4 = inlined_call_operand.hbm [shape: f32[1,256], index: 4, kind: input, shape index: {}]
  %s5 = inlined_call_operand.hbm [shape: f32[256,512], index: 5, kind: input, shape index: {}]
  %s6 = inlined_call_operand.hbm [shape: f32[1,512], index: 6, kind: input, shape index: {}]
  %s7 = inlined_call_operand.vmem [shape: f32[2,512], index: 7, kind: output, shape index: {}]
  %s8 = sld [smem:[#allocation0]]
  $region66: #{conv_decoder_forward.5} parent=0
    _
  %s10 = ssub.s32 1, %s8
  %s11 = scalar_select 0, %s10, %s8
  $region1: #{conv_decoder_forward.5} parent=0
    #allocation2 [shape = 'u8[1024]{0}', space=vmem, size = 0x400, scoped, tag = 'input window, operand 0, single buffered']
    #allocation3 [shape = 's32[1]{0}', space=sflag, size = 0x4, scoped, tag = 'scoped memory for conv_decoder_forward.5']
    #allocation4 [shape = 'u8[16384]{0}', space=vmem, size = 0x4000, scoped, tag = 'input window, operand 1, single buffered']
    #allocation5 [shape = 's32[1]{0}', space=sflag, size = 0x4, scoped, tag = 'scoped memory for conv_decoder_forward.5']
    #allocation6 [shape = 'u8[1024]{0}', space=vmem, size = 0x400, scoped, tag = 'input window, operand 2, single buffered']
    #allocation7 [shape = 'u8[262144]{0}', space=vmem, size = 0x40000, scoped, tag = 'input window, operand 3, single buffered']
    #allocation8 [shape = 's32[1]{0}', space=sflag, size = 0x4, scoped, tag = 'scoped memory for conv_decoder_forward.5']
    #allocation9 [shape = 'u8[1024]{0}', space=vmem, size = 0x400, scoped, tag = 'input window, operand 4, single buffered']
    #allocation10 [shape = 'u8[524288]{0}', space=vmem, size = 0x80000, scoped, tag = 'input window, operand 5, single buffered']
    #allocation11 [shape = 's32[1]{0}', space=sflag, size = 0x4, scoped, tag = 'scoped memory for conv_decoder_forward.5']
    #allocation12 [shape = 'u8[2048]{0}', space=vmem, size = 0x800, scoped, tag = 'input window, operand 6, single buffered']
    %12 = vsyncpa [#allocation3], 0
    %13 = vsyncpa [#allocation5], 0
    %14 = vsyncpa [#allocation8], 0
    %15 = vsyncpa [#allocation11], 0
    // Predicated region
    $region2: #{conv_decoder_forward.5} parent=1 // pred_check
      _
    $region3: #{conv_decoder_forward.5} parent=1 // pred_check_branch
      %17 = sbr.rel (0) target = $region5
    $region4: #{conv_decoder_forward.5} parent=1 // pred_region
      %s19 = ssub.s32 32, 32
      %20 = vsyncadd [#allocation3], %s19
      %s22 = sshll.u32 [#allocation2], 4
      %s23 = int_to_ptr.vmem [resolvable:$true] %s22
      %25 = dma.hbm_to_vmem [thread:$0]  %s0, 32, %s23, [#allocation3]
    $region5: #{conv_decoder_forward.5} parent=1 // pred_fallthru
      _
    // Predicated region
    $region6: #{conv_decoder_forward.5} parent=1 // pred_check
      _
    $region7: #{conv_decoder_forward.5} parent=1 // pred_check_branch
      %27 = sbr.rel (0) target = $region9
    $region8: #{conv_decoder_forward.5} parent=1 // pred_region
      %s29 = ssub.s32 512, 512
      %30 = vsyncadd [#allocation5], %s29
      %s31 = sshll.u32 [#allocation4], 4
      %s32 = int_to_ptr.vmem [resolvable:$true] %s31
      %37 = dma.hbm_to_vmem [thread:$0]  %s1, 512, %s32, [#allocation5], 256, 256, 16
    $region9: #{conv_decoder_forward.5} parent=1 // pred_fallthru
      _
    // Predicated region
    $region10: #{conv_decoder_forward.5} parent=1 // pred_check
      _
    $region11: #{conv_decoder_forward.5} parent=1 // pred_check_branch
      %39 = sbr.rel (0) target = $region13
    $region12: #{conv_decoder_forward.5} parent=1 // pred_region
      %s41 = ssub.s32 32, 32
      %42 = vsyncadd [#allocation5], %s41
      %s44 = sshll.u32 [#allocation6], 4
      %s45 = int_to_ptr.vmem [resolvable:$true] %s44
      %47 = dma.hbm_to_vmem [thread:$0]  %s2, 32, %s45, [#allocation5]
    $region13: #{conv_decoder_forward.5} parent=1 // pred_fallthru
      _
    // Predicated region
    $region14: #{conv_decoder_forward.5} parent=1 // pred_check
      _
    $region15: #{conv_decoder_forward.5} parent=1 // pred_check_branch
      %49 = sbr.rel (0) target = $region17
    $region16: #{conv_decoder_forward.5} parent=1 // pred_region
      %s51 = ssub.s32 8192, 8192
      %52 = vsyncadd [#allocation8], %s51
      %s53 = sshll.u32 [#allocation7], 4
      %s54 = int_to_ptr.vmem [resolvable:$true] %s53
      %59 = dma.hbm_to_vmem [thread:$0]  %s3, 8192, %s54, [#allocation8], 256, 256, 16
    $region17: #{conv_decoder_forward.5} parent=1 // pred_fallthru
      _
    // Predicated region
    $region18: #{conv_decoder_forward.5} parent=1 // pred_check
      _
    $region19: #{conv_decoder_forward.5} parent=1 // pred_check_branch
      %61 = sbr.rel (0) target = $region21
    $region20: #{conv_decoder_forward.5} parent=1 // pred_region
      %s63 = ssub.s32 32, 32
      %64 = vsyncadd [#allocation8], %s63
      %s66 = sshll.u32 [#allocation9], 4
      %s67 = int_to_ptr.vmem [resolvable:$true] %s66
      %69 = dma.hbm_to_vmem [thread:$0]  %s4, 32, %s67, [#allocation8]
    $region21: #{conv_decoder_forward.5} parent=1 // pred_fallthru
      _
    // Predicated region
    $region22: #{conv_decoder_forward.5} parent=1 // pred_check
      _
    $region23: #{conv_decoder_forward.5} parent=1 // pred_check_branch
      %71 = sbr.rel (0) target = $region25
    $region24: #{conv_decoder_forward.5} parent=1 // pred_region
      %s73 = ssub.s32 16384, 16384
      %74 = vsyncadd [#allocation11], %s73
      %s75 = sshll.u32 [#allocation10], 4
      %s76 = int_to_ptr.vmem [resolvable:$true] %s75
      %81 = dma.hbm_to_vmem [thread:$0]  %s5, 16384, %s76, [#allocation11], 512, 512, 32
    $region25: #{conv_decoder_forward.5} parent=1 // pred_fallthru
      _
    // Predicated region
    $region26: #{conv_decoder_forward.5} parent=1 // pred_check
      _
    $region27: #{conv_decoder_forward.5} parent=1 // pred_check_branch
      %83 = sbr.rel (0) target = $region29
    $region28: #{conv_decoder_forward.5} parent=1 // pred_region
      %s85 = ssub.s32 64, 64
      %86 = vsyncadd [#allocation11], %s85
      %s88 = sshll.u32 [#allocation12], 4
      %s89 = int_to_ptr.vmem [resolvable:$true] %s88
      %91 = dma.hbm_to_vmem [thread:$0]  %s6, 64, %s89, [#allocation11]
    $region29: #{conv_decoder_forward.5} parent=1 // pred_fallthru
      _
    // Predicated region
    $region30: #{conv_decoder_forward.5} parent=1 // pred_check
      _
    $region31: #{conv_decoder_forward.5} parent=1 // pred_check_branch
      %93 = sbr.rel (0) target = $region33
    $region32: #{conv_decoder_forward.5} parent=1 // pred_region
      %94 = dma.done [#allocation3], 32
    $region33: #{conv_decoder_forward.5} parent=1 // pred_fallthru
      _
    // Predicated region
    $region34: #{conv_decoder_forward.5} parent=1 // pred_check
      _
    $region35: #{conv_decoder_forward.5} parent=1 // pred_check_branch
      %96 = sbr.rel (0) target = $region37
    $region36: #{conv_decoder_forward.5} parent=1 // pred_region
      %97 = dma.done [#allocation5], 512
    $region37: #{conv_decoder_forward.5} parent=1 // pred_fallthru
      _
    // Predicated region
    $region38: #{conv_decoder_forward.5} parent=1 // pred_check
      _
    $region39: #{conv_decoder_forward.5} parent=1 // pred_check_branch
      %99 = sbr.rel (0) target = $region41
    $region40: #{conv_decoder_forward.5} parent=1 // pred_region
      %100 = dma.done [#allocation5], 32
    $region41: #{conv_decoder_forward.5} parent=1 // pred_fallthru
      _
    // Predicated region
    $region42: #{conv_decoder_forward.5} parent=1 // pred_check
      _
    $region43: #{conv_decoder_forward.5} parent=1 // pred_check_branch
      %102 = sbr.rel (0) target = $region45
    $region44: #{conv_decoder_forward.5} parent=1 // pred_region
      %103 = dma.done [#allocation8], 8192
    $region45: #{conv_decoder_forward.5} parent=1 // pred_fallthru
      _
    // Predicated region
    $region46: #{conv_decoder_forward.5} parent=1 // pred_check
      _
    $region47: #{conv_decoder_forward.5} parent=1 // pred_check_branch
      %105 = sbr.rel (0) target = $region49
    $region48: #{conv_decoder_forward.5} parent=1 // pred_region
      %106 = dma.done [#allocation8], 32
    $region49: #{conv_decoder_forward.5} parent=1 // pred_fallthru
      _
    // Predicated region
    $region50: #{conv_decoder_forward.5} parent=1 // pred_check
      _
    $region51: #{conv_decoder_forward.5} parent=1 // pred_check_branch
      %108 = sbr.rel (0) target = $region53
    $region52: #{conv_decoder_forward.5} parent=1 // pred_region
      %109 = dma.done [#allocation11], 16384
    $region53: #{conv_decoder_forward.5} parent=1 // pred_fallthru
      _
    // Predicated region
    $region54: #{conv_decoder_forward.5} parent=1 // pred_check
      _
    $region55: #{conv_decoder_forward.5} parent=1 // pred_check_branch
      %111 = sbr.rel (0) target = $region57
    $region56: #{conv_decoder_forward.5} parent=1 // pred_region
      %112 = dma.done [#allocation11], 64
    $region57: #{conv_decoder_forward.5} parent=1 // pred_fallthru
      _
    %v113 = vld [vmem:[#allocation2] sm:$0x3]
    %v114 = vld [vmem:[#allocation4] sm:$0xff]
    %v115 = vld [vmem:[#allocation4 + $0x8] sm:$0xff]
    %v116 = vld [vmem:[#allocation4 + $0x10] sm:$0xff]
    %v117 = vld [vmem:[#allocation4 + $0x18] sm:$0xff]
    %v118 = vld [vmem:[#allocation6] sm:$0x3]
    %v120 = vlaneseq
    %v121 = vshrl.u32 %v120, 7
    %v122 = vsub.s32 0, %v121
    %v123 = vrot.slane %v118, %v122
    %v124 = vlaneseq
    %v125 = vshrl.u32 %v124, 7
    %v126 = vsub.s32 1, %v125
    %v127 = vrot.slane %v118, %v126
    %vm130 = vcmask 130048
    %v132 = vsel %vm130, %v113, 0
    %134 = vmatprep.subr.mxu0 %v115
    %135 = vmatpush1.msra.mxu0 %v114
    %136 = vmatprep.subr.mxu0 %v117
    %137 = vmatpush1.msra.mxu0 %v116
    %138 = vmatprep.subr.mxu0 0.0
    %139 = vmatpush1.msra.mxu0 0.0
    %140 = vmatprep.subr.mxu0 0.0
    %141 = vmatpush1.msra.mxu0 0.0
    %142 = vmatprep.subr.mxu0 0.0
    %143 = vmatpush1.msra.mxu0 0.0
    %144 = vmatprep.subr.mxu0 0.0
    %145 = vmatpush1.msra.mxu0 0.0
    %146 = vmatprep.subr.mxu0 0.0
    %147 = vmatpush1.msra.mxu0 0.0
    %148 = vmatprep.subr.mxu0 0.0
    %149 = vmatpush1.msra.mxu0 0.0
    %150 = vmatprep.subr.mxu0 0.0
    %151 = vmatpush1.msra.mxu0 0.0
    %152 = vmatprep.subr.mxu0 0.0
    %153 = vmatpush1.msra.mxu0 0.0
    %154 = vmatprep.subr.mxu0 0.0
    %155 = vmatpush1.msra.mxu0 0.0
    %156 = vmatprep.subr.mxu0 0.0
    %157 = vmatpush1.msra.mxu0 0.0
    %158 = vmatprep.subr.mxu0 0.0
    %159 = vmatpush1.msra.mxu0 0.0
    %160 = vmatprep.subr.mxu0 0.0
    %161 = vmatpush1.msra.mxu0 0.0
    %162 = vmatprep.subr.mxu0 0.0
    %163 = vmatpush1.msra.mxu0 0.0
    %164 = vmatprep.subr.mxu0 0.0
    %165 = vmatpush1.msra.mxu0 0.0
    %166 = vmatprep.subr.mxu0 0.0
    %167 = vmatpush1.msra.mxu0 0.0
    %168 = vmatprep.subr.mxu0 0.0
    %169 = vmatpush1.msra.mxu0 0.0
    %170 = vmatprep.subr.mxu0 0.0
    %171 = vmatpush1.msra.mxu0 0.0
    %172 = vmatprep.subr.mxu0 0.0
    %173 = vmatpush1.msra.mxu0 0.0
    %174 = vmatprep.subr.mxu0 0.0
    %175 = vmatpush1.msra.mxu0 0.0
    %176 = vmatprep.subr.mxu0 0.0
    %177 = vmatpush1.msra.mxu0 0.0
    %178 = vmatprep.subr.mxu0 0.0
    %179 = vmatpush1.msra.mxu0 0.0
    %180 = vmatprep.subr.mxu0 0.0
    %181 = vmatpush1.msra.mxu0 0.0
    %182 = vmatprep.subr.mxu0 0.0
    %183 = vmatpush1.msra.mxu0 0.0
    %184 = vmatprep.subr.mxu0 0.0
    %185 = vmatpush1.msra.mxu0 0.0
    %186 = vmatprep.subr.mxu0 0.0
    %187 = vmatpush1.msra.mxu0 0.0
    %188 = vmatprep.subr.mxu0 0.0
    %189 = vmatpush1.msra.mxu0 0.0
    %190 = vmatprep.subr.mxu0 0.0
    %191 = vmatpush1.msra.mxu0 0.0
    %192 = vmatprep.subr.mxu0 0.0
    %193 = vmatpush1.msra.mxu0 0.0
    %194 = vmatprep.subr.mxu0 0.0
    %195 = vmatpush1.msra.mxu0 0.0
    %196 = vmatprep.subr.mxu0 0.0
    %197 = vmatpush1.msra.mxu0 0.0
    %198 = vmatprep.mubr.f32.mxu0 0.0
    %199 = vmatmul.mubr.f32.gmra.mrb[0].mxu0 %v132
    %v200 = vpop.f32.mrb[0].mxu0
    %v201 = vadd.f32 %v123, %v200
    %v202 = vpop.f32.mrb[0].mxu0
    %v203 = vadd.f32 %v127, %v202
    %204 = vdwg.mxu0
    %v205 = vmax.f32 %v201, 0.0
    %v206 = vmax.f32 %v203, 0.0
    %v207 = vld [vmem:[#allocation7] sm:$0xff]
    %v208 = vld [vmem:[#allocation7 + $0x8] sm:$0xff]
    %v209 = vld [vmem:[#allocation7 + $0x10] sm:$0xff]
    %v210 = vld [vmem:[#allocation7 + $0x18] sm:$0xff]
    %v211 = vld [vmem:[#allocation7 + $0x20] sm:$0xff]
    %v212 = vld [vmem:[#allocation7 + $0x28] sm:$0xff]
    %v213 = vld [vmem:[#allocation7 + $0x30] sm:$0xff]
    %v214 = vld [vmem:[#allocation7 + $0x38] sm:$0xff]
    %v215 = vld [vmem:[#allocation7 + $0x40] sm:$0xff]
    %v216 = vld [vmem:[#allocation7 + $0x48] sm:$0xff]
    %v217 = vld [vmem:[#allocation7 + $0x50] sm:$0xff]
    %v218 = vld [vmem:[#allocation7 + $0x58] sm:$0xff]
    %v219 = vld [vmem:[#allocation7 + $0x60] sm:$0xff]
    %v220 = vld [vmem:[#allocation7 + $0x68] sm:$0xff]
    %v221 = vld [vmem:[#allocation7 + $0x70] sm:$0xff]
    %v222 = vld [vmem:[#allocation7 + $0x78] sm:$0xff]
    %v223 = vld [vmem:[#allocation7 + $0x80] sm:$0xff]
    %v224 = vld [vmem:[#allocation7 + $0x88] sm:$0xff]
    %v225 = vld [vmem:[#allocation7 + $0x90] sm:$0xff]
    %v226 = vld [vmem:[#allocation7 + $0x98] sm:$0xff]
    %v227 = vld [vmem:[#allocation7 + $0xa0] sm:$0xff]
    %v228 = vld [vmem:[#allocation7 + $0xa8] sm:$0xff]
    %v229 = vld [vmem:[#allocation7 + $0xb0] sm:$0xff]
    %v230 = vld [vmem:[#allocation7 + $0xb8] sm:$0xff]
    %v231 = vld [vmem:[#allocation7 + $0xc0] sm:$0xff]
    %v232 = vld [vmem:[#allocation7 + $0xc8] sm:$0xff]
    %v233 = vld [vmem:[#allocation7 + $0xd0] sm:$0xff]
    %v234 = vld [vmem:[#allocation7 + $0xd8] sm:$0xff]
    %v235 = vld [vmem:[#allocation7 + $0xe0] sm:$0xff]
    %v236 = vld [vmem:[#allocation7 + $0xe8] sm:$0xff]
    %v237 = vld [vmem:[#allocation7 + $0xf0] sm:$0xff]
    %v238 = vld [vmem:[#allocation7 + $0xf8] sm:$0xff]
    %v239 = vld [vmem:[#allocation7 + $0x100] sm:$0xff]
    %v240 = vld [vmem:[#allocation7 + $0x108] sm:$0xff]
    %v241 = vld [vmem:[#allocation7 + $0x110] sm:$0xff]
    %v242 = vld [vmem:[#allocation7 + $0x118] sm:$0xff]
    %v243 = vld [vmem:[#allocation7 + $0x120] sm:$0xff]
    %v244 = vld [vmem:[#allocation7 + $0x128] sm:$0xff]
    %v245 = vld [vmem:[#allocation7 + $0x130] sm:$0xff]
    %v246 = vld [vmem:[#allocation7 + $0x138] sm:$0xff]
    %v247 = vld [vmem:[#allocation7 + $0x140] sm:$0xff]
    %v248 = vld [vmem:[#allocation7 + $0x148] sm:$0xff]
    %v249 = vld [vmem:[#allocation7 + $0x150] sm:$0xff]
    %v250 = vld [vmem:[#allocation7 + $0x158] sm:$0xff]
    %v251 = vld [vmem:[#allocation7 + $0x160] sm:$0xff]
    %v252 = vld [vmem:[#allocation7 + $0x168] sm:$0xff]
    %v253 = vld [vmem:[#allocation7 + $0x170] sm:$0xff]
    %v254 = vld [vmem:[#allocation7 + $0x178] sm:$0xff]
    %v255 = vld [vmem:[#allocation7 + $0x180] sm:$0xff]
    %v256 = vld [vmem:[#allocation7 + $0x188] sm:$0xff]
    %v257 = vld [vmem:[#allocation7 + $0x190] sm:$0xff]
    %v258 = vld [vmem:[#allocation7 + $0x198] sm:$0xff]
    %v259 = vld [vmem:[#allocation7 + $0x1a0] sm:$0xff]
    %v260 = vld [vmem:[#allocation7 + $0x1a8] sm:$0xff]
    %v261 = vld [vmem:[#allocation7 + $0x1b0] sm:$0xff]
    %v262 = vld [vmem:[#allocation7 + $0x1b8] sm:$0xff]
    %v263 = vld [vmem:[#allocation7 + $0x1c0] sm:$0xff]
    %v264 = vld [vmem:[#allocation7 + $0x1c8] sm:$0xff]
    %v265 = vld [vmem:[#allocation7 + $0x1d0] sm:$0xff]
    %v266 = vld [vmem:[#allocation7 + $0x1d8] sm:$0xff]
    %v267 = vld [vmem:[#allocation7 + $0x1e0] sm:$0xff]
    %v268 = vld [vmem:[#allocation7 + $0x1e8] sm:$0xff]
    %v269 = vld [vmem:[#allocation7 + $0x1f0] sm:$0xff]
    %v270 = vld [vmem:[#allocation7 + $0x1f8] sm:$0xff]
    %v271 = vld [vmem:[#allocation9] sm:$0x3]
    %v273 = vlaneseq
    %v274 = vshrl.u32 %v273, 7
    %v275 = vsub.s32 0, %v274
    %v276 = vrot.slane %v271, %v275
    %v277 = vlaneseq
    %v278 = vshrl.u32 %v277, 7
    %v279 = vsub.s32 1, %v278
    %v280 = vrot.slane %v271, %v279
    %283 = vmatprep.subr.mxu0 %v208
    %284 = vmatpush1.msra.mxu0 %v207
    %285 = vmatprep.subr.mxu0 %v210
    %286 = vmatpush1.msra.mxu0 %v209
    %287 = vmatprep.subr.mxu0 %v212
    %288 = vmatpush1.msra.mxu0 %v211
    %289 = vmatprep.subr.mxu0 %v214
    %290 = vmatpush1.msra.mxu0 %v213
    %291 = vmatprep.subr.mxu0 %v216
    %292 = vmatpush1.msra.mxu0 %v215
    %293 = vmatprep.subr.mxu0 %v218
    %294 = vmatpush1.msra.mxu0 %v217
    %295 = vmatprep.subr.mxu0 %v220
    %296 = vmatpush1.msra.mxu0 %v219
    %297 = vmatprep.subr.mxu0 %v222
    %298 = vmatpush1.msra.mxu0 %v221
    %299 = vmatprep.subr.mxu0 %v224
    %300 = vmatpush1.msra.mxu0 %v223
    %301 = vmatprep.subr.mxu0 %v226
    %302 = vmatpush1.msra.mxu0 %v225
    %303 = vmatprep.subr.mxu0 %v228
    %304 = vmatpush1.msra.mxu0 %v227
    %305 = vmatprep.subr.mxu0 %v230
    %306 = vmatpush1.msra.mxu0 %v229
    %307 = vmatprep.subr.mxu0 %v232
    %308 = vmatpush1.msra.mxu0 %v231
    %309 = vmatprep.subr.mxu0 %v234
    %310 = vmatpush1.msra.mxu0 %v233
    %311 = vmatprep.subr.mxu0 %v236
    %312 = vmatpush1.msra.mxu0 %v235
    %313 = vmatprep.subr.mxu0 %v238
    %314 = vmatpush1.msra.mxu0 %v237
    %315 = vmatprep.subr.mxu0 %v240
    %316 = vmatpush1.msra.mxu0 %v239
    %317 = vmatprep.subr.mxu0 %v242
    %318 = vmatpush1.msra.mxu0 %v241
    %319 = vmatprep.subr.mxu0 %v244
    %320 = vmatpush1.msra.mxu0 %v243
    %321 = vmatprep.subr.mxu0 %v246
    %322 = vmatpush1.msra.mxu0 %v245
    %323 = vmatprep.subr.mxu0 %v248
    %324 = vmatpush1.msra.mxu0 %v247
    %325 = vmatprep.subr.mxu0 %v250
    %326 = vmatpush1.msra.mxu0 %v249
    %327 = vmatprep.subr.mxu0 %v252
    %328 = vmatpush1.msra.mxu0 %v251
    %329 = vmatprep.subr.mxu0 %v254
    %330 = vmatpush1.msra.mxu0 %v253
    %331 = vmatprep.subr.mxu0 %v256
    %332 = vmatpush1.msra.mxu0 %v255
    %333 = vmatprep.subr.mxu0 %v258
    %334 = vmatpush1.msra.mxu0 %v257
    %335 = vmatprep.subr.mxu0 %v260
    %336 = vmatpush1.msra.mxu0 %v259
    %337 = vmatprep.subr.mxu0 %v262
    %338 = vmatpush1.msra.mxu0 %v261
    %339 = vmatprep.subr.mxu0 %v264
    %340 = vmatpush1.msra.mxu0 %v263
    %341 = vmatprep.subr.mxu0 %v266
    %342 = vmatpush1.msra.mxu0 %v265
    %343 = vmatprep.subr.mxu0 %v268
    %344 = vmatpush1.msra.mxu0 %v267
    %345 = vmatprep.subr.mxu0 %v270
    %346 = vmatpush1.msra.mxu0 %v269
    %347 = vmatprep.mubr.f32.mxu0 %v206
    %348 = vmatmul.mubr.f32.gmra.mrb[0].mxu0 %v205
    %v349 = vpop.f32.mrb[0].mxu0
    %v350 = vadd.f32 %v276, %v349
    %v351 = vpop.f32.mrb[0].mxu0
    %v352 = vadd.f32 %v280, %v351
    %353 = vdwg.mxu0
    %v354 = vmax.f32 %v350, 0.0
    %v355 = vmax.f32 %v352, 0.0
    %v356 = vld [vmem:[#allocation10] sm:$0xff]
    %v357 = vld [vmem:[#allocation10 + $0x8] sm:$0xff]
    %v358 = vld [vmem:[#allocation10 + $0x10] sm:$0xff]
    %v359 = vld [vmem:[#allocation10 + $0x18] sm:$0xff]
    %v360 = vld [vmem:[#allocation10 + $0x20] sm:$0xff]
    %v361 = vld [vmem:[#allocation10 + $0x28] sm:$0xff]
    %v362 = vld [vmem:[#allocation10 + $0x30] sm:$0xff]
    %v363 = vld [vmem:[#allocation10 + $0x38] sm:$0xff]
    %v364 = vld [vmem:[#allocation10 + $0x40] sm:$0xff]
    %v365 = vld [vmem:[#allocation10 + $0x48] sm:$0xff]
    %v366 = vld [vmem:[#allocation10 + $0x50] sm:$0xff]
    %v367 = vld [vmem:[#allocation10 + $0x58] sm:$0xff]
    %v368 = vld [vmem:[#allocation10 + $0x60] sm:$0xff]
    %v369 = vld [vmem:[#allocation10 + $0x68] sm:$0xff]
    %v370 = vld [vmem:[#allocation10 + $0x70] sm:$0xff]
    %v371 = vld [vmem:[#allocation10 + $0x78] sm:$0xff]
    %v372 = vld [vmem:[#allocation10 + $0x80] sm:$0xff]
    %v373 = vld [vmem:[#allocation10 + $0x88] sm:$0xff]
    %v374 = vld [vmem:[#allocation10 + $0x90] sm:$0xff]
    %v375 = vld [vmem:[#allocation10 + $0x98] sm:$0xff]
    %v376 = vld [vmem:[#allocation10 + $0xa0] sm:$0xff]
    %v377 = vld [vmem:[#allocation10 + $0xa8] sm:$0xff]
    %v378 = vld [vmem:[#allocation10 + $0xb0] sm:$0xff]
    %v379 = vld [vmem:[#allocation10 + $0xb8] sm:$0xff]
    %v380 = vld [vmem:[#allocation10 + $0xc0] sm:$0xff]
    %v381 = vld [vmem:[#allocation10 + $0xc8] sm:$0xff]
    %v382 = vld [vmem:[#allocation10 + $0xd0] sm:$0xff]
    %v383 = vld [vmem:[#allocation10 + $0xd8] sm:$0xff]
    %v384 = vld [vmem:[#allocation10 + $0xe0] sm:$0xff]
    %v385 = vld [vmem:[#allocation10 + $0xe8] sm:$0xff]
    %v386 = vld [vmem:[#allocation10 + $0xf0] sm:$0xff]
    %v387 = vld [vmem:[#allocation10 + $0xf8] sm:$0xff]
    %v388 = vld [vmem:[#allocation10 + $0x100] sm:$0xff]
    %v389 = vld [vmem:[#allocation10 + $0x108] sm:$0xff]
    %v390 = vld [vmem:[#allocation10 + $0x110] sm:$0xff]
    %v391 = vld [vmem:[#allocation10 + $0x118] sm:$0xff]
    %v392 = vld [vmem:[#allocation10 + $0x120] sm:$0xff]
    %v393 = vld [vmem:[#allocation10 + $0x128] sm:$0xff]
    %v394 = vld [vmem:[#allocation10 + $0x130] sm:$0xff]
    %v395 = vld [vmem:[#allocation10 + $0x138] sm:$0xff]
    %v396 = vld [vmem:[#allocation10 + $0x140] sm:$0xff]
    %v397 = vld [vmem:[#allocation10 + $0x148] sm:$0xff]
    %v398 = vld [vmem:[#allocation10 + $0x150] sm:$0xff]
    %v399 = vld [vmem:[#allocation10 + $0x158] sm:$0xff]
    %v400 = vld [vmem:[#allocation10 + $0x160] sm:$0xff]
    %v401 = vld [vmem:[#allocation10 + $0x168] sm:$0xff]
    %v402 = vld [vmem:[#allocation10 + $0x170] sm:$0xff]
    %v403 = vld [vmem:[#allocation10 + $0x178] sm:$0xff]
    %v404 = vld [vmem:[#allocation10 + $0x180] sm:$0xff]
    %v405 = vld [vmem:[#allocation10 + $0x188] sm:$0xff]
    %v406 = vld [vmem:[#allocation10 + $0x190] sm:$0xff]
    %v407 = vld [vmem:[#allocation10 + $0x198] sm:$0xff]
    %v408 = vld [vmem:[#allocation10 + $0x1a0] sm:$0xff]
    %v409 = vld [vmem:[#allocation10 + $0x1a8] sm:$0xff]
    %v410 = vld [vmem:[#allocation10 + $0x1b0] sm:$0xff]
    %v411 = vld [vmem:[#allocation10 + $0x1b8] sm:$0xff]
    %v412 = vld [vmem:[#allocation10 + $0x1c0] sm:$0xff]
    %v413 = vld [vmem:[#allocation10 + $0x1c8] sm:$0xff]
    %v414 = vld [vmem:[#allocation10 + $0x1d0] sm:$0xff]
    %v415 = vld [vmem:[#allocation10 + $0x1d8] sm:$0xff]
    %v416 = vld [vmem:[#allocation10 + $0x1e0] sm:$0xff]
    %v417 = vld [vmem:[#allocation10 + $0x1e8] sm:$0xff]
    %v418 = vld [vmem:[#allocation10 + $0x1f0] sm:$0xff]
    %v419 = vld [vmem:[#allocation10 + $0x1f8] sm:$0xff]
    %v420 = vld [vmem:[#allocation10 + $0x200] sm:$0xff]
    %v421 = vld [vmem:[#allocation10 + $0x208] sm:$0xff]
    %v422 = vld [vmem:[#allocation10 + $0x210] sm:$0xff]
    %v423 = vld [vmem:[#allocation10 + $0x218] sm:$0xff]
    %v424 = vld [vmem:[#allocation10 + $0x220] sm:$0xff]
    %v425 = vld [vmem:[#allocation10 + $0x228] sm:$0xff]
    %v426 = vld [vmem:[#allocation10 + $0x230] sm:$0xff]
    %v427 = vld [vmem:[#allocation10 + $0x238] sm:$0xff]
    %v428 = vld [vmem:[#allocation10 + $0x240] sm:$0xff]
    %v429 = vld [vmem:[#allocation10 + $0x248] sm:$0xff]
    %v430 = vld [vmem:[#allocation10 + $0x250] sm:$0xff]
    %v431 = vld [vmem:[#allocation10 + $0x258] sm:$0xff]
    %v432 = vld [vmem:[#allocation10 + $0x260] sm:$0xff]
    %v433 = vld [vmem:[#allocation10 + $0x268] sm:$0xff]
    %v434 = vld [vmem:[#allocation10 + $0x270] sm:$0xff]
    %v435 = vld [vmem:[#allocation10 + $0x278] sm:$0xff]
    %v436 = vld [vmem:[#allocation10 + $0x280] sm:$0xff]
    %v437 = vld [vmem:[#allocation10 + $0x288] sm:$0xff]
    %v438 = vld [vmem:[#allocation10 + $0x290] sm:$0xff]
    %v439 = vld [vmem:[#allocation10 + $0x298] sm:$0xff]
    %v440 = vld [vmem:[#allocation10 + $0x2a0] sm:$0xff]
    %v441 = vld [vmem:[#allocation10 + $0x2a8] sm:$0xff]
    %v442 = vld [vmem:[#allocation10 + $0x2b0] sm:$0xff]
    %v443 = vld [vmem:[#allocation10 + $0x2b8] sm:$0xff]
    %v444 = vld [vmem:[#allocation10 + $0x2c0] sm:$0xff]
    %v445 = vld [vmem:[#allocation10 + $0x2c8] sm:$0xff]
    %v446 = vld [vmem:[#allocation10 + $0x2d0] sm:$0xff]
    %v447 = vld [vmem:[#allocation10 + $0x2d8] sm:$0xff]
    %v448 = vld [vmem:[#allocation10 + $0x2e0] sm:$0xff]
    %v449 = vld [vmem:[#allocation10 + $0x2e8] sm:$0xff]
    %v450 = vld [vmem:[#allocation10 + $0x2f0] sm:$0xff]
    %v451 = vld [vmem:[#allocation10 + $0x2f8] sm:$0xff]
    %v452 = vld [vmem:[#allocation10 + $0x300] sm:$0xff]
    %v453 = vld [vmem:[#allocation10 + $0x308] sm:$0xff]
    %v454 = vld [vmem:[#allocation10 + $0x310] sm:$0xff]
    %v455 = vld [vmem:[#allocation10 + $0x318] sm:$0xff]
    %v456 = vld [vmem:[#allocation10 + $0x320] sm:$0xff]
    %v457 = vld [vmem:[#allocation10 + $0x328] sm:$0xff]
    %v458 = vld [vmem:[#allocation10 + $0x330] sm:$0xff]
    %v459 = vld [vmem:[#allocation10 + $0x338] sm:$0xff]
    %v460 = vld [vmem:[#allocation10 + $0x340] sm:$0xff]
    %v461 = vld [vmem:[#allocation10 + $0x348] sm:$0xff]
    %v462 = vld [vmem:[#allocation10 + $0x350] sm:$0xff]
    %v463 = vld [vmem:[#allocation10 + $0x358] sm:$0xff]
    %v464 = vld [vmem:[#allocation10 + $0x360] sm:$0xff]
    %v465 = vld [vmem:[#allocation10 + $0x368] sm:$0xff]
    %v466 = vld [vmem:[#allocation10 + $0x370] sm:$0xff]
    %v467 = vld [vmem:[#allocation10 + $0x378] sm:$0xff]
    %v468 = vld [vmem:[#allocation10 + $0x380] sm:$0xff]
    %v469 = vld [vmem:[#allocation10 + $0x388] sm:$0xff]
    %v470 = vld [vmem:[#allocation10 + $0x390] sm:$0xff]
    %v471 = vld [vmem:[#allocation10 + $0x398] sm:$0xff]
    %v472 = vld [vmem:[#allocation10 + $0x3a0] sm:$0xff]
    %v473 = vld [vmem:[#allocation10 + $0x3a8] sm:$0xff]
    %v474 = vld [vmem:[#allocation10 + $0x3b0] sm:$0xff]
    %v475 = vld [vmem:[#allocation10 + $0x3b8] sm:$0xff]
    %v476 = vld [vmem:[#allocation10 + $0x3c0] sm:$0xff]
    %v477 = vld [vmem:[#allocation10 + $0x3c8] sm:$0xff]
    %v478 = vld [vmem:[#allocation10 + $0x3d0] sm:$0xff]
    %v479 = vld [vmem:[#allocation10 + $0x3d8] sm:$0xff]
    %v480 = vld [vmem:[#allocation10 + $0x3e0] sm:$0xff]
    %v481 = vld [vmem:[#allocation10 + $0x3e8] sm:$0xff]
    %v482 = vld [vmem:[#allocation10 + $0x3f0] sm:$0xff]
    %v483 = vld [vmem:[#allocation10 + $0x3f8] sm:$0xff]
    %v484 = vld [vmem:[#allocation12] sm:$0xf]
    %v486 = vlaneseq
    %v487 = vshrl.u32 %v486, 7
    %v488 = vsub.s32 0, %v487
    %v489 = vrot.slane %v484, %v488
    %v490 = vlaneseq
    %v491 = vshrl.u32 %v490, 7
    %v492 = vsub.s32 1, %v491
    %v493 = vrot.slane %v484, %v492
    %v494 = vlaneseq
    %v495 = vshrl.u32 %v494, 7
    %v496 = vsub.s32 2, %v495
    %v497 = vrot.slane %v484, %v496
    %v498 = vlaneseq
    %v499 = vshrl.u32 %v498, 7
    %v500 = vsub.s32 3, %v499
    %v501 = vrot.slane %v484, %v500
    %506 = vmatprep.subr.mxu0 %v357
    %507 = vmatpush1.msra.mxu0 %v356
    %508 = vmatprep.subr.mxu0 %v361
    %509 = vmatpush1.msra.mxu0 %v360
    %510 = vmatprep.subr.mxu0 %v365
    %511 = vmatpush1.msra.mxu0 %v364
    %512 = vmatprep.subr.mxu0 %v369
    %513 = vmatpush1.msra.mxu0 %v368
    %514 = vmatprep.subr.mxu0 %v373
    %515 = vmatpush1.msra.mxu0 %v372
    %516 = vmatprep.subr.mxu0 %v377
    %517 = vmatpush1.msra.mxu0 %v376
    %518 = vmatprep.subr.mxu0 %v381
    %519 = vmatpush1.msra.mxu0 %v380
    %520 = vmatprep.subr.mxu0 %v385
    %521 = vmatpush1.msra.mxu0 %v384
    %522 = vmatprep.subr.mxu0 %v389
    %523 = vmatpush1.msra.mxu0 %v388
    %524 = vmatprep.subr.mxu0 %v393
    %525 = vmatpush1.msra.mxu0 %v392
    %526 = vmatprep.subr.mxu0 %v397
    %527 = vmatpush1.msra.mxu0 %v396
    %528 = vmatprep.subr.mxu0 %v401
    %529 = vmatpush1.msra.mxu0 %v400
    %530 = vmatprep.subr.mxu0 %v405
    %531 = vmatpush1.msra.mxu0 %v404
    %532 = vmatprep.subr.mxu0 %v409
    %533 = vmatpush1.msra.mxu0 %v408
    %534 = vmatprep.subr.mxu0 %v413
    %535 = vmatpush1.msra.mxu0 %v412
    %536 = vmatprep.subr.mxu0 %v417
    %537 = vmatpush1.msra.mxu0 %v416
    %538 = vmatprep.subr.mxu0 %v421
    %539 = vmatpush1.msra.mxu0 %v420
    %540 = vmatprep.subr.mxu0 %v425
    %541 = vmatpush1.msra.mxu0 %v424
    %542 = vmatprep.subr.mxu0 %v429
    %543 = vmatpush1.msra.mxu0 %v428
    %544 = vmatprep.subr.mxu0 %v433
    %545 = vmatpush1.msra.mxu0 %v432
    %546 = vmatprep.subr.mxu0 %v437
    %547 = vmatpush1.msra.mxu0 %v436
    %548 = vmatprep.subr.mxu0 %v441
    %549 = vmatpush1.msra.mxu0 %v440
    %550 = vmatprep.subr.mxu0 %v445
    %551 = vmatpush1.msra.mxu0 %v444
    %552 = vmatprep.subr.mxu0 %v449
    %553 = vmatpush1.msra.mxu0 %v448
    %554 = vmatprep.subr.mxu0 %v453
    %555 = vmatpush1.msra.mxu0 %v452
    %556 = vmatprep.subr.mxu0 %v457
    %557 = vmatpush1.msra.mxu0 %v456
    %558 = vmatprep.subr.mxu0 %v461
    %559 = vmatpush1.msra.mxu0 %v460
    %560 = vmatprep.subr.mxu0 %v465
    %561 = vmatpush1.msra.mxu0 %v464
    %562 = vmatprep.subr.mxu0 %v469
    %563 = vmatpush1.msra.mxu0 %v468
    %564 = vmatprep.subr.mxu0 %v473
    %565 = vmatpush1.msra.mxu0 %v472
    %566 = vmatprep.subr.mxu0 %v477
    %567 = vmatpush1.msra.mxu0 %v476
    %568 = vmatprep.subr.mxu0 %v481
    %569 = vmatpush1.msra.mxu0 %v480
    %570 = vmatprep.mubr.f32.mxu0 %v355
    %571 = vmatmul.mubr.f32.gmra.mrb[0].mxu0 %v354
    %v572 = vpop.f32.mrb[0].mxu0
    %v573 = vadd.f32 %v489, %v572
    %v574 = vpop.f32.mrb[0].mxu0
    %v575 = vadd.f32 %v493, %v574
    %576 = vdwg.mxu0
    %577 = vmatprep.subr.mxu0 %v359
    %578 = vmatpush1.msra.mxu0 %v358
    %579 = vmatprep.subr.mxu0 %v363
    %580 = vmatpush1.msra.mxu0 %v362
    %581 = vmatprep.subr.mxu0 %v367
    %582 = vmatpush1.msra.mxu0 %v366
    %583 = vmatprep.subr.mxu0 %v371
    %584 = vmatpush1.msra.mxu0 %v370
    %585 = vmatprep.subr.mxu0 %v375
    %586 = vmatpush1.msra.mxu0 %v374
    %587 = vmatprep.subr.mxu0 %v379
    %588 = vmatpush1.msra.mxu0 %v378
    %589 = vmatprep.subr.mxu0 %v383
    %590 = vmatpush1.msra.mxu0 %v382
    %591 = vmatprep.subr.mxu0 %v387
    %592 = vmatpush1.msra.mxu0 %v386
    %593 = vmatprep.subr.mxu0 %v391
    %594 = vmatpush1.msra.mxu0 %v390
    %595 = vmatprep.subr.mxu0 %v395
    %596 = vmatpush1.msra.mxu0 %v394
    %597 = vmatprep.subr.mxu0 %v399
    %598 = vmatpush1.msra.mxu0 %v398
    %599 = vmatprep.subr.mxu0 %v403
    %600 = vmatpush1.msra.mxu0 %v402
    %601 = vmatprep.subr.mxu0 %v407
    %602 = vmatpush1.msra.mxu0 %v406
    %603 = vmatprep.subr.mxu0 %v411
    %604 = vmatpush1.msra.mxu0 %v410
    %605 = vmatprep.subr.mxu0 %v415
    %606 = vmatpush1.msra.mxu0 %v414
    %607 = vmatprep.subr.mxu0 %v419
    %608 = vmatpush1.msra.mxu0 %v418
    %609 = vmatprep.subr.mxu0 %v423
    %610 = vmatpush1.msra.mxu0 %v422
    %611 = vmatprep.subr.mxu0 %v427
    %612 = vmatpush1.msra.mxu0 %v426
    %613 = vmatprep.subr.mxu0 %v431
    %614 = vmatpush1.msra.mxu0 %v430
    %615 = vmatprep.subr.mxu0 %v435
    %616 = vmatpush1.msra.mxu0 %v434
    %617 = vmatprep.subr.mxu0 %v439
    %618 = vmatpush1.msra.mxu0 %v438
    %619 = vmatprep.subr.mxu0 %v443
    %620 = vmatpush1.msra.mxu0 %v442
    %621 = vmatprep.subr.mxu0 %v447
    %622 = vmatpush1.msra.mxu0 %v446
    %623 = vmatprep.subr.mxu0 %v451
    %624 = vmatpush1.msra.mxu0 %v450
    %625 = vmatprep.subr.mxu0 %v455
    %626 = vmatpush1.msra.mxu0 %v454
    %627 = vmatprep.subr.mxu0 %v459
    %628 = vmatpush1.msra.mxu0 %v458
    %629 = vmatprep.subr.mxu0 %v463
    %630 = vmatpush1.msra.mxu0 %v462
    %631 = vmatprep.subr.mxu0 %v467
    %632 = vmatpush1.msra.mxu0 %v466
    %633 = vmatprep.subr.mxu0 %v471
    %634 = vmatpush1.msra.mxu0 %v470
    %635 = vmatprep.subr.mxu0 %v475
    %636 = vmatpush1.msra.mxu0 %v474
    %637 = vmatprep.subr.mxu0 %v479
    %638 = vmatpush1.msra.mxu0 %v478
    %639 = vmatprep.subr.mxu0 %v483
    %640 = vmatpush1.msra.mxu0 %v482
    %641 = vmatprep.mubr.f32.mxu0 %v355
    %642 = vmatmul.mubr.f32.gmra.mrb[0].mxu0 %v354
    %v643 = vpop.f32.mrb[0].mxu0
    %v644 = vadd.f32 %v497, %v643
    %v645 = vpop.f32.mrb[0].mxu0
    %v646 = vadd.f32 %v501, %v645
    %647 = vdwg.mxu0
    %v648 = vmax.f32 %v573, 0.0
    %v649 = vmax.f32 %v575, 0.0
    %v650 = vmax.f32 %v644, 0.0
    %v651 = vmax.f32 %v646, 0.0
    %v656 = vcombine.low %v648, %v649
    %v657 = vcombine.low %v650, %v651
    %v659 = vunpack.c.l.s4 1983009808
    %v660 = vunpack.c.0.s8 %v659
    %v661 = vlaneseq
    %v662 = vshrl.u32 %v661, 7
    %v663 = vsub.s32 %v660, %v662
    %v664 = vrot.slane %v656, %v663
    %v666 = vunpack.c.l.s4 1983009808
    %v667 = vunpack.c.0.s8 %v666
    %v668 = vlaneseq
    %v669 = vshrl.u32 %v668, 7
    %v670 = vsub.s32 %v667, %v669
    %v671 = vrot.slane %v657, %v670
    %v672 = vcombine.low %v664, %v671
    %674 = vst [vmem:[%s7] sm:$0xff] %v672
    // Predicated region
    $region58: #{conv_decoder_forward.5} parent=1 // pred_check
      _
    $region59: #{conv_decoder_forward.5} parent=1 // pred_check_branch
      %676 = sbr.rel (0) target = $region61
    $region60: #{conv_decoder_forward.5} parent=1 // pred_region
      _
    $region61: #{conv_decoder_forward.5} parent=1 // pred_fallthru
      _
    // Predicated region
    $region62: #{conv_decoder_forward.5} parent=1 // pred_check
      _
    $region63: #{conv_decoder_forward.5} parent=1 // pred_check_branch
      %678 = sbr.rel (0) target = $region65
    $region64: #{conv_decoder_forward.5} parent=1 // pred_region
      _
    $region65: #{conv_decoder_forward.5} parent=1 // pred_fallthru
      _
    %679 = vsyncpa [#allocation3], 1
    %680 = vsyncpa [#allocation5], 1
    %681 = vsyncpa [#allocation8], 1
    %682 = vsyncpa [#allocation11], 1

// kernel: conv_decoder_forward.7
$region0: #{conv_decoder_forward.7}
  #allocation0 [shape = 'u32[]', space=smem, size = 0x4, offset = 0x4, fixed_abs, tag = 'smem constant byte address 0x4 - core index']
  #allocation1 [shape = 'u32[144,128]{1,0:T(1,128)}', space=vmem, size = 0x12000, scoped, tag = 'internal scratch']
  %s0 = inlined_call_operand.vmem [shape: bf16[128,288], index: 0, kind: input, shape index: {}]
  %s1 = inlined_call_operand.hbm [shape: bf16[288,128], index: 1, kind: input, shape index: {}]
  %s2 = inlined_call_operand.hbm [shape: f32[1,128], index: 2, kind: input, shape index: {}]
  %s3 = inlined_call_operand.vmem [shape: bf16[128,128], index: 3, kind: output, shape index: {}]
  %s4 = sld [smem:[#allocation0]]
  $region30: #{conv_decoder_forward.7} parent=0
    _
  %s6 = ssub.s32 1, %s4
  %s7 = scalar_select 0, %s6, %s4
  $region1: #{conv_decoder_forward.7} parent=0
    #allocation2 [shape = 'u8[73728]{0}', space=vmem, size = 0x12000, scoped, tag = 'input window, operand 1, single buffered']
    #allocation3 [shape = 's32[1]{0}', space=sflag, size = 0x4, scoped, tag = 'scoped memory for conv_decoder_forward.7']
    #allocation4 [shape = 'u8[512]{0}', space=vmem, size = 0x400, scoped, tag = 'input window, operand 2, single buffered']
    #allocation5 [shape = 's32[1]{0}', space=sflag, size = 0x4, scoped, tag = 'scoped memory for conv_decoder_forward.7']
    %8 = vsyncpa [#allocation3], 0
    %9 = vsyncpa [#allocation5], 0
    // Predicated region
    $region2: #{conv_decoder_forward.7} parent=1 // pred_check
      _
    $region3: #{conv_decoder_forward.7} parent=1 // pred_check_branch
      %11 = sbr.rel (0) target = $region5
    $region4: #{conv_decoder_forward.7} parent=1 // pred_region
      _
    $region5: #{conv_decoder_forward.7} parent=1 // pred_fallthru
      _
    // Predicated region
    $region6: #{conv_decoder_forward.7} parent=1 // pred_check
      _
    $region7: #{conv_decoder_forward.7} parent=1 // pred_check_branch
      %13 = sbr.rel (0) target = $region9
    $region8: #{conv_decoder_forward.7} parent=1 // pred_region
      %s15 = ssub.s32 2304, 2304
      %16 = vsyncadd [#allocation3], %s15
      %s17 = sshll.u32 [#allocation2], 4
      %s18 = int_to_ptr.vmem [resolvable:$true] %s17
      %23 = dma.hbm_to_vmem [thread:$0]  %s1, 2304, %s18, [#allocation3], 64, 64, 4
    $region9: #{conv_decoder_forward.7} parent=1 // pred_fallthru
      _
    // Predicated region
    $region10: #{conv_decoder_forward.7} parent=1 // pred_check
      _
    $region11: #{conv_decoder_forward.7} parent=1 // pred_check_branch
      %25 = sbr.rel (0) target = $region13
    $region12: #{conv_decoder_forward.7} parent=1 // pred_region
      %s27 = ssub.s32 16, 16
      %28 = vsyncadd [#allocation5], %s27
      %s30 = sshll.u32 [#allocation4], 4
      %s31 = int_to_ptr.vmem [resolvable:$true] %s30
      %33 = dma.hbm_to_vmem [thread:$0]  %s2, 16, %s31, [#allocation5]
    $region13: #{conv_decoder_forward.7} parent=1 // pred_fallthru
      _
    // Predicated region
    $region14: #{conv_decoder_forward.7} parent=1 // pred_check
      _
    $region15: #{conv_decoder_forward.7} parent=1 // pred_check_branch
      %35 = sbr.rel (0) target = $region17
    $region16: #{conv_decoder_forward.7} parent=1 // pred_region
      %36 = dma.done [#allocation3], 2304
    $region17: #{conv_decoder_forward.7} parent=1 // pred_fallthru
      _
    // Predicated region
    $region18: #{conv_decoder_forward.7} parent=1 // pred_check
      _
    $region19: #{conv_decoder_forward.7} parent=1 // pred_check_branch
      %38 = sbr.rel (0) target = $region21
    $region20: #{conv_decoder_forward.7} parent=1 // pred_region
      %39 = dma.done [#allocation5], 16
    $region21: #{conv_decoder_forward.7} parent=1 // pred_fallthru
      _
    %v41 = vld [vmem:[%s0] sm:$0xff]
    %v42 = vld [vmem:[%s0 + $0x8] sm:$0xf]
    %v43 = vld [vmem:[%s0 + $0xc] sm:$0xff]
    %v44 = vld [vmem:[%s0 + $0x14] sm:$0xf]
    %v45 = vld [vmem:[%s0 + $0x18] sm:$0xff]
    %v46 = vld [vmem:[%s0 + $0x20] sm:$0xf]
    %v47 = vld [vmem:[%s0 + $0x24] sm:$0xff]
    %v48 = vld [vmem:[%s0 + $0x2c] sm:$0xf]
    %v49 = vld [vmem:[%s0 + $0x30] sm:$0xff]
    %v50 = vld [vmem:[%s0 + $0x38] sm:$0xf]
    %v51 = vld [vmem:[%s0 + $0x3c] sm:$0xff]
    %v52 = vld [vmem:[%s0 + $0x44] sm:$0xf]
    %v53 = vld [vmem:[%s0 + $0x48] sm:$0xff]
    %v54 = vld [vmem:[%s0 + $0x50] sm:$0xf]
    %v55 = vld [vmem:[%s0 + $0x54] sm:$0xff]
    %v56 = vld [vmem:[%s0 + $0x5c] sm:$0xf]
    %v57 = vld [vmem:[%s0 + $0x60] sm:$0xff]
    %v58 = vld [vmem:[%s0 + $0x68] sm:$0xf]
    %v59 = vld [vmem:[%s0 + $0x6c] sm:$0xff]
    %v60 = vld [vmem:[%s0 + $0x74] sm:$0xf]
    %v61 = vld [vmem:[%s0 + $0x78] sm:$0xff]
    %v62 = vld [vmem:[%s0 + $0x80] sm:$0xf]
    %v63 = vld [vmem:[%s0 + $0x84] sm:$0xff]
    %v64 = vld [vmem:[%s0 + $0x8c] sm:$0xf]
    %v65 = vld [vmem:[%s0 + $0x90] sm:$0xff]
    %v66 = vld [vmem:[%s0 + $0x98] sm:$0xf]
    %v67 = vld [vmem:[%s0 + $0x9c] sm:$0xff]
    %v68 = vld [vmem:[%s0 + $0xa4] sm:$0xf]
    %v69 = vld [vmem:[%s0 + $0xa8] sm:$0xff]
    %v70 = vld [vmem:[%s0 + $0xb0] sm:$0xf]
    %v71 = vld [vmem:[%s0 + $0xb4] sm:$0xff]
    %v72 = vld [vmem:[%s0 + $0xbc] sm:$0xf]
    %v73 = vld [vmem:[#allocation2] sm:$0xf]
    %v74 = vld [vmem:[#allocation2 + $0x4] sm:$0xf]
    %v75 = vld [vmem:[#allocation2 + $0x8] sm:$0xf]
    %v76 = vld [vmem:[#allocation2 + $0xc] sm:$0xf]
    %v77 = vld [vmem:[#allocation2 + $0x10] sm:$0xf]
    %v78 = vld [vmem:[#allocation2 + $0x14] sm:$0xf]
    %v79 = vld [vmem:[#allocation2 + $0x18] sm:$0xf]
    %v80 = vld [vmem:[#allocation2 + $0x1c] sm:$0xf]
    %v81 = vld [vmem:[#allocation2 + $0x20] sm:$0xf]
    %v82 = vld [vmem:[#allocation2 + $0x24] sm:$0xf]
    %v83 = vld [vmem:[#allocation2 + $0x28] sm:$0xf]
    %v84 = vld [vmem:[#allocation2 + $0x2c] sm:$0xf]
    %v85 = vld [vmem:[#allocation2 + $0x30] sm:$0xf]
    %v86 = vld [vmem:[#allocation2 + $0x34] sm:$0xf]
    %v87 = vld [vmem:[#allocation2 + $0x38] sm:$0xf]
    %v88 = vld [vmem:[#allocation2 + $0x3c] sm:$0xf]
    %v89 = vld [vmem:[#allocation2 + $0x40] sm:$0xf]
    %v90 = vld [vmem:[#allocation2 + $0x44] sm:$0xf]
    %v91 = vld [vmem:[#allocation2 + $0x48] sm:$0xf]
    %v92 = vld [vmem:[#allocation2 + $0x4c] sm:$0xf]
    %v93 = vld [vmem:[#allocation2 + $0x50] sm:$0xf]
    %v94 = vld [vmem:[#allocation2 + $0x54] sm:$0xf]
    %v95 = vld [vmem:[#allocation2 + $0x58] sm:$0xf]
    %v96 = vld [vmem:[#allocation2 + $0x5c] sm:$0xf]
    %v97 = vld [vmem:[#allocation2 + $0x60] sm:$0xf]
    %v98 = vld [vmem:[#allocation2 + $0x64] sm:$0xf]
    %v99 = vld [vmem:[#allocation2 + $0x68] sm:$0xf]
    %v100 = vld [vmem:[#allocation2 + $0x6c] sm:$0xf]
    %v101 = vld [vmem:[#allocation2 + $0x70] sm:$0xf]
    %v102 = vld [vmem:[#allocation2 + $0x74] sm:$0xf]
    %v103 = vld [vmem:[#allocation2 + $0x78] sm:$0xf]
    %v104 = vld [vmem:[#allocation2 + $0x7c] sm:$0xf]
    %v105 = vld [vmem:[#allocation2 + $0x80] sm:$0xf]
    %v106 = vld [vmem:[#allocation2 + $0x84] sm:$0xf]
    %v107 = vld [vmem:[#allocation2 + $0x88] sm:$0xf]
    %v108 = vld [vmem:[#allocation2 + $0x8c] sm:$0xf]
    %v109 = vld [vmem:[#allocation4] sm:$0x1]
    %v111 = vlaneseq
    %v112 = vshrl.u32 %v111, 7
    %v113 = vsub.s32 0, %v112
    %v114 = vrot.slane %v109, %v113
    %v148 = vunpack.c.l.b16 %v41
    %v149 = vunpack.c.h.b16 %v41
    %v150 = vunpack.c.l.b16 %v42
    %v151 = vunpack.c.l.b16 %v43
    %v152 = vunpack.c.h.b16 %v43
    %v153 = vunpack.c.l.b16 %v44
    %v154 = vunpack.c.l.b16 %v45
    %v155 = vunpack.c.h.b16 %v45
    %v156 = vunpack.c.l.b16 %v46
    %v157 = vunpack.c.l.b16 %v47
    %v158 = vunpack.c.h.b16 %v47
    %v159 = vunpack.c.l.b16 %v48
    %v160 = vunpack.c.l.b16 %v49
    %v161 = vunpack.c.h.b16 %v49
    %v162 = vunpack.c.l.b16 %v50
    %v163 = vunpack.c.l.b16 %v51
    %v164 = vunpack.c.h.b16 %v51
    %v165 = vunpack.c.l.b16 %v52
    %v166 = vunpack.c.l.b16 %v53
    %v167 = vunpack.c.h.b16 %v53
    %v168 = vunpack.c.l.b16 %v54
    %v169 = vunpack.c.l.b16 %v55
    %v170 = vunpack.c.h.b16 %v55
    %v171 = vunpack.c.l.b16 %v56
    %v172 = vunpack.c.l.b16 %v57
    %v173 = vunpack.c.h.b16 %v57
    %v174 = vunpack.c.l.b16 %v58
    %v175 = vunpack.c.l.b16 %v59
    %v176 = vunpack.c.h.b16 %v59
    %v177 = vunpack.c.l.b16 %v60
    %v178 = vunpack.c.l.b16 %v61
    %v179 = vunpack.c.h.b16 %v61
    %v180 = vunpack.c.l.b16 %v62
    %v181 = vunpack.c.l.b16 %v63
    %v182 = vunpack.c.h.b16 %v63
    %v183 = vunpack.c.l.b16 %v64
    %v184 = vunpack.c.l.b16 %v65
    %v185 = vunpack.c.h.b16 %v65
    %v186 = vunpack.c.l.b16 %v66
    %v187 = vunpack.c.l.b16 %v67
    %v188 = vunpack.c.h.b16 %v67
    %v189 = vunpack.c.l.b16 %v68
    %v190 = vunpack.c.l.b16 %v69
    %v191 = vunpack.c.h.b16 %v69
    %v192 = vunpack.c.l.b16 %v70
    %v193 = vunpack.c.l.b16 %v71
    %v194 = vunpack.c.h.b16 %v71
    %v195 = vunpack.c.l.b16 %v72
    %v196 = vpack.c.b16 %v151, %v148
    %v197 = vpack.c.b16 %v152, %v149
    %v198 = vpack.c.b16 %v153, %v150
    %v199 = vpack.c.b16 %v157, %v154
    %v200 = vpack.c.b16 %v158, %v155
    %v201 = vpack.c.b16 %v159, %v156
    %v202 = vpack.c.b16 %v163, %v160
    %v203 = vpack.c.b16 %v164, %v161
    %v204 = vpack.c.b16 %v165, %v162
    %v205 = vpack.c.b16 %v169, %v166
    %v206 = vpack.c.b16 %v170, %v167
    %v207 = vpack.c.b16 %v171, %v168
    %v208 = vpack.c.b16 %v175, %v172
    %v209 = vpack.c.b16 %v176, %v173
    %v210 = vpack.c.b16 %v177, %v174
    %v211 = vpack.c.b16 %v181, %v178
    %v212 = vpack.c.b16 %v182, %v179
    %v213 = vpack.c.b16 %v183, %v180
    %v214 = vpack.c.b16 %v187, %v184
    %v215 = vpack.c.b16 %v188, %v185
    %v216 = vpack.c.b16 %v189, %v186
    %v217 = vpack.c.b16 %v193, %v190
    %v218 = vpack.c.b16 %v194, %v191
    %v219 = vpack.c.b16 %v195, %v192
    %v272 = vunpack.c.l.b16 %v73
    %v273 = vunpack.c.l.b16 %v74
    %v274 = vunpack.c.l.b16 %v75
    %v275 = vunpack.c.l.b16 %v76
    %v276 = vunpack.c.l.b16 %v77
    %v277 = vunpack.c.l.b16 %v78
    %v278 = vunpack.c.l.b16 %v79
    %v279 = vunpack.c.l.b16 %v80
    %v280 = vunpack.c.l.b16 %v81
    %v281 = vunpack.c.l.b16 %v82
    %v282 = vunpack.c.l.b16 %v83
    %v283 = vunpack.c.l.b16 %v84
    %v284 = vunpack.c.l.b16 %v85
    %v285 = vunpack.c.l.b16 %v86
    %v286 = vunpack.c.l.b16 %v87
    %v287 = vunpack.c.l.b16 %v88
    %v288 = vunpack.c.l.b16 %v89
    %v289 = vunpack.c.l.b16 %v90
    %v290 = vunpack.c.l.b16 %v91
    %v291 = vunpack.c.l.b16 %v92
    %v292 = vunpack.c.l.b16 %v93
    %v293 = vunpack.c.l.b16 %v94
    %v294 = vunpack.c.l.b16 %v95
    %v295 = vunpack.c.l.b16 %v96
    %v296 = vunpack.c.l.b16 %v97
    %v297 = vunpack.c.l.b16 %v98
    %v298 = vunpack.c.l.b16 %v99
    %v299 = vunpack.c.l.b16 %v100
    %v300 = vunpack.c.l.b16 %v101
    %v301 = vunpack.c.l.b16 %v102
    %v302 = vunpack.c.l.b16 %v103
    %v303 = vunpack.c.l.b16 %v104
    %v304 = vunpack.c.l.b16 %v105
    %v305 = vunpack.c.l.b16 %v106
    %v306 = vunpack.c.l.b16 %v107
    %v307 = vunpack.c.l.b16 %v108
    %v308 = vpack.c.b16 %v273, %v272
    %v309 = vpack.c.b16 %v275, %v274
    %v310 = vpack.c.b16 %v277, %v276
    %v311 = vpack.c.b16 %v279, %v278
    %v312 = vpack.c.b16 %v281, %v280
    %v313 = vpack.c.b16 %v283, %v282
    %v314 = vpack.c.b16 %v285, %v284
    %v315 = vpack.c.b16 %v287, %v286
    %v316 = vpack.c.b16 %v289, %v288
    %v317 = vpack.c.b16 %v291, %v290
    %v318 = vpack.c.b16 %v293, %v292
    %v319 = vpack.c.b16 %v295, %v294
    %v320 = vpack.c.b16 %v297, %v296
    %v321 = vpack.c.b16 %v299, %v298
    %v322 = vpack.c.b16 %v301, %v300
    %v323 = vpack.c.b16 %v303, %v302
    %v324 = vpack.c.b16 %v305, %v304
    %v325 = vpack.c.b16 %v307, %v306
    %vm344 = vcmask 261120
    %v346 = vsel %vm344, %v198, 0
    %v349 = vsel %vm344, %v201, 0
    %v352 = vsel %vm344, %v204, 0
    %v355 = vsel %vm344, %v207, 0
    %v358 = vsel %vm344, %v210, 0
    %v361 = vsel %vm344, %v213, 0
    %v364 = vsel %vm344, %v216, 0
    %v367 = vsel %vm344, %v219, 0
    %369 = vmatprep.subr.bf16.mxu0 0
    %370 = vmatpush1.bf16.msra.mxu0 %v308
    %371 = vmatprep.subr.bf16.mxu0 0
    %372 = vmatpush1.bf16.msra.mxu0 %v309
    %373 = vmatprep.subr.bf16.mxu0 0
    %374 = vmatpush1.bf16.msra.mxu0 %v310
    %375 = vmatprep.subr.bf16.mxu0 0
    %376 = vmatpush1.bf16.msra.mxu0 %v311
    %377 = vmatprep.subr.bf16.mxu0 0
    %378 = vmatpush1.bf16.msra.mxu0 %v312
    %379 = vmatprep.subr.bf16.mxu0 0
    %380 = vmatpush1.bf16.msra.mxu0 %v313
    %381 = vmatprep.subr.bf16.mxu0 0
    %382 = vmatpush1.bf16.msra.mxu0 %v314
    %383 = vmatprep.subr.bf16.mxu0 0
    %384 = vmatpush1.bf16.msra.mxu0 %v315
    %385 = vmatprep.subr.bf16.mxu0 0
    %386 = vmatpush1.bf16.msra.mxu0 %v316
    %387 = vmatprep.subr.bf16.mxu0 0
    %388 = vmatpush1.bf16.msra.mxu0 %v317
    %389 = vmatprep.subr.bf16.mxu0 0
    %390 = vmatpush1.bf16.msra.mxu0 %v318
    %391 = vmatprep.subr.bf16.mxu0 0
    %392 = vmatpush1.bf16.msra.mxu0 %v319
    %393 = vmatprep.subr.bf16.mxu0 0
    %394 = vmatpush1.bf16.msra.mxu0 %v320
    %395 = vmatprep.subr.bf16.mxu0 0
    %396 = vmatpush1.bf16.msra.mxu0 %v321
    %397 = vmatprep.subr.bf16.mxu0 0
    %398 = vmatpush1.bf16.msra.mxu0 %v322
    %399 = vmatprep.subr.bf16.mxu0 0
    %400 = vmatpush1.bf16.msra.mxu0 %v323
    %401 = vmatprep.mubr.bf16.mxu0 %v197
    %402 = vmatmul.mubr.bf16.gmra.mrb[0].mxu0 %v196
    %v403 = vpop.f32.mrb[0].mxu0
    %v404 = vadd.f32 %v114, %v403
    %v405 = vpop.f32.mrb[0].mxu0
    %v406 = vpop.f32.mrb[0].mxu0
    %v407 = vadd.f32 %v114, %v406
    %v408 = vpop.f32.mrb[0].mxu0
    %409 = vmatprep.mubr.bf16.mxu0 %v200
    %410 = vmatmul.mubr.bf16.gmra.mrb[0].mxu0 %v199
    %v411 = vpop.f32.mrb[0].mxu0
    %v412 = vadd.f32 %v114, %v411
    %v413 = vpop.f32.mrb[0].mxu0
    %v414 = vpop.f32.mrb[0].mxu0
    %v415 = vadd.f32 %v114, %v414
    %v416 = vpop.f32.mrb[0].mxu0
    %417 = vmatprep.mubr.bf16.mxu0 %v203
    %418 = vmatmul.mubr.bf16.gmra.mrb[0].mxu0 %v202
    %v419 = vpop.f32.mrb[0].mxu0
    %v420 = vadd.f32 %v114, %v419
    %v421 = vpop.f32.mrb[0].mxu0
    %v422 = vpop.f32.mrb[0].mxu0
    %v423 = vadd.f32 %v114, %v422
    %v424 = vpop.f32.mrb[0].mxu0
    %425 = vmatprep.mubr.bf16.mxu0 %v206
    %426 = vmatmul.mubr.bf16.gmra.mrb[0].mxu0 %v205
    %v427 = vpop.f32.mrb[0].mxu0
    %v428 = vadd.f32 %v114, %v427
    %v429 = vpop.f32.mrb[0].mxu0
    %v430 = vpop.f32.mrb[0].mxu0
    %v431 = vadd.f32 %v114, %v430
    %v432 = vpop.f32.mrb[0].mxu0
    %433 = vmatprep.mubr.bf16.mxu0 %v209
    %434 = vmatmul.mubr.bf16.gmra.mrb[0].mxu0 %v208
    %v435 = vpop.f32.mrb[0].mxu0
    %v436 = vadd.f32 %v114, %v435
    %v437 = vpop.f32.mrb[0].mxu0
    %v438 = vpop.f32.mrb[0].mxu0
    %v439 = vadd.f32 %v114, %v438
    %v440 = vpop.f32.mrb[0].mxu0
    %441 = vmatprep.mubr.bf16.mxu0 %v212
    %442 = vmatmul.mubr.bf16.gmra.mrb[0].mxu0 %v211
    %v443 = vpop.f32.mrb[0].mxu0
    %v444 = vadd.f32 %v114, %v443
    %v445 = vpop.f32.mrb[0].mxu0
    %v446 = vpop.f32.mrb[0].mxu0
    %v447 = vadd.f32 %v114, %v446
    %v448 = vpop.f32.mrb[0].mxu0
    %449 = vmatprep.mubr.bf16.mxu0 %v215
    %450 = vmatmul.mubr.bf16.gmra.mrb[0].mxu0 %v214
    %v451 = vpop.f32.mrb[0].mxu0
    %v452 = vadd.f32 %v114, %v451
    %v453 = vpop.f32.mrb[0].mxu0
    %v454 = vpop.f32.mrb[0].mxu0
    %v455 = vadd.f32 %v114, %v454
    %v456 = vpop.f32.mrb[0].mxu0
    %457 = vmatprep.mubr.bf16.mxu0 %v218
    %458 = vmatmul.mubr.bf16.gmra.mrb[0].mxu0 %v217
    %v459 = vpop.f32.mrb[0].mxu0
    %v460 = vadd.f32 %v114, %v459
    %v461 = vpop.f32.mrb[0].mxu0
    %v462 = vpop.f32.mrb[0].mxu0
    %v463 = vadd.f32 %v114, %v462
    %v464 = vpop.f32.mrb[0].mxu0
    %465 = vdwg.mxu0
    %466 = vmatprep.subr.bf16.mxu0 0
    %467 = vmatpush1.bf16.msra.mxu0 %v324
    %468 = vmatprep.subr.bf16.mxu0 0
    %469 = vmatpush1.bf16.msra.mxu0 %v325
    %470 = vmatprep.subr.bf16.mxu0 0
    %471 = vmatpush1.bf16.msra.mxu0 0
    %472 = vmatprep.subr.bf16.mxu0 0
    %473 = vmatpush1.bf16.msra.mxu0 0
    %474 = vmatprep.subr.bf16.mxu0 0
    %475 = vmatpush1.bf16.msra.mxu0 0
    %476 = vmatprep.subr.bf16.mxu0 0
    %477 = vmatpush1.bf16.msra.mxu0 0
    %478 = vmatprep.subr.bf16.mxu0 0
    %479 = vmatpush1.bf16.msra.mxu0 0
    %480 = vmatprep.subr.bf16.mxu0 0
    %481 = vmatpush1.bf16.msra.mxu0 0
    %482 = vmatprep.subr.bf16.mxu0 0
    %483 = vmatpush1.bf16.msra.mxu0 0
    %484 = vmatprep.subr.bf16.mxu0 0
    %485 = vmatpush1.bf16.msra.mxu0 0
    %486 = vmatprep.subr.bf16.mxu0 0
    %487 = vmatpush1.bf16.msra.mxu0 0
    %488 = vmatprep.subr.bf16.mxu0 0
    %489 = vmatpush1.bf16.msra.mxu0 0
    %490 = vmatprep.subr.bf16.mxu0 0
    %491 = vmatpush1.bf16.msra.mxu0 0
    %492 = vmatprep.subr.bf16.mxu0 0
    %493 = vmatpush1.bf16.msra.mxu0 0
    %494 = vmatprep.subr.bf16.mxu0 0
    %495 = vmatpush1.bf16.msra.mxu0 0
    %496 = vmatprep.subr.bf16.mxu0 0
    %497 = vmatpush1.bf16.msra.mxu0 0
    %498 = vmatprep.mubr.bf16.mxu0 0
    %499 = vmatmul.mubr.bf16.gmra.mrb[0].mxu0 %v346
    %v500 = vpop.f32.mrb[0].mxu0
    %v501 = vadd.f32 %v404, %v500
    %v502 = vpop.f32.mrb[0].mxu0
    %v503 = vpop.f32.mrb[0].mxu0
    %v504 = vadd.f32 %v407, %v503
    %v505 = vpop.f32.mrb[0].mxu0
    %506 = vmatprep.mubr.bf16.mxu0 0
    %507 = vmatmul.mubr.bf16.gmra.mrb[0].mxu0 %v349
    %v508 = vpop.f32.mrb[0].mxu0
    %v509 = vadd.f32 %v412, %v508
    %v510 = vpop.f32.mrb[0].mxu0
    %v511 = vpop.f32.mrb[0].mxu0
    %v512 = vadd.f32 %v415, %v511
    %v513 = vpop.f32.mrb[0].mxu0
    %514 = vmatprep.mubr.bf16.mxu0 0
    %515 = vmatmul.mubr.bf16.gmra.mrb[0].mxu0 %v352
    %v516 = vpop.f32.mrb[0].mxu0
    %v517 = vadd.f32 %v420, %v516
    %v518 = vpop.f32.mrb[0].mxu0
    %v519 = vpop.f32.mrb[0].mxu0
    %v520 = vadd.f32 %v423, %v519
    %v521 = vpop.f32.mrb[0].mxu0
    %522 = vmatprep.mubr.bf16.mxu0 0
    %523 = vmatmul.mubr.bf16.gmra.mrb[0].mxu0 %v355
    %v524 = vpop.f32.mrb[0].mxu0
    %v525 = vadd.f32 %v428, %v524
    %v526 = vpop.f32.mrb[0].mxu0
    %v527 = vpop.f32.mrb[0].mxu0
    %v528 = vadd.f32 %v431, %v527
    %v529 = vpop.f32.mrb[0].mxu0
    %530 = vmatprep.mubr.bf16.mxu0 0
    %531 = vmatmul.mubr.bf16.gmra.mrb[0].mxu0 %v358
    %v532 = vpop.f32.mrb[0].mxu0
    %v533 = vadd.f32 %v436, %v532
    %v534 = vpop.f32.mrb[0].mxu0
    %v535 = vpop.f32.mrb[0].mxu0
    %v536 = vadd.f32 %v439, %v535
    %v537 = vpop.f32.mrb[0].mxu0
    %538 = vmatprep.mubr.bf16.mxu0 0
    %539 = vmatmul.mubr.bf16.gmra.mrb[0].mxu0 %v361
    %v540 = vpop.f32.mrb[0].mxu0
    %v541 = vadd.f32 %v444, %v540
    %v542 = vpop.f32.mrb[0].mxu0
    %v543 = vpop.f32.mrb[0].mxu0
    %v544 = vadd.f32 %v447, %v543
    %v545 = vpop.f32.mrb[0].mxu0
    %546 = vmatprep.mubr.bf16.mxu0 0
    %547 = vmatmul.mubr.bf16.gmra.mrb[0].mxu0 %v364
    %v548 = vpop.f32.mrb[0].mxu0
    %v549 = vadd.f32 %v452, %v548
    %v550 = vpop.f32.mrb[0].mxu0
    %v551 = vpop.f32.mrb[0].mxu0
    %v552 = vadd.f32 %v455, %v551
    %v553 = vpop.f32.mrb[0].mxu0
    %554 = vmatprep.mubr.bf16.mxu0 0
    %555 = vmatmul.mubr.bf16.gmra.mrb[0].mxu0 %v367
    %v556 = vpop.f32.mrb[0].mxu0
    %v557 = vadd.f32 %v460, %v556
    %v558 = vpop.f32.mrb[0].mxu0
    %v559 = vpop.f32.mrb[0].mxu0
    %v560 = vadd.f32 %v463, %v559
    %v561 = vpop.f32.mrb[0].mxu0
    %562 = vdwg.mxu0
    %v563 = vmax.f32 %v501, 0.0
    %v564 = vmax.f32 %v504, 0.0
    %v565 = vmax.f32 %v509, 0.0
    %v566 = vmax.f32 %v512, 0.0
    %v567 = vmax.f32 %v517, 0.0
    %v568 = vmax.f32 %v520, 0.0
    %v569 = vmax.f32 %v525, 0.0
    %v570 = vmax.f32 %v528, 0.0
    %v571 = vmax.f32 %v533, 0.0
    %v572 = vmax.f32 %v536, 0.0
    %v573 = vmax.f32 %v541, 0.0
    %v574 = vmax.f32 %v544, 0.0
    %v575 = vmax.f32 %v549, 0.0
    %v576 = vmax.f32 %v552, 0.0
    %v577 = vmax.f32 %v557, 0.0
    %v578 = vmax.f32 %v560, 0.0
    %v579 = vpack.c.bf16 %v564, %v563
    %v580 = vpack.c.bf16 %v566, %v565
    %v581 = vpack.c.bf16 %v568, %v567
    %v582 = vpack.c.bf16 %v570, %v569
    %v583 = vpack.c.bf16 %v572, %v571
    %v584 = vpack.c.bf16 %v574, %v573
    %v585 = vpack.c.bf16 %v576, %v575
    %v586 = vpack.c.bf16 %v578, %v577
    %v595 = vunpack.c.l.b16 %v579
    %v596 = vunpack.c.h.b16 %v579
    %v597 = vunpack.c.l.b16 %v580
    %v598 = vunpack.c.h.b16 %v580
    %v599 = vunpack.c.l.b16 %v581
    %v600 = vunpack.c.h.b16 %v581
    %v601 = vunpack.c.l.b16 %v582
    %v602 = vunpack.c.h.b16 %v582
    %v603 = vunpack.c.l.b16 %v583
    %v604 = vunpack.c.h.b16 %v583
    %v605 = vunpack.c.l.b16 %v584
    %v606 = vunpack.c.h.b16 %v584
    %v607 = vunpack.c.l.b16 %v585
    %v608 = vunpack.c.h.b16 %v585
    %v609 = vunpack.c.l.b16 %v586
    %v610 = vunpack.c.h.b16 %v586
    %v611 = vpack.c.b16 %v595, %v595
    %v612 = vpack.c.b16 %v596, %v596
    %v613 = vpack.c.b16 %v597, %v597
    %v614 = vpack.c.b16 %v598, %v598
    %v615 = vpack.c.b16 %v599, %v599
    %v616 = vpack.c.b16 %v600, %v600
    %v617 = vpack.c.b16 %v601, %v601
    %v618 = vpack.c.b16 %v602, %v602
    %v619 = vpack.c.b16 %v603, %v603
    %v620 = vpack.c.b16 %v604, %v604
    %v621 = vpack.c.b16 %v605, %v605
    %v622 = vpack.c.b16 %v606, %v606
    %v623 = vpack.c.b16 %v607, %v607
    %v624 = vpack.c.b16 %v608, %v608
    %v625 = vpack.c.b16 %v609, %v609
    %v626 = vpack.c.b16 %v610, %v610
    %643 = vst [vmem:[%s3] sm:$0xf] %v611
    %644 = vst [vmem:[%s3 + $0x4] sm:$0xf] %v612
    %645 = vst [vmem:[%s3 + $0x8] sm:$0xf] %v613
    %646 = vst [vmem:[%s3 + $0xc] sm:$0xf] %v614
    %647 = vst [vmem:[%s3 + $0x10] sm:$0xf] %v615
    %648 = vst [vmem:[%s3 + $0x14] sm:$0xf] %v616
    %649 = vst [vmem:[%s3 + $0x18] sm:$0xf] %v617
    %650 = vst [vmem:[%s3 + $0x1c] sm:$0xf] %v618
    %651 = vst [vmem:[%s3 + $0x20] sm:$0xf] %v619
    %652 = vst [vmem:[%s3 + $0x24] sm:$0xf] %v620
    %653 = vst [vmem:[%s3 + $0x28] sm:$0xf] %v621
    %654 = vst [vmem:[%s3 + $0x2c] sm:$0xf] %v622
    %655 = vst [vmem:[%s3 + $0x30] sm:$0xf] %v623
    %656 = vst [vmem:[%s3 + $0x34] sm:$0xf] %v624
    %657 = vst [vmem:[%s3 + $0x38] sm:$0xf] %v625
    %658 = vst [vmem:[%s3 + $0x3c] sm:$0xf] %v626
    // Predicated region
    $region22: #{conv_decoder_forward.7} parent=1 // pred_check
      _
    $region23: #{conv_decoder_forward.7} parent=1 // pred_check_branch
      %660 = sbr.rel (0) target = $region25
    $region24: #{conv_decoder_forward.7} parent=1 // pred_region
      _
    $region25: #{conv_decoder_forward.7} parent=1 // pred_fallthru
      _
    // Predicated region
    $region26: #{conv_decoder_forward.7} parent=1 // pred_check
      _
    $region27: #{conv_decoder_forward.7} parent=1 // pred_check_branch
      %662 = sbr.rel (0) target = $region29
    $region28: #{conv_decoder_forward.7} parent=1 // pred_region
      _
    $region29: #{conv_decoder_forward.7} parent=1 // pred_fallthru
      _
    %663 = vsyncpa [#allocation3], 1
    %664 = vsyncpa [#allocation5], 1

// kernel: conv_decoder_forward.8
$region0: #{conv_decoder_forward.8}
  #allocation0 [shape = 'u32[]', space=smem, size = 0x4, offset = 0x4, fixed_abs, tag = 'smem constant byte address 0x4 - core index']
  #allocation1 [shape = 'u32[144,128]{1,0:T(1,128)}', space=vmem, size = 0x12000, scoped, tag = 'internal scratch']
  %s0 = inlined_call_operand.vmem [shape: bf16[512,288], index: 0, kind: input, shape index: {}]
  %s1 = inlined_call_operand.hbm [shape: bf16[288,128], index: 1, kind: input, shape index: {}]
  %s2 = inlined_call_operand.hbm [shape: f32[1,128], index: 2, kind: input, shape index: {}]
  %s3 = inlined_call_operand.vmem [shape: bf16[512,128], index: 3, kind: output, shape index: {}]
  %s4 = sld [smem:[#allocation0]]
  $region30: #{conv_decoder_forward.8} parent=0
    _
  %s6 = ssub.s32 1, %s4
  %s7 = scalar_select 0, %s6, %s4
  $region1: #{conv_decoder_forward.8} parent=0
    #allocation2 [shape = 'u8[73728]{0}', space=vmem, size = 0x12000, scoped, tag = 'input window, operand 1, single buffered']
    #allocation3 [shape = 's32[1]{0}', space=sflag, size = 0x4, scoped, tag = 'scoped memory for conv_decoder_forward.8']
    #allocation4 [shape = 'u8[512]{0}', space=vmem, size = 0x400, scoped, tag = 'input window, operand 2, single buffered']
    #allocation5 [shape = 's32[1]{0}', space=sflag, size = 0x4, scoped, tag = 'scoped memory for conv_decoder_forward.8']
    %8 = vsyncpa [#allocation3], 0
    %9 = vsyncpa [#allocation5], 0
    // Predicated region
    $region2: #{conv_decoder_forward.8} parent=1 // pred_check
      _
    $region3: #{conv_decoder_forward.8} parent=1 // pred_check_branch
      %11 = sbr.rel (0) target = $region5
    $region4: #{conv_decoder_forward.8} parent=1 // pred_region
      _
    $region5: #{conv_decoder_forward.8} parent=1 // pred_fallthru
      _
    // Predicated region
    $region6: #{conv_decoder_forward.8} parent=1 // pred_check
      _
    $region7: #{conv_decoder_forward.8} parent=1 // pred_check_branch
      %13 = sbr.rel (0) target = $region9
    $region8: #{conv_decoder_forward.8} parent=1 // pred_region
      %s15 = ssub.s32 2304, 2304
      %16 = vsyncadd [#allocation3], %s15
      %s17 = sshll.u32 [#allocation2], 4
      %s18 = int_to_ptr.vmem [resolvable:$true] %s17
      %23 = dma.hbm_to_vmem [thread:$0]  %s1, 2304, %s18, [#allocation3], 64, 64, 4
    $region9: #{conv_decoder_forward.8} parent=1 // pred_fallthru
      _
    // Predicated region
    $region10: #{conv_decoder_forward.8} parent=1 // pred_check
      _
    $region11: #{conv_decoder_forward.8} parent=1 // pred_check_branch
      %25 = sbr.rel (0) target = $region13
    $region12: #{conv_decoder_forward.8} parent=1 // pred_region
      %s27 = ssub.s32 16, 16
      %28 = vsyncadd [#allocation5], %s27
      %s30 = sshll.u32 [#allocation4], 4
      %s31 = int_to_ptr.vmem [resolvable:$true] %s30
      %33 = dma.hbm_to_vmem [thread:$0]  %s2, 16, %s31, [#allocation5]
    $region13: #{conv_decoder_forward.8} parent=1 // pred_fallthru
      _
    // Predicated region
    $region14: #{conv_decoder_forward.8} parent=1 // pred_check
      _
    $region15: #{conv_decoder_forward.8} parent=1 // pred_check_branch
      %35 = sbr.rel (0) target = $region17
    $region16: #{conv_decoder_forward.8} parent=1 // pred_region
      %36 = dma.done [#allocation3], 2304
    $region17: #{conv_decoder_forward.8} parent=1 // pred_fallthru
      _
    // Predicated region
    $region18: #{conv_decoder_forward.8} parent=1 // pred_check
      _
    $region19: #{conv_decoder_forward.8} parent=1 // pred_check_branch
      %38 = sbr.rel (0) target = $region21
    $region20: #{conv_decoder_forward.8} parent=1 // pred_region
      %39 = dma.done [#allocation5], 16
    $region21: #{conv_decoder_forward.8} parent=1 // pred_fallthru
      _
    %v41 = vld [vmem:[%s0] sm:$0xff]
    %v42 = vld [vmem:[%s0 + $0x8] sm:$0xf]
    %v43 = vld [vmem:[%s0 + $0xc] sm:$0xff]
    %v44 = vld [vmem:[%s0 + $0x14] sm:$0xf]
    %v45 = vld [vmem:[%s0 + $0x18] sm:$0xff]
    %v46 = vld [vmem:[%s0 + $0x20] sm:$0xf]
    %v47 = vld [vmem:[%s0 + $0x24] sm:$0xff]
    %v48 = vld [vmem:[%s0 + $0x2c] sm:$0xf]
    %v49 = vld [vmem:[%s0 + $0x30] sm:$0xff]
    %v50 = vld [vmem:[%s0 + $0x38] sm:$0xf]
    %v51 = vld [vmem:[%s0 + $0x3c] sm:$0xff]
    %v52 = vld [vmem:[%s0 + $0x44] sm:$0xf]
    %v53 = vld [vmem:[%s0 + $0x48] sm:$0xff]
    %v54 = vld [vmem:[%s0 + $0x50] sm:$0xf]
    %v55 = vld [vmem:[%s0 + $0x54] sm:$0xff]
    %v56 = vld [vmem:[%s0 + $0x5c] sm:$0xf]
    %v57 = vld [vmem:[%s0 + $0x60] sm:$0xff]
    %v58 = vld [vmem:[%s0 + $0x68] sm:$0xf]
    %v59 = vld [vmem:[%s0 + $0x6c] sm:$0xff]
    %v60 = vld [vmem:[%s0 + $0x74] sm:$0xf]
    %v61 = vld [vmem:[%s0 + $0x78] sm:$0xff]
    %v62 = vld [vmem:[%s0 + $0x80] sm:$0xf]
    %v63 = vld [vmem:[%s0 + $0x84] sm:$0xff]
    %v64 = vld [vmem:[%s0 + $0x8c] sm:$0xf]
    %v65 = vld [vmem:[%s0 + $0x90] sm:$0xff]
    %v66 = vld [vmem:[%s0 + $0x98] sm:$0xf]
    %v67 = vld [vmem:[%s0 + $0x9c] sm:$0xff]
    %v68 = vld [vmem:[%s0 + $0xa4] sm:$0xf]
    %v69 = vld [vmem:[%s0 + $0xa8] sm:$0xff]
    %v70 = vld [vmem:[%s0 + $0xb0] sm:$0xf]
    %v71 = vld [vmem:[%s0 + $0xb4] sm:$0xff]
    %v72 = vld [vmem:[%s0 + $0xbc] sm:$0xf]
    %v73 = vld [vmem:[%s0 + $0xc0] sm:$0xff]
    %v74 = vld [vmem:[%s0 + $0xc8] sm:$0xf]
    %v75 = vld [vmem:[%s0 + $0xcc] sm:$0xff]
    %v76 = vld [vmem:[%s0 + $0xd4] sm:$0xf]
    %v77 = vld [vmem:[%s0 + $0xd8] sm:$0xff]
    %v78 = vld [vmem:[%s0 + $0xe0] sm:$0xf]
    %v79 = vld [vmem:[%s0 + $0xe4] sm:$0xff]
    %v80 = vld [vmem:[%s0 + $0xec] sm:$0xf]
    %v81 = vld [vmem:[%s0 + $0xf0] sm:$0xff]
    %v82 = vld [vmem:[%s0 + $0xf8] sm:$0xf]
    %v83 = vld [vmem:[%s0 + $0xfc] sm:$0xff]
    %v84 = vld [vmem:[%s0 + $0x104] sm:$0xf]
    %v85 = vld [vmem:[%s0 + $0x108] sm:$0xff]
    %v86 = vld [vmem:[%s0 + $0x110] sm:$0xf]
    %v87 = vld [vmem:[%s0 + $0x114] sm:$0xff]
    %v88 = vld [vmem:[%s0 + $0x11c] sm:$0xf]
    %v89 = vld [vmem:[%s0 + $0x120] sm:$0xff]
    %v90 = vld [vmem:[%s0 + $0x128] sm:$0xf]
    %v91 = vld [vmem:[%s0 + $0x12c] sm:$0xff]
    %v92 = vld [vmem:[%s0 + $0x134] sm:$0xf]
    %v93 = vld [vmem:[%s0 + $0x138] sm:$0xff]
    %v94 = vld [vmem:[%s0 + $0x140] sm:$0xf]
    %v95 = vld [vmem:[%s0 + $0x144] sm:$0xff]
    %v96 = vld [vmem:[%s0 + $0x14c] sm:$0xf]
    %v97 = vld [vmem:[%s0 + $0x150] sm:$0xff]
    %v98 = vld [vmem:[%s0 + $0x158] sm:$0xf]
    %v99 = vld [vmem:[%s0 + $0x15c] sm:$0xff]
    %v100 = vld [vmem:[%s0 + $0x164] sm:$0xf]
    %v101 = vld [vmem:[%s0 + $0x168] sm:$0xff]
    %v102 = vld [vmem:[%s0 + $0x170] sm:$0xf]
    %v103 = vld [vmem:[%s0 + $0x174] sm:$0xff]
    %v104 = vld [vmem:[%s0 + $0x17c] sm:$0xf]
    %v105 = vld [vmem:[%s0 + $0x180] sm:$0xff]
    %v106 = vld [vmem:[%s0 + $0x188] sm:$0xf]
    %v107 = vld [vmem:[%s0 + $0x18c] sm:$0xff]
    %v108 = vld [vmem:[%s0 + $0x194] sm:$0xf]
    %v109 = vld [vmem:[%s0 + $0x198] sm:$0xff]
    %v110 = vld [vmem:[%s0 + $0x1a0] sm:$0xf]
    %v111 = vld [vmem:[%s0 + $0x1a4] sm:$0xff]
    %v112 = vld [vmem:[%s0 + $0x1ac] sm:$0xf]
    %v113 = vld [vmem:[%s0 + $0x1b0] sm:$0xff]
    %v114 = vld [vmem:[%s0 + $0x1b8] sm:$0xf]
    %v115 = vld [vmem:[%s0 + $0x1bc] sm:$0xff]
    %v116 = vld [vmem:[%s0 + $0x1c4] sm:$0xf]
    %v117 = vld [vmem:[%s0 + $0x1c8] sm:$0xff]
    %v118 = vld [vmem:[%s0 + $0x1d0] sm:$0xf]
    %v119 = vld [vmem:[%s0 + $0x1d4] sm:$0xff]
    %v120 = vld [vmem:[%s0 + $0x1dc] sm:$0xf]
    %v121 = vld [vmem:[%s0 + $0x1e0] sm:$0xff]
    %v122 = vld [vmem:[%s0 + $0x1e8] sm:$0xf]
    %v123 = vld [vmem:[%s0 + $0x1ec] sm:$0xff]
    %v124 = vld [vmem:[%s0 + $0x1f4] sm:$0xf]
    %v125 = vld [vmem:[%s0 + $0x1f8] sm:$0xff]
    %v126 = vld [vmem:[%s0 + $0x200] sm:$0xf]
    %v127 = vld [vmem:[%s0 + $0x204] sm:$0xff]
    %v128 = vld [vmem:[%s0 + $0x20c] sm:$0xf]
    %v129 = vld [vmem:[%s0 + $0x210] sm:$0xff]
    %v130 = vld [vmem:[%s0 + $0x218] sm:$0xf]
    %v131 = vld [vmem:[%s0 + $0x21c] sm:$0xff]
    %v132 = vld [vmem:[%s0 + $0x224] sm:$0xf]
    %v133 = vld [vmem:[%s0 + $0x228] sm:$0xff]
    %v134 = vld [vmem:[%s0 + $0x230] sm:$0xf]
    %v135 = vld [vmem:[%s0 + $0x234] sm:$0xff]
    %v136 = vld [vmem:[%s0 + $0x23c] sm:$0xf]
    %v137 = vld [vmem:[%s0 + $0x240] sm:$0xff]
    %v138 = vld [vmem:[%s0 + $0x248] sm:$0xf]
    %v139 = vld [vmem:[%s0 + $0x24c] sm:$0xff]
    %v140 = vld [vmem:[%s0 + $0x254] sm:$0xf]
    %v141 = vld [vmem:[%s0 + $0x258] sm:$0xff]
    %v142 = vld [vmem:[%s0 + $0x260] sm:$0xf]
    %v143 = vld [vmem:[%s0 + $0x264] sm:$0xff]
    %v144 = vld [vmem:[%s0 + $0x26c] sm:$0xf]
    %v145 = vld [vmem:[%s0 + $0x270] sm:$0xff]
    %v146 = vld [vmem:[%s0 + $0x278] sm:$0xf]
    %v147 = vld [vmem:[%s0 + $0x27c] sm:$0xff]
    %v148 = vld [vmem:[%s0 + $0x284] sm:$0xf]
    %v149 = vld [vmem:[%s0 + $0x288] sm:$0xff]
    %v150 = vld [vmem:[%s0 + $0x290] sm:$0xf]
    %v151 = vld [vmem:[%s0 + $0x294] sm:$0xff]
    %v152 = vld [vmem:[%s0 + $0x29c] sm:$0xf]
    %v153 = vld [vmem:[%s0 + $0x2a0] sm:$0xff]
    %v154 = vld [vmem:[%s0 + $0x2a8] sm:$0xf]
    %v155 = vld [vmem:[%s0 + $0x2ac] sm:$0xff]
    %v156 = vld [vmem:[%s0 + $0x2b4] sm:$0xf]
    %v157 = vld [vmem:[%s0 + $0x2b8] sm:$0xff]
    %v158 = vld [vmem:[%s0 + $0x2c0] sm:$0xf]
    %v159 = vld [vmem:[%s0 + $0x2c4] sm:$0xff]
    %v160 = vld [vmem:[%s0 + $0x2cc] sm:$0xf]
    %v161 = vld [vmem:[%s0 + $0x2d0] sm:$0xff]
    %v162 = vld [vmem:[%s0 + $0x2d8] sm:$0xf]
    %v163 = vld [vmem:[%s0 + $0x2dc] sm:$0xff]
    %v164 = vld [vmem:[%s0 + $0x2e4] sm:$0xf]
    %v165 = vld [vmem:[%s0 + $0x2e8] sm:$0xff]
    %v166 = vld [vmem:[%s0 + $0x2f0] sm:$0xf]
    %v167 = vld [vmem:[%s0 + $0x2f4] sm:$0xff]
    %v168 = vld [vmem:[%s0 + $0x2fc] sm:$0xf]
    %v169 = vld [vmem:[#allocation2] sm:$0xf]
    %v170 = vld [vmem:[#allocation2 + $0x4] sm:$0xf]
    %v171 = vld [vmem:[#allocation2 + $0x8] sm:$0xf]
    %v172 = vld [vmem:[#allocation2 + $0xc] sm:$0xf]
    %v173 = vld [vmem:[#allocation2 + $0x10] sm:$0xf]
    %v174 = vld [vmem:[#allocation2 + $0x14] sm:$0xf]
    %v175 = vld [vmem:[#allocation2 + $0x18] sm:$0xf]
    %v176 = vld [vmem:[#allocation2 + $0x1c] sm:$0xf]
    %v177 = vld [vmem:[#allocation2 + $0x20] sm:$0xf]
    %v178 = vld [vmem:[#allocation2 + $0x24] sm:$0xf]
    %v179 = vld [vmem:[#allocation2 + $0x28] sm:$0xf]
    %v180 = vld [vmem:[#allocation2 + $0x2c] sm:$0xf]
    %v181 = vld [vmem:[#allocation2 + $0x30] sm:$0xf]
    %v182 = vld [vmem:[#allocation2 + $0x34] sm:$0xf]
    %v183 = vld [vmem:[#allocation2 + $0x38] sm:$0xf]
    %v184 = vld [vmem:[#allocation2 + $0x3c] sm:$0xf]
    %v185 = vld [vmem:[#allocation2 + $0x40] sm:$0xf]
    %v186 = vld [vmem:[#allocation2 + $0x44] sm:$0xf]
    %v187 = vld [vmem:[#allocation2 + $0x48] sm:$0xf]
    %v188 = vld [vmem:[#allocation2 + $0x4c] sm:$0xf]
    %v189 = vld [vmem:[#allocation2 + $0x50] sm:$0xf]
    %v190 = vld [vmem:[#allocation2 + $0x54] sm:$0xf]
    %v191 = vld [vmem:[#allocation2 + $0x58] sm:$0xf]
    %v192 = vld [vmem:[#allocation2 + $0x5c] sm:$0xf]
    %v193 = vld [vmem:[#allocation2 + $0x60] sm:$0xf]
    %v194 = vld [vmem:[#allocation2 + $0x64] sm:$0xf]
    %v195 = vld [vmem:[#allocation2 + $0x68] sm:$0xf]
    %v196 = vld [vmem:[#allocation2 + $0x6c] sm:$0xf]
    %v197 = vld [vmem:[#allocation2 + $0x70] sm:$0xf]
    %v198 = vld [vmem:[#allocation2 + $0x74] sm:$0xf]
    %v199 = vld [vmem:[#allocation2 + $0x78] sm:$0xf]
    %v200 = vld [vmem:[#allocation2 + $0x7c] sm:$0xf]
    %v201 = vld [vmem:[#allocation2 + $0x80] sm:$0xf]
    %v202 = vld [vmem:[#allocation2 + $0x84] sm:$0xf]
    %v203 = vld [vmem:[#allocation2 + $0x88] sm:$0xf]
    %v204 = vld [vmem:[#allocation2 + $0x8c] sm:$0xf]
    %v205 = vld [vmem:[#allocation4] sm:$0x1]
    %v207 = vlaneseq
    %v208 = vshrl.u32 %v207, 7
    %v209 = vsub.s32 0, %v208
    %v210 = vrot.slane %v205, %v209
    %v340 = vunpack.c.l.b16 %v41
    %v341 = vunpack.c.h.b16 %v41
    %v342 = vunpack.c.l.b16 %v42
    %v343 = vunpack.c.l.b16 %v43
    %v344 = vunpack.c.h.b16 %v43
    %v345 = vunpack.c.l.b16 %v44
    %v346 = vunpack.c.l.b16 %v45
    %v347 = vunpack.c.h.b16 %v45
    %v348 = vunpack.c.l.b16 %v46
    %v349 = vunpack.c.l.b16 %v47
    %v350 = vunpack.c.h.b16 %v47
    %v351 = vunpack.c.l.b16 %v48
    %v352 = vunpack.c.l.b16 %v49
    %v353 = vunpack.c.h.b16 %v49
    %v354 = vunpack.c.l.b16 %v50
    %v355 = vunpack.c.l.b16 %v51
    %v356 = vunpack.c.h.b16 %v51
    %v357 = vunpack.c.l.b16 %v52
    %v358 = vunpack.c.l.b16 %v53
    %v359 = vunpack.c.h.b16 %v53
    %v360 = vunpack.c.l.b16 %v54
    %v361 = vunpack.c.l.b16 %v55
    %v362 = vunpack.c.h.b16 %v55
    %v363 = vunpack.c.l.b16 %v56
    %v364 = vunpack.c.l.b16 %v57
    %v365 = vunpack.c.h.b16 %v57
    %v366 = vunpack.c.l.b16 %v58
    %v367 = vunpack.c.l.b16 %v59
    %v368 = vunpack.c.h.b16 %v59
    %v369 = vunpack.c.l.b16 %v60
    %v370 = vunpack.c.l.b16 %v61
    %v371 = vunpack.c.h.b16 %v61
    %v372 = vunpack.c.l.b16 %v62
    %v373 = vunpack.c.l.b16 %v63
    %v374 = vunpack.c.h.b16 %v63
    %v375 = vunpack.c.l.b16 %v64
    %v376 = vunpack.c.l.b16 %v65
    %v377 = vunpack.c.h.b16 %v65
    %v378 = vunpack.c.l.b16 %v66
    %v379 = vunpack.c.l.b16 %v67
    %v380 = vunpack.c.h.b16 %v67
    %v381 = vunpack.c.l.b16 %v68
    %v382 = vunpack.c.l.b16 %v69
    %v383 = vunpack.c.h.b16 %v69
    %v384 = vunpack.c.l.b16 %v70
    %v385 = vunpack.c.l.b16 %v71
    %v386 = vunpack.c.h.b16 %v71
    %v387 = vunpack.c.l.b16 %v72
    %v388 = vunpack.c.l.b16 %v73
    %v389 = vunpack.c.h.b16 %v73
    %v390 = vunpack.c.l.b16 %v74
    %v391 = vunpack.c.l.b16 %v75
    %v392 = vunpack.c.h.b16 %v75
    %v393 = vunpack.c.l.b16 %v76
    %v394 = vunpack.c.l.b16 %v77
    %v395 = vunpack.c.h.b16 %v77
    %v396 = vunpack.c.l.b16 %v78
    %v397 = vunpack.c.l.b16 %v79
    %v398 = vunpack.c.h.b16 %v79
    %v399 = vunpack.c.l.b16 %v80
    %v400 = vunpack.c.l.b16 %v81
    %v401 = vunpack.c.h.b16 %v81
    %v402 = vunpack.c.l.b16 %v82
    %v403 = vunpack.c.l.b16 %v83
    %v404 = vunpack.c.h.b16 %v83
    %v405 = vunpack.c.l.b16 %v84
    %v406 = vunpack.c.l.b16 %v85
    %v407 = vunpack.c.h.b16 %v85
    %v408 = vunpack.c.l.b16 %v86
    %v409 = vunpack.c.l.b16 %v87
    %v410 = vunpack.c.h.b16 %v87
    %v411 = vunpack.c.l.b16 %v88
    %v412 = vunpack.c.l.b16 %v89
    %v413 = vunpack.c.h.b16 %v89
    %v414 = vunpack.c.l.b16 %v90
    %v415 = vunpack.c.l.b16 %v91
    %v416 = vunpack.c.h.b16 %v91
    %v417 = vunpack.c.l.b16 %v92
    %v418 = vunpack.c.l.b16 %v93
    %v419 = vunpack.c.h.b16 %v93
    %v420 = vunpack.c.l.b16 %v94
    %v421 = vunpack.c.l.b16 %v95
    %v422 = vunpack.c.h.b16 %v95
    %v423 = vunpack.c.l.b16 %v96
    %v424 = vunpack.c.l.b16 %v97
    %v425 = vunpack.c.h.b16 %v97
    %v426 = vunpack.c.l.b16 %v98
    %v427 = vunpack.c.l.b16 %v99
    %v428 = vunpack.c.h.b16 %v99
    %v429 = vunpack.c.l.b16 %v100
    %v430 = vunpack.c.l.b16 %v101
    %v431 = vunpack.c.h.b16 %v101
    %v432 = vunpack.c.l.b16 %v102
    %v433 = vunpack.c.l.b16 %v103
    %v434 = vunpack.c.h.b16 %v103
    %v435 = vunpack.c.l.b16 %v104
    %v436 = vunpack.c.l.b16 %v105
    %v437 = vunpack.c.h.b16 %v105
    %v438 = vunpack.c.l.b16 %v106
    %v439 = vunpack.c.l.b16 %v107
    %v440 = vunpack.c.h.b16 %v107
    %v441 = vunpack.c.l.b16 %v108
    %v442 = vunpack.c.l.b16 %v109
    %v443 = vunpack.c.h.b16 %v109
    %v444 = vunpack.c.l.b16 %v110
    %v445 = vunpack.c.l.b16 %v111
    %v446 = vunpack.c.h.b16 %v111
    %v447 = vunpack.c.l.b16 %v112
    %v448 = vunpack.c.l.b16 %v113
    %v449 = vunpack.c.h.b16 %v113
    %v450 = vunpack.c.l.b16 %v114
    %v451 = vunpack.c.l.b16 %v115
    %v452 = vunpack.c.h.b16 %v115
    %v453 = vunpack.c.l.b16 %v116
    %v454 = vunpack.c.l.b16 %v117
    %v455 = vunpack.c.h.b16 %v117
    %v456 = vunpack.c.l.b16 %v118
    %v457 = vunpack.c.l.b16 %v119
    %v458 = vunpack.c.h.b16 %v119
    %v459 = vunpack.c.l.b16 %v120
    %v460 = vunpack.c.l.b16 %v121
    %v461 = vunpack.c.h.b16 %v121
    %v462 = vunpack.c.l.b16 %v122
    %v463 = vunpack.c.l.b16 %v123
    %v464 = vunpack.c.h.b16 %v123
    %v465 = vunpack.c.l.b16 %v124
    %v466 = vunpack.c.l.b16 %v125
    %v467 = vunpack.c.h.b16 %v125
    %v468 = vunpack.c.l.b16 %v126
    %v469 = vunpack.c.l.b16 %v127
    %v470 = vunpack.c.h.b16 %v127
    %v471 = vunpack.c.l.b16 %v128
    %v472 = vunpack.c.l.b16 %v129
    %v473 = vunpack.c.h.b16 %v129
    %v474 = vunpack.c.l.b16 %v130
    %v475 = vunpack.c.l.b16 %v131
    %v476 = vunpack.c.h.b16 %v131
    %v477 = vunpack.c.l.b16 %v132
    %v478 = vunpack.c.l.b16 %v133
    %v479 = vunpack.c.h.b16 %v133
    %v480 = vunpack.c.l.b16 %v134
    %v481 = vunpack.c.l.b16 %v135
    %v482 = vunpack.c.h.b16 %v135
    %v483 = vunpack.c.l.b16 %v136
    %v484 = vunpack.c.l.b16 %v137
    %v485 = vunpack.c.h.b16 %v137
    %v486 = vunpack.c.l.b16 %v138
    %v487 = vunpack.c.l.b16 %v139
    %v488 = vunpack.c.h.b16 %v139
    %v489 = vunpack.c.l.b16 %v140
    %v490 = vunpack.c.l.b16 %v141
    %v491 = vunpack.c.h.b16 %v141
    %v492 = vunpack.c.l.b16 %v142
    %v493 = vunpack.c.l.b16 %v143
    %v494 = vunpack.c.h.b16 %v143
    %v495 = vunpack.c.l.b16 %v144
    %v496 = vunpack.c.l.b16 %v145
    %v497 = vunpack.c.h.b16 %v145
    %v498 = vunpack.c.l.b16 %v146
    %v499 = vunpack.c.l.b16 %v147
    %v500 = vunpack.c.h.b16 %v147
    %v501 = vunpack.c.l.b16 %v148
    %v502 = vunpack.c.l.b16 %v149
    %v503 = vunpack.c.h.b16 %v149
    %v504 = vunpack.c.l.b16 %v150
    %v505 = vunpack.c.l.b16 %v151
    %v506 = vunpack.c.h.b16 %v151
    %v507 = vunpack.c.l.b16 %v152
    %v508 = vunpack.c.l.b16 %v153
    %v509 = vunpack.c.h.b16 %v153
    %v510 = vunpack.c.l.b16 %v154
    %v511 = vunpack.c.l.b16 %v155
    %v512 = vunpack.c.h.b16 %v155
    %v513 = vunpack.c.l.b16 %v156
    %v514 = vunpack.c.l.b16 %v157
    %v515 = vunpack.c.h.b16 %v157
    %v516 = vunpack.c.l.b16 %v158
    %v517 = vunpack.c.l.b16 %v159
    %v518 = vunpack.c.h.b16 %v159
    %v519 = vunpack.c.l.b16 %v160
    %v520 = vunpack.c.l.b16 %v161
    %v521 = vunpack.c.h.b16 %v161
    %v522 = vunpack.c.l.b16 %v162
    %v523 = vunpack.c.l.b16 %v163
    %v524 = vunpack.c.h.b16 %v163
    %v525 = vunpack.c.l.b16 %v164
    %v526 = vunpack.c.l.b16 %v165
    %v527 = vunpack.c.h.b16 %v165
    %v528 = vunpack.c.l.b16 %v166
    %v529 = vunpack.c.l.b16 %v167
    %v530 = vunpack.c.h.b16 %v167
    %v531 = vunpack.c.l.b16 %v168
    %v532 = vpack.c.b16 %v343, %v340
    %v533 = vpack.c.b16 %v344, %v341
    %v534 = vpack.c.b16 %v345, %v342
    %v535 = vpack.c.b16 %v349, %v346
    %v536 = vpack.c.b16 %v350, %v347
    %v537 = vpack.c.b16 %v351, %v348
    %v538 = vpack.c.b16 %v355, %v352
    %v539 = vpack.c.b16 %v356, %v353
    %v540 = vpack.c.b16 %v357, %v354
    %v541 = vpack.c.b16 %v361, %v358
    %v542 = vpack.c.b16 %v362, %v359
    %v543 = vpack.c.b16 %v363, %v360
    %v544 = vpack.c.b16 %v367, %v364
    %v545 = vpack.c.b16 %v368, %v365
    %v546 = vpack.c.b16 %v369, %v366
    %v547 = vpack.c.b16 %v373, %v370
    %v548 = vpack.c.b16 %v374, %v371
    %v549 = vpack.c.b16 %v375, %v372
    %v550 = vpack.c.b16 %v379, %v376
    %v551 = vpack.c.b16 %v380, %v377
    %v552 = vpack.c.b16 %v381, %v378
    %v553 = vpack.c.b16 %v385, %v382
    %v554 = vpack.c.b16 %v386, %v383
    %v555 = vpack.c.b16 %v387, %v384
    %v556 = vpack.c.b16 %v391, %v388
    %v557 = vpack.c.b16 %v392, %v389
    %v558 = vpack.c.b16 %v393, %v390
    %v559 = vpack.c.b16 %v397, %v394
    %v560 = vpack.c.b16 %v398, %v395
    %v561 = vpack.c.b16 %v399, %v396
    %v562 = vpack.c.b16 %v403, %v400
    %v563 = vpack.c.b16 %v404, %v401
    %v564 = vpack.c.b16 %v405, %v402
    %v565 = vpack.c.b16 %v409, %v406
    %v566 = vpack.c.b16 %v410, %v407
    %v567 = vpack.c.b16 %v411, %v408
    %v568 = vpack.c.b16 %v415, %v412
    %v569 = vpack.c.b16 %v416, %v413
    %v570 = vpack.c.b16 %v417, %v414
    %v571 = vpack.c.b16 %v421, %v418
    %v572 = vpack.c.b16 %v422, %v419
    %v573 = vpack.c.b16 %v423, %v420
    %v574 = vpack.c.b16 %v427, %v424
    %v575 = vpack.c.b16 %v428, %v425
    %v576 = vpack.c.b16 %v429, %v426
    %v577 = vpack.c.b16 %v433, %v430
    %v578 = vpack.c.b16 %v434, %v431
    %v579 = vpack.c.b16 %v435, %v432
    %v580 = vpack.c.b16 %v439, %v436
    %v581 = vpack.c.b16 %v440, %v437
    %v582 = vpack.c.b16 %v441, %v438
    %v583 = vpack.c.b16 %v445, %v442
    %v584 = vpack.c.b16 %v446, %v443
    %v585 = vpack.c.b16 %v447, %v444
    %v586 = vpack.c.b16 %v451, %v448
    %v587 = vpack.c.b16 %v452, %v449
    %v588 = vpack.c.b16 %v453, %v450
    %v589 = vpack.c.b16 %v457, %v454
    %v590 = vpack.c.b16 %v458, %v455
    %v591 = vpack.c.b16 %v459, %v456
    %v592 = vpack.c.b16 %v463, %v460
    %v593 = vpack.c.b16 %v464, %v461
    %v594 = vpack.c.b16 %v465, %v462
    %v595 = vpack.c.b16 %v469, %v466
    %v596 = vpack.c.b16 %v470, %v467
    %v597 = vpack.c.b16 %v471, %v468
    %v598 = vpack.c.b16 %v475, %v472
    %v599 = vpack.c.b16 %v476, %v473
    %v600 = vpack.c.b16 %v477, %v474
    %v601 = vpack.c.b16 %v481, %v478
    %v602 = vpack.c.b16 %v482, %v479
    %v603 = vpack.c.b16 %v483, %v480
    %v604 = vpack.c.b16 %v487, %v484
    %v605 = vpack.c.b16 %v488, %v485
    %v606 = vpack.c.b16 %v489, %v486
    %v607 = vpack.c.b16 %v493, %v490
    %v608 = vpack.c.b16 %v494, %v491
    %v609 = vpack.c.b16 %v495, %v492
    %v610 = vpack.c.b16 %v499, %v496
    %v611 = vpack.c.b16 %v500, %v497
    %v612 = vpack.c.b16 %v501, %v498
    %v613 = vpack.c.b16 %v505, %v502
    %v614 = vpack.c.b16 %v506, %v503
    %v615 = vpack.c.b16 %v507, %v504
    %v616 = vpack.c.b16 %v511, %v508
    %v617 = vpack.c.b16 %v512, %v509
    %v618 = vpack.c.b16 %v513, %v510
    %v619 = vpack.c.b16 %v517, %v514
    %v620 = vpack.c.b16 %v518, %v515
    %v621 = vpack.c.b16 %v519, %v516
    %v622 = vpack.c.b16 %v523, %v520
    %v623 = vpack.c.b16 %v524, %v521
    %v624 = vpack.c.b16 %v525, %v522
    %v625 = vpack.c.b16 %v529, %v526
    %v626 = vpack.c.b16 %v530, %v527
    %v627 = vpack.c.b16 %v531, %v528
    %v728 = vunpack.c.l.b16 %v169
    %v729 = vunpack.c.l.b16 %v170
    %v730 = vunpack.c.l.b16 %v171
    %v731 = vunpack.c.l.b16 %v172
    %v732 = vunpack.c.l.b16 %v173
    %v733 = vunpack.c.l.b16 %v174
    %v734 = vunpack.c.l.b16 %v175
    %v735 = vunpack.c.l.b16 %v176
    %v736 = vunpack.c.l.b16 %v177
    %v737 = vunpack.c.l.b16 %v178
    %v738 = vunpack.c.l.b16 %v179
    %v739 = vunpack.c.l.b16 %v180
    %v740 = vunpack.c.l.b16 %v181
    %v741 = vunpack.c.l.b16 %v182
    %v742 = vunpack.c.l.b16 %v183
    %v743 = vunpack.c.l.b16 %v184
    %v744 = vunpack.c.l.b16 %v185
    %v745 = vunpack.c.l.b16 %v186
    %v746 = vunpack.c.l.b16 %v187
    %v747 = vunpack.c.l.b16 %v188
    %v748 = vunpack.c.l.b16 %v189
    %v749 = vunpack.c.l.b16 %v190
    %v750 = vunpack.c.l.b16 %v191
    %v751 = vunpack.c.l.b16 %v192
    %v752 = vunpack.c.l.b16 %v193
    %v753 = vunpack.c.l.b16 %v194
    %v754 = vunpack.c.l.b16 %v195
    %v755 = vunpack.c.l.b16 %v196
    %v756 = vunpack.c.l.b16 %v197
    %v757 = vunpack.c.l.b16 %v198
    %v758 = vunpack.c.l.b16 %v199
    %v759 = vunpack.c.l.b16 %v200
    %v760 = vunpack.c.l.b16 %v201
    %v761 = vunpack.c.l.b16 %v202
    %v762 = vunpack.c.l.b16 %v203
    %v763 = vunpack.c.l.b16 %v204
    %v764 = vpack.c.b16 %v729, %v728
    %v765 = vpack.c.b16 %v731, %v730
    %v766 = vpack.c.b16 %v733, %v732
    %v767 = vpack.c.b16 %v735, %v734
    %v768 = vpack.c.b16 %v737, %v736
    %v769 = vpack.c.b16 %v739, %v738
    %v770 = vpack.c.b16 %v741, %v740
    %v771 = vpack.c.b16 %v743, %v742
    %v772 = vpack.c.b16 %v745, %v744
    %v773 = vpack.c.b16 %v747, %v746
    %v774 = vpack.c.b16 %v749, %v748
    %v775 = vpack.c.b16 %v751, %v750
    %v776 = vpack.c.b16 %v753, %v752
    %v777 = vpack.c.b16 %v755, %v754
    %v778 = vpack.c.b16 %v757, %v756
    %v779 = vpack.c.b16 %v759, %v758
    %v780 = vpack.c.b16 %v761, %v760
    %v781 = vpack.c.b16 %v763, %v762
    %vm800 = vcmask 261120
    %v802 = vsel %vm800, %v534, 0
    %v805 = vsel %vm800, %v537, 0
    %v808 = vsel %vm800, %v540, 0
    %v811 = vsel %vm800, %v543, 0
    %v814 = vsel %vm800, %v546, 0
    %v817 = vsel %vm800, %v549, 0
    %v820 = vsel %vm800, %v552, 0
    %v823 = vsel %vm800, %v555, 0
    %v826 = vsel %vm800, %v558, 0
    %v829 = vsel %vm800, %v561, 0
    %v832 = vsel %vm800, %v564, 0
    %v835 = vsel %vm800, %v567, 0
    %v838 = vsel %vm800, %v570, 0
    %v841 = vsel %vm800, %v573, 0
    %v844 = vsel %vm800, %v576, 0
    %v847 = vsel %vm800, %v579, 0
    %v850 = vsel %vm800, %v582, 0
    %v853 = vsel %vm800, %v585, 0
    %v856 = vsel %vm800, %v588, 0
    %v859 = vsel %vm800, %v591, 0
    %v862 = vsel %vm800, %v594, 0
    %v865 = vsel %vm800, %v597, 0
    %v868 = vsel %vm800, %v600, 0
    %v871 = vsel %vm800, %v603, 0
    %v874 = vsel %vm800, %v606, 0
    %v877 = vsel %vm800, %v609, 0
    %v880 = vsel %vm800, %v612, 0
    %v883 = vsel %vm800, %v615, 0
    %v886 = vsel %vm800, %v618, 0
    %v889 = vsel %vm800, %v621, 0
    %v892 = vsel %vm800, %v624, 0
    %v895 = vsel %vm800, %v627, 0
    %897 = vmatprep.subr.bf16.mxu0 0
    %898 = vmatpush1.bf16.msra.mxu0 %v764
    %899 = vmatprep.subr.bf16.mxu0 0
    %900 = vmatpush1.bf16.msra.mxu0 %v765
    %901 = vmatprep.subr.bf16.mxu0 0
    %902 = vmatpush1.bf16.msra.mxu0 %v766
    %903 = vmatprep.subr.bf16.mxu0 0
    %904 = vmatpush1.bf16.msra.mxu0 %v767
    %905 = vmatprep.subr.bf16.mxu0 0
    %906 = vmatpush1.bf16.msra.mxu0 %v768
    %907 = vmatprep.subr.bf16.mxu0 0
    %908 = vmatpush1.bf16.msra.mxu0 %v769
    %909 = vmatprep.subr.bf16.mxu0 0
    %910 = vmatpush1.bf16.msra.mxu0 %v770
    %911 = vmatprep.subr.bf16.mxu0 0
    %912 = vmatpush1.bf16.msra.mxu0 %v771
    %913 = vmatprep.subr.bf16.mxu0 0
    %914 = vmatpush1.bf16.msra.mxu0 %v772
    %915 = vmatprep.subr.bf16.mxu0 0
    %916 = vmatpush1.bf16.msra.mxu0 %v773
    %917 = vmatprep.subr.bf16.mxu0 0
    %918 = vmatpush1.bf16.msra.mxu0 %v774
    %919 = vmatprep.subr.bf16.mxu0 0
    %920 = vmatpush1.bf16.msra.mxu0 %v775
    %921 = vmatprep.subr.bf16.mxu0 0
    %922 = vmatpush1.bf16.msra.mxu0 %v776
    %923 = vmatprep.subr.bf16.mxu0 0
    %924 = vmatpush1.bf16.msra.mxu0 %v777
    %925 = vmatprep.subr.bf16.mxu0 0
    %926 = vmatpush1.bf16.msra.mxu0 %v778
    %927 = vmatprep.subr.bf16.mxu0 0
    %928 = vmatpush1.bf16.msra.mxu0 %v779
    %929 = vmatprep.mubr.bf16.mxu0 %v533
    %930 = vmatmul.mubr.bf16.gmra.mrb[0].mxu0 %v532
    %v931 = vpop.f32.mrb[0].mxu0
    %v932 = vadd.f32 %v210, %v931
    %v933 = vpop.f32.mrb[0].mxu0
    %v934 = vpop.f32.mrb[0].mxu0
    %v935 = vadd.f32 %v210, %v934
    %v936 = vpop.f32.mrb[0].mxu0
    %937 = vmatprep.mubr.bf16.mxu0 %v536
    %938 = vmatmul.mubr.bf16.gmra.mrb[0].mxu0 %v535
    %v939 = vpop.f32.mrb[0].mxu0
    %v940 = vadd.f32 %v210, %v939
    %v941 = vpop.f32.mrb[0].mxu0
    %v942 = vpop.f32.mrb[0].mxu0
    %v943 = vadd.f32 %v210, %v942
    %v944 = vpop.f32.mrb[0].mxu0
    %945 = vmatprep.mubr.bf16.mxu0 %v539
    %946 = vmatmul.mubr.bf16.gmra.mrb[0].mxu0 %v538
    %v947 = vpop.f32.mrb[0].mxu0
    %v948 = vadd.f32 %v210, %v947
    %v949 = vpop.f32.mrb[0].mxu0
    %v950 = vpop.f32.mrb[0].mxu0
    %v951 = vadd.f32 %v210, %v950
    %v952 = vpop.f32.mrb[0].mxu0
    %953 = vmatprep.mubr.bf16.mxu0 %v542
    %954 = vmatmul.mubr.bf16.gmra.mrb[0].mxu0 %v541
    %v955 = vpop.f32.mrb[0].mxu0
    %v956 = vadd.f32 %v210, %v955
    %v957 = vpop.f32.mrb[0].mxu0
    %v958 = vpop.f32.mrb[0].mxu0
    %v959 = vadd.f32 %v210, %v958
    %v960 = vpop.f32.mrb[0].mxu0
    %961 = vmatprep.mubr.bf16.mxu0 %v545
    %962 = vmatmul.mubr.bf16.gmra.mrb[0].mxu0 %v544
    %v963 = vpop.f32.mrb[0].mxu0
    %v964 = vadd.f32 %v210, %v963
    %v965 = vpop.f32.mrb[0].mxu0
    %v966 = vpop.f32.mrb[0].mxu0
    %v967 = vadd.f32 %v210, %v966
    %v968 = vpop.f32.mrb[0].mxu0
    %969 = vmatprep.mubr.bf16.mxu0 %v548
    %970 = vmatmul.mubr.bf16.gmra.mrb[0].mxu0 %v547
    %v971 = vpop.f32.mrb[0].mxu0
    %v972 = vadd.f32 %v210, %v971
    %v973 = vpop.f32.mrb[0].mxu0
    %v974 = vpop.f32.mrb[0].mxu0
    %v975 = vadd.f32 %v210, %v974
    %v976 = vpop.f32.mrb[0].mxu0
    %977 = vmatprep.mubr.bf16.mxu0 %v551
    %978 = vmatmul.mubr.bf16.gmra.mrb[0].mxu0 %v550
    %v979 = vpop.f32.mrb[0].mxu0
    %v980 = vadd.f32 %v210, %v979
    %v981 = vpop.f32.mrb[0].mxu0
    %v982 = vpop.f32.mrb[0].mxu0
    %v983 = vadd.f32 %v210, %v982
    %v984 = vpop.f32.mrb[0].mxu0
    %985 = vmatprep.mubr.bf16.mxu0 %v554
    %986 = vmatmul.mubr.bf16.gmra.mrb[0].mxu0 %v553
    %v987 = vpop.f32.mrb[0].mxu0
    %v988 = vadd.f32 %v210, %v987
    %v989 = vpop.f32.mrb[0].mxu0
    %v990 = vpop.f32.mrb[0].mxu0
    %v991 = vadd.f32 %v210, %v990
    %v992 = vpop.f32.mrb[0].mxu0
    %993 = vmatprep.mubr.bf16.mxu0 %v557
    %994 = vmatmul.mubr.bf16.gmra.mrb[0].mxu0 %v556
    %v995 = vpop.f32.mrb[0].mxu0
    %v996 = vadd.f32 %v210, %v995
    %v997 = vpop.f32.mrb[0].mxu0
    %v998 = vpop.f32.mrb[0].mxu0
    %v999 = vadd.f32 %v210, %v998
    %v1000 = vpop.f32.mrb[0].mxu0
    %1001 = vmatprep.mubr.bf16.mxu0 %v560
    %1002 = vmatmul.mubr.bf16.gmra.mrb[0].mxu0 %v559
    %v1003 = vpop.f32.mrb[0].mxu0
    %v1004 = vadd.f32 %v210, %v1003
    %v1005 = vpop.f32.mrb[0].mxu0
    %v1006 = vpop.f32.mrb[0].mxu0
    %v1007 = vadd.f32 %v210, %v1006
    %v1008 = vpop.f32.mrb[0].mxu0
    %1009 = vmatprep.mubr.bf16.mxu0 %v563
    %1010 = vmatmul.mubr.bf16.gmra.mrb[0].mxu0 %v562
    %v1011 = vpop.f32.mrb[0].mxu0
    %v1012 = vadd.f32 %v210, %v1011
    %v1013 = vpop.f32.mrb[0].mxu0
    %v1014 = vpop.f32.mrb[0].mxu0
    %v1015 = vadd.f32 %v210, %v1014
    %v1016 = vpop.f32.mrb[0].mxu0
    %1017 = vmatprep.mubr.bf16.mxu0 %v566
    %1018 = vmatmul.mubr.bf16.gmra.mrb[0].mxu0 %v565
    %v1019 = vpop.f32.mrb[0].mxu0
    %v1020 = vadd.f32 %v210, %v1019
    %v1021 = vpop.f32.mrb[0].mxu0
    %v1022 = vpop.f32.mrb[0].mxu0
    %v1023 = vadd.f32 %v210, %v1022
    %v1024 = vpop.f32.mrb[0].mxu0
    %1025 = vmatprep.mubr.bf16.mxu0 %v569
    %1026 = vmatmul.mubr.bf16.gmra.mrb[0].mxu0 %v568
    %v1027 = vpop.f32.mrb[0].mxu0
    %v1028 = vadd.f32 %v210, %v1027
    %v1029 = vpop.f32.mrb[0].mxu0
    %v1030 = vpop.f32.mrb[0].mxu0
    %v1031 = vadd.f32 %v210, %v1030
    %v1032 = vpop.f32.mrb[0].mxu0
    %1033 = vmatprep.mubr.bf16.mxu0 %v572
    %1034 = vmatmul.mubr.bf16.gmra.mrb[0].mxu0 %v571
    %v1035 = vpop.f32.mrb[0].mxu0
    %v1036 = vadd.f32 %v210, %v1035
    %v1037 = vpop.f32.mrb[0].mxu0
    %v1038 = vpop.f32.mrb[0].mxu0
    %v1039 = vadd.f32 %v210, %v1038
    %v1040 = vpop.f32.mrb[0].mxu0
    %1041 = vmatprep.mubr.bf16.mxu0 %v575
    %1042 = vmatmul.mubr.bf16.gmra.mrb[0].mxu0 %v574
    %v1043 = vpop.f32.mrb[0].mxu0
    %v1044 = vadd.f32 %v210, %v1043
    %v1045 = vpop.f32.mrb[0].mxu0
    %v1046 = vpop.f32.mrb[0].mxu0
    %v1047 = vadd.f32 %v210, %v1046
    %v1048 = vpop.f32.mrb[0].mxu0
    %1049 = vmatprep.mubr.bf16.mxu0 %v578
    %1050 = vmatmul.mubr.bf16.gmra.mrb[0].mxu0 %v577
    %v1051 = vpop.f32.mrb[0].mxu0
    %v1052 = vadd.f32 %v210, %v1051
    %v1053 = vpop.f32.mrb[0].mxu0
    %v1054 = vpop.f32.mrb[0].mxu0
    %v1055 = vadd.f32 %v210, %v1054
    %v1056 = vpop.f32.mrb[0].mxu0
    %1057 = vmatprep.mubr.bf16.mxu0 %v581
    %1058 = vmatmul.mubr.bf16.gmra.mrb[0].mxu0 %v580
    %v1059 = vpop.f32.mrb[0].mxu0
    %v1060 = vadd.f32 %v210, %v1059
    %v1061 = vpop.f32.mrb[0].mxu0
    %v1062 = vpop.f32.mrb[0].mxu0
    %v1063 = vadd.f32 %v210, %v1062
    %v1064 = vpop.f32.mrb[0].mxu0
    %1065 = vmatprep.mubr.bf16.mxu0 %v584
    %1066 = vmatmul.mubr.bf16.gmra.mrb[0].mxu0 %v583
    %v1067 = vpop.f32.mrb[0].mxu0
    %v1068 = vadd.f32 %v210, %v1067
    %v1069 = vpop.f32.mrb[0].mxu0
    %v1070 = vpop.f32.mrb[0].mxu0
    %v1071 = vadd.f32 %v210, %v1070
    %v1072 = vpop.f32.mrb[0].mxu0
    %1073 = vmatprep.mubr.bf16.mxu0 %v587
    %1074 = vmatmul.mubr.bf16.gmra.mrb[0].mxu0 %v586
    %v1075 = vpop.f32.mrb[0].mxu0
    %v1076 = vadd.f32 %v210, %v1075
    %v1077 = vpop.f32.mrb[0].mxu0
    %v1078 = vpop.f32.mrb[0].mxu0
    %v1079 = vadd.f32 %v210, %v1078
    %v1080 = vpop.f32.mrb[0].mxu0
    %1081 = vmatprep.mubr.bf16.mxu0 %v590
    %1082 = vmatmul.mubr.bf16.gmra.mrb[0].mxu0 %v589
    %v1083 = vpop.f32.mrb[0].mxu0
    %v1084 = vadd.f32 %v210, %v1083
    %v1085 = vpop.f32.mrb[0].mxu0
    %v1086 = vpop.f32.mrb[0].mxu0
    %v1087 = vadd.f32 %v210, %v1086
    %v1088 = vpop.f32.mrb[0].mxu0
    %1089 = vmatprep.mubr.bf16.mxu0 %v593
    %1090 = vmatmul.mubr.bf16.gmra.mrb[0].mxu0 %v592
    %v1091 = vpop.f32.mrb[0].mxu0
    %v1092 = vadd.f32 %v210, %v1091
    %v1093 = vpop.f32.mrb[0].mxu0
    %v1094 = vpop.f32.mrb[0].mxu0
    %v1095 = vadd.f32 %v210, %v1094
    %v1096 = vpop.f32.mrb[0].mxu0
    %1097 = vmatprep.mubr.bf16.mxu0 %v596
    %1098 = vmatmul.mubr.bf16.gmra.mrb[0].mxu0 %v595
    %v1099 = vpop.f32.mrb[0].mxu0
    %v1100 = vadd.f32 %v210, %v1099
    %v1101 = vpop.f32.mrb[0].mxu0
    %v1102 = vpop.f32.mrb[0].mxu0
    %v1103 = vadd.f32 %v210, %v1102
    %v1104 = vpop.f32.mrb[0].mxu0
    %1105 = vmatprep.mubr.bf16.mxu0 %v599
    %1106 = vmatmul.mubr.bf16.gmra.mrb[0].mxu0 %v598
    %v1107 = vpop.f32.mrb[0].mxu0
    %v1108 = vadd.f32 %v210, %v1107
    %v1109 = vpop.f32.mrb[0].mxu0
    %v1110 = vpop.f32.mrb[0].mxu0
    %v1111 = vadd.f32 %v210, %v1110
    %v1112 = vpop.f32.mrb[0].mxu0
    %1113 = vmatprep.mubr.bf16.mxu0 %v602
    %1114 = vmatmul.mubr.bf16.gmra.mrb[0].mxu0 %v601
    %v1115 = vpop.f32.mrb[0].mxu0
    %v1116 = vadd.f32 %v210, %v1115
    %v1117 = vpop.f32.mrb[0].mxu0
    %v1118 = vpop.f32.mrb[0].mxu0
    %v1119 = vadd.f32 %v210, %v1118
    %v1120 = vpop.f32.mrb[0].mxu0
    %1121 = vmatprep.mubr.bf16.mxu0 %v605
    %1122 = vmatmul.mubr.bf16.gmra.mrb[0].mxu0 %v604
    %v1123 = vpop.f32.mrb[0].mxu0
    %v1124 = vadd.f32 %v210, %v1123
    %v1125 = vpop.f32.mrb[0].mxu0
    %v1126 = vpop.f32.mrb[0].mxu0
    %v1127 = vadd.f32 %v210, %v1126
    %v1128 = vpop.f32.mrb[0].mxu0
    %1129 = vmatprep.mubr.bf16.mxu0 %v608
    %1130 = vmatmul.mubr.bf16.gmra.mrb[0].mxu0 %v607
    %v1131 = vpop.f32.mrb[0].mxu0
    %v1132 = vadd.f32 %v210, %v1131
    %v1133 = vpop.f32.mrb[0].mxu0
    %v1134 = vpop.f32.mrb[0].mxu0
    %v1135 = vadd.f32 %v210, %v1134
    %v1136 = vpop.f32.mrb[0].mxu0
    %1137 = vmatprep.mubr.bf16.mxu0 %v611
    %1138 = vmatmul.mubr.bf16.gmra.mrb[0].mxu0 %v610
    %v1139 = vpop.f32.mrb[0].mxu0
    %v1140 = vadd.f32 %v210, %v1139
    %v1141 = vpop.f32.mrb[0].mxu0
    %v1142 = vpop.f32.mrb[0].mxu0
    %v1143 = vadd.f32 %v210, %v1142
    %v1144 = vpop.f32.mrb[0].mxu0
    %1145 = vmatprep.mubr.bf16.mxu0 %v614
    %1146 = vmatmul.mubr.bf16.gmra.mrb[0].mxu0 %v613
    %v1147 = vpop.f32.mrb[0].mxu0
    %v1148 = vadd.f32 %v210, %v1147
    %v1149 = vpop.f32.mrb[0].mxu0
    %v1150 = vpop.f32.mrb[0].mxu0
    %v1151 = vadd.f32 %v210, %v1150
    %v1152 = vpop.f32.mrb[0].mxu0
    %1153 = vmatprep.mubr.bf16.mxu0 %v617
    %1154 = vmatmul.mubr.bf16.gmra.mrb[0].mxu0 %v616
    %v1155 = vpop.f32.mrb[0].mxu0
    %v1156 = vadd.f32 %v210, %v1155
    %v1157 = vpop.f32.mrb[0].mxu0
    %v1158 = vpop.f32.mrb[0].mxu0
    %v1159 = vadd.f32 %v210, %v1158
    %v1160 = vpop.f32.mrb[0].mxu0
    %1161 = vmatprep.mubr.bf16.mxu0 %v620
    %1162 = vmatmul.mubr.bf16.gmra.mrb[0].mxu0 %v619
    %v1163 = vpop.f32.mrb[0].mxu0
    %v1164 = vadd.f32 %v210, %v1163
    %v1165 = vpop.f32.mrb[0].mxu0
    %v1166 = vpop.f32.mrb[0].mxu0
    %v1167 = vadd.f32 %v210, %v1166
    %v1168 = vpop.f32.mrb[0].mxu0
    %1169 = vmatprep.mubr.bf16.mxu0 %v623
    %1170 = vmatmul.mubr.bf16.gmra.mrb[0].mxu0 %v622
    %v1171 = vpop.f32.mrb[0].mxu0
    %v1172 = vadd.f32 %v210, %v1171
    %v1173 = vpop.f32.mrb[0].mxu0
    %v1174 = vpop.f32.mrb[0].mxu0
    %v1175 = vadd.f32 %v210, %v1174
    %v1176 = vpop.f32.mrb[0].mxu0
    %1177 = vmatprep.mubr.bf16.mxu0 %v626
    %1178 = vmatmul.mubr.bf16.gmra.mrb[0].mxu0 %v625
    %v1179 = vpop.f32.mrb[0].mxu0
    %v1180 = vadd.f32 %v210, %v1179
    %v1181 = vpop.f32.mrb[0].mxu0
    %v1182 = vpop.f32.mrb[0].mxu0
    %v1183 = vadd.f32 %v210, %v1182
    %v1184 = vpop.f32.mrb[0].mxu0
    %1185 = vdwg.mxu0
    %1186 = vmatprep.subr.bf16.mxu0 0
    %1187 = vmatpush1.bf16.msra.mxu0 %v780
    %1188 = vmatprep.subr.bf16.mxu0 0
    %1189 = vmatpush1.bf16.msra.mxu0 %v781
    %1190 = vmatprep.subr.bf16.mxu0 0
    %1191 = vmatpush1.bf16.msra.mxu0 0
    %1192 = vmatprep.subr.bf16.mxu0 0
    %1193 = vmatpush1.bf16.msra.mxu0 0
    %1194 = vmatprep.subr.bf16.mxu0 0
    %1195 = vmatpush1.bf16.msra.mxu0 0
    %1196 = vmatprep.subr.bf16.mxu0 0
    %1197 = vmatpush1.bf16.msra.mxu0 0
    %1198 = vmatprep.subr.bf16.mxu0 0
    %1199 = vmatpush1.bf16.msra.mxu0 0
    %1200 = vmatprep.subr.bf16.mxu0 0
    %1201 = vmatpush1.bf16.msra.mxu0 0
    %1202 = vmatprep.subr.bf16.mxu0 0
    %1203 = vmatpush1.bf16.msra.mxu0 0
    %1204 = vmatprep.subr.bf16.mxu0 0
    %1205 = vmatpush1.bf16.msra.mxu0 0
    %1206 = vmatprep.subr.bf16.mxu0 0
    %1207 = vmatpush1.bf16.msra.mxu0 0
    %1208 = vmatprep.subr.bf16.mxu0 0
    %1209 = vmatpush1.bf16.msra.mxu0 0
    %1210 = vmatprep.subr.bf16.mxu0 0
    %1211 = vmatpush1.bf16.msra.mxu0 0
    %1212 = vmatprep.subr.bf16.mxu0 0
    %1213 = vmatpush1.bf16.msra.mxu0 0
    %1214 = vmatprep.subr.bf16.mxu0 0
    %1215 = vmatpush1.bf16.msra.mxu0 0
    %1216 = vmatprep.subr.bf16.mxu0 0
    %1217 = vmatpush1.bf16.msra.mxu0 0
    %1218 = vmatprep.mubr.bf16.mxu0 0
    %1219 = vmatmul.mubr.bf16.gmra.mrb[0].mxu0 %v802
    %v1220 = vpop.f32.mrb[0].mxu0
    %v1221 = vadd.f32 %v932, %v1220
    %v1222 = vpop.f32.mrb[0].mxu0
    %v1223 = vpop.f32.mrb[0].mxu0
    %v1224 = vadd.f32 %v935, %v1223
    %v1225 = vpop.f32.mrb[0].mxu0
    %1226 = vmatprep.mubr.bf16.mxu0 0
    %1227 = vmatmul.mubr.bf16.gmra.mrb[0].mxu0 %v805
    %v1228 = vpop.f32.mrb[0].mxu0
    %v1229 = vadd.f32 %v940, %v1228
    %v1230 = vpop.f32.mrb[0].mxu0
    %v1231 = vpop.f32.mrb[0].mxu0
    %v1232 = vadd.f32 %v943, %v1231
    %v1233 = vpop.f32.mrb[0].mxu0
    %1234 = vmatprep.mubr.bf16.mxu0 0
    %1235 = vmatmul.mubr.bf16.gmra.mrb[0].mxu0 %v808
    %v1236 = vpop.f32.mrb[0].mxu0
    %v1237 = vadd.f32 %v948, %v1236
    %v1238 = vpop.f32.mrb[0].mxu0
    %v1239 = vpop.f32.mrb[0].mxu0
    %v1240 = vadd.f32 %v951, %v1239
    %v1241 = vpop.f32.mrb[0].mxu0
    %1242 = vmatprep.mubr.bf16.mxu0 0
    %1243 = vmatmul.mubr.bf16.gmra.mrb[0].mxu0 %v811
    %v1244 = vpop.f32.mrb[0].mxu0
    %v1245 = vadd.f32 %v956, %v1244
    %v1246 = vpop.f32.mrb[0].mxu0
    %v1247 = vpop.f32.mrb[0].mxu0
    %v1248 = vadd.f32 %v959, %v1247
    %v1249 = vpop.f32.mrb[0].mxu0
    %1250 = vmatprep.mubr.bf16.mxu0 0
    %1251 = vmatmul.mubr.bf16.gmra.mrb[0].mxu0 %v814
    %v1252 = vpop.f32.mrb[0].mxu0
    %v1253 = vadd.f32 %v964, %v1252
    %v1254 = vpop.f32.mrb[0].mxu0
    %v1255 = vpop.f32.mrb[0].mxu0
    %v1256 = vadd.f32 %v967, %v1255
    %v1257 = vpop.f32.mrb[0].mxu0
    %1258 = vmatprep.mubr.bf16.mxu0 0
    %1259 = vmatmul.mubr.bf16.gmra.mrb[0].mxu0 %v817
    %v1260 = vpop.f32.mrb[0].mxu0
    %v1261 = vadd.f32 %v972, %v1260
    %v1262 = vpop.f32.mrb[0].mxu0
    %v1263 = vpop.f32.mrb[0].mxu0
    %v1264 = vadd.f32 %v975, %v1263
    %v1265 = vpop.f32.mrb[0].mxu0
    %1266 = vmatprep.mubr.bf16.mxu0 0
    %1267 = vmatmul.mubr.bf16.gmra.mrb[0].mxu0 %v820
    %v1268 = vpop.f32.mrb[0].mxu0
    %v1269 = vadd.f32 %v980, %v1268
    %v1270 = vpop.f32.mrb[0].mxu0
    %v1271 = vpop.f32.mrb[0].mxu0
    %v1272 = vadd.f32 %v983, %v1271
    %v1273 = vpop.f32.mrb[0].mxu0
    %1274 = vmatprep.mubr.bf16.mxu0 0
    %1275 = vmatmul.mubr.bf16.gmra.mrb[0].mxu0 %v823
    %v1276 = vpop.f32.mrb[0].mxu0
    %v1277 = vadd.f32 %v988, %v1276
    %v1278 = vpop.f32.mrb[0].mxu0
    %v1279 = vpop.f32.mrb[0].mxu0
    %v1280 = vadd.f32 %v991, %v1279
    %v1281 = vpop.f32.mrb[0].mxu0
    %1282 = vmatprep.mubr.bf16.mxu0 0
    %1283 = vmatmul.mubr.bf16.gmra.mrb[0].mxu0 %v826
    %v1284 = vpop.f32.mrb[0].mxu0
    %v1285 = vadd.f32 %v996, %v1284
    %v1286 = vpop.f32.mrb[0].mxu0
    %v1287 = vpop.f32.mrb[0].mxu0
    %v1288 = vadd.f32 %v999, %v1287
    %v1289 = vpop.f32.mrb[0].mxu0
    %1290 = vmatprep.mubr.bf16.mxu0 0
    %1291 = vmatmul.mubr.bf16.gmra.mrb[0].mxu0 %v829
    %v1292 = vpop.f32.mrb[0].mxu0
    %v1293 = vadd.f32 %v1004, %v1292
    %v1294 = vpop.f32.mrb[0].mxu0
    %v1295 = vpop.f32.mrb[0].mxu0
    %v1296 = vadd.f32 %v1007, %v1295
    %v1297 = vpop.f32.mrb[0].mxu0
    %1298 = vmatprep.mubr.bf16.mxu0 0
    %1299 = vmatmul.mubr.bf16.gmra.mrb[0].mxu0 %v832
    %v1300 = vpop.f32.mrb[0].mxu0
    %v1301 = vadd.f32 %v1012, %v1300
    %v1302 = vpop.f32.mrb[0].mxu0
    %v1303 = vpop.f32.mrb[0].mxu0
    %v1304 = vadd.f32 %v1015, %v1303
    %v1305 = vpop.f32.mrb[0].mxu0
    %1306 = vmatprep.mubr.bf16.mxu0 0
    %1307 = vmatmul.mubr.bf16.gmra.mrb[0].mxu0 %v835
    %v1308 = vpop.f32.mrb[0].mxu0
    %v1309 = vadd.f32 %v1020, %v1308
    %v1310 = vpop.f32.mrb[0].mxu0
    %v1311 = vpop.f32.mrb[0].mxu0
    %v1312 = vadd.f32 %v1023, %v1311
    %v1313 = vpop.f32.mrb[0].mxu0
    %1314 = vmatprep.mubr.bf16.mxu0 0
    %1315 = vmatmul.mubr.bf16.gmra.mrb[0].mxu0 %v838
    %v1316 = vpop.f32.mrb[0].mxu0
    %v1317 = vadd.f32 %v1028, %v1316
    %v1318 = vpop.f32.mrb[0].mxu0
    %v1319 = vpop.f32.mrb[0].mxu0
    %v1320 = vadd.f32 %v1031, %v1319
    %v1321 = vpop.f32.mrb[0].mxu0
    %1322 = vmatprep.mubr.bf16.mxu0 0
    %1323 = vmatmul.mubr.bf16.gmra.mrb[0].mxu0 %v841
    %v1324 = vpop.f32.mrb[0].mxu0
    %v1325 = vadd.f32 %v1036, %v1324
    %v1326 = vpop.f32.mrb[0].mxu0
    %v1327 = vpop.f32.mrb[0].mxu0
    %v1328 = vadd.f32 %v1039, %v1327
    %v1329 = vpop.f32.mrb[0].mxu0
    %1330 = vmatprep.mubr.bf16.mxu0 0
    %1331 = vmatmul.mubr.bf16.gmra.mrb[0].mxu0 %v844
    %v1332 = vpop.f32.mrb[0].mxu0
    %v1333 = vadd.f32 %v1044, %v1332
    %v1334 = vpop.f32.mrb[0].mxu0
    %v1335 = vpop.f32.mrb[0].mxu0
    %v1336 = vadd.f32 %v1047, %v1335
    %v1337 = vpop.f32.mrb[0].mxu0
    %1338 = vmatprep.mubr.bf16.mxu0 0
    %1339 = vmatmul.mubr.bf16.gmra.mrb[0].mxu0 %v847
    %v1340 = vpop.f32.mrb[0].mxu0
    %v1341 = vadd.f32 %v1052, %v1340
    %v1342 = vpop.f32.mrb[0].mxu0
    %v1343 = vpop.f32.mrb[0].mxu0
    %v1344 = vadd.f32 %v1055, %v1343
    %v1345 = vpop.f32.mrb[0].mxu0
    %1346 = vmatprep.mubr.bf16.mxu0 0
    %1347 = vmatmul.mubr.bf16.gmra.mrb[0].mxu0 %v850
    %v1348 = vpop.f32.mrb[0].mxu0
    %v1349 = vadd.f32 %v1060, %v1348
    %v1350 = vpop.f32.mrb[0].mxu0
    %v1351 = vpop.f32.mrb[0].mxu0
    %v1352 = vadd.f32 %v1063, %v1351
    %v1353 = vpop.f32.mrb[0].mxu0
    %1354 = vmatprep.mubr.bf16.mxu0 0
    %1355 = vmatmul.mubr.bf16.gmra.mrb[0].mxu0 %v853
    %v1356 = vpop.f32.mrb[0].mxu0
    %v1357 = vadd.f32 %v1068, %v1356
    %v1358 = vpop.f32.mrb[0].mxu0
    %v1359 = vpop.f32.mrb[0].mxu0
    %v1360 = vadd.f32 %v1071, %v1359
    %v1361 = vpop.f32.mrb[0].mxu0
    %1362 = vmatprep.mubr.bf16.mxu0 0
    %1363 = vmatmul.mubr.bf16.gmra.mrb[0].mxu0 %v856
    %v1364 = vpop.f32.mrb[0].mxu0
    %v1365 = vadd.f32 %v1076, %v1364
    %v1366 = vpop.f32.mrb[0].mxu0
    %v1367 = vpop.f32.mrb[0].mxu0
    %v1368 = vadd.f32 %v1079, %v1367
    %v1369 = vpop.f32.mrb[0].mxu0
    %1370 = vmatprep.mubr.bf16.mxu0 0
    %1371 = vmatmul.mubr.bf16.gmra.mrb[0].mxu0 %v859
    %v1372 = vpop.f32.mrb[0].mxu0
    %v1373 = vadd.f32 %v1084, %v1372
    %v1374 = vpop.f32.mrb[0].mxu0
    %v1375 = vpop.f32.mrb[0].mxu0
    %v1376 = vadd.f32 %v1087, %v1375
    %v1377 = vpop.f32.mrb[0].mxu0
    %1378 = vmatprep.mubr.bf16.mxu0 0
    %1379 = vmatmul.mubr.bf16.gmra.mrb[0].mxu0 %v862
    %v1380 = vpop.f32.mrb[0].mxu0
    %v1381 = vadd.f32 %v1092, %v1380
    %v1382 = vpop.f32.mrb[0].mxu0
    %v1383 = vpop.f32.mrb[0].mxu0
    %v1384 = vadd.f32 %v1095, %v1383
    %v1385 = vpop.f32.mrb[0].mxu0
    %1386 = vmatprep.mubr.bf16.mxu0 0
    %1387 = vmatmul.mubr.bf16.gmra.mrb[0].mxu0 %v865
    %v1388 = vpop.f32.mrb[0].mxu0
    %v1389 = vadd.f32 %v1100, %v1388
    %v1390 = vpop.f32.mrb[0].mxu0
    %v1391 = vpop.f32.mrb[0].mxu0
    %v1392 = vadd.f32 %v1103, %v1391
    %v1393 = vpop.f32.mrb[0].mxu0
    %1394 = vmatprep.mubr.bf16.mxu0 0
    %1395 = vmatmul.mubr.bf16.gmra.mrb[0].mxu0 %v868
    %v1396 = vpop.f32.mrb[0].mxu0
    %v1397 = vadd.f32 %v1108, %v1396
    %v1398 = vpop.f32.mrb[0].mxu0
    %v1399 = vpop.f32.mrb[0].mxu0
    %v1400 = vadd.f32 %v1111, %v1399
    %v1401 = vpop.f32.mrb[0].mxu0
    %1402 = vmatprep.mubr.bf16.mxu0 0
    %1403 = vmatmul.mubr.bf16.gmra.mrb[0].mxu0 %v871
    %v1404 = vpop.f32.mrb[0].mxu0
    %v1405 = vadd.f32 %v1116, %v1404
    %v1406 = vpop.f32.mrb[0].mxu0
    %v1407 = vpop.f32.mrb[0].mxu0
    %v1408 = vadd.f32 %v1119, %v1407
    %v1409 = vpop.f32.mrb[0].mxu0
    %1410 = vmatprep.mubr.bf16.mxu0 0
    %1411 = vmatmul.mubr.bf16.gmra.mrb[0].mxu0 %v874
    %v1412 = vpop.f32.mrb[0].mxu0
    %v1413 = vadd.f32 %v1124, %v1412
    %v1414 = vpop.f32.mrb[0].mxu0
    %v1415 = vpop.f32.mrb[0].mxu0
    %v1416 = vadd.f32 %v1127, %v1415
    %v1417 = vpop.f32.mrb[0].mxu0
    %1418 = vmatprep.mubr.bf16.mxu0 0
    %1419 = vmatmul.mubr.bf16.gmra.mrb[0].mxu0 %v877
    %v1420 = vpop.f32.mrb[0].mxu0
    %v1421 = vadd.f32 %v1132, %v1420
    %v1422 = vpop.f32.mrb[0].mxu0
    %v1423 = vpop.f32.mrb[0].mxu0
    %v1424 = vadd.f32 %v1135, %v1423
    %v1425 = vpop.f32.mrb[0].mxu0
    %1426 = vmatprep.mubr.bf16.mxu0 0
    %1427 = vmatmul.mubr.bf16.gmra.mrb[0].mxu0 %v880
    %v1428 = vpop.f32.mrb[0].mxu0
    %v1429 = vadd.f32 %v1140, %v1428
    %v1430 = vpop.f32.mrb[0].mxu0
    %v1431 = vpop.f32.mrb[0].mxu0
    %v1432 = vadd.f32 %v1143, %v1431
    %v1433 = vpop.f32.mrb[0].mxu0
    %1434 = vmatprep.mubr.bf16.mxu0 0
    %1435 = vmatmul.mubr.bf16.gmra.mrb[0].mxu0 %v883
    %v1436 = vpop.f32.mrb[0].mxu0
    %v1437 = vadd.f32 %v1148, %v1436
    %v1438 = vpop.f32.mrb[0].mxu0
    %v1439 = vpop.f32.mrb[0].mxu0
    %v1440 = vadd.f32 %v1151, %v1439
    %v1441 = vpop.f32.mrb[0].mxu0
    %1442 = vmatprep.mubr.bf16.mxu0 0
    %1443 = vmatmul.mubr.bf16.gmra.mrb[0].mxu0 %v886
    %v1444 = vpop.f32.mrb[0].mxu0
    %v1445 = vadd.f32 %v1156, %v1444
    %v1446 = vpop.f32.mrb[0].mxu0
    %v1447 = vpop.f32.mrb[0].mxu0
    %v1448 = vadd.f32 %v1159, %v1447
    %v1449 = vpop.f32.mrb[0].mxu0
    %1450 = vmatprep.mubr.bf16.mxu0 0
    %1451 = vmatmul.mubr.bf16.gmra.mrb[0].mxu0 %v889
    %v1452 = vpop.f32.mrb[0].mxu0
    %v1453 = vadd.f32 %v1164, %v1452
    %v1454 = vpop.f32.mrb[0].mxu0
    %v1455 = vpop.f32.mrb[0].mxu0
    %v1456 = vadd.f32 %v1167, %v1455
    %v1457 = vpop.f32.mrb[0].mxu0
    %1458 = vmatprep.mubr.bf16.mxu0 0
    %1459 = vmatmul.mubr.bf16.gmra.mrb[0].mxu0 %v892
    %v1460 = vpop.f32.mrb[0].mxu0
    %v1461 = vadd.f32 %v1172, %v1460
    %v1462 = vpop.f32.mrb[0].mxu0
    %v1463 = vpop.f32.mrb[0].mxu0
    %v1464 = vadd.f32 %v1175, %v1463
    %v1465 = vpop.f32.mrb[0].mxu0
    %1466 = vmatprep.mubr.bf16.mxu0 0
    %1467 = vmatmul.mubr.bf16.gmra.mrb[0].mxu0 %v895
    %v1468 = vpop.f32.mrb[0].mxu0
    %v1469 = vadd.f32 %v1180, %v1468
    %v1470 = vpop.f32.mrb[0].mxu0
    %v1471 = vpop.f32.mrb[0].mxu0
    %v1472 = vadd.f32 %v1183, %v1471
    %v1473 = vpop.f32.mrb[0].mxu0
    %1474 = vdwg.mxu0
    %v1475 = vmax.f32 %v1221, 0.0
    %v1476 = vmax.f32 %v1224, 0.0
    %v1477 = vmax.f32 %v1229, 0.0
    %v1478 = vmax.f32 %v1232, 0.0
    %v1479 = vmax.f32 %v1237, 0.0
    %v1480 = vmax.f32 %v1240, 0.0
    %v1481 = vmax.f32 %v1245, 0.0
    %v1482 = vmax.f32 %v1248, 0.0
    %v1483 = vmax.f32 %v1253, 0.0
    %v1484 = vmax.f32 %v1256, 0.0
    %v1485 = vmax.f32 %v1261, 0.0
    %v1486 = vmax.f32 %v1264, 0.0
    %v1487 = vmax.f32 %v1269, 0.0
    %v1488 = vmax.f32 %v1272, 0.0
    %v1489 = vmax.f32 %v1277, 0.0
    %v1490 = vmax.f32 %v1280, 0.0
    %v1491 = vmax.f32 %v1285, 0.0
    %v1492 = vmax.f32 %v1288, 0.0
    %v1493 = vmax.f32 %v1293, 0.0
    %v1494 = vmax.f32 %v1296, 0.0
    %v1495 = vmax.f32 %v1301, 0.0
    %v1496 = vmax.f32 %v1304, 0.0
    %v1497 = vmax.f32 %v1309, 0.0
    %v1498 = vmax.f32 %v1312, 0.0
    %v1499 = vmax.f32 %v1317, 0.0
    %v1500 = vmax.f32 %v1320, 0.0
    %v1501 = vmax.f32 %v1325, 0.0
    %v1502 = vmax.f32 %v1328, 0.0
    %v1503 = vmax.f32 %v1333, 0.0
    %v1504 = vmax.f32 %v1336, 0.0
    %v1505 = vmax.f32 %v1341, 0.0
    %v1506 = vmax.f32 %v1344, 0.0
    %v1507 = vmax.f32 %v1349, 0.0
    %v1508 = vmax.f32 %v1352, 0.0
    %v1509 = vmax.f32 %v1357, 0.0
    %v1510 = vmax.f32 %v1360, 0.0
    %v1511 = vmax.f32 %v1365, 0.0
    %v1512 = vmax.f32 %v1368, 0.0
    %v1513 = vmax.f32 %v1373, 0.0
    %v1514 = vmax.f32 %v1376, 0.0
    %v1515 = vmax.f32 %v1381, 0.0
    %v1516 = vmax.f32 %v1384, 0.0
    %v1517 = vmax.f32 %v1389, 0.0
    %v1518 = vmax.f32 %v1392, 0.0
    %v1519 = vmax.f32 %v1397, 0.0
    %v1520 = vmax.f32 %v1400, 0.0
    %v1521 = vmax.f32 %v1405, 0.0
    %v1522 = vmax.f32 %v1408, 0.0
    %v1523 = vmax.f32 %v1413, 0.0
    %v1524 = vmax.f32 %v1416, 0.0
    %v1525 = vmax.f32 %v1421, 0.0
    %v1526 = vmax.f32 %v1424, 0.0
    %v1527 = vmax.f32 %v1429, 0.0
    %v1528 = vmax.f32 %v1432, 0.0
    %v1529 = vmax.f32 %v1437, 0.0
    %v1530 = vmax.f32 %v1440, 0.0
    %v1531 = vmax.f32 %v1445, 0.0
    %v1532 = vmax.f32 %v1448, 0.0
    %v1533 = vmax.f32 %v1453, 0.0
    %v1534 = vmax.f32 %v1456, 0.0
    %v1535 = vmax.f32 %v1461, 0.0
    %v1536 = vmax.f32 %v1464, 0.0
    %v1537 = vmax.f32 %v1469, 0.0
    %v1538 = vmax.f32 %v1472, 0.0
    %v1539 = vpack.c.bf16 %v1476, %v1475
    %v1540 = vpack.c.bf16 %v1478, %v1477
    %v1541 = vpack.c.bf16 %v1480, %v1479
    %v1542 = vpack.c.bf16 %v1482, %v1481
    %v1543 = vpack.c.bf16 %v1484, %v1483
    %v1544 = vpack.c.bf16 %v1486, %v1485
    %v1545 = vpack.c.bf16 %v1488, %v1487
    %v1546 = vpack.c.bf16 %v1490, %v1489
    %v1547 = vpack.c.bf16 %v1492, %v1491
    %v1548 = vpack.c.bf16 %v1494, %v1493
    %v1549 = vpack.c.bf16 %v1496, %v1495
    %v1550 = vpack.c.bf16 %v1498, %v1497
    %v1551 = vpack.c.bf16 %v1500, %v1499
    %v1552 = vpack.c.bf16 %v1502, %v1501
    %v1553 = vpack.c.bf16 %v1504, %v1503
    %v1554 = vpack.c.bf16 %v1506, %v1505
    %v1555 = vpack.c.bf16 %v1508, %v1507
    %v1556 = vpack.c.bf16 %v1510, %v1509
    %v1557 = vpack.c.bf16 %v1512, %v1511
    %v1558 = vpack.c.bf16 %v1514, %v1513
    %v1559 = vpack.c.bf16 %v1516, %v1515
    %v1560 = vpack.c.bf16 %v1518, %v1517
    %v1561 = vpack.c.bf16 %v1520, %v1519
    %v1562 = vpack.c.bf16 %v1522, %v1521
    %v1563 = vpack.c.bf16 %v1524, %v1523
    %v1564 = vpack.c.bf16 %v1526, %v1525
    %v1565 = vpack.c.bf16 %v1528, %v1527
    %v1566 = vpack.c.bf16 %v1530, %v1529
    %v1567 = vpack.c.bf16 %v1532, %v1531
    %v1568 = vpack.c.bf16 %v1534, %v1533
    %v1569 = vpack.c.bf16 %v1536, %v1535
    %v1570 = vpack.c.bf16 %v1538, %v1537
    %v1603 = vunpack.c.l.b16 %v1539
    %v1604 = vunpack.c.h.b16 %v1539
    %v1605 = vunpack.c.l.b16 %v1540
    %v1606 = vunpack.c.h.b16 %v1540
    %v1607 = vunpack.c.l.b16 %v1541
    %v1608 = vunpack.c.h.b16 %v1541
    %v1609 = vunpack.c.l.b16 %v1542
    %v1610 = vunpack.c.h.b16 %v1542
    %v1611 = vunpack.c.l.b16 %v1543
    %v1612 = vunpack.c.h.b16 %v1543
    %v1613 = vunpack.c.l.b16 %v1544
    %v1614 = vunpack.c.h.b16 %v1544
    %v1615 = vunpack.c.l.b16 %v1545
    %v1616 = vunpack.c.h.b16 %v1545
    %v1617 = vunpack.c.l.b16 %v1546
    %v1618 = vunpack.c.h.b16 %v1546
    %v1619 = vunpack.c.l.b16 %v1547
    %v1620 = vunpack.c.h.b16 %v1547
    %v1621 = vunpack.c.l.b16 %v1548
    %v1622 = vunpack.c.h.b16 %v1548
    %v1623 = vunpack.c.l.b16 %v1549
    %v1624 = vunpack.c.h.b16 %v1549
    %v1625 = vunpack.c.l.b16 %v1550
    %v1626 = vunpack.c.h.b16 %v1550
    %v1627 = vunpack.c.l.b16 %v1551
    %v1628 = vunpack.c.h.b16 %v1551
    %v1629 = vunpack.c.l.b16 %v1552
    %v1630 = vunpack.c.h.b16 %v1552
    %v1631 = vunpack.c.l.b16 %v1553
    %v1632 = vunpack.c.h.b16 %v1553
    %v1633 = vunpack.c.l.b16 %v1554
    %v1634 = vunpack.c.h.b16 %v1554
    %v1635 = vunpack.c.l.b16 %v1555
    %v1636 = vunpack.c.h.b16 %v1555
    %v1637 = vunpack.c.l.b16 %v1556
    %v1638 = vunpack.c.h.b16 %v1556
    %v1639 = vunpack.c.l.b16 %v1557
    %v1640 = vunpack.c.h.b16 %v1557
    %v1641 = vunpack.c.l.b16 %v1558
    %v1642 = vunpack.c.h.b16 %v1558
    %v1643 = vunpack.c.l.b16 %v1559
    %v1644 = vunpack.c.h.b16 %v1559
    %v1645 = vunpack.c.l.b16 %v1560
    %v1646 = vunpack.c.h.b16 %v1560
    %v1647 = vunpack.c.l.b16 %v1561
    %v1648 = vunpack.c.h.b16 %v1561
    %v1649 = vunpack.c.l.b16 %v1562
    %v1650 = vunpack.c.h.b16 %v1562
    %v1651 = vunpack.c.l.b16 %v1563
    %v1652 = vunpack.c.h.b16 %v1563
    %v1653 = vunpack.c.l.b16 %v1564
    %v1654 = vunpack.c.h.b16 %v1564
    %v1655 = vunpack.c.l.b16 %v1565
    %v1656 = vunpack.c.h.b16 %v1565
    %v1657 = vunpack.c.l.b16 %v1566
    %v1658 = vunpack.c.h.b16 %v1566
    %v1659 = vunpack.c.l.b16 %v1567
    %v1660 = vunpack.c.h.b16 %v1567
    %v1661 = vunpack.c.l.b16 %v1568
    %v1662 = vunpack.c.h.b16 %v1568
    %v1663 = vunpack.c.l.b16 %v1569
    %v1664 = vunpack.c.h.b16 %v1569
    %v1665 = vunpack.c.l.b16 %v1570
    %v1666 = vunpack.c.h.b16 %v1570
    %v1667 = vpack.c.b16 %v1603, %v1603
    %v1668 = vpack.c.b16 %v1604, %v1604
    %v1669 = vpack.c.b16 %v1605, %v1605
    %v1670 = vpack.c.b16 %v1606, %v1606
    %v1671 = vpack.c.b16 %v1607, %v1607
    %v1672 = vpack.c.b16 %v1608, %v1608
    %v1673 = vpack.c.b16 %v1609, %v1609
    %v1674 = vpack.c.b16 %v1610, %v1610
    %v1675 = vpack.c.b16 %v1611, %v1611
    %v1676 = vpack.c.b16 %v1612, %v1612
    %v1677 = vpack.c.b16 %v1613, %v1613
    %v1678 = vpack.c.b16 %v1614, %v1614
    %v1679 = vpack.c.b16 %v1615, %v1615
    %v1680 = vpack.c.b16 %v1616, %v1616
    %v1681 = vpack.c.b16 %v1617, %v1617
    %v1682 = vpack.c.b16 %v1618, %v1618
    %v1683 = vpack.c.b16 %v1619, %v1619
    %v1684 = vpack.c.b16 %v1620, %v1620
    %v1685 = vpack.c.b16 %v1621, %v1621
    %v1686 = vpack.c.b16 %v1622, %v1622
    %v1687 = vpack.c.b16 %v1623, %v1623
    %v1688 = vpack.c.b16 %v1624, %v1624
    %v1689 = vpack.c.b16 %v1625, %v1625
    %v1690 = vpack.c.b16 %v1626, %v1626
    %v1691 = vpack.c.b16 %v1627, %v1627
    %v1692 = vpack.c.b16 %v1628, %v1628
    %v1693 = vpack.c.b16 %v1629, %v1629
    %v1694 = vpack.c.b16 %v1630, %v1630
    %v1695 = vpack.c.b16 %v1631, %v1631
    %v1696 = vpack.c.b16 %v1632, %v1632
    %v1697 = vpack.c.b16 %v1633, %v1633
    %v1698 = vpack.c.b16 %v1634, %v1634
    %v1699 = vpack.c.b16 %v1635, %v1635
    %v1700 = vpack.c.b16 %v1636, %v1636
    %v1701 = vpack.c.b16 %v1637, %v1637
    %v1702 = vpack.c.b16 %v1638, %v1638
    %v1703 = vpack.c.b16 %v1639, %v1639
    %v1704 = vpack.c.b16 %v1640, %v1640
    %v1705 = vpack.c.b16 %v1641, %v1641
    %v1706 = vpack.c.b16 %v1642, %v1642
    %v1707 = vpack.c.b16 %v1643, %v1643
    %v1708 = vpack.c.b16 %v1644, %v1644
    %v1709 = vpack.c.b16 %v1645, %v1645
    %v1710 = vpack.c.b16 %v1646, %v1646
    %v1711 = vpack.c.b16 %v1647, %v1647
    %v1712 = vpack.c.b16 %v1648, %v1648
    %v1713 = vpack.c.b16 %v1649, %v1649
    %v1714 = vpack.c.b16 %v1650, %v1650
    %v1715 = vpack.c.b16 %v1651, %v1651
    %v1716 = vpack.c.b16 %v1652, %v1652
    %v1717 = vpack.c.b16 %v1653, %v1653
    %v1718 = vpack.c.b16 %v1654, %v1654
    %v1719 = vpack.c.b16 %v1655, %v1655
    %v1720 = vpack.c.b16 %v1656, %v1656
    %v1721 = vpack.c.b16 %v1657, %v1657
    %v1722 = vpack.c.b16 %v1658, %v1658
    %v1723 = vpack.c.b16 %v1659, %v1659
    %v1724 = vpack.c.b16 %v1660, %v1660
    %v1725 = vpack.c.b16 %v1661, %v1661
    %v1726 = vpack.c.b16 %v1662, %v1662
    %v1727 = vpack.c.b16 %v1663, %v1663
    %v1728 = vpack.c.b16 %v1664, %v1664
    %v1729 = vpack.c.b16 %v1665, %v1665
    %v1730 = vpack.c.b16 %v1666, %v1666
    %1795 = vst [vmem:[%s3] sm:$0xf] %v1667
    %1796 = vst [vmem:[%s3 + $0x4] sm:$0xf] %v1668
    %1797 = vst [vmem:[%s3 + $0x8] sm:$0xf] %v1669
    %1798 = vst [vmem:[%s3 + $0xc] sm:$0xf] %v1670
    %1799 = vst [vmem:[%s3 + $0x10] sm:$0xf] %v1671
    %1800 = vst [vmem:[%s3 + $0x14] sm:$0xf] %v1672
    %1801 = vst [vmem:[%s3 + $0x18] sm:$0xf] %v1673
    %1802 = vst [vmem:[%s3 + $0x1c] sm:$0xf] %v1674
    %1803 = vst [vmem:[%s3 + $0x20] sm:$0xf] %v1675
    %1804 = vst [vmem:[%s3 + $0x24] sm:$0xf] %v1676
    %1805 = vst [vmem:[%s3 + $0x28] sm:$0xf] %v1677
    %1806 = vst [vmem:[%s3 + $0x2c] sm:$0xf] %v1678
    %1807 = vst [vmem:[%s3 + $0x30] sm:$0xf] %v1679
    %1808 = vst [vmem:[%s3 + $0x34] sm:$0xf] %v1680
    %1809 = vst [vmem:[%s3 + $0x38] sm:$0xf] %v1681
    %1810 = vst [vmem:[%s3 + $0x3c] sm:$0xf] %v1682
    %1811 = vst [vmem:[%s3 + $0x40] sm:$0xf] %v1683
    %1812 = vst [vmem:[%s3 + $0x44] sm:$0xf] %v1684
    %1813 = vst [vmem:[%s3 + $0x48] sm:$0xf] %v1685
    %1814 = vst [vmem:[%s3 + $0x4c] sm:$0xf] %v1686
    %1815 = vst [vmem:[%s3 + $0x50] sm:$0xf] %v1687
    %1816 = vst [vmem:[%s3 + $0x54] sm:$0xf] %v1688
    %1817 = vst [vmem:[%s3 + $0x58] sm:$0xf] %v1689
    %1818 = vst [vmem:[%s3 + $0x5c] sm:$0xf] %v1690
    %1819 = vst [vmem:[%s3 + $0x60] sm:$0xf] %v1691
    %1820 = vst [vmem:[%s3 + $0x64] sm:$0xf] %v1692
    %1821 = vst [vmem:[%s3 + $0x68] sm:$0xf] %v1693
    %1822 = vst [vmem:[%s3 + $0x6c] sm:$0xf] %v1694
    %1823 = vst [vmem:[%s3 + $0x70] sm:$0xf] %v1695
    %1824 = vst [vmem:[%s3 + $0x74] sm:$0xf] %v1696
    %1825 = vst [vmem:[%s3 + $0x78] sm:$0xf] %v1697
    %1826 = vst [vmem:[%s3 + $0x7c] sm:$0xf] %v1698
    %1827 = vst [vmem:[%s3 + $0x80] sm:$0xf] %v1699
    %1828 = vst [vmem:[%s3 + $0x84] sm:$0xf] %v1700
    %1829 = vst [vmem:[%s3 + $0x88] sm:$0xf] %v1701
    %1830 = vst [vmem:[%s3 + $0x8c] sm:$0xf] %v1702
    %1831 = vst [vmem:[%s3 + $0x90] sm:$0xf] %v1703
    %1832 = vst [vmem:[%s3 + $0x94] sm:$0xf] %v1704
    %1833 = vst [vmem:[%s3 + $0x98] sm:$0xf] %v1705
    %1834 = vst [vmem:[%s3 + $0x9c] sm:$0xf] %v1706
    %1835 = vst [vmem:[%s3 + $0xa0] sm:$0xf] %v1707
    %1836 = vst [vmem:[%s3 + $0xa4] sm:$0xf] %v1708
    %1837 = vst [vmem:[%s3 + $0xa8] sm:$0xf] %v1709
    %1838 = vst [vmem:[%s3 + $0xac] sm:$0xf] %v1710
    %1839 = vst [vmem:[%s3 + $0xb0] sm:$0xf] %v1711
    %1840 = vst [vmem:[%s3 + $0xb4] sm:$0xf] %v1712
    %1841 = vst [vmem:[%s3 + $0xb8] sm:$0xf] %v1713
    %1842 = vst [vmem:[%s3 + $0xbc] sm:$0xf] %v1714
    %1843 = vst [vmem:[%s3 + $0xc0] sm:$0xf] %v1715
    %1844 = vst [vmem:[%s3 + $0xc4] sm:$0xf] %v1716
    %1845 = vst [vmem:[%s3 + $0xc8] sm:$0xf] %v1717
    %1846 = vst [vmem:[%s3 + $0xcc] sm:$0xf] %v1718
    %1847 = vst [vmem:[%s3 + $0xd0] sm:$0xf] %v1719
    %1848 = vst [vmem:[%s3 + $0xd4] sm:$0xf] %v1720
    %1849 = vst [vmem:[%s3 + $0xd8] sm:$0xf] %v1721
    %1850 = vst [vmem:[%s3 + $0xdc] sm:$0xf] %v1722
    %1851 = vst [vmem:[%s3 + $0xe0] sm:$0xf] %v1723
    %1852 = vst [vmem:[%s3 + $0xe4] sm:$0xf] %v1724
    %1853 = vst [vmem:[%s3 + $0xe8] sm:$0xf] %v1725
    %1854 = vst [vmem:[%s3 + $0xec] sm:$0xf] %v1726
    %1855 = vst [vmem:[%s3 + $0xf0] sm:$0xf] %v1727
    %1856 = vst [vmem:[%s3 + $0xf4] sm:$0xf] %v1728
    %1857 = vst [vmem:[%s3 + $0xf8] sm:$0xf] %v1729
    %1858 = vst [vmem:[%s3 + $0xfc] sm:$0xf] %v1730
    // Predicated region
    $region22: #{conv_decoder_forward.8} parent=1 // pred_check
      _
    $region23: #{conv_decoder_forward.8} parent=1 // pred_check_branch
      %1860 = sbr.rel (0) target = $region25
    $region24: #{conv_decoder_forward.8} parent=1 // pred_region
      _
    $region25: #{conv_decoder_forward.8} parent=1 // pred_fallthru
      _
    // Predicated region
    $region26: #{conv_decoder_forward.8} parent=1 // pred_check
      _
    $region27: #{conv_decoder_forward.8} parent=1 // pred_check_branch
      %1862 = sbr.rel (0) target = $region29
    $region28: #{conv_decoder_forward.8} parent=1 // pred_region
      _
    $region29: #{conv_decoder_forward.8} parent=1 // pred_fallthru
      _
    %1863 = vsyncpa [#allocation3], 1
    %1864 = vsyncpa [#allocation5], 1

// kernel: conv_decoder_forward.9
$region0: #{conv_decoder_forward.9}
  #allocation0 [shape = 'u32[]', space=smem, size = 0x4, offset = 0x4, fixed_abs, tag = 'smem constant byte address 0x4 - core index']
  #allocation1 [shape = 'u32[144,128]{1,0:T(1,128)}', space=vmem, size = 0x12000, scoped, tag = 'internal scratch']
  %s0 = inlined_call_operand.vmem [shape: bf16[2048,288], index: 0, kind: input, shape index: {}]
  %s1 = inlined_call_operand.vmem [shape: bf16[288,12], index: 1, kind: input, shape index: {}]
  %s2 = inlined_call_operand.vmem [shape: f32[1,12], index: 2, kind: input, shape index: {}]
  %s3 = inlined_call_operand.vmem [shape: f32[2048,12], index: 3, kind: output, shape index: {}]
  %s4 = sld [smem:[#allocation0]]
  $region45: #{conv_decoder_forward.9} parent=0
    _
  %s6 = ssub.s32 1, %s4
  %s7 = scalar_select 0, %s6, %s4
  loop: start=0, step=1, limit=4
  $region2: #{conv_decoder_forward.9} parent=0 // loop_pre_header
    _
  $region3: #{conv_decoder_forward.9} parent=0 // loop_header
    %s9 = sphi 0, %s13
    %p10 = scmp.ge.s32.totalorder %s9, 4
    %s19 = sphi 0, %s21
    %s22 = sphi 0, %s19
    %s23 = sphi 0, %s22
    %s39 = sphi 0, %s23
    %s43 = sphi 0, %s43
    %s45 = sphi 0, %s43
    %s46 = sphi 0, %s45
    %s60 = sphi 0, %s46
    %s64 = sphi 0, %s64
    %s66 = sphi 0, %s64
    %s67 = sphi 0, %s66
    %s81 = sphi 0, %s67
    %s87 = sphi 0, %s89
    %s90 = sphi 0, %s87
    %s91 = sphi 0, %s90
    %s107 = sphi 0, %s91
  $region4: #{conv_decoder_forward.9} parent=0 // loop_header_branch
    %12 = sbr.rel (%p10) target = $region8
  $region5: #{conv_decoder_forward.9} parent=0 // loop_body
    %s14 = ssub.s32 %s9, 1
    %s15 = ssub.s32 %s9, 2
    %s16 = sadd.s32 %s9, 1
    %s17 = ssub.s32 %s9, %s16
    %p18 = scmp.eq.s32.totalorder %s17, 0
    %s20 = sadd.s32 %s19, 1
    %s21 = scalar_select %p18, %s19, %s20
    %p24 = pneg %p18
    %p25 = scmp.eq.s32.totalorder %s9, 1
    %p26 = por %p24, %p25
    %p27 = scmp.ne.s32.totalorder %s19, %s22
    %p28 = scmp.eq.s32.totalorder %s9, 0
    %p29 = por %p27, %p28
    %p30 = scmp.ne.s32.totalorder %s19, %s22
    %p31 = scmp.eq.s32.totalorder %s14, 1
    %p32 = por %p30, %p31
    %p33 = scmp.ne.s32.totalorder %s22, %s23
    %p34 = scmp.eq.s32.totalorder %s14, 0
    %p35 = por %p33, %p34
    %p36 = scmp.ne.s32.totalorder %s22, %s23
    %p37 = scmp.eq.s32.totalorder %s15, 1
    %p38 = por %p36, %p37
    %p40 = scmp.ne.s32.totalorder %s23, %s39
    %p41 = scmp.eq.s32.totalorder %s15, 0
    %p42 = por %p40, %p41
    %s44 = sadd.s32 %s43, 1
    %p47 = scmp.eq.s32.totalorder %s9, 1
    %p48 = scmp.ne.s32.totalorder %s43, %s45
    %p49 = scmp.eq.s32.totalorder %s9, 0
    %p50 = por %p48, %p49
    %p51 = scmp.ne.s32.totalorder %s43, %s45
    %p52 = scmp.eq.s32.totalorder %s14, 1
    %p53 = por %p51, %p52
    %p54 = scmp.ne.s32.totalorder %s45, %s46
    %p55 = scmp.eq.s32.totalorder %s14, 0
    %p56 = por %p54, %p55
    %p57 = scmp.ne.s32.totalorder %s45, %s46
    %p58 = scmp.eq.s32.totalorder %s15, 1
    %p59 = por %p57, %p58
    %p61 = scmp.ne.s32.totalorder %s46, %s60
    %p62 = scmp.eq.s32.totalorder %s15, 0
    %p63 = por %p61, %p62
    %s65 = sadd.s32 %s64, 1
    %p68 = scmp.eq.s32.totalorder %s9, 1
    %p69 = scmp.ne.s32.totalorder %s64, %s66
    %p70 = scmp.eq.s32.totalorder %s9, 0
    %p71 = por %p69, %p70
    %p72 = scmp.ne.s32.totalorder %s64, %s66
    %p73 = scmp.eq.s32.totalorder %s14, 1
    %p74 = por %p72, %p73
    %p75 = scmp.ne.s32.totalorder %s66, %s67
    %p76 = scmp.eq.s32.totalorder %s14, 0
    %p77 = por %p75, %p76
    %p78 = scmp.ne.s32.totalorder %s66, %s67
    %p79 = scmp.eq.s32.totalorder %s15, 1
    %p80 = por %p78, %p79
    %p82 = scmp.ne.s32.totalorder %s67, %s81
    %p83 = scmp.eq.s32.totalorder %s15, 0
    %p84 = por %p82, %p83
    %s85 = ssub.s32 %s9, %s16
    %p86 = scmp.eq.s32.totalorder %s85, 0
    %s88 = sadd.s32 %s87, 1
    %s89 = scalar_select %p86, %s87, %s88
    %p92 = pneg %p86
    %p93 = scmp.eq.s32.totalorder %s9, 1
    %p94 = por %p92, %p93
    %p95 = scmp.ne.s32.totalorder %s87, %s90
    %p96 = scmp.eq.s32.totalorder %s9, 0
    %p97 = por %p95, %p96
    %p98 = scmp.ne.s32.totalorder %s87, %s90
    %p99 = scmp.eq.s32.totalorder %s14, 1
    %p100 = por %p98, %p99
    %p101 = scmp.ne.s32.totalorder %s90, %s91
    %p102 = scmp.eq.s32.totalorder %s14, 0
    %p103 = por %p101, %p102
    %p104 = scmp.ne.s32.totalorder %s90, %s91
    %p105 = scmp.eq.s32.totalorder %s15, 1
    %p106 = por %p104, %p105
    %p108 = scmp.ne.s32.totalorder %s91, %s107
    %p109 = scmp.eq.s32.totalorder %s15, 0
    %p110 = por %p108, %p109
    %p111 = scmp.le.s32.totalorder 1, %s9
    %p112 = scmp.lt.s32.totalorder %s9, 3
    %p113 = pnand %p111, %p112
    %p114 = pneg %p113
    // Predicated region
    $region9: #{conv_decoder_forward.9} parent=5 // pred_check
      _
    $region10: #{conv_decoder_forward.9} parent=5 // pred_check_branch
      %116 = sbr.rel (%p113) target = $region12
    $region11: #{conv_decoder_forward.9} parent=5 // pred_region
      %s117 = ssub.s32 %s9, 1
      // Predicated region
      $region13: #{conv_decoder_forward.9} parent=11 // pred_check
        %p118 = pneg %p56
      $region14: #{conv_decoder_forward.9} parent=11 // pred_check_branch
        %120 = sbr.rel (%p118) target = $region16
      $region15: #{conv_decoder_forward.9} parent=11 // pred_region
        _
      $region16: #{conv_decoder_forward.9} parent=11 // pred_fallthru
        _
      // Predicated region
      $region17: #{conv_decoder_forward.9} parent=11 // pred_check
        %p121 = pneg %p77
      $region18: #{conv_decoder_forward.9} parent=11 // pred_check_branch
        %123 = sbr.rel (%p121) target = $region20
      $region19: #{conv_decoder_forward.9} parent=11 // pred_region
        _
      $region20: #{conv_decoder_forward.9} parent=11 // pred_fallthru
        _
    $region12: #{conv_decoder_forward.9} parent=5 // pred_fallthru
      _
    %p124 = scmp.lt.s32.totalorder %s9, 2
    // Predicated region
    $region21: #{conv_decoder_forward.9} parent=5 // pred_check
      %p125 = pneg %p124
    $region22: #{conv_decoder_forward.9} parent=5 // pred_check_branch
      %127 = sbr.rel (%p125) target = $region24
    $region23: #{conv_decoder_forward.9} parent=5 // pred_region
      // Predicated region
      $region25: #{conv_decoder_forward.9} parent=23 // pred_check
        %p128 = pneg %p29
      $region26: #{conv_decoder_forward.9} parent=23 // pred_check_branch
        %130 = sbr.rel (%p128) target = $region28
      $region27: #{conv_decoder_forward.9} parent=23 // pred_region
        %s131 = smul.u32 128, %s9
        %p132 = scmp.lt.s32.totalorder %s131, 255
        %s133 = scalar_select %p132, %s131, 255
        %s134 = smul.addr %s133, 3
        %s135 = smul.addr %s134, 4
        %s136 = scalar_lea.vmem %s0, %s135
        %s137 = smul.u32 128, %s9
      $region28: #{conv_decoder_forward.9} parent=23 // pred_fallthru
        _
    $region24: #{conv_decoder_forward.9} parent=5 // pred_fallthru
      _
    %p138 = scmp.le.s32.totalorder 1, %s9
    %p139 = scmp.lt.s32.totalorder %s9, 3
    %p140 = pnand %p138, %p139
    %p141 = pneg %p140
    // Predicated region
    $region29: #{conv_decoder_forward.9} parent=5 // pred_check
      _
    $region30: #{conv_decoder_forward.9} parent=5 // pred_check_branch
      %143 = sbr.rel (%p140) target = $region32
    $region31: #{conv_decoder_forward.9} parent=5 // pred_region
      %s144 = ssub.s32 %s9, 1
      %s145 = smul.u32 128, %s14
      %p146 = scmp.lt.s32.totalorder %s145, 255
      %s147 = scalar_select %p146, %s145, 255
      %s148 = smul.addr %s147, 3
      %s149 = smul.addr %s148, 4
      %s150 = scalar_lea.vmem %s0, %s149
      %p151 = pneg %p35
      %p152 = pneg %p32
      %p153 = pneg %p56
      %p154 = pneg %p53
      %p155 = pneg %p77
      %p156 = pneg %p74
      %p157 = pneg %p103
      %p158 = pneg %p100
      %s159 = smul.u32 128, %s14
      %p160 = scmp.lt.s32.totalorder %s159, 255
      %s161 = scalar_select %p160, %s159, 255
      %s162 = smul.addr %s161, 8
      %s163 = scalar_lea.vmem %s3, %s162
      %s164 = smul.u32 128, %s14
      %p165 = scmp.lt.s32.totalorder %s164, 255
      %s166 = scalar_select %p165, %s164, 255
      %s167 = smul.addr %s166, 3
      %s168 = smul.addr %s167, 4
      %s169 = scalar_lea.vmem %s0, %s168
      %s170 = smul.u32 128, %s14
      %s171 = smul.u32 128, %s14
      %p172 = scmp.lt.s32.totalorder %s171, 255
      %s173 = scalar_select %p172, %s171, 255
      %s174 = smul.addr %s173, 8
      %s175 = scalar_lea.vmem %s3, %s174
      %s176 = smul.u32 128, %s14
      %v178 = vld [vmem:[%s169] sm:$0xff]
      %v179 = vld [vmem:[%s169 + $0x8] sm:$0xf]
      %v180 = vld [vmem:[%s169 + $0xc] sm:$0xff]
      %v181 = vld [vmem:[%s169 + $0x14] sm:$0xf]
      %v182 = vld [vmem:[%s169 + $0x18] sm:$0xff]
      %v183 = vld [vmem:[%s169 + $0x20] sm:$0xf]
      %v184 = vld [vmem:[%s169 + $0x24] sm:$0xff]
      %v185 = vld [vmem:[%s169 + $0x2c] sm:$0xf]
      %v186 = vld [vmem:[%s169 + $0x30] sm:$0xff]
      %v187 = vld [vmem:[%s169 + $0x38] sm:$0xf]
      %v188 = vld [vmem:[%s169 + $0x3c] sm:$0xff]
      %v189 = vld [vmem:[%s169 + $0x44] sm:$0xf]
      %v190 = vld [vmem:[%s169 + $0x48] sm:$0xff]
      %v191 = vld [vmem:[%s169 + $0x50] sm:$0xf]
      %v192 = vld [vmem:[%s169 + $0x54] sm:$0xff]
      %v193 = vld [vmem:[%s169 + $0x5c] sm:$0xf]
      %v194 = vld [vmem:[%s169 + $0x60] sm:$0xff]
      %v195 = vld [vmem:[%s169 + $0x68] sm:$0xf]
      %v196 = vld [vmem:[%s169 + $0x6c] sm:$0xff]
      %v197 = vld [vmem:[%s169 + $0x74] sm:$0xf]
      %v198 = vld [vmem:[%s169 + $0x78] sm:$0xff]
      %v199 = vld [vmem:[%s169 + $0x80] sm:$0xf]
      %v200 = vld [vmem:[%s169 + $0x84] sm:$0xff]
      %v201 = vld [vmem:[%s169 + $0x8c] sm:$0xf]
      %v202 = vld [vmem:[%s169 + $0x90] sm:$0xff]
      %v203 = vld [vmem:[%s169 + $0x98] sm:$0xf]
      %v204 = vld [vmem:[%s169 + $0x9c] sm:$0xff]
      %v205 = vld [vmem:[%s169 + $0xa4] sm:$0xf]
      %v206 = vld [vmem:[%s169 + $0xa8] sm:$0xff]
      %v207 = vld [vmem:[%s169 + $0xb0] sm:$0xf]
      %v208 = vld [vmem:[%s169 + $0xb4] sm:$0xff]
      %v209 = vld [vmem:[%s169 + $0xbc] sm:$0xf]
      %v210 = vld [vmem:[%s169 + $0xc0] sm:$0xff]
      %v211 = vld [vmem:[%s169 + $0xc8] sm:$0xf]
      %v212 = vld [vmem:[%s169 + $0xcc] sm:$0xff]
      %v213 = vld [vmem:[%s169 + $0xd4] sm:$0xf]
      %v214 = vld [vmem:[%s169 + $0xd8] sm:$0xff]
      %v215 = vld [vmem:[%s169 + $0xe0] sm:$0xf]
      %v216 = vld [vmem:[%s169 + $0xe4] sm:$0xff]
      %v217 = vld [vmem:[%s169 + $0xec] sm:$0xf]
      %v218 = vld [vmem:[%s169 + $0xf0] sm:$0xff]
      %v219 = vld [vmem:[%s169 + $0xf8] sm:$0xf]
      %v220 = vld [vmem:[%s169 + $0xfc] sm:$0xff]
      %v221 = vld [vmem:[%s169 + $0x104] sm:$0xf]
      %v222 = vld [vmem:[%s169 + $0x108] sm:$0xff]
      %v223 = vld [vmem:[%s169 + $0x110] sm:$0xf]
      %v224 = vld [vmem:[%s169 + $0x114] sm:$0xff]
      %v225 = vld [vmem:[%s169 + $0x11c] sm:$0xf]
      %v226 = vld [vmem:[%s169 + $0x120] sm:$0xff]
      %v227 = vld [vmem:[%s169 + $0x128] sm:$0xf]
      %v228 = vld [vmem:[%s169 + $0x12c] sm:$0xff]
      %v229 = vld [vmem:[%s169 + $0x134] sm:$0xf]
      %v230 = vld [vmem:[%s169 + $0x138] sm:$0xff]
      %v231 = vld [vmem:[%s169 + $0x140] sm:$0xf]
      %v232 = vld [vmem:[%s169 + $0x144] sm:$0xff]
      %v233 = vld [vmem:[%s169 + $0x14c] sm:$0xf]
      %v234 = vld [vmem:[%s169 + $0x150] sm:$0xff]
      %v235 = vld [vmem:[%s169 + $0x158] sm:$0xf]
      %v236 = vld [vmem:[%s169 + $0x15c] sm:$0xff]
      %v237 = vld [vmem:[%s169 + $0x164] sm:$0xf]
      %v238 = vld [vmem:[%s169 + $0x168] sm:$0xff]
      %v239 = vld [vmem:[%s169 + $0x170] sm:$0xf]
      %v240 = vld [vmem:[%s169 + $0x174] sm:$0xff]
      %v241 = vld [vmem:[%s169 + $0x17c] sm:$0xf]
      %v242 = vld [vmem:[%s169 + $0x180] sm:$0xff]
      %v243 = vld [vmem:[%s169 + $0x188] sm:$0xf]
      %v244 = vld [vmem:[%s169 + $0x18c] sm:$0xff]
      %v245 = vld [vmem:[%s169 + $0x194] sm:$0xf]
      %v246 = vld [vmem:[%s169 + $0x198] sm:$0xff]
      %v247 = vld [vmem:[%s169 + $0x1a0] sm:$0xf]
      %v248 = vld [vmem:[%s169 + $0x1a4] sm:$0xff]
      %v249 = vld [vmem:[%s169 + $0x1ac] sm:$0xf]
      %v250 = vld [vmem:[%s169 + $0x1b0] sm:$0xff]
      %v251 = vld [vmem:[%s169 + $0x1b8] sm:$0xf]
      %v252 = vld [vmem:[%s169 + $0x1bc] sm:$0xff]
      %v253 = vld [vmem:[%s169 + $0x1c4] sm:$0xf]
      %v254 = vld [vmem:[%s169 + $0x1c8] sm:$0xff]
      %v255 = vld [vmem:[%s169 + $0x1d0] sm:$0xf]
      %v256 = vld [vmem:[%s169 + $0x1d4] sm:$0xff]
      %v257 = vld [vmem:[%s169 + $0x1dc] sm:$0xf]
      %v258 = vld [vmem:[%s169 + $0x1e0] sm:$0xff]
      %v259 = vld [vmem:[%s169 + $0x1e8] sm:$0xf]
      %v260 = vld [vmem:[%s169 + $0x1ec] sm:$0xff]
      %v261 = vld [vmem:[%s169 + $0x1f4] sm:$0xf]
      %v262 = vld [vmem:[%s169 + $0x1f8] sm:$0xff]
      %v263 = vld [vmem:[%s169 + $0x200] sm:$0xf]
      %v264 = vld [vmem:[%s169 + $0x204] sm:$0xff]
      %v265 = vld [vmem:[%s169 + $0x20c] sm:$0xf]
      %v266 = vld [vmem:[%s169 + $0x210] sm:$0xff]
      %v267 = vld [vmem:[%s169 + $0x218] sm:$0xf]
      %v268 = vld [vmem:[%s169 + $0x21c] sm:$0xff]
      %v269 = vld [vmem:[%s169 + $0x224] sm:$0xf]
      %v270 = vld [vmem:[%s169 + $0x228] sm:$0xff]
      %v271 = vld [vmem:[%s169 + $0x230] sm:$0xf]
      %v272 = vld [vmem:[%s169 + $0x234] sm:$0xff]
      %v273 = vld [vmem:[%s169 + $0x23c] sm:$0xf]
      %v274 = vld [vmem:[%s169 + $0x240] sm:$0xff]
      %v275 = vld [vmem:[%s169 + $0x248] sm:$0xf]
      %v276 = vld [vmem:[%s169 + $0x24c] sm:$0xff]
      %v277 = vld [vmem:[%s169 + $0x254] sm:$0xf]
      %v278 = vld [vmem:[%s169 + $0x258] sm:$0xff]
      %v279 = vld [vmem:[%s169 + $0x260] sm:$0xf]
      %v280 = vld [vmem:[%s169 + $0x264] sm:$0xff]
      %v281 = vld [vmem:[%s169 + $0x26c] sm:$0xf]
      %v282 = vld [vmem:[%s169 + $0x270] sm:$0xff]
      %v283 = vld [vmem:[%s169 + $0x278] sm:$0xf]
      %v284 = vld [vmem:[%s169 + $0x27c] sm:$0xff]
      %v285 = vld [vmem:[%s169 + $0x284] sm:$0xf]
      %v286 = vld [vmem:[%s169 + $0x288] sm:$0xff]
      %v287 = vld [vmem:[%s169 + $0x290] sm:$0xf]
      %v288 = vld [vmem:[%s169 + $0x294] sm:$0xff]
      %v289 = vld [vmem:[%s169 + $0x29c] sm:$0xf]
      %v290 = vld [vmem:[%s169 + $0x2a0] sm:$0xff]
      %v291 = vld [vmem:[%s169 + $0x2a8] sm:$0xf]
      %v292 = vld [vmem:[%s169 + $0x2ac] sm:$0xff]
      %v293 = vld [vmem:[%s169 + $0x2b4] sm:$0xf]
      %v294 = vld [vmem:[%s169 + $0x2b8] sm:$0xff]
      %v295 = vld [vmem:[%s169 + $0x2c0] sm:$0xf]
      %v296 = vld [vmem:[%s169 + $0x2c4] sm:$0xff]
      %v297 = vld [vmem:[%s169 + $0x2cc] sm:$0xf]
      %v298 = vld [vmem:[%s169 + $0x2d0] sm:$0xff]
      %v299 = vld [vmem:[%s169 + $0x2d8] sm:$0xf]
      %v300 = vld [vmem:[%s169 + $0x2dc] sm:$0xff]
      %v301 = vld [vmem:[%s169 + $0x2e4] sm:$0xf]
      %v302 = vld [vmem:[%s169 + $0x2e8] sm:$0xff]
      %v303 = vld [vmem:[%s169 + $0x2f0] sm:$0xf]
      %v304 = vld [vmem:[%s169 + $0x2f4] sm:$0xff]
      %v305 = vld [vmem:[%s169 + $0x2fc] sm:$0xf]
      %v306 = vld [vmem:[%s169 + $0x300] sm:$0xff]
      %v307 = vld [vmem:[%s169 + $0x308] sm:$0xf]
      %v308 = vld [vmem:[%s169 + $0x30c] sm:$0xff]
      %v309 = vld [vmem:[%s169 + $0x314] sm:$0xf]
      %v310 = vld [vmem:[%s169 + $0x318] sm:$0xff]
      %v311 = vld [vmem:[%s169 + $0x320] sm:$0xf]
      %v312 = vld [vmem:[%s169 + $0x324] sm:$0xff]
      %v313 = vld [vmem:[%s169 + $0x32c] sm:$0xf]
      %v314 = vld [vmem:[%s169 + $0x330] sm:$0xff]
      %v315 = vld [vmem:[%s169 + $0x338] sm:$0xf]
      %v316 = vld [vmem:[%s169 + $0x33c] sm:$0xff]
      %v317 = vld [vmem:[%s169 + $0x344] sm:$0xf]
      %v318 = vld [vmem:[%s169 + $0x348] sm:$0xff]
      %v319 = vld [vmem:[%s169 + $0x350] sm:$0xf]
      %v320 = vld [vmem:[%s169 + $0x354] sm:$0xff]
      %v321 = vld [vmem:[%s169 + $0x35c] sm:$0xf]
      %v322 = vld [vmem:[%s169 + $0x360] sm:$0xff]
      %v323 = vld [vmem:[%s169 + $0x368] sm:$0xf]
      %v324 = vld [vmem:[%s169 + $0x36c] sm:$0xff]
      %v325 = vld [vmem:[%s169 + $0x374] sm:$0xf]
      %v326 = vld [vmem:[%s169 + $0x378] sm:$0xff]
      %v327 = vld [vmem:[%s169 + $0x380] sm:$0xf]
      %v328 = vld [vmem:[%s169 + $0x384] sm:$0xff]
      %v329 = vld [vmem:[%s169 + $0x38c] sm:$0xf]
      %v330 = vld [vmem:[%s169 + $0x390] sm:$0xff]
      %v331 = vld [vmem:[%s169 + $0x398] sm:$0xf]
      %v332 = vld [vmem:[%s169 + $0x39c] sm:$0xff]
      %v333 = vld [vmem:[%s169 + $0x3a4] sm:$0xf]
      %v334 = vld [vmem:[%s169 + $0x3a8] sm:$0xff]
      %v335 = vld [vmem:[%s169 + $0x3b0] sm:$0xf]
      %v336 = vld [vmem:[%s169 + $0x3b4] sm:$0xff]
      %v337 = vld [vmem:[%s169 + $0x3bc] sm:$0xf]
      %v338 = vld [vmem:[%s169 + $0x3c0] sm:$0xff]
      %v339 = vld [vmem:[%s169 + $0x3c8] sm:$0xf]
      %v340 = vld [vmem:[%s169 + $0x3cc] sm:$0xff]
      %v341 = vld [vmem:[%s169 + $0x3d4] sm:$0xf]
      %v342 = vld [vmem:[%s169 + $0x3d8] sm:$0xff]
      %v343 = vld [vmem:[%s169 + $0x3e0] sm:$0xf]
      %v344 = vld [vmem:[%s169 + $0x3e4] sm:$0xff]
      %v345 = vld [vmem:[%s169 + $0x3ec] sm:$0xf]
      %v346 = vld [vmem:[%s169 + $0x3f0] sm:$0xff]
      %v347 = vld [vmem:[%s169 + $0x3f8] sm:$0xf]
      %v348 = vld [vmem:[%s169 + $0x3fc] sm:$0xff]
      %v349 = vld [vmem:[%s169 + $0x404] sm:$0xf]
      %v350 = vld [vmem:[%s169 + $0x408] sm:$0xff]
      %v351 = vld [vmem:[%s169 + $0x410] sm:$0xf]
      %v352 = vld [vmem:[%s169 + $0x414] sm:$0xff]
      %v353 = vld [vmem:[%s169 + $0x41c] sm:$0xf]
      %v354 = vld [vmem:[%s169 + $0x420] sm:$0xff]
      %v355 = vld [vmem:[%s169 + $0x428] sm:$0xf]
      %v356 = vld [vmem:[%s169 + $0x42c] sm:$0xff]
      %v357 = vld [vmem:[%s169 + $0x434] sm:$0xf]
      %v358 = vld [vmem:[%s169 + $0x438] sm:$0xff]
      %v359 = vld [vmem:[%s169 + $0x440] sm:$0xf]
      %v360 = vld [vmem:[%s169 + $0x444] sm:$0xff]
      %v361 = vld [vmem:[%s169 + $0x44c] sm:$0xf]
      %v362 = vld [vmem:[%s169 + $0x450] sm:$0xff]
      %v363 = vld [vmem:[%s169 + $0x458] sm:$0xf]
      %v364 = vld [vmem:[%s169 + $0x45c] sm:$0xff]
      %v365 = vld [vmem:[%s169 + $0x464] sm:$0xf]
      %v366 = vld [vmem:[%s169 + $0x468] sm:$0xff]
      %v367 = vld [vmem:[%s169 + $0x470] sm:$0xf]
      %v368 = vld [vmem:[%s169 + $0x474] sm:$0xff]
      %v369 = vld [vmem:[%s169 + $0x47c] sm:$0xf]
      %v370 = vld [vmem:[%s169 + $0x480] sm:$0xff]
      %v371 = vld [vmem:[%s169 + $0x488] sm:$0xf]
      %v372 = vld [vmem:[%s169 + $0x48c] sm:$0xff]
      %v373 = vld [vmem:[%s169 + $0x494] sm:$0xf]
      %v374 = vld [vmem:[%s169 + $0x498] sm:$0xff]
      %v375 = vld [vmem:[%s169 + $0x4a0] sm:$0xf]
      %v376 = vld [vmem:[%s169 + $0x4a4] sm:$0xff]
      %v377 = vld [vmem:[%s169 + $0x4ac] sm:$0xf]
      %v378 = vld [vmem:[%s169 + $0x4b0] sm:$0xff]
      %v379 = vld [vmem:[%s169 + $0x4b8] sm:$0xf]
      %v380 = vld [vmem:[%s169 + $0x4bc] sm:$0xff]
      %v381 = vld [vmem:[%s169 + $0x4c4] sm:$0xf]
      %v382 = vld [vmem:[%s169 + $0x4c8] sm:$0xff]
      %v383 = vld [vmem:[%s169 + $0x4d0] sm:$0xf]
      %v384 = vld [vmem:[%s169 + $0x4d4] sm:$0xff]
      %v385 = vld [vmem:[%s169 + $0x4dc] sm:$0xf]
      %v386 = vld [vmem:[%s169 + $0x4e0] sm:$0xff]
      %v387 = vld [vmem:[%s169 + $0x4e8] sm:$0xf]
      %v388 = vld [vmem:[%s169 + $0x4ec] sm:$0xff]
      %v389 = vld [vmem:[%s169 + $0x4f4] sm:$0xf]
      %v390 = vld [vmem:[%s169 + $0x4f8] sm:$0xff]
      %v391 = vld [vmem:[%s169 + $0x500] sm:$0xf]
      %v392 = vld [vmem:[%s169 + $0x504] sm:$0xff]
      %v393 = vld [vmem:[%s169 + $0x50c] sm:$0xf]
      %v394 = vld [vmem:[%s169 + $0x510] sm:$0xff]
      %v395 = vld [vmem:[%s169 + $0x518] sm:$0xf]
      %v396 = vld [vmem:[%s169 + $0x51c] sm:$0xff]
      %v397 = vld [vmem:[%s169 + $0x524] sm:$0xf]
      %v398 = vld [vmem:[%s169 + $0x528] sm:$0xff]
      %v399 = vld [vmem:[%s169 + $0x530] sm:$0xf]
      %v400 = vld [vmem:[%s169 + $0x534] sm:$0xff]
      %v401 = vld [vmem:[%s169 + $0x53c] sm:$0xf]
      %v402 = vld [vmem:[%s169 + $0x540] sm:$0xff]
      %v403 = vld [vmem:[%s169 + $0x548] sm:$0xf]
      %v404 = vld [vmem:[%s169 + $0x54c] sm:$0xff]
      %v405 = vld [vmem:[%s169 + $0x554] sm:$0xf]
      %v406 = vld [vmem:[%s169 + $0x558] sm:$0xff]
      %v407 = vld [vmem:[%s169 + $0x560] sm:$0xf]
      %v408 = vld [vmem:[%s169 + $0x564] sm:$0xff]
      %v409 = vld [vmem:[%s169 + $0x56c] sm:$0xf]
      %v410 = vld [vmem:[%s169 + $0x570] sm:$0xff]
      %v411 = vld [vmem:[%s169 + $0x578] sm:$0xf]
      %v412 = vld [vmem:[%s169 + $0x57c] sm:$0xff]
      %v413 = vld [vmem:[%s169 + $0x584] sm:$0xf]
      %v414 = vld [vmem:[%s169 + $0x588] sm:$0xff]
      %v415 = vld [vmem:[%s169 + $0x590] sm:$0xf]
      %v416 = vld [vmem:[%s169 + $0x594] sm:$0xff]
      %v417 = vld [vmem:[%s169 + $0x59c] sm:$0xf]
      %v418 = vld [vmem:[%s169 + $0x5a0] sm:$0xff]
      %v419 = vld [vmem:[%s169 + $0x5a8] sm:$0xf]
      %v420 = vld [vmem:[%s169 + $0x5ac] sm:$0xff]
      %v421 = vld [vmem:[%s169 + $0x5b4] sm:$0xf]
      %v422 = vld [vmem:[%s169 + $0x5b8] sm:$0xff]
      %v423 = vld [vmem:[%s169 + $0x5c0] sm:$0xf]
      %v424 = vld [vmem:[%s169 + $0x5c4] sm:$0xff]
      %v425 = vld [vmem:[%s169 + $0x5cc] sm:$0xf]
      %v426 = vld [vmem:[%s169 + $0x5d0] sm:$0xff]
      %v427 = vld [vmem:[%s169 + $0x5d8] sm:$0xf]
      %v428 = vld [vmem:[%s169 + $0x5dc] sm:$0xff]
      %v429 = vld [vmem:[%s169 + $0x5e4] sm:$0xf]
      %v430 = vld [vmem:[%s169 + $0x5e8] sm:$0xff]
      %v431 = vld [vmem:[%s169 + $0x5f0] sm:$0xf]
      %v432 = vld [vmem:[%s169 + $0x5f4] sm:$0xff]
      %v433 = vld [vmem:[%s169 + $0x5fc] sm:$0xf]
      %v434 = vld [vmem:[%s1] sm:$0xf]
      %v435 = vld [vmem:[%s1 + $0x4] sm:$0xf]
      %v436 = vld [vmem:[%s1 + $0x8] sm:$0xf]
      %v437 = vld [vmem:[%s1 + $0xc] sm:$0xf]
      %v438 = vld [vmem:[%s1 + $0x10] sm:$0xf]
      %v439 = vld [vmem:[%s1 + $0x14] sm:$0xf]
      %v440 = vld [vmem:[%s1 + $0x18] sm:$0xf]
      %v441 = vld [vmem:[%s1 + $0x1c] sm:$0xf]
      %v442 = vld [vmem:[%s1 + $0x20] sm:$0xf]
      %v443 = vld [vmem:[%s1 + $0x24] sm:$0xf]
      %v444 = vld [vmem:[%s1 + $0x28] sm:$0xf]
      %v445 = vld [vmem:[%s1 + $0x2c] sm:$0xf]
      %v446 = vld [vmem:[%s1 + $0x30] sm:$0xf]
      %v447 = vld [vmem:[%s1 + $0x34] sm:$0xf]
      %v448 = vld [vmem:[%s1 + $0x38] sm:$0xf]
      %v449 = vld [vmem:[%s1 + $0x3c] sm:$0xf]
      %v450 = vld [vmem:[%s1 + $0x40] sm:$0xf]
      %v451 = vld [vmem:[%s1 + $0x44] sm:$0xf]
      %v452 = vld [vmem:[%s1 + $0x48] sm:$0xf]
      %v453 = vld [vmem:[%s1 + $0x4c] sm:$0xf]
      %v454 = vld [vmem:[%s1 + $0x50] sm:$0xf]
      %v455 = vld [vmem:[%s1 + $0x54] sm:$0xf]
      %v456 = vld [vmem:[%s1 + $0x58] sm:$0xf]
      %v457 = vld [vmem:[%s1 + $0x5c] sm:$0xf]
      %v458 = vld [vmem:[%s1 + $0x60] sm:$0xf]
      %v459 = vld [vmem:[%s1 + $0x64] sm:$0xf]
      %v460 = vld [vmem:[%s1 + $0x68] sm:$0xf]
      %v461 = vld [vmem:[%s1 + $0x6c] sm:$0xf]
      %v462 = vld [vmem:[%s1 + $0x70] sm:$0xf]
      %v463 = vld [vmem:[%s1 + $0x74] sm:$0xf]
      %v464 = vld [vmem:[%s1 + $0x78] sm:$0xf]
      %v465 = vld [vmem:[%s1 + $0x7c] sm:$0xf]
      %v466 = vld [vmem:[%s1 + $0x80] sm:$0xf]
      %v467 = vld [vmem:[%s1 + $0x84] sm:$0xf]
      %v468 = vld [vmem:[%s1 + $0x88] sm:$0xf]
      %v469 = vld [vmem:[%s1 + $0x8c] sm:$0xf]
      %v470 = vld [vmem:[%s2] sm:$0x1]
      %v472 = vlaneseq
      %v473 = vshrl.u32 %v472, 7
      %v474 = vsub.s32 0, %v473
      %v475 = vrot.slane %v470, %v474
      %v733 = vunpack.c.l.b16 %v178
      %v734 = vunpack.c.h.b16 %v178
      %v735 = vunpack.c.l.b16 %v179
      %v736 = vunpack.c.l.b16 %v180
      %v737 = vunpack.c.h.b16 %v180
      %v738 = vunpack.c.l.b16 %v181
      %v739 = vunpack.c.l.b16 %v182
      %v740 = vunpack.c.h.b16 %v182
      %v741 = vunpack.c.l.b16 %v183
      %v742 = vunpack.c.l.b16 %v184
      %v743 = vunpack.c.h.b16 %v184
      %v744 = vunpack.c.l.b16 %v185
      %v745 = vunpack.c.l.b16 %v186
      %v746 = vunpack.c.h.b16 %v186
      %v747 = vunpack.c.l.b16 %v187
      %v748 = vunpack.c.l.b16 %v188
      %v749 = vunpack.c.h.b16 %v188
      %v750 = vunpack.c.l.b16 %v189
      %v751 = vunpack.c.l.b16 %v190
      %v752 = vunpack.c.h.b16 %v190
      %v753 = vunpack.c.l.b16 %v191
      %v754 = vunpack.c.l.b16 %v192
      %v755 = vunpack.c.h.b16 %v192
      %v756 = vunpack.c.l.b16 %v193
      %v757 = vunpack.c.l.b16 %v194
      %v758 = vunpack.c.h.b16 %v194
      %v759 = vunpack.c.l.b16 %v195
      %v760 = vunpack.c.l.b16 %v196
      %v761 = vunpack.c.h.b16 %v196
      %v762 = vunpack.c.l.b16 %v197
      %v763 = vunpack.c.l.b16 %v198
      %v764 = vunpack.c.h.b16 %v198
      %v765 = vunpack.c.l.b16 %v199
      %v766 = vunpack.c.l.b16 %v200
      %v767 = vunpack.c.h.b16 %v200
      %v768 = vunpack.c.l.b16 %v201
      %v769 = vunpack.c.l.b16 %v202
      %v770 = vunpack.c.h.b16 %v202
      %v771 = vunpack.c.l.b16 %v203
      %v772 = vunpack.c.l.b16 %v204
      %v773 = vunpack.c.h.b16 %v204
      %v774 = vunpack.c.l.b16 %v205
      %v775 = vunpack.c.l.b16 %v206
      %v776 = vunpack.c.h.b16 %v206
      %v777 = vunpack.c.l.b16 %v207
      %v778 = vunpack.c.l.b16 %v208
      %v779 = vunpack.c.h.b16 %v208
      %v780 = vunpack.c.l.b16 %v209
      %v781 = vunpack.c.l.b16 %v210
      %v782 = vunpack.c.h.b16 %v210
      %v783 = vunpack.c.l.b16 %v211
      %v784 = vunpack.c.l.b16 %v212
      %v785 = vunpack.c.h.b16 %v212
      %v786 = vunpack.c.l.b16 %v213
      %v787 = vunpack.c.l.b16 %v214
      %v788 = vunpack.c.h.b16 %v214
      %v789 = vunpack.c.l.b16 %v215
      %v790 = vunpack.c.l.b16 %v216
      %v791 = vunpack.c.h.b16 %v216
      %v792 = vunpack.c.l.b16 %v217
      %v793 = vunpack.c.l.b16 %v218
      %v794 = vunpack.c.h.b16 %v218
      %v795 = vunpack.c.l.b16 %v219
      %v796 = vunpack.c.l.b16 %v220
      %v797 = vunpack.c.h.b16 %v220
      %v798 = vunpack.c.l.b16 %v221
      %v799 = vunpack.c.l.b16 %v222
      %v800 = vunpack.c.h.b16 %v222
      %v801 = vunpack.c.l.b16 %v223
      %v802 = vunpack.c.l.b16 %v224
      %v803 = vunpack.c.h.b16 %v224
      %v804 = vunpack.c.l.b16 %v225
      %v805 = vunpack.c.l.b16 %v226
      %v806 = vunpack.c.h.b16 %v226
      %v807 = vunpack.c.l.b16 %v227
      %v808 = vunpack.c.l.b16 %v228
      %v809 = vunpack.c.h.b16 %v228
      %v810 = vunpack.c.l.b16 %v229
      %v811 = vunpack.c.l.b16 %v230
      %v812 = vunpack.c.h.b16 %v230
      %v813 = vunpack.c.l.b16 %v231
      %v814 = vunpack.c.l.b16 %v232
      %v815 = vunpack.c.h.b16 %v232
      %v816 = vunpack.c.l.b16 %v233
      %v817 = vunpack.c.l.b16 %v234
      %v818 = vunpack.c.h.b16 %v234
      %v819 = vunpack.c.l.b16 %v235
      %v820 = vunpack.c.l.b16 %v236
      %v821 = vunpack.c.h.b16 %v236
      %v822 = vunpack.c.l.b16 %v237
      %v823 = vunpack.c.l.b16 %v238
      %v824 = vunpack.c.h.b16 %v238
      %v825 = vunpack.c.l.b16 %v239
      %v826 = vunpack.c.l.b16 %v240
      %v827 = vunpack.c.h.b16 %v240
      %v828 = vunpack.c.l.b16 %v241
      %v829 = vunpack.c.l.b16 %v242
      %v830 = vunpack.c.h.b16 %v242
      %v831 = vunpack.c.l.b16 %v243
      %v832 = vunpack.c.l.b16 %v244
      %v833 = vunpack.c.h.b16 %v244
      %v834 = vunpack.c.l.b16 %v245
      %v835 = vunpack.c.l.b16 %v246
      %v836 = vunpack.c.h.b16 %v246
      %v837 = vunpack.c.l.b16 %v247
      %v838 = vunpack.c.l.b16 %v248
      %v839 = vunpack.c.h.b16 %v248
      %v840 = vunpack.c.l.b16 %v249
      %v841 = vunpack.c.l.b16 %v250
      %v842 = vunpack.c.h.b16 %v250
      %v843 = vunpack.c.l.b16 %v251
      %v844 = vunpack.c.l.b16 %v252
      %v845 = vunpack.c.h.b16 %v252
      %v846 = vunpack.c.l.b16 %v253
      %v847 = vunpack.c.l.b16 %v254
      %v848 = vunpack.c.h.b16 %v254
      %v849 = vunpack.c.l.b16 %v255
      %v850 = vunpack.c.l.b16 %v256
      %v851 = vunpack.c.h.b16 %v256
      %v852 = vunpack.c.l.b16 %v257
      %v853 = vunpack.c.l.b16 %v258
      %v854 = vunpack.c.h.b16 %v258
      %v855 = vunpack.c.l.b16 %v259
      %v856 = vunpack.c.l.b16 %v260
      %v857 = vunpack.c.h.b16 %v260
      %v858 = vunpack.c.l.b16 %v261
      %v859 = vunpack.c.l.b16 %v262
      %v860 = vunpack.c.h.b16 %v262
      %v861 = vunpack.c.l.b16 %v263
      %v862 = vunpack.c.l.b16 %v264
      %v863 = vunpack.c.h.b16 %v264
      %v864 = vunpack.c.l.b16 %v265
      %v865 = vunpack.c.l.b16 %v266
      %v866 = vunpack.c.h.b16 %v266
      %v867 = vunpack.c.l.b16 %v267
      %v868 = vunpack.c.l.b16 %v268
      %v869 = vunpack.c.h.b16 %v268
      %v870 = vunpack.c.l.b16 %v269
      %v871 = vunpack.c.l.b16 %v270
      %v872 = vunpack.c.h.b16 %v270
      %v873 = vunpack.c.l.b16 %v271
      %v874 = vunpack.c.l.b16 %v272
      %v875 = vunpack.c.h.b16 %v272
      %v876 = vunpack.c.l.b16 %v273
      %v877 = vunpack.c.l.b16 %v274
      %v878 = vunpack.c.h.b16 %v274
      %v879 = vunpack.c.l.b16 %v275
      %v880 = vunpack.c.l.b16 %v276
      %v881 = vunpack.c.h.b16 %v276
      %v882 = vunpack.c.l.b16 %v277
      %v883 = vunpack.c.l.b16 %v278
      %v884 = vunpack.c.h.b16 %v278
      %v885 = vunpack.c.l.b16 %v279
      %v886 = vunpack.c.l.b16 %v280
      %v887 = vunpack.c.h.b16 %v280
      %v888 = vunpack.c.l.b16 %v281
      %v889 = vunpack.c.l.b16 %v282
      %v890 = vunpack.c.h.b16 %v282
      %v891 = vunpack.c.l.b16 %v283
      %v892 = vunpack.c.l.b16 %v284
      %v893 = vunpack.c.h.b16 %v284
      %v894 = vunpack.c.l.b16 %v285
      %v895 = vunpack.c.l.b16 %v286
      %v896 = vunpack.c.h.b16 %v286
      %v897 = vunpack.c.l.b16 %v287
      %v898 = vunpack.c.l.b16 %v288
      %v899 = vunpack.c.h.b16 %v288
      %v900 = vunpack.c.l.b16 %v289
      %v901 = vunpack.c.l.b16 %v290
      %v902 = vunpack.c.h.b16 %v290
      %v903 = vunpack.c.l.b16 %v291
      %v904 = vunpack.c.l.b16 %v292
      %v905 = vunpack.c.h.b16 %v292
      %v906 = vunpack.c.l.b16 %v293
      %v907 = vunpack.c.l.b16 %v294
      %v908 = vunpack.c.h.b16 %v294
      %v909 = vunpack.c.l.b16 %v295
      %v910 = vunpack.c.l.b16 %v296
      %v911 = vunpack.c.h.b16 %v296
      %v912 = vunpack.c.l.b16 %v297
      %v913 = vunpack.c.l.b16 %v298
      %v914 = vunpack.c.h.b16 %v298
      %v915 = vunpack.c.l.b16 %v299
      %v916 = vunpack.c.l.b16 %v300
      %v917 = vunpack.c.h.b16 %v300
      %v918 = vunpack.c.l.b16 %v301
      %v919 = vunpack.c.l.b16 %v302
      %v920 = vunpack.c.h.b16 %v302
      %v921 = vunpack.c.l.b16 %v303
      %v922 = vunpack.c.l.b16 %v304
      %v923 = vunpack.c.h.b16 %v304
      %v924 = vunpack.c.l.b16 %v305
      %v925 = vunpack.c.l.b16 %v306
      %v926 = vunpack.c.h.b16 %v306
      %v927 = vunpack.c.l.b16 %v307
      %v928 = vunpack.c.l.b16 %v308
      %v929 = vunpack.c.h.b16 %v308
      %v930 = vunpack.c.l.b16 %v309
      %v931 = vunpack.c.l.b16 %v310
      %v932 = vunpack.c.h.b16 %v310
      %v933 = vunpack.c.l.b16 %v311
      %v934 = vunpack.c.l.b16 %v312
      %v935 = vunpack.c.h.b16 %v312
      %v936 = vunpack.c.l.b16 %v313
      %v937 = vunpack.c.l.b16 %v314
      %v938 = vunpack.c.h.b16 %v314
      %v939 = vunpack.c.l.b16 %v315
      %v940 = vunpack.c.l.b16 %v316
      %v941 = vunpack.c.h.b16 %v316
      %v942 = vunpack.c.l.b16 %v317
      %v943 = vunpack.c.l.b16 %v318
      %v944 = vunpack.c.h.b16 %v318
      %v945 = vunpack.c.l.b16 %v319
      %v946 = vunpack.c.l.b16 %v320
      %v947 = vunpack.c.h.b16 %v320
      %v948 = vunpack.c.l.b16 %v321
      %v949 = vunpack.c.l.b16 %v322
      %v950 = vunpack.c.h.b16 %v322
      %v951 = vunpack.c.l.b16 %v323
      %v952 = vunpack.c.l.b16 %v324
      %v953 = vunpack.c.h.b16 %v324
      %v954 = vunpack.c.l.b16 %v325
      %v955 = vunpack.c.l.b16 %v326
      %v956 = vunpack.c.h.b16 %v326
      %v957 = vunpack.c.l.b16 %v327
      %v958 = vunpack.c.l.b16 %v328
      %v959 = vunpack.c.h.b16 %v328
      %v960 = vunpack.c.l.b16 %v329
      %v961 = vunpack.c.l.b16 %v330
      %v962 = vunpack.c.h.b16 %v330
      %v963 = vunpack.c.l.b16 %v331
      %v964 = vunpack.c.l.b16 %v332
      %v965 = vunpack.c.h.b16 %v332
      %v966 = vunpack.c.l.b16 %v333
      %v967 = vunpack.c.l.b16 %v334
      %v968 = vunpack.c.h.b16 %v334
      %v969 = vunpack.c.l.b16 %v335
      %v970 = vunpack.c.l.b16 %v336
      %v971 = vunpack.c.h.b16 %v336
      %v972 = vunpack.c.l.b16 %v337
      %v973 = vunpack.c.l.b16 %v338
      %v974 = vunpack.c.h.b16 %v338
      %v975 = vunpack.c.l.b16 %v339
      %v976 = vunpack.c.l.b16 %v340
      %v977 = vunpack.c.h.b16 %v340
      %v978 = vunpack.c.l.b16 %v341
      %v979 = vunpack.c.l.b16 %v342
      %v980 = vunpack.c.h.b16 %v342
      %v981 = vunpack.c.l.b16 %v343
      %v982 = vunpack.c.l.b16 %v344
      %v983 = vunpack.c.h.b16 %v344
      %v984 = vunpack.c.l.b16 %v345
      %v985 = vunpack.c.l.b16 %v346
      %v986 = vunpack.c.h.b16 %v346
      %v987 = vunpack.c.l.b16 %v347
      %v988 = vunpack.c.l.b16 %v348
      %v989 = vunpack.c.h.b16 %v348
      %v990 = vunpack.c.l.b16 %v349
      %v991 = vunpack.c.l.b16 %v350
      %v992 = vunpack.c.h.b16 %v350
      %v993 = vunpack.c.l.b16 %v351
      %v994 = vunpack.c.l.b16 %v352
      %v995 = vunpack.c.h.b16 %v352
      %v996 = vunpack.c.l.b16 %v353
      %v997 = vunpack.c.l.b16 %v354
      %v998 = vunpack.c.h.b16 %v354
      %v999 = vunpack.c.l.b16 %v355
      %v1000 = vunpack.c.l.b16 %v356
      %v1001 = vunpack.c.h.b16 %v356
      %v1002 = vunpack.c.l.b16 %v357
      %v1003 = vunpack.c.l.b16 %v358
      %v1004 = vunpack.c.h.b16 %v358
      %v1005 = vunpack.c.l.b16 %v359
      %v1006 = vunpack.c.l.b16 %v360
      %v1007 = vunpack.c.h.b16 %v360
      %v1008 = vunpack.c.l.b16 %v361
      %v1009 = vunpack.c.l.b16 %v362
      %v1010 = vunpack.c.h.b16 %v362
      %v1011 = vunpack.c.l.b16 %v363
      %v1012 = vunpack.c.l.b16 %v364
      %v1013 = vunpack.c.h.b16 %v364
      %v1014 = vunpack.c.l.b16 %v365
      %v1015 = vunpack.c.l.b16 %v366
      %v1016 = vunpack.c.h.b16 %v366
      %v1017 = vunpack.c.l.b16 %v367
      %v1018 = vunpack.c.l.b16 %v368
      %v1019 = vunpack.c.h.b16 %v368
      %v1020 = vunpack.c.l.b16 %v369
      %v1021 = vunpack.c.l.b16 %v370
      %v1022 = vunpack.c.h.b16 %v370
      %v1023 = vunpack.c.l.b16 %v371
      %v1024 = vunpack.c.l.b16 %v372
      %v1025 = vunpack.c.h.b16 %v372
      %v1026 = vunpack.c.l.b16 %v373
      %v1027 = vunpack.c.l.b16 %v374
      %v1028 = vunpack.c.h.b16 %v374
      %v1029 = vunpack.c.l.b16 %v375
      %v1030 = vunpack.c.l.b16 %v376
      %v1031 = vunpack.c.h.b16 %v376
      %v1032 = vunpack.c.l.b16 %v377
      %v1033 = vunpack.c.l.b16 %v378
      %v1034 = vunpack.c.h.b16 %v378
      %v1035 = vunpack.c.l.b16 %v379
      %v1036 = vunpack.c.l.b16 %v380
      %v1037 = vunpack.c.h.b16 %v380
      %v1038 = vunpack.c.l.b16 %v381
      %v1039 = vunpack.c.l.b16 %v382
      %v1040 = vunpack.c.h.b16 %v382
      %v1041 = vunpack.c.l.b16 %v383
      %v1042 = vunpack.c.l.b16 %v384
      %v1043 = vunpack.c.h.b16 %v384
      %v1044 = vunpack.c.l.b16 %v385
      %v1045 = vunpack.c.l.b16 %v386
      %v1046 = vunpack.c.h.b16 %v386
      %v1047 = vunpack.c.l.b16 %v387
      %v1048 = vunpack.c.l.b16 %v388
      %v1049 = vunpack.c.h.b16 %v388
      %v1050 = vunpack.c.l.b16 %v389
      %v1051 = vunpack.c.l.b16 %v390
      %v1052 = vunpack.c.h.b16 %v390
      %v1053 = vunpack.c.l.b16 %v391
      %v1054 = vunpack.c.l.b16 %v392
      %v1055 = vunpack.c.h.b16 %v392
      %v1056 = vunpack.c.l.b16 %v393
      %v1057 = vunpack.c.l.b16 %v394
      %v1058 = vunpack.c.h.b16 %v394
      %v1059 = vunpack.c.l.b16 %v395
      %v1060 = vunpack.c.l.b16 %v396
      %v1061 = vunpack.c.h.b16 %v396
      %v1062 = vunpack.c.l.b16 %v397
      %v1063 = vunpack.c.l.b16 %v398
      %v1064 = vunpack.c.h.b16 %v398
      %v1065 = vunpack.c.l.b16 %v399
      %v1066 = vunpack.c.l.b16 %v400
      %v1067 = vunpack.c.h.b16 %v400
      %v1068 = vunpack.c.l.b16 %v401
      %v1069 = vunpack.c.l.b16 %v402
      %v1070 = vunpack.c.h.b16 %v402
      %v1071 = vunpack.c.l.b16 %v403
      %v1072 = vunpack.c.l.b16 %v404
      %v1073 = vunpack.c.h.b16 %v404
      %v1074 = vunpack.c.l.b16 %v405
      %v1075 = vunpack.c.l.b16 %v406
      %v1076 = vunpack.c.h.b16 %v406
      %v1077 = vunpack.c.l.b16 %v407
      %v1078 = vunpack.c.l.b16 %v408
      %v1079 = vunpack.c.h.b16 %v408
      %v1080 = vunpack.c.l.b16 %v409
      %v1081 = vunpack.c.l.b16 %v410
      %v1082 = vunpack.c.h.b16 %v410
      %v1083 = vunpack.c.l.b16 %v411
      %v1084 = vunpack.c.l.b16 %v412
      %v1085 = vunpack.c.h.b16 %v412
      %v1086 = vunpack.c.l.b16 %v413
      %v1087 = vunpack.c.l.b16 %v414
      %v1088 = vunpack.c.h.b16 %v414
      %v1089 = vunpack.c.l.b16 %v415
      %v1090 = vunpack.c.l.b16 %v416
      %v1091 = vunpack.c.h.b16 %v416
      %v1092 = vunpack.c.l.b16 %v417
      %v1093 = vunpack.c.l.b16 %v418
      %v1094 = vunpack.c.h.b16 %v418
      %v1095 = vunpack.c.l.b16 %v419
      %v1096 = vunpack.c.l.b16 %v420
      %v1097 = vunpack.c.h.b16 %v420
      %v1098 = vunpack.c.l.b16 %v421
      %v1099 = vunpack.c.l.b16 %v422
      %v1100 = vunpack.c.h.b16 %v422
      %v1101 = vunpack.c.l.b16 %v423
      %v1102 = vunpack.c.l.b16 %v424
      %v1103 = vunpack.c.h.b16 %v424
      %v1104 = vunpack.c.l.b16 %v425
      %v1105 = vunpack.c.l.b16 %v426
      %v1106 = vunpack.c.h.b16 %v426
      %v1107 = vunpack.c.l.b16 %v427
      %v1108 = vunpack.c.l.b16 %v428
      %v1109 = vunpack.c.h.b16 %v428
      %v1110 = vunpack.c.l.b16 %v429
      %v1111 = vunpack.c.l.b16 %v430
      %v1112 = vunpack.c.h.b16 %v430
      %v1113 = vunpack.c.l.b16 %v431
      %v1114 = vunpack.c.l.b16 %v432
      %v1115 = vunpack.c.h.b16 %v432
      %v1116 = vunpack.c.l.b16 %v433
      %v1117 = vpack.c.b16 %v736, %v733
      %v1118 = vpack.c.b16 %v737, %v734
      %v1119 = vpack.c.b16 %v738, %v735
      %v1120 = vpack.c.b16 %v742, %v739
      %v1121 = vpack.c.b16 %v743, %v740
      %v1122 = vpack.c.b16 %v744, %v741
      %v1123 = vpack.c.b16 %v748, %v745
      %v1124 = vpack.c.b16 %v749, %v746
      %v1125 = vpack.c.b16 %v750, %v747
      %v1126 = vpack.c.b16 %v754, %v751
      %v1127 = vpack.c.b16 %v755, %v752
      %v1128 = vpack.c.b16 %v756, %v753
      %v1129 = vpack.c.b16 %v760, %v757
      %v1130 = vpack.c.b16 %v761, %v758
      %v1131 = vpack.c.b16 %v762, %v759
      %v1132 = vpack.c.b16 %v766, %v763
      %v1133 = vpack.c.b16 %v767, %v764
      %v1134 = vpack.c.b16 %v768, %v765
      %v1135 = vpack.c.b16 %v772, %v769
      %v1136 = vpack.c.b16 %v773, %v770
      %v1137 = vpack.c.b16 %v774, %v771
      %v1138 = vpack.c.b16 %v778, %v775
      %v1139 = vpack.c.b16 %v779, %v776
      %v1140 = vpack.c.b16 %v780, %v777
      %v1141 = vpack.c.b16 %v784, %v781
      %v1142 = vpack.c.b16 %v785, %v782
      %v1143 = vpack.c.b16 %v786, %v783
      %v1144 = vpack.c.b16 %v790, %v787
      %v1145 = vpack.c.b16 %v791, %v788
      %v1146 = vpack.c.b16 %v792, %v789
      %v1147 = vpack.c.b16 %v796, %v793
      %v1148 = vpack.c.b16 %v797, %v794
      %v1149 = vpack.c.b16 %v798, %v795
      %v1150 = vpack.c.b16 %v802, %v799
      %v1151 = vpack.c.b16 %v803, %v800
      %v1152 = vpack.c.b16 %v804, %v801
      %v1153 = vpack.c.b16 %v808, %v805
      %v1154 = vpack.c.b16 %v809, %v806
      %v1155 = vpack.c.b16 %v810, %v807
      %v1156 = vpack.c.b16 %v814, %v811
      %v1157 = vpack.c.b16 %v815, %v812
      %v1158 = vpack.c.b16 %v816, %v813
      %v1159 = vpack.c.b16 %v820, %v817
      %v1160 = vpack.c.b16 %v821, %v818
      %v1161 = vpack.c.b16 %v822, %v819
      %v1162 = vpack.c.b16 %v826, %v823
      %v1163 = vpack.c.b16 %v827, %v824
      %v1164 = vpack.c.b16 %v828, %v825
      %v1165 = vpack.c.b16 %v832, %v829
      %v1166 = vpack.c.b16 %v833, %v830
      %v1167 = vpack.c.b16 %v834, %v831
      %v1168 = vpack.c.b16 %v838, %v835
      %v1169 = vpack.c.b16 %v839, %v836
      %v1170 = vpack.c.b16 %v840, %v837
      %v1171 = vpack.c.b16 %v844, %v841
      %v1172 = vpack.c.b16 %v845, %v842
      %v1173 = vpack.c.b16 %v846, %v843
      %v1174 = vpack.c.b16 %v850, %v847
      %v1175 = vpack.c.b16 %v851, %v848
      %v1176 = vpack.c.b16 %v852, %v849
      %v1177 = vpack.c.b16 %v856, %v853
      %v1178 = vpack.c.b16 %v857, %v854
      %v1179 = vpack.c.b16 %v858, %v855
      %v1180 = vpack.c.b16 %v862, %v859
      %v1181 = vpack.c.b16 %v863, %v860
      %v1182 = vpack.c.b16 %v864, %v861
      %v1183 = vpack.c.b16 %v868, %v865
      %v1184 = vpack.c.b16 %v869, %v866
      %v1185 = vpack.c.b16 %v870, %v867
      %v1186 = vpack.c.b16 %v874, %v871
      %v1187 = vpack.c.b16 %v875, %v872
      %v1188 = vpack.c.b16 %v876, %v873
      %v1189 = vpack.c.b16 %v880, %v877
      %v1190 = vpack.c.b16 %v881, %v878
      %v1191 = vpack.c.b16 %v882, %v879
      %v1192 = vpack.c.b16 %v886, %v883
      %v1193 = vpack.c.b16 %v887, %v884
      %v1194 = vpack.c.b16 %v888, %v885
      %v1195 = vpack.c.b16 %v892, %v889
      %v1196 = vpack.c.b16 %v893, %v890
      %v1197 = vpack.c.b16 %v894, %v891
      %v1198 = vpack.c.b16 %v898, %v895
      %v1199 = vpack.c.b16 %v899, %v896
      %v1200 = vpack.c.b16 %v900, %v897
      %v1201 = vpack.c.b16 %v904, %v901
      %v1202 = vpack.c.b16 %v905, %v902
      %v1203 = vpack.c.b16 %v906, %v903
      %v1204 = vpack.c.b16 %v910, %v907
      %v1205 = vpack.c.b16 %v911, %v908
      %v1206 = vpack.c.b16 %v912, %v909
      %v1207 = vpack.c.b16 %v916, %v913
      %v1208 = vpack.c.b16 %v917, %v914
      %v1209 = vpack.c.b16 %v918, %v915
      %v1210 = vpack.c.b16 %v922, %v919
      %v1211 = vpack.c.b16 %v923, %v920
      %v1212 = vpack.c.b16 %v924, %v921
      %v1213 = vpack.c.b16 %v928, %v925
      %v1214 = vpack.c.b16 %v929, %v926
      %v1215 = vpack.c.b16 %v930, %v927
      %v1216 = vpack.c.b16 %v934, %v931
      %v1217 = vpack.c.b16 %v935, %v932
      %v1218 = vpack.c.b16 %v936, %v933
      %v1219 = vpack.c.b16 %v940, %v937
      %v1220 = vpack.c.b16 %v941, %v938
      %v1221 = vpack.c.b16 %v942, %v939
      %v1222 = vpack.c.b16 %v946, %v943
      %v1223 = vpack.c.b16 %v947, %v944
      %v1224 = vpack.c.b16 %v948, %v945
      %v1225 = vpack.c.b16 %v952, %v949
      %v1226 = vpack.c.b16 %v953, %v950
      %v1227 = vpack.c.b16 %v954, %v951
      %v1228 = vpack.c.b16 %v958, %v955
      %v1229 = vpack.c.b16 %v959, %v956
      %v1230 = vpack.c.b16 %v960, %v957
      %v1231 = vpack.c.b16 %v964, %v961
      %v1232 = vpack.c.b16 %v965, %v962
      %v1233 = vpack.c.b16 %v966, %v963
      %v1234 = vpack.c.b16 %v970, %v967
      %v1235 = vpack.c.b16 %v971, %v968
      %v1236 = vpack.c.b16 %v972, %v969
      %v1237 = vpack.c.b16 %v976, %v973
      %v1238 = vpack.c.b16 %v977, %v974
      %v1239 = vpack.c.b16 %v978, %v975
      %v1240 = vpack.c.b16 %v982, %v979
      %v1241 = vpack.c.b16 %v983, %v980
      %v1242 = vpack.c.b16 %v984, %v981
      %v1243 = vpack.c.b16 %v988, %v985
      %v1244 = vpack.c.b16 %v989, %v986
      %v1245 = vpack.c.b16 %v990, %v987
      %v1246 = vpack.c.b16 %v994, %v991
      %v1247 = vpack.c.b16 %v995, %v992
      %v1248 = vpack.c.b16 %v996, %v993
      %v1249 = vpack.c.b16 %v1000, %v997
      %v1250 = vpack.c.b16 %v1001, %v998
      %v1251 = vpack.c.b16 %v1002, %v999
      %v1252 = vpack.c.b16 %v1006, %v1003
      %v1253 = vpack.c.b16 %v1007, %v1004
      %v1254 = vpack.c.b16 %v1008, %v1005
      %v1255 = vpack.c.b16 %v1012, %v1009
      %v1256 = vpack.c.b16 %v1013, %v1010
      %v1257 = vpack.c.b16 %v1014, %v1011
      %v1258 = vpack.c.b16 %v1018, %v1015
      %v1259 = vpack.c.b16 %v1019, %v1016
      %v1260 = vpack.c.b16 %v1020, %v1017
      %v1261 = vpack.c.b16 %v1024, %v1021
      %v1262 = vpack.c.b16 %v1025, %v1022
      %v1263 = vpack.c.b16 %v1026, %v1023
      %v1264 = vpack.c.b16 %v1030, %v1027
      %v1265 = vpack.c.b16 %v1031, %v1028
      %v1266 = vpack.c.b16 %v1032, %v1029
      %v1267 = vpack.c.b16 %v1036, %v1033
      %v1268 = vpack.c.b16 %v1037, %v1034
      %v1269 = vpack.c.b16 %v1038, %v1035
      %v1270 = vpack.c.b16 %v1042, %v1039
      %v1271 = vpack.c.b16 %v1043, %v1040
      %v1272 = vpack.c.b16 %v1044, %v1041
      %v1273 = vpack.c.b16 %v1048, %v1045
      %v1274 = vpack.c.b16 %v1049, %v1046
      %v1275 = vpack.c.b16 %v1050, %v1047
      %v1276 = vpack.c.b16 %v1054, %v1051
      %v1277 = vpack.c.b16 %v1055, %v1052
      %v1278 = vpack.c.b16 %v1056, %v1053
      %v1279 = vpack.c.b16 %v1060, %v1057
      %v1280 = vpack.c.b16 %v1061, %v1058
      %v1281 = vpack.c.b16 %v1062, %v1059
      %v1282 = vpack.c.b16 %v1066, %v1063
      %v1283 = vpack.c.b16 %v1067, %v1064
      %v1284 = vpack.c.b16 %v1068, %v1065
      %v1285 = vpack.c.b16 %v1072, %v1069
      %v1286 = vpack.c.b16 %v1073, %v1070
      %v1287 = vpack.c.b16 %v1074, %v1071
      %v1288 = vpack.c.b16 %v1078, %v1075
      %v1289 = vpack.c.b16 %v1079, %v1076
      %v1290 = vpack.c.b16 %v1080, %v1077
      %v1291 = vpack.c.b16 %v1084, %v1081
      %v1292 = vpack.c.b16 %v1085, %v1082
      %v1293 = vpack.c.b16 %v1086, %v1083
      %v1294 = vpack.c.b16 %v1090, %v1087
      %v1295 = vpack.c.b16 %v1091, %v1088
      %v1296 = vpack.c.b16 %v1092, %v1089
      %v1297 = vpack.c.b16 %v1096, %v1093
      %v1298 = vpack.c.b16 %v1097, %v1094
      %v1299 = vpack.c.b16 %v1098, %v1095
      %v1300 = vpack.c.b16 %v1102, %v1099
      %v1301 = vpack.c.b16 %v1103, %v1100
      %v1302 = vpack.c.b16 %v1104, %v1101
      %v1303 = vpack.c.b16 %v1108, %v1105
      %v1304 = vpack.c.b16 %v1109, %v1106
      %v1305 = vpack.c.b16 %v1110, %v1107
      %v1306 = vpack.c.b16 %v1114, %v1111
      %v1307 = vpack.c.b16 %v1115, %v1112
      %v1308 = vpack.c.b16 %v1116, %v1113
      %v1473 = vunpack.c.l.b16 %v434
      %v1474 = vunpack.c.l.b16 %v435
      %v1475 = vunpack.c.l.b16 %v436
      %v1476 = vunpack.c.l.b16 %v437
      %v1477 = vunpack.c.l.b16 %v438
      %v1478 = vunpack.c.l.b16 %v439
      %v1479 = vunpack.c.l.b16 %v440
      %v1480 = vunpack.c.l.b16 %v441
      %v1481 = vunpack.c.l.b16 %v442
      %v1482 = vunpack.c.l.b16 %v443
      %v1483 = vunpack.c.l.b16 %v444
      %v1484 = vunpack.c.l.b16 %v445
      %v1485 = vunpack.c.l.b16 %v446
      %v1486 = vunpack.c.l.b16 %v447
      %v1487 = vunpack.c.l.b16 %v448
      %v1488 = vunpack.c.l.b16 %v449
      %v1489 = vunpack.c.l.b16 %v450
      %v1490 = vunpack.c.l.b16 %v451
      %v1491 = vunpack.c.l.b16 %v452
      %v1492 = vunpack.c.l.b16 %v453
      %v1493 = vunpack.c.l.b16 %v454
      %v1494 = vunpack.c.l.b16 %v455
      %v1495 = vunpack.c.l.b16 %v456
      %v1496 = vunpack.c.l.b16 %v457
      %v1497 = vunpack.c.l.b16 %v458
      %v1498 = vunpack.c.l.b16 %v459
      %v1499 = vunpack.c.l.b16 %v460
      %v1500 = vunpack.c.l.b16 %v461
      %v1501 = vunpack.c.l.b16 %v462
      %v1502 = vunpack.c.l.b16 %v463
      %v1503 = vunpack.c.l.b16 %v464
      %v1504 = vunpack.c.l.b16 %v465
      %v1505 = vunpack.c.l.b16 %v466
      %v1506 = vunpack.c.l.b16 %v467
      %v1507 = vunpack.c.l.b16 %v468
      %v1508 = vunpack.c.l.b16 %v469
      %v1509 = vpack.c.b16 %v1474, %v1473
      %v1510 = vpack.c.b16 %v1476, %v1475
      %v1511 = vpack.c.b16 %v1478, %v1477
      %v1512 = vpack.c.b16 %v1480, %v1479
      %v1513 = vpack.c.b16 %v1482, %v1481
      %v1514 = vpack.c.b16 %v1484, %v1483
      %v1515 = vpack.c.b16 %v1486, %v1485
      %v1516 = vpack.c.b16 %v1488, %v1487
      %v1517 = vpack.c.b16 %v1490, %v1489
      %v1518 = vpack.c.b16 %v1492, %v1491
      %v1519 = vpack.c.b16 %v1494, %v1493
      %v1520 = vpack.c.b16 %v1496, %v1495
      %v1521 = vpack.c.b16 %v1498, %v1497
      %v1522 = vpack.c.b16 %v1500, %v1499
      %v1523 = vpack.c.b16 %v1502, %v1501
      %v1524 = vpack.c.b16 %v1504, %v1503
      %v1525 = vpack.c.b16 %v1506, %v1505
      %v1526 = vpack.c.b16 %v1508, %v1507
      %vm1545 = vcmask 261120
      %v1547 = vsel %vm1545, %v1119, 0
      %v1550 = vsel %vm1545, %v1122, 0
      %v1553 = vsel %vm1545, %v1125, 0
      %v1556 = vsel %vm1545, %v1128, 0
      %v1559 = vsel %vm1545, %v1131, 0
      %v1562 = vsel %vm1545, %v1134, 0
      %v1565 = vsel %vm1545, %v1137, 0
      %v1568 = vsel %vm1545, %v1140, 0
      %v1571 = vsel %vm1545, %v1143, 0
      %v1574 = vsel %vm1545, %v1146, 0
      %v1577 = vsel %vm1545, %v1149, 0
      %v1580 = vsel %vm1545, %v1152, 0
      %v1583 = vsel %vm1545, %v1155, 0
      %v1586 = vsel %vm1545, %v1158, 0
      %v1589 = vsel %vm1545, %v1161, 0
      %v1592 = vsel %vm1545, %v1164, 0
      %v1595 = vsel %vm1545, %v1167, 0
      %v1598 = vsel %vm1545, %v1170, 0
      %v1601 = vsel %vm1545, %v1173, 0
      %v1604 = vsel %vm1545, %v1176, 0
      %v1607 = vsel %vm1545, %v1179, 0
      %v1610 = vsel %vm1545, %v1182, 0
      %v1613 = vsel %vm1545, %v1185, 0
      %v1616 = vsel %vm1545, %v1188, 0
      %v1619 = vsel %vm1545, %v1191, 0
      %v1622 = vsel %vm1545, %v1194, 0
      %v1625 = vsel %vm1545, %v1197, 0
      %v1628 = vsel %vm1545, %v1200, 0
      %v1631 = vsel %vm1545, %v1203, 0
      %v1634 = vsel %vm1545, %v1206, 0
      %v1637 = vsel %vm1545, %v1209, 0
      %v1640 = vsel %vm1545, %v1212, 0
      %v1643 = vsel %vm1545, %v1215, 0
      %v1646 = vsel %vm1545, %v1218, 0
      %v1649 = vsel %vm1545, %v1221, 0
      %v1652 = vsel %vm1545, %v1224, 0
      %v1655 = vsel %vm1545, %v1227, 0
      %v1658 = vsel %vm1545, %v1230, 0
      %v1661 = vsel %vm1545, %v1233, 0
      %v1664 = vsel %vm1545, %v1236, 0
      %v1667 = vsel %vm1545, %v1239, 0
      %v1670 = vsel %vm1545, %v1242, 0
      %v1673 = vsel %vm1545, %v1245, 0
      %v1676 = vsel %vm1545, %v1248, 0
      %v1679 = vsel %vm1545, %v1251, 0
      %v1682 = vsel %vm1545, %v1254, 0
      %v1685 = vsel %vm1545, %v1257, 0
      %v1688 = vsel %vm1545, %v1260, 0
      %v1691 = vsel %vm1545, %v1263, 0
      %v1694 = vsel %vm1545, %v1266, 0
      %v1697 = vsel %vm1545, %v1269, 0
      %v1700 = vsel %vm1545, %v1272, 0
      %v1703 = vsel %vm1545, %v1275, 0
      %v1706 = vsel %vm1545, %v1278, 0
      %v1709 = vsel %vm1545, %v1281, 0
      %v1712 = vsel %vm1545, %v1284, 0
      %v1715 = vsel %vm1545, %v1287, 0
      %v1718 = vsel %vm1545, %v1290, 0
      %v1721 = vsel %vm1545, %v1293, 0
      %v1724 = vsel %vm1545, %v1296, 0
      %v1727 = vsel %vm1545, %v1299, 0
      %v1730 = vsel %vm1545, %v1302, 0
      %v1733 = vsel %vm1545, %v1305, 0
      %v1736 = vsel %vm1545, %v1308, 0
      %1738 = vmatprep.subr.bf16.mxu0 0
      %1739 = vmatpush1.bf16.msra.mxu0 %v1509
      %1740 = vmatprep.subr.bf16.mxu0 0
      %1741 = vmatpush1.bf16.msra.mxu0 %v1510
      %1742 = vmatprep.subr.bf16.mxu0 0
      %1743 = vmatpush1.bf16.msra.mxu0 %v1511
      %1744 = vmatprep.subr.bf16.mxu0 0
      %1745 = vmatpush1.bf16.msra.mxu0 %v1512
      %1746 = vmatprep.subr.bf16.mxu0 0
      %1747 = vmatpush1.bf16.msra.mxu0 %v1513
      %1748 = vmatprep.subr.bf16.mxu0 0
      %1749 = vmatpush1.bf16.msra.mxu0 %v1514
      %1750 = vmatprep.subr.bf16.mxu0 0
      %1751 = vmatpush1.bf16.msra.mxu0 %v1515
      %1752 = vmatprep.subr.bf16.mxu0 0
      %1753 = vmatpush1.bf16.msra.mxu0 %v1516
      %1754 = vmatprep.subr.bf16.mxu0 0
      %1755 = vmatpush1.bf16.msra.mxu0 %v1517
      %1756 = vmatprep.subr.bf16.mxu0 0
      %1757 = vmatpush1.bf16.msra.mxu0 %v1518
      %1758 = vmatprep.subr.bf16.mxu0 0
      %1759 = vmatpush1.bf16.msra.mxu0 %v1519
      %1760 = vmatprep.subr.bf16.mxu0 0
      %1761 = vmatpush1.bf16.msra.mxu0 %v1520
      %1762 = vmatprep.subr.bf16.mxu0 0
      %1763 = vmatpush1.bf16.msra.mxu0 %v1521
      %1764 = vmatprep.subr.bf16.mxu0 0
      %1765 = vmatpush1.bf16.msra.mxu0 %v1522
      %1766 = vmatprep.subr.bf16.mxu0 0
      %1767 = vmatpush1.bf16.msra.mxu0 %v1523
      %1768 = vmatprep.subr.bf16.mxu0 0
      %1769 = vmatpush1.bf16.msra.mxu0 %v1524
      %1770 = vmatprep.mubr.bf16.mxu0 %v1118
      %1771 = vmatmul.mubr.bf16.gmra.mrb[0].mxu0 %v1117
      %v1772 = vpop.f32.mrb[0].mxu0
      %v1773 = vadd.f32 %v475, %v1772
      %v1774 = vpop.f32.mrb[0].mxu0
      %v1775 = vpop.f32.mrb[0].mxu0
      %v1776 = vadd.f32 %v475, %v1775
      %v1777 = vpop.f32.mrb[0].mxu0
      %1778 = vmatprep.mubr.bf16.mxu0 %v1121
      %1779 = vmatmul.mubr.bf16.gmra.mrb[0].mxu0 %v1120
      %v1780 = vpop.f32.mrb[0].mxu0
      %v1781 = vadd.f32 %v475, %v1780
      %v1782 = vpop.f32.mrb[0].mxu0
      %v1783 = vpop.f32.mrb[0].mxu0
      %v1784 = vadd.f32 %v475, %v1783
      %v1785 = vpop.f32.mrb[0].mxu0
      %1786 = vmatprep.mubr.bf16.mxu0 %v1124
      %1787 = vmatmul.mubr.bf16.gmra.mrb[0].mxu0 %v1123
      %v1788 = vpop.f32.mrb[0].mxu0
      %v1789 = vadd.f32 %v475, %v1788
      %v1790 = vpop.f32.mrb[0].mxu0
      %v1791 = vpop.f32.mrb[0].mxu0
      %v1792 = vadd.f32 %v475, %v1791
      %v1793 = vpop.f32.mrb[0].mxu0
      %1794 = vmatprep.mubr.bf16.mxu0 %v1127
      %1795 = vmatmul.mubr.bf16.gmra.mrb[0].mxu0 %v1126
      %v1796 = vpop.f32.mrb[0].mxu0
      %v1797 = vadd.f32 %v475, %v1796
      %v1798 = vpop.f32.mrb[0].mxu0
      %v1799 = vpop.f32.mrb[0].mxu0
      %v1800 = vadd.f32 %v475, %v1799
      %v1801 = vpop.f32.mrb[0].mxu0
      %1802 = vmatprep.mubr.bf16.mxu0 %v1130
      %1803 = vmatmul.mubr.bf16.gmra.mrb[0].mxu0 %v1129
      %v1804 = vpop.f32.mrb[0].mxu0
      %v1805 = vadd.f32 %v475, %v1804
      %v1806 = vpop.f32.mrb[0].mxu0
      %v1807 = vpop.f32.mrb[0].mxu0
      %v1808 = vadd.f32 %v475, %v1807
      %v1809 = vpop.f32.mrb[0].mxu0
      %1810 = vmatprep.mubr.bf16.mxu0 %v1133
      %1811 = vmatmul.mubr.bf16.gmra.mrb[0].mxu0 %v1132
      %v1812 = vpop.f32.mrb[0].mxu0
      %v1813 = vadd.f32 %v475, %v1812
      %v1814 = vpop.f32.mrb[0].mxu0
      %v1815 = vpop.f32.mrb[0].mxu0
      %v1816 = vadd.f32 %v475, %v1815
      %v1817 = vpop.f32.mrb[0].mxu0
      %1818 = vmatprep.mubr.bf16.mxu0 %v1136
      %1819 = vmatmul.mubr.bf16.gmra.mrb[0].mxu0 %v1135
      %v1820 = vpop.f32.mrb[0].mxu0
      %v1821 = vadd.f32 %v475, %v1820
      %v1822 = vpop.f32.mrb[0].mxu0
      %v1823 = vpop.f32.mrb[0].mxu0
      %v1824 = vadd.f32 %v475, %v1823
      %v1825 = vpop.f32.mrb[0].mxu0
      %1826 = vmatprep.mubr.bf16.mxu0 %v1139
      %1827 = vmatmul.mubr.bf16.gmra.mrb[0].mxu0 %v1138
      %v1828 = vpop.f32.mrb[0].mxu0
      %v1829 = vadd.f32 %v475, %v1828
      %v1830 = vpop.f32.mrb[0].mxu0
      %v1831 = vpop.f32.mrb[0].mxu0
      %v1832 = vadd.f32 %v475, %v1831
      %v1833 = vpop.f32.mrb[0].mxu0
      %1834 = vmatprep.mubr.bf16.mxu0 %v1142
      %1835 = vmatmul.mubr.bf16.gmra.mrb[0].mxu0 %v1141
      %v1836 = vpop.f32.mrb[0].mxu0
      %v1837 = vadd.f32 %v475, %v1836
      %v1838 = vpop.f32.mrb[0].mxu0
      %v1839 = vpop.f32.mrb[0].mxu0
      %v1840 = vadd.f32 %v475, %v1839
      %v1841 = vpop.f32.mrb[0].mxu0
      %1842 = vmatprep.mubr.bf16.mxu0 %v1145
      %1843 = vmatmul.mubr.bf16.gmra.mrb[0].mxu0 %v1144
      %v1844 = vpop.f32.mrb[0].mxu0
      %v1845 = vadd.f32 %v475, %v1844
      %v1846 = vpop.f32.mrb[0].mxu0
      %v1847 = vpop.f32.mrb[0].mxu0
      %v1848 = vadd.f32 %v475, %v1847
      %v1849 = vpop.f32.mrb[0].mxu0
      %1850 = vmatprep.mubr.bf16.mxu0 %v1148
      %1851 = vmatmul.mubr.bf16.gmra.mrb[0].mxu0 %v1147
      %v1852 = vpop.f32.mrb[0].mxu0
      %v1853 = vadd.f32 %v475, %v1852
      %v1854 = vpop.f32.mrb[0].mxu0
      %v1855 = vpop.f32.mrb[0].mxu0
      %v1856 = vadd.f32 %v475, %v1855
      %v1857 = vpop.f32.mrb[0].mxu0
      %1858 = vmatprep.mubr.bf16.mxu0 %v1151
      %1859 = vmatmul.mubr.bf16.gmra.mrb[0].mxu0 %v1150
      %v1860 = vpop.f32.mrb[0].mxu0
      %v1861 = vadd.f32 %v475, %v1860
      %v1862 = vpop.f32.mrb[0].mxu0
      %v1863 = vpop.f32.mrb[0].mxu0
      %v1864 = vadd.f32 %v475, %v1863
      %v1865 = vpop.f32.mrb[0].mxu0
      %1866 = vmatprep.mubr.bf16.mxu0 %v1154
      %1867 = vmatmul.mubr.bf16.gmra.mrb[0].mxu0 %v1153
      %v1868 = vpop.f32.mrb[0].mxu0
      %v1869 = vadd.f32 %v475, %v1868
      %v1870 = vpop.f32.mrb[0].mxu0
      %v1871 = vpop.f32.mrb[0].mxu0
      %v1872 = vadd.f32 %v475, %v1871
      %v1873 = vpop.f32.mrb[0].mxu0
      %1874 = vmatprep.mubr.bf16.mxu0 %v1157
      %1875 = vmatmul.mubr.bf16.gmra.mrb[0].mxu0 %v1156
      %v1876 = vpop.f32.mrb[0].mxu0
      %v1877 = vadd.f32 %v475, %v1876
      %v1878 = vpop.f32.mrb[0].mxu0
      %v1879 = vpop.f32.mrb[0].mxu0
      %v1880 = vadd.f32 %v475, %v1879
      %v1881 = vpop.f32.mrb[0].mxu0
      %1882 = vmatprep.mubr.bf16.mxu0 %v1160
      %1883 = vmatmul.mubr.bf16.gmra.mrb[0].mxu0 %v1159
      %v1884 = vpop.f32.mrb[0].mxu0
      %v1885 = vadd.f32 %v475, %v1884
      %v1886 = vpop.f32.mrb[0].mxu0
      %v1887 = vpop.f32.mrb[0].mxu0
      %v1888 = vadd.f32 %v475, %v1887
      %v1889 = vpop.f32.mrb[0].mxu0
      %1890 = vmatprep.mubr.bf16.mxu0 %v1163
      %1891 = vmatmul.mubr.bf16.gmra.mrb[0].mxu0 %v1162
      %v1892 = vpop.f32.mrb[0].mxu0
      %v1893 = vadd.f32 %v475, %v1892
      %v1894 = vpop.f32.mrb[0].mxu0
      %v1895 = vpop.f32.mrb[0].mxu0
      %v1896 = vadd.f32 %v475, %v1895
      %v1897 = vpop.f32.mrb[0].mxu0
      %1898 = vmatprep.mubr.bf16.mxu0 %v1166
      %1899 = vmatmul.mubr.bf16.gmra.mrb[0].mxu0 %v1165
      %v1900 = vpop.f32.mrb[0].mxu0
      %v1901 = vadd.f32 %v475, %v1900
      %v1902 = vpop.f32.mrb[0].mxu0
      %v1903 = vpop.f32.mrb[0].mxu0
      %v1904 = vadd.f32 %v475, %v1903
      %v1905 = vpop.f32.mrb[0].mxu0
      %1906 = vmatprep.mubr.bf16.mxu0 %v1169
      %1907 = vmatmul.mubr.bf16.gmra.mrb[0].mxu0 %v1168
      %v1908 = vpop.f32.mrb[0].mxu0
      %v1909 = vadd.f32 %v475, %v1908
      %v1910 = vpop.f32.mrb[0].mxu0
      %v1911 = vpop.f32.mrb[0].mxu0
      %v1912 = vadd.f32 %v475, %v1911
      %v1913 = vpop.f32.mrb[0].mxu0
      %1914 = vmatprep.mubr.bf16.mxu0 %v1172
      %1915 = vmatmul.mubr.bf16.gmra.mrb[0].mxu0 %v1171
      %v1916 = vpop.f32.mrb[0].mxu0
      %v1917 = vadd.f32 %v475, %v1916
      %v1918 = vpop.f32.mrb[0].mxu0
      %v1919 = vpop.f32.mrb[0].mxu0
      %v1920 = vadd.f32 %v475, %v1919
      %v1921 = vpop.f32.mrb[0].mxu0
      %1922 = vmatprep.mubr.bf16.mxu0 %v1175
      %1923 = vmatmul.mubr.bf16.gmra.mrb[0].mxu0 %v1174
      %v1924 = vpop.f32.mrb[0].mxu0
      %v1925 = vadd.f32 %v475, %v1924
      %v1926 = vpop.f32.mrb[0].mxu0
      %v1927 = vpop.f32.mrb[0].mxu0
      %v1928 = vadd.f32 %v475, %v1927
      %v1929 = vpop.f32.mrb[0].mxu0
      %1930 = vmatprep.mubr.bf16.mxu0 %v1178
      %1931 = vmatmul.mubr.bf16.gmra.mrb[0].mxu0 %v1177
      %v1932 = vpop.f32.mrb[0].mxu0
      %v1933 = vadd.f32 %v475, %v1932
      %v1934 = vpop.f32.mrb[0].mxu0
      %v1935 = vpop.f32.mrb[0].mxu0
      %v1936 = vadd.f32 %v475, %v1935
      %v1937 = vpop.f32.mrb[0].mxu0
      %1938 = vmatprep.mubr.bf16.mxu0 %v1181
      %1939 = vmatmul.mubr.bf16.gmra.mrb[0].mxu0 %v1180
      %v1940 = vpop.f32.mrb[0].mxu0
      %v1941 = vadd.f32 %v475, %v1940
      %v1942 = vpop.f32.mrb[0].mxu0
      %v1943 = vpop.f32.mrb[0].mxu0
      %v1944 = vadd.f32 %v475, %v1943
      %v1945 = vpop.f32.mrb[0].mxu0
      %1946 = vmatprep.mubr.bf16.mxu0 %v1184
      %1947 = vmatmul.mubr.bf16.gmra.mrb[0].mxu0 %v1183
      %v1948 = vpop.f32.mrb[0].mxu0
      %v1949 = vadd.f32 %v475, %v1948
      %v1950 = vpop.f32.mrb[0].mxu0
      %v1951 = vpop.f32.mrb[0].mxu0
      %v1952 = vadd.f32 %v475, %v1951
      %v1953 = vpop.f32.mrb[0].mxu0
      %1954 = vmatprep.mubr.bf16.mxu0 %v1187
      %1955 = vmatmul.mubr.bf16.gmra.mrb[0].mxu0 %v1186
      %v1956 = vpop.f32.mrb[0].mxu0
      %v1957 = vadd.f32 %v475, %v1956
      %v1958 = vpop.f32.mrb[0].mxu0
      %v1959 = vpop.f32.mrb[0].mxu0
      %v1960 = vadd.f32 %v475, %v1959
      %v1961 = vpop.f32.mrb[0].mxu0
      %1962 = vmatprep.mubr.bf16.mxu0 %v1190
      %1963 = vmatmul.mubr.bf16.gmra.mrb[0].mxu0 %v1189
      %v1964 = vpop.f32.mrb[0].mxu0
      %v1965 = vadd.f32 %v475, %v1964
      %v1966 = vpop.f32.mrb[0].mxu0
      %v1967 = vpop.f32.mrb[0].mxu0
      %v1968 = vadd.f32 %v475, %v1967
      %v1969 = vpop.f32.mrb[0].mxu0
      %1970 = vmatprep.mubr.bf16.mxu0 %v1193
      %1971 = vmatmul.mubr.bf16.gmra.mrb[0].mxu0 %v1192
      %v1972 = vpop.f32.mrb[0].mxu0
      %v1973 = vadd.f32 %v475, %v1972
      %v1974 = vpop.f32.mrb[0].mxu0
      %v1975 = vpop.f32.mrb[0].mxu0
      %v1976 = vadd.f32 %v475, %v1975
      %v1977 = vpop.f32.mrb[0].mxu0
      %1978 = vmatprep.mubr.bf16.mxu0 %v1196
      %1979 = vmatmul.mubr.bf16.gmra.mrb[0].mxu0 %v1195
      %v1980 = vpop.f32.mrb[0].mxu0
      %v1981 = vadd.f32 %v475, %v1980
      %v1982 = vpop.f32.mrb[0].mxu0
      %v1983 = vpop.f32.mrb[0].mxu0
      %v1984 = vadd.f32 %v475, %v1983
      %v1985 = vpop.f32.mrb[0].mxu0
      %1986 = vmatprep.mubr.bf16.mxu0 %v1199
      %1987 = vmatmul.mubr.bf16.gmra.mrb[0].mxu0 %v1198
      %v1988 = vpop.f32.mrb[0].mxu0
      %v1989 = vadd.f32 %v475, %v1988
      %v1990 = vpop.f32.mrb[0].mxu0
      %v1991 = vpop.f32.mrb[0].mxu0
      %v1992 = vadd.f32 %v475, %v1991
      %v1993 = vpop.f32.mrb[0].mxu0
      %1994 = vmatprep.mubr.bf16.mxu0 %v1202
      %1995 = vmatmul.mubr.bf16.gmra.mrb[0].mxu0 %v1201
      %v1996 = vpop.f32.mrb[0].mxu0
      %v1997 = vadd.f32 %v475, %v1996
      %v1998 = vpop.f32.mrb[0].mxu0
      %v1999 = vpop.f32.mrb[0].mxu0
      %v2000 = vadd.f32 %v475, %v1999
      %v2001 = vpop.f32.mrb[0].mxu0
      %2002 = vmatprep.mubr.bf16.mxu0 %v1205
      %2003 = vmatmul.mubr.bf16.gmra.mrb[0].mxu0 %v1204
      %v2004 = vpop.f32.mrb[0].mxu0
      %v2005 = vadd.f32 %v475, %v2004
      %v2006 = vpop.f32.mrb[0].mxu0
      %v2007 = vpop.f32.mrb[0].mxu0
      %v2008 = vadd.f32 %v475, %v2007
      %v2009 = vpop.f32.mrb[0].mxu0
      %2010 = vmatprep.mubr.bf16.mxu0 %v1208
      %2011 = vmatmul.mubr.bf16.gmra.mrb[0].mxu0 %v1207
      %v2012 = vpop.f32.mrb[0].mxu0
      %v2013 = vadd.f32 %v475, %v2012
      %v2014 = vpop.f32.mrb[0].mxu0
      %v2015 = vpop.f32.mrb[0].mxu0
      %v2016 = vadd.f32 %v475, %v2015
      %v2017 = vpop.f32.mrb[0].mxu0
      %2018 = vmatprep.mubr.bf16.mxu0 %v1211
      %2019 = vmatmul.mubr.bf16.gmra.mrb[0].mxu0 %v1210
      %v2020 = vpop.f32.mrb[0].mxu0
      %v2021 = vadd.f32 %v475, %v2020
      %v2022 = vpop.f32.mrb[0].mxu0
      %v2023 = vpop.f32.mrb[0].mxu0
      %v2024 = vadd.f32 %v475, %v2023
      %v2025 = vpop.f32.mrb[0].mxu0
      %2026 = vmatprep.mubr.bf16.mxu0 %v1214
      %2027 = vmatmul.mubr.bf16.gmra.mrb[0].mxu0 %v1213
      %v2028 = vpop.f32.mrb[0].mxu0
      %v2029 = vadd.f32 %v475, %v2028
      %v2030 = vpop.f32.mrb[0].mxu0
      %v2031 = vpop.f32.mrb[0].mxu0
      %v2032 = vadd.f32 %v475, %v2031
      %v2033 = vpop.f32.mrb[0].mxu0
      %2034 = vmatprep.mubr.bf16.mxu0 %v1217
      %2035 = vmatmul.mubr.bf16.gmra.mrb[0].mxu0 %v1216
      %v2036 = vpop.f32.mrb[0].mxu0
      %v2037 = vadd.f32 %v475, %v2036
      %v2038 = vpop.f32.mrb[0].mxu0
      %v2039 = vpop.f32.mrb[0].mxu0
      %v2040 = vadd.f32 %v475, %v2039
      %v2041 = vpop.f32.mrb[0].mxu0
      %2042 = vmatprep.mubr.bf16.mxu0 %v1220
      %2043 = vmatmul.mubr.bf16.gmra.mrb[0].mxu0 %v1219
      %v2044 = vpop.f32.mrb[0].mxu0
      %v2045 = vadd.f32 %v475, %v2044
      %v2046 = vpop.f32.mrb[0].mxu0
      %v2047 = vpop.f32.mrb[0].mxu0
      %v2048 = vadd.f32 %v475, %v2047
      %v2049 = vpop.f32.mrb[0].mxu0
      %2050 = vmatprep.mubr.bf16.mxu0 %v1223
      %2051 = vmatmul.mubr.bf16.gmra.mrb[0].mxu0 %v1222
      %v2052 = vpop.f32.mrb[0].mxu0
      %v2053 = vadd.f32 %v475, %v2052
      %v2054 = vpop.f32.mrb[0].mxu0
      %v2055 = vpop.f32.mrb[0].mxu0
      %v2056 = vadd.f32 %v475, %v2055
      %v2057 = vpop.f32.mrb[0].mxu0
      %2058 = vmatprep.mubr.bf16.mxu0 %v1226
      %2059 = vmatmul.mubr.bf16.gmra.mrb[0].mxu0 %v1225
      %v2060 = vpop.f32.mrb[0].mxu0
      %v2061 = vadd.f32 %v475, %v2060
      %v2062 = vpop.f32.mrb[0].mxu0
      %v2063 = vpop.f32.mrb[0].mxu0
      %v2064 = vadd.f32 %v475, %v2063
      %v2065 = vpop.f32.mrb[0].mxu0
      %2066 = vmatprep.mubr.bf16.mxu0 %v1229
      %2067 = vmatmul.mubr.bf16.gmra.mrb[0].mxu0 %v1228
      %v2068 = vpop.f32.mrb[0].mxu0
      %v2069 = vadd.f32 %v475, %v2068
      %v2070 = vpop.f32.mrb[0].mxu0
      %v2071 = vpop.f32.mrb[0].mxu0
      %v2072 = vadd.f32 %v475, %v2071
      %v2073 = vpop.f32.mrb[0].mxu0
      %2074 = vmatprep.mubr.bf16.mxu0 %v1232
      %2075 = vmatmul.mubr.bf16.gmra.mrb[0].mxu0 %v1231
      %v2076 = vpop.f32.mrb[0].mxu0
      %v2077 = vadd.f32 %v475, %v2076
      %v2078 = vpop.f32.mrb[0].mxu0
      %v2079 = vpop.f32.mrb[0].mxu0
      %v2080 = vadd.f32 %v475, %v2079
      %v2081 = vpop.f32.mrb[0].mxu0
      %2082 = vmatprep.mubr.bf16.mxu0 %v1235
      %2083 = vmatmul.mubr.bf16.gmra.mrb[0].mxu0 %v1234
      %v2084 = vpop.f32.mrb[0].mxu0
      %v2085 = vadd.f32 %v475, %v2084
      %v2086 = vpop.f32.mrb[0].mxu0
      %v2087 = vpop.f32.mrb[0].mxu0
      %v2088 = vadd.f32 %v475, %v2087
      %v2089 = vpop.f32.mrb[0].mxu0
      %2090 = vmatprep.mubr.bf16.mxu0 %v1238
      %2091 = vmatmul.mubr.bf16.gmra.mrb[0].mxu0 %v1237
      %v2092 = vpop.f32.mrb[0].mxu0
      %v2093 = vadd.f32 %v475, %v2092
      %v2094 = vpop.f32.mrb[0].mxu0
      %v2095 = vpop.f32.mrb[0].mxu0
      %v2096 = vadd.f32 %v475, %v2095
      %v2097 = vpop.f32.mrb[0].mxu0
      %2098 = vmatprep.mubr.bf16.mxu0 %v1241
      %2099 = vmatmul.mubr.bf16.gmra.mrb[0].mxu0 %v1240
      %v2100 = vpop.f32.mrb[0].mxu0
      %v2101 = vadd.f32 %v475, %v2100
      %v2102 = vpop.f32.mrb[0].mxu0
      %v2103 = vpop.f32.mrb[0].mxu0
      %v2104 = vadd.f32 %v475, %v2103
      %v2105 = vpop.f32.mrb[0].mxu0
      %2106 = vmatprep.mubr.bf16.mxu0 %v1244
      %2107 = vmatmul.mubr.bf16.gmra.mrb[0].mxu0 %v1243
      %v2108 = vpop.f32.mrb[0].mxu0
      %v2109 = vadd.f32 %v475, %v2108
      %v2110 = vpop.f32.mrb[0].mxu0
      %v2111 = vpop.f32.mrb[0].mxu0
      %v2112 = vadd.f32 %v475, %v2111
      %v2113 = vpop.f32.mrb[0].mxu0
      %2114 = vmatprep.mubr.bf16.mxu0 %v1247
      %2115 = vmatmul.mubr.bf16.gmra.mrb[0].mxu0 %v1246
      %v2116 = vpop.f32.mrb[0].mxu0
      %v2117 = vadd.f32 %v475, %v2116
      %v2118 = vpop.f32.mrb[0].mxu0
      %v2119 = vpop.f32.mrb[0].mxu0
      %v2120 = vadd.f32 %v475, %v2119
      %v2121 = vpop.f32.mrb[0].mxu0
      %2122 = vmatprep.mubr.bf16.mxu0 %v1250
      %2123 = vmatmul.mubr.bf16.gmra.mrb[0].mxu0 %v1249
      %v2124 = vpop.f32.mrb[0].mxu0
      %v2125 = vadd.f32 %v475, %v2124
      %v2126 = vpop.f32.mrb[0].mxu0
      %v2127 = vpop.f32.mrb[0].mxu0
      %v2128 = vadd.f32 %v475, %v2127
      %v2129 = vpop.f32.mrb[0].mxu0
      %2130 = vmatprep.mubr.bf16.mxu0 %v1253
      %2131 = vmatmul.mubr.bf16.gmra.mrb[0].mxu0 %v1252
      %v2132 = vpop.f32.mrb[0].mxu0
      %v2133 = vadd.f32 %v475, %v2132
      %v2134 = vpop.f32.mrb[0].mxu0
      %v2135 = vpop.f32.mrb[0].mxu0
      %v2136 = vadd.f32 %v475, %v2135
      %v2137 = vpop.f32.mrb[0].mxu0
      %2138 = vmatprep.mubr.bf16.mxu0 %v1256
      %2139 = vmatmul.mubr.bf16.gmra.mrb[0].mxu0 %v1255
      %v2140 = vpop.f32.mrb[0].mxu0
      %v2141 = vadd.f32 %v475, %v2140
      %v2142 = vpop.f32.mrb[0].mxu0
      %v2143 = vpop.f32.mrb[0].mxu0
      %v2144 = vadd.f32 %v475, %v2143
      %v2145 = vpop.f32.mrb[0].mxu0
      %2146 = vmatprep.mubr.bf16.mxu0 %v1259
      %2147 = vmatmul.mubr.bf16.gmra.mrb[0].mxu0 %v1258
      %v2148 = vpop.f32.mrb[0].mxu0
      %v2149 = vadd.f32 %v475, %v2148
      %v2150 = vpop.f32.mrb[0].mxu0
      %v2151 = vpop.f32.mrb[0].mxu0
      %v2152 = vadd.f32 %v475, %v2151
      %v2153 = vpop.f32.mrb[0].mxu0
      %2154 = vmatprep.mubr.bf16.mxu0 %v1262
      %2155 = vmatmul.mubr.bf16.gmra.mrb[0].mxu0 %v1261
      %v2156 = vpop.f32.mrb[0].mxu0
      %v2157 = vadd.f32 %v475, %v2156
      %v2158 = vpop.f32.mrb[0].mxu0
      %v2159 = vpop.f32.mrb[0].mxu0
      %v2160 = vadd.f32 %v475, %v2159
      %v2161 = vpop.f32.mrb[0].mxu0
      %2162 = vmatprep.mubr.bf16.mxu0 %v1265
      %2163 = vmatmul.mubr.bf16.gmra.mrb[0].mxu0 %v1264
      %v2164 = vpop.f32.mrb[0].mxu0
      %v2165 = vadd.f32 %v475, %v2164
      %v2166 = vpop.f32.mrb[0].mxu0
      %v2167 = vpop.f32.mrb[0].mxu0
      %v2168 = vadd.f32 %v475, %v2167
      %v2169 = vpop.f32.mrb[0].mxu0
      %2170 = vmatprep.mubr.bf16.mxu0 %v1268
      %2171 = vmatmul.mubr.bf16.gmra.mrb[0].mxu0 %v1267
      %v2172 = vpop.f32.mrb[0].mxu0
      %v2173 = vadd.f32 %v475, %v2172
      %v2174 = vpop.f32.mrb[0].mxu0
      %v2175 = vpop.f32.mrb[0].mxu0
      %v2176 = vadd.f32 %v475, %v2175
      %v2177 = vpop.f32.mrb[0].mxu0
      %2178 = vmatprep.mubr.bf16.mxu0 %v1271
      %2179 = vmatmul.mubr.bf16.gmra.mrb[0].mxu0 %v1270
      %v2180 = vpop.f32.mrb[0].mxu0
      %v2181 = vadd.f32 %v475, %v2180
      %v2182 = vpop.f32.mrb[0].mxu0
      %v2183 = vpop.f32.mrb[0].mxu0
      %v2184 = vadd.f32 %v475, %v2183
      %v2185 = vpop.f32.mrb[0].mxu0
      %2186 = vmatprep.mubr.bf16.mxu0 %v1274
      %2187 = vmatmul.mubr.bf16.gmra.mrb[0].mxu0 %v1273
      %v2188 = vpop.f32.mrb[0].mxu0
      %v2189 = vadd.f32 %v475, %v2188
      %v2190 = vpop.f32.mrb[0].mxu0
      %v2191 = vpop.f32.mrb[0].mxu0
      %v2192 = vadd.f32 %v475, %v2191
      %v2193 = vpop.f32.mrb[0].mxu0
      %2194 = vmatprep.mubr.bf16.mxu0 %v1277
      %2195 = vmatmul.mubr.bf16.gmra.mrb[0].mxu0 %v1276
      %v2196 = vpop.f32.mrb[0].mxu0
      %v2197 = vadd.f32 %v475, %v2196
      %v2198 = vpop.f32.mrb[0].mxu0
      %v2199 = vpop.f32.mrb[0].mxu0
      %v2200 = vadd.f32 %v475, %v2199
      %v2201 = vpop.f32.mrb[0].mxu0
      %2202 = vmatprep.mubr.bf16.mxu0 %v1280
      %2203 = vmatmul.mubr.bf16.gmra.mrb[0].mxu0 %v1279
      %v2204 = vpop.f32.mrb[0].mxu0
      %v2205 = vadd.f32 %v475, %v2204
      %v2206 = vpop.f32.mrb[0].mxu0
      %v2207 = vpop.f32.mrb[0].mxu0
      %v2208 = vadd.f32 %v475, %v2207
      %v2209 = vpop.f32.mrb[0].mxu0
      %2210 = vmatprep.mubr.bf16.mxu0 %v1283
      %2211 = vmatmul.mubr.bf16.gmra.mrb[0].mxu0 %v1282
      %v2212 = vpop.f32.mrb[0].mxu0
      %v2213 = vadd.f32 %v475, %v2212
      %v2214 = vpop.f32.mrb[0].mxu0
      %v2215 = vpop.f32.mrb[0].mxu0
      %v2216 = vadd.f32 %v475, %v2215
      %v2217 = vpop.f32.mrb[0].mxu0
      %2218 = vmatprep.mubr.bf16.mxu0 %v1286
      %2219 = vmatmul.mubr.bf16.gmra.mrb[0].mxu0 %v1285
      %v2220 = vpop.f32.mrb[0].mxu0
      %v2221 = vadd.f32 %v475, %v2220
      %v2222 = vpop.f32.mrb[0].mxu0
      %v2223 = vpop.f32.mrb[0].mxu0
      %v2224 = vadd.f32 %v475, %v2223
      %v2225 = vpop.f32.mrb[0].mxu0
      %2226 = vmatprep.mubr.bf16.mxu0 %v1289
      %2227 = vmatmul.mubr.bf16.gmra.mrb[0].mxu0 %v1288
      %v2228 = vpop.f32.mrb[0].mxu0
      %v2229 = vadd.f32 %v475, %v2228
      %v2230 = vpop.f32.mrb[0].mxu0
      %v2231 = vpop.f32.mrb[0].mxu0
      %v2232 = vadd.f32 %v475, %v2231
      %v2233 = vpop.f32.mrb[0].mxu0
      %2234 = vmatprep.mubr.bf16.mxu0 %v1292
      %2235 = vmatmul.mubr.bf16.gmra.mrb[0].mxu0 %v1291
      %v2236 = vpop.f32.mrb[0].mxu0
      %v2237 = vadd.f32 %v475, %v2236
      %v2238 = vpop.f32.mrb[0].mxu0
      %v2239 = vpop.f32.mrb[0].mxu0
      %v2240 = vadd.f32 %v475, %v2239
      %v2241 = vpop.f32.mrb[0].mxu0
      %2242 = vmatprep.mubr.bf16.mxu0 %v1295
      %2243 = vmatmul.mubr.bf16.gmra.mrb[0].mxu0 %v1294
      %v2244 = vpop.f32.mrb[0].mxu0
      %v2245 = vadd.f32 %v475, %v2244
      %v2246 = vpop.f32.mrb[0].mxu0
      %v2247 = vpop.f32.mrb[0].mxu0
      %v2248 = vadd.f32 %v475, %v2247
      %v2249 = vpop.f32.mrb[0].mxu0
      %2250 = vmatprep.mubr.bf16.mxu0 %v1298
      %2251 = vmatmul.mubr.bf16.gmra.mrb[0].mxu0 %v1297
      %v2252 = vpop.f32.mrb[0].mxu0
      %v2253 = vadd.f32 %v475, %v2252
      %v2254 = vpop.f32.mrb[0].mxu0
      %v2255 = vpop.f32.mrb[0].mxu0
      %v2256 = vadd.f32 %v475, %v2255
      %v2257 = vpop.f32.mrb[0].mxu0
      %2258 = vmatprep.mubr.bf16.mxu0 %v1301
      %2259 = vmatmul.mubr.bf16.gmra.mrb[0].mxu0 %v1300
      %v2260 = vpop.f32.mrb[0].mxu0
      %v2261 = vadd.f32 %v475, %v2260
      %v2262 = vpop.f32.mrb[0].mxu0
      %v2263 = vpop.f32.mrb[0].mxu0
      %v2264 = vadd.f32 %v475, %v2263
      %v2265 = vpop.f32.mrb[0].mxu0
      %2266 = vmatprep.mubr.bf16.mxu0 %v1304
      %2267 = vmatmul.mubr.bf16.gmra.mrb[0].mxu0 %v1303
      %v2268 = vpop.f32.mrb[0].mxu0
      %v2269 = vadd.f32 %v475, %v2268
      %v2270 = vpop.f32.mrb[0].mxu0
      %v2271 = vpop.f32.mrb[0].mxu0
      %v2272 = vadd.f32 %v475, %v2271
      %v2273 = vpop.f32.mrb[0].mxu0
      %2274 = vmatprep.mubr.bf16.mxu0 %v1307
      %2275 = vmatmul.mubr.bf16.gmra.mrb[0].mxu0 %v1306
      %v2276 = vpop.f32.mrb[0].mxu0
      %v2277 = vadd.f32 %v475, %v2276
      %v2278 = vpop.f32.mrb[0].mxu0
      %v2279 = vpop.f32.mrb[0].mxu0
      %v2280 = vadd.f32 %v475, %v2279
      %v2281 = vpop.f32.mrb[0].mxu0
      %2282 = vdwg.mxu0
      %2283 = vmatprep.subr.bf16.mxu0 0
      %2284 = vmatpush1.bf16.msra.mxu0 %v1525
      %2285 = vmatprep.subr.bf16.mxu0 0
      %2286 = vmatpush1.bf16.msra.mxu0 %v1526
      %2287 = vmatprep.subr.bf16.mxu0 0
      %2288 = vmatpush1.bf16.msra.mxu0 0
      %2289 = vmatprep.subr.bf16.mxu0 0
      %2290 = vmatpush1.bf16.msra.mxu0 0
      %2291 = vmatprep.subr.bf16.mxu0 0
      %2292 = vmatpush1.bf16.msra.mxu0 0
      %2293 = vmatprep.subr.bf16.mxu0 0
      %2294 = vmatpush1.bf16.msra.mxu0 0
      %2295 = vmatprep.subr.bf16.mxu0 0
      %2296 = vmatpush1.bf16.msra.mxu0 0
      %2297 = vmatprep.subr.bf16.mxu0 0
      %2298 = vmatpush1.bf16.msra.mxu0 0
      %2299 = vmatprep.subr.bf16.mxu0 0
      %2300 = vmatpush1.bf16.msra.mxu0 0
      %2301 = vmatprep.subr.bf16.mxu0 0
      %2302 = vmatpush1.bf16.msra.mxu0 0
      %2303 = vmatprep.subr.bf16.mxu0 0
      %2304 = vmatpush1.bf16.msra.mxu0 0
      %2305 = vmatprep.subr.bf16.mxu0 0
      %2306 = vmatpush1.bf16.msra.mxu0 0
      %2307 = vmatprep.subr.bf16.mxu0 0
      %2308 = vmatpush1.bf16.msra.mxu0 0
      %2309 = vmatprep.subr.bf16.mxu0 0
      %2310 = vmatpush1.bf16.msra.mxu0 0
      %2311 = vmatprep.subr.bf16.mxu0 0
      %2312 = vmatpush1.bf16.msra.mxu0 0
      %2313 = vmatprep.subr.bf16.mxu0 0
      %2314 = vmatpush1.bf16.msra.mxu0 0
      %2315 = vmatprep.mubr.bf16.mxu0 0
      %2316 = vmatmul.mubr.bf16.gmra.mrb[0].mxu0 %v1547
      %v2317 = vpop.f32.mrb[0].mxu0
      %v2318 = vadd.f32 %v1773, %v2317
      %v2319 = vpop.f32.mrb[0].mxu0
      %v2320 = vpop.f32.mrb[0].mxu0
      %v2321 = vadd.f32 %v1776, %v2320
      %v2322 = vpop.f32.mrb[0].mxu0
      %2323 = vmatprep.mubr.bf16.mxu0 0
      %2324 = vmatmul.mubr.bf16.gmra.mrb[0].mxu0 %v1550
      %v2325 = vpop.f32.mrb[0].mxu0
      %v2326 = vadd.f32 %v1781, %v2325
      %v2327 = vpop.f32.mrb[0].mxu0
      %v2328 = vpop.f32.mrb[0].mxu0
      %v2329 = vadd.f32 %v1784, %v2328
      %v2330 = vpop.f32.mrb[0].mxu0
      %2331 = vmatprep.mubr.bf16.mxu0 0
      %2332 = vmatmul.mubr.bf16.gmra.mrb[0].mxu0 %v1553
      %v2333 = vpop.f32.mrb[0].mxu0
      %v2334 = vadd.f32 %v1789, %v2333
      %v2335 = vpop.f32.mrb[0].mxu0
      %v2336 = vpop.f32.mrb[0].mxu0
      %v2337 = vadd.f32 %v1792, %v2336
      %v2338 = vpop.f32.mrb[0].mxu0
      %2339 = vmatprep.mubr.bf16.mxu0 0
      %2340 = vmatmul.mubr.bf16.gmra.mrb[0].mxu0 %v1556
      %v2341 = vpop.f32.mrb[0].mxu0
      %v2342 = vadd.f32 %v1797, %v2341
      %v2343 = vpop.f32.mrb[0].mxu0
      %v2344 = vpop.f32.mrb[0].mxu0
      %v2345 = vadd.f32 %v1800, %v2344
      %v2346 = vpop.f32.mrb[0].mxu0
      %2347 = vmatprep.mubr.bf16.mxu0 0
      %2348 = vmatmul.mubr.bf16.gmra.mrb[0].mxu0 %v1559
      %v2349 = vpop.f32.mrb[0].mxu0
      %v2350 = vadd.f32 %v1805, %v2349
      %v2351 = vpop.f32.mrb[0].mxu0
      %v2352 = vpop.f32.mrb[0].mxu0
      %v2353 = vadd.f32 %v1808, %v2352
      %v2354 = vpop.f32.mrb[0].mxu0
      %2355 = vmatprep.mubr.bf16.mxu0 0
      %2356 = vmatmul.mubr.bf16.gmra.mrb[0].mxu0 %v1562
      %v2357 = vpop.f32.mrb[0].mxu0
      %v2358 = vadd.f32 %v1813, %v2357
      %v2359 = vpop.f32.mrb[0].mxu0
      %v2360 = vpop.f32.mrb[0].mxu0
      %v2361 = vadd.f32 %v1816, %v2360
      %v2362 = vpop.f32.mrb[0].mxu0
      %2363 = vmatprep.mubr.bf16.mxu0 0
      %2364 = vmatmul.mubr.bf16.gmra.mrb[0].mxu0 %v1565
      %v2365 = vpop.f32.mrb[0].mxu0
      %v2366 = vadd.f32 %v1821, %v2365
      %v2367 = vpop.f32.mrb[0].mxu0
      %v2368 = vpop.f32.mrb[0].mxu0
      %v2369 = vadd.f32 %v1824, %v2368
      %v2370 = vpop.f32.mrb[0].mxu0
      %2371 = vmatprep.mubr.bf16.mxu0 0
      %2372 = vmatmul.mubr.bf16.gmra.mrb[0].mxu0 %v1568
      %v2373 = vpop.f32.mrb[0].mxu0
      %v2374 = vadd.f32 %v1829, %v2373
      %v2375 = vpop.f32.mrb[0].mxu0
      %v2376 = vpop.f32.mrb[0].mxu0
      %v2377 = vadd.f32 %v1832, %v2376
      %v2378 = vpop.f32.mrb[0].mxu0
      %2379 = vmatprep.mubr.bf16.mxu0 0
      %2380 = vmatmul.mubr.bf16.gmra.mrb[0].mxu0 %v1571
      %v2381 = vpop.f32.mrb[0].mxu0
      %v2382 = vadd.f32 %v1837, %v2381
      %v2383 = vpop.f32.mrb[0].mxu0
      %v2384 = vpop.f32.mrb[0].mxu0
      %v2385 = vadd.f32 %v1840, %v2384
      %v2386 = vpop.f32.mrb[0].mxu0
      %2387 = vmatprep.mubr.bf16.mxu0 0
      %2388 = vmatmul.mubr.bf16.gmra.mrb[0].mxu0 %v1574
      %v2389 = vpop.f32.mrb[0].mxu0
      %v2390 = vadd.f32 %v1845, %v2389
      %v2391 = vpop.f32.mrb[0].mxu0
      %v2392 = vpop.f32.mrb[0].mxu0
      %v2393 = vadd.f32 %v1848, %v2392
      %v2394 = vpop.f32.mrb[0].mxu0
      %2395 = vmatprep.mubr.bf16.mxu0 0
      %2396 = vmatmul.mubr.bf16.gmra.mrb[0].mxu0 %v1577
      %v2397 = vpop.f32.mrb[0].mxu0
      %v2398 = vadd.f32 %v1853, %v2397
      %v2399 = vpop.f32.mrb[0].mxu0
      %v2400 = vpop.f32.mrb[0].mxu0
      %v2401 = vadd.f32 %v1856, %v2400
      %v2402 = vpop.f32.mrb[0].mxu0
      %2403 = vmatprep.mubr.bf16.mxu0 0
      %2404 = vmatmul.mubr.bf16.gmra.mrb[0].mxu0 %v1580
      %v2405 = vpop.f32.mrb[0].mxu0
      %v2406 = vadd.f32 %v1861, %v2405
      %v2407 = vpop.f32.mrb[0].mxu0
      %v2408 = vpop.f32.mrb[0].mxu0
      %v2409 = vadd.f32 %v1864, %v2408
      %v2410 = vpop.f32.mrb[0].mxu0
      %2411 = vmatprep.mubr.bf16.mxu0 0
      %2412 = vmatmul.mubr.bf16.gmra.mrb[0].mxu0 %v1583
      %v2413 = vpop.f32.mrb[0].mxu0
      %v2414 = vadd.f32 %v1869, %v2413
      %v2415 = vpop.f32.mrb[0].mxu0
      %v2416 = vpop.f32.mrb[0].mxu0
      %v2417 = vadd.f32 %v1872, %v2416
      %v2418 = vpop.f32.mrb[0].mxu0
      %2419 = vmatprep.mubr.bf16.mxu0 0
      %2420 = vmatmul.mubr.bf16.gmra.mrb[0].mxu0 %v1586
      %v2421 = vpop.f32.mrb[0].mxu0
      %v2422 = vadd.f32 %v1877, %v2421
      %v2423 = vpop.f32.mrb[0].mxu0
      %v2424 = vpop.f32.mrb[0].mxu0
      %v2425 = vadd.f32 %v1880, %v2424
      %v2426 = vpop.f32.mrb[0].mxu0
      %2427 = vmatprep.mubr.bf16.mxu0 0
      %2428 = vmatmul.mubr.bf16.gmra.mrb[0].mxu0 %v1589
      %v2429 = vpop.f32.mrb[0].mxu0
      %v2430 = vadd.f32 %v1885, %v2429
      %v2431 = vpop.f32.mrb[0].mxu0
      %v2432 = vpop.f32.mrb[0].mxu0
      %v2433 = vadd.f32 %v1888, %v2432
      %v2434 = vpop.f32.mrb[0].mxu0
      %2435 = vmatprep.mubr.bf16.mxu0 0
      %2436 = vmatmul.mubr.bf16.gmra.mrb[0].mxu0 %v1592
      %v2437 = vpop.f32.mrb[0].mxu0
      %v2438 = vadd.f32 %v1893, %v2437
      %v2439 = vpop.f32.mrb[0].mxu0
      %v2440 = vpop.f32.mrb[0].mxu0
      %v2441 = vadd.f32 %v1896, %v2440
      %v2442 = vpop.f32.mrb[0].mxu0
      %2443 = vmatprep.mubr.bf16.mxu0 0
      %2444 = vmatmul.mubr.bf16.gmra.mrb[0].mxu0 %v1595
      %v2445 = vpop.f32.mrb[0].mxu0
      %v2446 = vadd.f32 %v1901, %v2445
      %v2447 = vpop.f32.mrb[0].mxu0
      %v2448 = vpop.f32.mrb[0].mxu0
      %v2449 = vadd.f32 %v1904, %v2448
      %v2450 = vpop.f32.mrb[0].mxu0
      %2451 = vmatprep.mubr.bf16.mxu0 0
      %2452 = vmatmul.mubr.bf16.gmra.mrb[0].mxu0 %v1598
      %v2453 = vpop.f32.mrb[0].mxu0
      %v2454 = vadd.f32 %v1909, %v2453
      %v2455 = vpop.f32.mrb[0].mxu0
      %v2456 = vpop.f32.mrb[0].mxu0
      %v2457 = vadd.f32 %v1912, %v2456
      %v2458 = vpop.f32.mrb[0].mxu0
      %2459 = vmatprep.mubr.bf16.mxu0 0
      %2460 = vmatmul.mubr.bf16.gmra.mrb[0].mxu0 %v1601
      %v2461 = vpop.f32.mrb[0].mxu0
      %v2462 = vadd.f32 %v1917, %v2461
      %v2463 = vpop.f32.mrb[0].mxu0
      %v2464 = vpop.f32.mrb[0].mxu0
      %v2465 = vadd.f32 %v1920, %v2464
      %v2466 = vpop.f32.mrb[0].mxu0
      %2467 = vmatprep.mubr.bf16.mxu0 0
      %2468 = vmatmul.mubr.bf16.gmra.mrb[0].mxu0 %v1604
      %v2469 = vpop.f32.mrb[0].mxu0
      %v2470 = vadd.f32 %v1925, %v2469
      %v2471 = vpop.f32.mrb[0].mxu0
      %v2472 = vpop.f32.mrb[0].mxu0
      %v2473 = vadd.f32 %v1928, %v2472
      %v2474 = vpop.f32.mrb[0].mxu0
      %2475 = vmatprep.mubr.bf16.mxu0 0
      %2476 = vmatmul.mubr.bf16.gmra.mrb[0].mxu0 %v1607
      %v2477 = vpop.f32.mrb[0].mxu0
      %v2478 = vadd.f32 %v1933, %v2477
      %v2479 = vpop.f32.mrb[0].mxu0
      %v2480 = vpop.f32.mrb[0].mxu0
      %v2481 = vadd.f32 %v1936, %v2480
      %v2482 = vpop.f32.mrb[0].mxu0
      %2483 = vmatprep.mubr.bf16.mxu0 0
      %2484 = vmatmul.mubr.bf16.gmra.mrb[0].mxu0 %v1610
      %v2485 = vpop.f32.mrb[0].mxu0
      %v2486 = vadd.f32 %v1941, %v2485
      %v2487 = vpop.f32.mrb[0].mxu0
      %v2488 = vpop.f32.mrb[0].mxu0
      %v2489 = vadd.f32 %v1944, %v2488
      %v2490 = vpop.f32.mrb[0].mxu0
      %2491 = vmatprep.mubr.bf16.mxu0 0
      %2492 = vmatmul.mubr.bf16.gmra.mrb[0].mxu0 %v1613
      %v2493 = vpop.f32.mrb[0].mxu0
      %v2494 = vadd.f32 %v1949, %v2493
      %v2495 = vpop.f32.mrb[0].mxu0
      %v2496 = vpop.f32.mrb[0].mxu0
      %v2497 = vadd.f32 %v1952, %v2496
      %v2498 = vpop.f32.mrb[0].mxu0
      %2499 = vmatprep.mubr.bf16.mxu0 0
      %2500 = vmatmul.mubr.bf16.gmra.mrb[0].mxu0 %v1616
      %v2501 = vpop.f32.mrb[0].mxu0
      %v2502 = vadd.f32 %v1957, %v2501
      %v2503 = vpop.f32.mrb[0].mxu0
      %v2504 = vpop.f32.mrb[0].mxu0
      %v2505 = vadd.f32 %v1960, %v2504
      %v2506 = vpop.f32.mrb[0].mxu0
      %2507 = vmatprep.mubr.bf16.mxu0 0
      %2508 = vmatmul.mubr.bf16.gmra.mrb[0].mxu0 %v1619
      %v2509 = vpop.f32.mrb[0].mxu0
      %v2510 = vadd.f32 %v1965, %v2509
      %v2511 = vpop.f32.mrb[0].mxu0
      %v2512 = vpop.f32.mrb[0].mxu0
      %v2513 = vadd.f32 %v1968, %v2512
      %v2514 = vpop.f32.mrb[0].mxu0
      %2515 = vmatprep.mubr.bf16.mxu0 0
      %2516 = vmatmul.mubr.bf16.gmra.mrb[0].mxu0 %v1622
      %v2517 = vpop.f32.mrb[0].mxu0
      %v2518 = vadd.f32 %v1973, %v2517
      %v2519 = vpop.f32.mrb[0].mxu0
      %v2520 = vpop.f32.mrb[0].mxu0
      %v2521 = vadd.f32 %v1976, %v2520
      %v2522 = vpop.f32.mrb[0].mxu0
      %2523 = vmatprep.mubr.bf16.mxu0 0
      %2524 = vmatmul.mubr.bf16.gmra.mrb[0].mxu0 %v1625
      %v2525 = vpop.f32.mrb[0].mxu0
      %v2526 = vadd.f32 %v1981, %v2525
      %v2527 = vpop.f32.mrb[0].mxu0
      %v2528 = vpop.f32.mrb[0].mxu0
      %v2529 = vadd.f32 %v1984, %v2528
      %v2530 = vpop.f32.mrb[0].mxu0
      %2531 = vmatprep.mubr.bf16.mxu0 0
      %2532 = vmatmul.mubr.bf16.gmra.mrb[0].mxu0 %v1628
      %v2533 = vpop.f32.mrb[0].mxu0
      %v2534 = vadd.f32 %v1989, %v2533
      %v2535 = vpop.f32.mrb[0].mxu0
      %v2536 = vpop.f32.mrb[0].mxu0
      %v2537 = vadd.f32 %v1992, %v2536
      %v2538 = vpop.f32.mrb[0].mxu0
      %2539 = vmatprep.mubr.bf16.mxu0 0
      %2540 = vmatmul.mubr.bf16.gmra.mrb[0].mxu0 %v1631
      %v2541 = vpop.f32.mrb[0].mxu0
      %v2542 = vadd.f32 %v1997, %v2541
      %v2543 = vpop.f32.mrb[0].mxu0
      %v2544 = vpop.f32.mrb[0].mxu0
      %v2545 = vadd.f32 %v2000, %v2544
      %v2546 = vpop.f32.mrb[0].mxu0
      %2547 = vmatprep.mubr.bf16.mxu0 0
      %2548 = vmatmul.mubr.bf16.gmra.mrb[0].mxu0 %v1634
      %v2549 = vpop.f32.mrb[0].mxu0
      %v2550 = vadd.f32 %v2005, %v2549
      %v2551 = vpop.f32.mrb[0].mxu0
      %v2552 = vpop.f32.mrb[0].mxu0
      %v2553 = vadd.f32 %v2008, %v2552
      %v2554 = vpop.f32.mrb[0].mxu0
      %2555 = vmatprep.mubr.bf16.mxu0 0
      %2556 = vmatmul.mubr.bf16.gmra.mrb[0].mxu0 %v1637
      %v2557 = vpop.f32.mrb[0].mxu0
      %v2558 = vadd.f32 %v2013, %v2557
      %v2559 = vpop.f32.mrb[0].mxu0
      %v2560 = vpop.f32.mrb[0].mxu0
      %v2561 = vadd.f32 %v2016, %v2560
      %v2562 = vpop.f32.mrb[0].mxu0
      %2563 = vmatprep.mubr.bf16.mxu0 0
      %2564 = vmatmul.mubr.bf16.gmra.mrb[0].mxu0 %v1640
      %v2565 = vpop.f32.mrb[0].mxu0
      %v2566 = vadd.f32 %v2021, %v2565
      %v2567 = vpop.f32.mrb[0].mxu0
      %v2568 = vpop.f32.mrb[0].mxu0
      %v2569 = vadd.f32 %v2024, %v2568
      %v2570 = vpop.f32.mrb[0].mxu0
      %2571 = vmatprep.mubr.bf16.mxu0 0
      %2572 = vmatmul.mubr.bf16.gmra.mrb[0].mxu0 %v1643
      %v2573 = vpop.f32.mrb[0].mxu0
      %v2574 = vadd.f32 %v2029, %v2573
      %v2575 = vpop.f32.mrb[0].mxu0
      %v2576 = vpop.f32.mrb[0].mxu0
      %v2577 = vadd.f32 %v2032, %v2576
      %v2578 = vpop.f32.mrb[0].mxu0
      %2579 = vmatprep.mubr.bf16.mxu0 0
      %2580 = vmatmul.mubr.bf16.gmra.mrb[0].mxu0 %v1646
      %v2581 = vpop.f32.mrb[0].mxu0
      %v2582 = vadd.f32 %v2037, %v2581
      %v2583 = vpop.f32.mrb[0].mxu0
      %v2584 = vpop.f32.mrb[0].mxu0
      %v2585 = vadd.f32 %v2040, %v2584
      %v2586 = vpop.f32.mrb[0].mxu0
      %2587 = vmatprep.mubr.bf16.mxu0 0
      %2588 = vmatmul.mubr.bf16.gmra.mrb[0].mxu0 %v1649
      %v2589 = vpop.f32.mrb[0].mxu0
      %v2590 = vadd.f32 %v2045, %v2589
      %v2591 = vpop.f32.mrb[0].mxu0
      %v2592 = vpop.f32.mrb[0].mxu0
      %v2593 = vadd.f32 %v2048, %v2592
      %v2594 = vpop.f32.mrb[0].mxu0
      %2595 = vmatprep.mubr.bf16.mxu0 0
      %2596 = vmatmul.mubr.bf16.gmra.mrb[0].mxu0 %v1652
      %v2597 = vpop.f32.mrb[0].mxu0
      %v2598 = vadd.f32 %v2053, %v2597
      %v2599 = vpop.f32.mrb[0].mxu0
      %v2600 = vpop.f32.mrb[0].mxu0
      %v2601 = vadd.f32 %v2056, %v2600
      %v2602 = vpop.f32.mrb[0].mxu0
      %2603 = vmatprep.mubr.bf16.mxu0 0
      %2604 = vmatmul.mubr.bf16.gmra.mrb[0].mxu0 %v1655
      %v2605 = vpop.f32.mrb[0].mxu0
      %v2606 = vadd.f32 %v2061, %v2605
      %v2607 = vpop.f32.mrb[0].mxu0
      %v2608 = vpop.f32.mrb[0].mxu0
      %v2609 = vadd.f32 %v2064, %v2608
      %v2610 = vpop.f32.mrb[0].mxu0
      %2611 = vmatprep.mubr.bf16.mxu0 0
      %2612 = vmatmul.mubr.bf16.gmra.mrb[0].mxu0 %v1658
      %v2613 = vpop.f32.mrb[0].mxu0
      %v2614 = vadd.f32 %v2069, %v2613
      %v2615 = vpop.f32.mrb[0].mxu0
      %v2616 = vpop.f32.mrb[0].mxu0
      %v2617 = vadd.f32 %v2072, %v2616
      %v2618 = vpop.f32.mrb[0].mxu0
      %2619 = vmatprep.mubr.bf16.mxu0 0
      %2620 = vmatmul.mubr.bf16.gmra.mrb[0].mxu0 %v1661
      %v2621 = vpop.f32.mrb[0].mxu0
      %v2622 = vadd.f32 %v2077, %v2621
      %v2623 = vpop.f32.mrb[0].mxu0
      %v2624 = vpop.f32.mrb[0].mxu0
      %v2625 = vadd.f32 %v2080, %v2624
      %v2626 = vpop.f32.mrb[0].mxu0
      %2627 = vmatprep.mubr.bf16.mxu0 0
      %2628 = vmatmul.mubr.bf16.gmra.mrb[0].mxu0 %v1664
      %v2629 = vpop.f32.mrb[0].mxu0
      %v2630 = vadd.f32 %v2085, %v2629
      %v2631 = vpop.f32.mrb[0].mxu0
      %v2632 = vpop.f32.mrb[0].mxu0
      %v2633 = vadd.f32 %v2088, %v2632
      %v2634 = vpop.f32.mrb[0].mxu0
      %2635 = vmatprep.mubr.bf16.mxu0 0
      %2636 = vmatmul.mubr.bf16.gmra.mrb[0].mxu0 %v1667
      %v2637 = vpop.f32.mrb[0].mxu0
      %v2638 = vadd.f32 %v2093, %v2637
      %v2639 = vpop.f32.mrb[0].mxu0
      %v2640 = vpop.f32.mrb[0].mxu0
      %v2641 = vadd.f32 %v2096, %v2640
      %v2642 = vpop.f32.mrb[0].mxu0
      %2643 = vmatprep.mubr.bf16.mxu0 0
      %2644 = vmatmul.mubr.bf16.gmra.mrb[0].mxu0 %v1670
      %v2645 = vpop.f32.mrb[0].mxu0
      %v2646 = vadd.f32 %v2101, %v2645
      %v2647 = vpop.f32.mrb[0].mxu0
      %v2648 = vpop.f32.mrb[0].mxu0
      %v2649 = vadd.f32 %v2104, %v2648
      %v2650 = vpop.f32.mrb[0].mxu0
      %2651 = vmatprep.mubr.bf16.mxu0 0
      %2652 = vmatmul.mubr.bf16.gmra.mrb[0].mxu0 %v1673
      %v2653 = vpop.f32.mrb[0].mxu0
      %v2654 = vadd.f32 %v2109, %v2653
      %v2655 = vpop.f32.mrb[0].mxu0
      %v2656 = vpop.f32.mrb[0].mxu0
      %v2657 = vadd.f32 %v2112, %v2656
      %v2658 = vpop.f32.mrb[0].mxu0
      %2659 = vmatprep.mubr.bf16.mxu0 0
      %2660 = vmatmul.mubr.bf16.gmra.mrb[0].mxu0 %v1676
      %v2661 = vpop.f32.mrb[0].mxu0
      %v2662 = vadd.f32 %v2117, %v2661
      %v2663 = vpop.f32.mrb[0].mxu0
      %v2664 = vpop.f32.mrb[0].mxu0
      %v2665 = vadd.f32 %v2120, %v2664
      %v2666 = vpop.f32.mrb[0].mxu0
      %2667 = vmatprep.mubr.bf16.mxu0 0
      %2668 = vmatmul.mubr.bf16.gmra.mrb[0].mxu0 %v1679
      %v2669 = vpop.f32.mrb[0].mxu0
      %v2670 = vadd.f32 %v2125, %v2669
      %v2671 = vpop.f32.mrb[0].mxu0
      %v2672 = vpop.f32.mrb[0].mxu0
      %v2673 = vadd.f32 %v2128, %v2672
      %v2674 = vpop.f32.mrb[0].mxu0
      %2675 = vmatprep.mubr.bf16.mxu0 0
      %2676 = vmatmul.mubr.bf16.gmra.mrb[0].mxu0 %v1682
      %v2677 = vpop.f32.mrb[0].mxu0
      %v2678 = vadd.f32 %v2133, %v2677
      %v2679 = vpop.f32.mrb[0].mxu0
      %v2680 = vpop.f32.mrb[0].mxu0
      %v2681 = vadd.f32 %v2136, %v2680
      %v2682 = vpop.f32.mrb[0].mxu0
      %2683 = vmatprep.mubr.bf16.mxu0 0
      %2684 = vmatmul.mubr.bf16.gmra.mrb[0].mxu0 %v1685
      %v2685 = vpop.f32.mrb[0].mxu0
      %v2686 = vadd.f32 %v2141, %v2685
      %v2687 = vpop.f32.mrb[0].mxu0
      %v2688 = vpop.f32.mrb[0].mxu0
      %v2689 = vadd.f32 %v2144, %v2688
      %v2690 = vpop.f32.mrb[0].mxu0
      %2691 = vmatprep.mubr.bf16.mxu0 0
      %2692 = vmatmul.mubr.bf16.gmra.mrb[0].mxu0 %v1688
      %v2693 = vpop.f32.mrb[0].mxu0
      %v2694 = vadd.f32 %v2149, %v2693
      %v2695 = vpop.f32.mrb[0].mxu0
      %v2696 = vpop.f32.mrb[0].mxu0
      %v2697 = vadd.f32 %v2152, %v2696
      %v2698 = vpop.f32.mrb[0].mxu0
      %2699 = vmatprep.mubr.bf16.mxu0 0
      %2700 = vmatmul.mubr.bf16.gmra.mrb[0].mxu0 %v1691
      %v2701 = vpop.f32.mrb[0].mxu0
      %v2702 = vadd.f32 %v2157, %v2701
      %v2703 = vpop.f32.mrb[0].mxu0
      %v2704 = vpop.f32.mrb[0].mxu0
      %v2705 = vadd.f32 %v2160, %v2704
      %v2706 = vpop.f32.mrb[0].mxu0
      %2707 = vmatprep.mubr.bf16.mxu0 0
      %2708 = vmatmul.mubr.bf16.gmra.mrb[0].mxu0 %v1694
      %v2709 = vpop.f32.mrb[0].mxu0
      %v2710 = vadd.f32 %v2165, %v2709
      %v2711 = vpop.f32.mrb[0].mxu0
      %v2712 = vpop.f32.mrb[0].mxu0
      %v2713 = vadd.f32 %v2168, %v2712
      %v2714 = vpop.f32.mrb[0].mxu0
      %2715 = vmatprep.mubr.bf16.mxu0 0
      %2716 = vmatmul.mubr.bf16.gmra.mrb[0].mxu0 %v1697
      %v2717 = vpop.f32.mrb[0].mxu0
      %v2718 = vadd.f32 %v2173, %v2717
      %v2719 = vpop.f32.mrb[0].mxu0
      %v2720 = vpop.f32.mrb[0].mxu0
      %v2721 = vadd.f32 %v2176, %v2720
      %v2722 = vpop.f32.mrb[0].mxu0
      %2723 = vmatprep.mubr.bf16.mxu0 0
      %2724 = vmatmul.mubr.bf16.gmra.mrb[0].mxu0 %v1700
      %v2725 = vpop.f32.mrb[0].mxu0
      %v2726 = vadd.f32 %v2181, %v2725
      %v2727 = vpop.f32.mrb[0].mxu0
      %v2728 = vpop.f32.mrb[0].mxu0
      %v2729 = vadd.f32 %v2184, %v2728
      %v2730 = vpop.f32.mrb[0].mxu0
      %2731 = vmatprep.mubr.bf16.mxu0 0
      %2732 = vmatmul.mubr.bf16.gmra.mrb[0].mxu0 %v1703
      %v2733 = vpop.f32.mrb[0].mxu0
      %v2734 = vadd.f32 %v2189, %v2733
      %v2735 = vpop.f32.mrb[0].mxu0
      %v2736 = vpop.f32.mrb[0].mxu0
      %v2737 = vadd.f32 %v2192, %v2736
      %v2738 = vpop.f32.mrb[0].mxu0
      %2739 = vmatprep.mubr.bf16.mxu0 0
      %2740 = vmatmul.mubr.bf16.gmra.mrb[0].mxu0 %v1706
      %v2741 = vpop.f32.mrb[0].mxu0
      %v2742 = vadd.f32 %v2197, %v2741
      %v2743 = vpop.f32.mrb[0].mxu0
      %v2744 = vpop.f32.mrb[0].mxu0
      %v2745 = vadd.f32 %v2200, %v2744
      %v2746 = vpop.f32.mrb[0].mxu0
      %2747 = vmatprep.mubr.bf16.mxu0 0
      %2748 = vmatmul.mubr.bf16.gmra.mrb[0].mxu0 %v1709
      %v2749 = vpop.f32.mrb[0].mxu0
      %v2750 = vadd.f32 %v2205, %v2749
      %v2751 = vpop.f32.mrb[0].mxu0
      %v2752 = vpop.f32.mrb[0].mxu0
      %v2753 = vadd.f32 %v2208, %v2752
      %v2754 = vpop.f32.mrb[0].mxu0
      %2755 = vmatprep.mubr.bf16.mxu0 0
      %2756 = vmatmul.mubr.bf16.gmra.mrb[0].mxu0 %v1712
      %v2757 = vpop.f32.mrb[0].mxu0
      %v2758 = vadd.f32 %v2213, %v2757
      %v2759 = vpop.f32.mrb[0].mxu0
      %v2760 = vpop.f32.mrb[0].mxu0
      %v2761 = vadd.f32 %v2216, %v2760
      %v2762 = vpop.f32.mrb[0].mxu0
      %2763 = vmatprep.mubr.bf16.mxu0 0
      %2764 = vmatmul.mubr.bf16.gmra.mrb[0].mxu0 %v1715
      %v2765 = vpop.f32.mrb[0].mxu0
      %v2766 = vadd.f32 %v2221, %v2765
      %v2767 = vpop.f32.mrb[0].mxu0
      %v2768 = vpop.f32.mrb[0].mxu0
      %v2769 = vadd.f32 %v2224, %v2768
      %v2770 = vpop.f32.mrb[0].mxu0
      %2771 = vmatprep.mubr.bf16.mxu0 0
      %2772 = vmatmul.mubr.bf16.gmra.mrb[0].mxu0 %v1718
      %v2773 = vpop.f32.mrb[0].mxu0
      %v2774 = vadd.f32 %v2229, %v2773
      %v2775 = vpop.f32.mrb[0].mxu0
      %v2776 = vpop.f32.mrb[0].mxu0
      %v2777 = vadd.f32 %v2232, %v2776
      %v2778 = vpop.f32.mrb[0].mxu0
      %2779 = vmatprep.mubr.bf16.mxu0 0
      %2780 = vmatmul.mubr.bf16.gmra.mrb[0].mxu0 %v1721
      %v2781 = vpop.f32.mrb[0].mxu0
      %v2782 = vadd.f32 %v2237, %v2781
      %v2783 = vpop.f32.mrb[0].mxu0
      %v2784 = vpop.f32.mrb[0].mxu0
      %v2785 = vadd.f32 %v2240, %v2784
      %v2786 = vpop.f32.mrb[0].mxu0
      %2787 = vmatprep.mubr.bf16.mxu0 0
      %2788 = vmatmul.mubr.bf16.gmra.mrb[0].mxu0 %v1724
      %v2789 = vpop.f32.mrb[0].mxu0
      %v2790 = vadd.f32 %v2245, %v2789
      %v2791 = vpop.f32.mrb[0].mxu0
      %v2792 = vpop.f32.mrb[0].mxu0
      %v2793 = vadd.f32 %v2248, %v2792
      %v2794 = vpop.f32.mrb[0].mxu0
      %2795 = vmatprep.mubr.bf16.mxu0 0
      %2796 = vmatmul.mubr.bf16.gmra.mrb[0].mxu0 %v1727
      %v2797 = vpop.f32.mrb[0].mxu0
      %v2798 = vadd.f32 %v2253, %v2797
      %v2799 = vpop.f32.mrb[0].mxu0
      %v2800 = vpop.f32.mrb[0].mxu0
      %v2801 = vadd.f32 %v2256, %v2800
      %v2802 = vpop.f32.mrb[0].mxu0
      %2803 = vmatprep.mubr.bf16.mxu0 0
      %2804 = vmatmul.mubr.bf16.gmra.mrb[0].mxu0 %v1730
      %v2805 = vpop.f32.mrb[0].mxu0
      %v2806 = vadd.f32 %v2261, %v2805
      %v2807 = vpop.f32.mrb[0].mxu0
      %v2808 = vpop.f32.mrb[0].mxu0
      %v2809 = vadd.f32 %v2264, %v2808
      %v2810 = vpop.f32.mrb[0].mxu0
      %2811 = vmatprep.mubr.bf16.mxu0 0
      %2812 = vmatmul.mubr.bf16.gmra.mrb[0].mxu0 %v1733
      %v2813 = vpop.f32.mrb[0].mxu0
      %v2814 = vadd.f32 %v2269, %v2813
      %v2815 = vpop.f32.mrb[0].mxu0
      %v2816 = vpop.f32.mrb[0].mxu0
      %v2817 = vadd.f32 %v2272, %v2816
      %v2818 = vpop.f32.mrb[0].mxu0
      %2819 = vmatprep.mubr.bf16.mxu0 0
      %2820 = vmatmul.mubr.bf16.gmra.mrb[0].mxu0 %v1736
      %v2821 = vpop.f32.mrb[0].mxu0
      %v2822 = vadd.f32 %v2277, %v2821
      %v2823 = vpop.f32.mrb[0].mxu0
      %v2824 = vpop.f32.mrb[0].mxu0
      %v2825 = vadd.f32 %v2280, %v2824
      %v2826 = vpop.f32.mrb[0].mxu0
      %2827 = vdwg.mxu0
      %v2828 = vxor.u32 %v2318, 2147483648
      %v2829 = vxor.u32 %v2321, 2147483648
      %v2830 = vxor.u32 %v2326, 2147483648
      %v2831 = vxor.u32 %v2329, 2147483648
      %v2832 = vxor.u32 %v2334, 2147483648
      %v2833 = vxor.u32 %v2337, 2147483648
      %v2834 = vxor.u32 %v2342, 2147483648
      %v2835 = vxor.u32 %v2345, 2147483648
      %v2836 = vxor.u32 %v2350, 2147483648
      %v2837 = vxor.u32 %v2353, 2147483648
      %v2838 = vxor.u32 %v2358, 2147483648
      %v2839 = vxor.u32 %v2361, 2147483648
      %v2840 = vxor.u32 %v2366, 2147483648
      %v2841 = vxor.u32 %v2369, 2147483648
      %v2842 = vxor.u32 %v2374, 2147483648
      %v2843 = vxor.u32 %v2377, 2147483648
      %v2844 = vxor.u32 %v2382, 2147483648
      %v2845 = vxor.u32 %v2385, 2147483648
      %v2846 = vxor.u32 %v2390, 2147483648
      %v2847 = vxor.u32 %v2393, 2147483648
      %v2848 = vxor.u32 %v2398, 2147483648
      %v2849 = vxor.u32 %v2401, 2147483648
      %v2850 = vxor.u32 %v2406, 2147483648
      %v2851 = vxor.u32 %v2409, 2147483648
      %v2852 = vxor.u32 %v2414, 2147483648
      %v2853 = vxor.u32 %v2417, 2147483648
      %v2854 = vxor.u32 %v2422, 2147483648
      %v2855 = vxor.u32 %v2425, 2147483648
      %v2856 = vxor.u32 %v2430, 2147483648
      %v2857 = vxor.u32 %v2433, 2147483648
      %v2858 = vxor.u32 %v2438, 2147483648
      %v2859 = vxor.u32 %v2441, 2147483648
      %v2860 = vxor.u32 %v2446, 2147483648
      %v2861 = vxor.u32 %v2449, 2147483648
      %v2862 = vxor.u32 %v2454, 2147483648
      %v2863 = vxor.u32 %v2457, 2147483648
      %v2864 = vxor.u32 %v2462, 2147483648
      %v2865 = vxor.u32 %v2465, 2147483648
      %v2866 = vxor.u32 %v2470, 2147483648
      %v2867 = vxor.u32 %v2473, 2147483648
      %v2868 = vxor.u32 %v2478, 2147483648
      %v2869 = vxor.u32 %v2481, 2147483648
      %v2870 = vxor.u32 %v2486, 2147483648
      %v2871 = vxor.u32 %v2489, 2147483648
      %v2872 = vxor.u32 %v2494, 2147483648
      %v2873 = vxor.u32 %v2497, 2147483648
      %v2874 = vxor.u32 %v2502, 2147483648
      %v2875 = vxor.u32 %v2505, 2147483648
      %v2876 = vxor.u32 %v2510, 2147483648
      %v2877 = vxor.u32 %v2513, 2147483648
      %v2878 = vxor.u32 %v2518, 2147483648
      %v2879 = vxor.u32 %v2521, 2147483648
      %v2880 = vxor.u32 %v2526, 2147483648
      %v2881 = vxor.u32 %v2529, 2147483648
      %v2882 = vxor.u32 %v2534, 2147483648
      %v2883 = vxor.u32 %v2537, 2147483648
      %v2884 = vxor.u32 %v2542, 2147483648
      %v2885 = vxor.u32 %v2545, 2147483648
      %v2886 = vxor.u32 %v2550, 2147483648
      %v2887 = vxor.u32 %v2553, 2147483648
      %v2888 = vxor.u32 %v2558, 2147483648
      %v2889 = vxor.u32 %v2561, 2147483648
      %v2890 = vxor.u32 %v2566, 2147483648
      %v2891 = vxor.u32 %v2569, 2147483648
      %v2892 = vxor.u32 %v2574, 2147483648
      %v2893 = vxor.u32 %v2577, 2147483648
      %v2894 = vxor.u32 %v2582, 2147483648
      %v2895 = vxor.u32 %v2585, 2147483648
      %v2896 = vxor.u32 %v2590, 2147483648
      %v2897 = vxor.u32 %v2593, 2147483648
      %v2898 = vxor.u32 %v2598, 2147483648
      %v2899 = vxor.u32 %v2601, 2147483648
      %v2900 = vxor.u32 %v2606, 2147483648
      %v2901 = vxor.u32 %v2609, 2147483648
      %v2902 = vxor.u32 %v2614, 2147483648
      %v2903 = vxor.u32 %v2617, 2147483648
      %v2904 = vxor.u32 %v2622, 2147483648
      %v2905 = vxor.u32 %v2625, 2147483648
      %v2906 = vxor.u32 %v2630, 2147483648
      %v2907 = vxor.u32 %v2633, 2147483648
      %v2908 = vxor.u32 %v2638, 2147483648
      %v2909 = vxor.u32 %v2641, 2147483648
      %v2910 = vxor.u32 %v2646, 2147483648
      %v2911 = vxor.u32 %v2649, 2147483648
      %v2912 = vxor.u32 %v2654, 2147483648
      %v2913 = vxor.u32 %v2657, 2147483648
      %v2914 = vxor.u32 %v2662, 2147483648
      %v2915 = vxor.u32 %v2665, 2147483648
      %v2916 = vxor.u32 %v2670, 2147483648
      %v2917 = vxor.u32 %v2673, 2147483648
      %v2918 = vxor.u32 %v2678, 2147483648
      %v2919 = vxor.u32 %v2681, 2147483648
      %v2920 = vxor.u32 %v2686, 2147483648
      %v2921 = vxor.u32 %v2689, 2147483648
      %v2922 = vxor.u32 %v2694, 2147483648
      %v2923 = vxor.u32 %v2697, 2147483648
      %v2924 = vxor.u32 %v2702, 2147483648
      %v2925 = vxor.u32 %v2705, 2147483648
      %v2926 = vxor.u32 %v2710, 2147483648
      %v2927 = vxor.u32 %v2713, 2147483648
      %v2928 = vxor.u32 %v2718, 2147483648
      %v2929 = vxor.u32 %v2721, 2147483648
      %v2930 = vxor.u32 %v2726, 2147483648
      %v2931 = vxor.u32 %v2729, 2147483648
      %v2932 = vxor.u32 %v2734, 2147483648
      %v2933 = vxor.u32 %v2737, 2147483648
      %v2934 = vxor.u32 %v2742, 2147483648
      %v2935 = vxor.u32 %v2745, 2147483648
      %v2936 = vxor.u32 %v2750, 2147483648
      %v2937 = vxor.u32 %v2753, 2147483648
      %v2938 = vxor.u32 %v2758, 2147483648
      %v2939 = vxor.u32 %v2761, 2147483648
      %v2940 = vxor.u32 %v2766, 2147483648
      %v2941 = vxor.u32 %v2769, 2147483648
      %v2942 = vxor.u32 %v2774, 2147483648
      %v2943 = vxor.u32 %v2777, 2147483648
      %v2944 = vxor.u32 %v2782, 2147483648
      %v2945 = vxor.u32 %v2785, 2147483648
      %v2946 = vxor.u32 %v2790, 2147483648
      %v2947 = vxor.u32 %v2793, 2147483648
      %v2948 = vxor.u32 %v2798, 2147483648
      %v2949 = vxor.u32 %v2801, 2147483648
      %v2950 = vxor.u32 %v2806, 2147483648
      %v2951 = vxor.u32 %v2809, 2147483648
      %v2952 = vxor.u32 %v2814, 2147483648
      %v2953 = vxor.u32 %v2817, 2147483648
      %v2954 = vxor.u32 %v2822, 2147483648
      %v2955 = vxor.u32 %v2825, 2147483648
      %v2956 = vmul.f32 %v2828, 1.442695
      %v2957 = vpow.pop %v2956
      %v2958 = vmul.f32 %v2829, 1.442695
      %v2959 = vpow.pop %v2958
      %v2960 = vmul.f32 %v2830, 1.442695
      %v2961 = vpow.pop %v2960
      %v2962 = vmul.f32 %v2831, 1.442695
      %v2963 = vpow.pop %v2962
      %v2964 = vmul.f32 %v2832, 1.442695
      %v2965 = vpow.pop %v2964
      %v2966 = vmul.f32 %v2833, 1.442695
      %v2967 = vpow.pop %v2966
      %v2968 = vmul.f32 %v2834, 1.442695
      %v2969 = vpow.pop %v2968
      %v2970 = vmul.f32 %v2835, 1.442695
      %v2971 = vpow.pop %v2970
      %v2972 = vmul.f32 %v2836, 1.442695
      %v2973 = vpow.pop %v2972
      %v2974 = vmul.f32 %v2837, 1.442695
      %v2975 = vpow.pop %v2974
      %v2976 = vmul.f32 %v2838, 1.442695
      %v2977 = vpow.pop %v2976
      %v2978 = vmul.f32 %v2839, 1.442695
      %v2979 = vpow.pop %v2978
      %v2980 = vmul.f32 %v2840, 1.442695
      %v2981 = vpow.pop %v2980
      %v2982 = vmul.f32 %v2841, 1.442695
      %v2983 = vpow.pop %v2982
      %v2984 = vmul.f32 %v2842, 1.442695
      %v2985 = vpow.pop %v2984
      %v2986 = vmul.f32 %v2843, 1.442695
      %v2987 = vpow.pop %v2986
      %v2988 = vmul.f32 %v2844, 1.442695
      %v2989 = vpow.pop %v2988
      %v2990 = vmul.f32 %v2845, 1.442695
      %v2991 = vpow.pop %v2990
      %v2992 = vmul.f32 %v2846, 1.442695
      %v2993 = vpow.pop %v2992
      %v2994 = vmul.f32 %v2847, 1.442695
      %v2995 = vpow.pop %v2994
      %v2996 = vmul.f32 %v2848, 1.442695
      %v2997 = vpow.pop %v2996
      %v2998 = vmul.f32 %v2849, 1.442695
      %v2999 = vpow.pop %v2998
      %v3000 = vmul.f32 %v2850, 1.442695
      %v3001 = vpow.pop %v3000
      %v3002 = vmul.f32 %v2851, 1.442695
      %v3003 = vpow.pop %v3002
      %v3004 = vmul.f32 %v2852, 1.442695
      %v3005 = vpow.pop %v3004
      %v3006 = vmul.f32 %v2853, 1.442695
      %v3007 = vpow.pop %v3006
      %v3008 = vmul.f32 %v2854, 1.442695
      %v3009 = vpow.pop %v3008
      %v3010 = vmul.f32 %v2855, 1.442695
      %v3011 = vpow.pop %v3010
      %v3012 = vmul.f32 %v2856, 1.442695
      %v3013 = vpow.pop %v3012
      %v3014 = vmul.f32 %v2857, 1.442695
      %v3015 = vpow.pop %v3014
      %v3016 = vmul.f32 %v2858, 1.442695
      %v3017 = vpow.pop %v3016
      %v3018 = vmul.f32 %v2859, 1.442695
      %v3019 = vpow.pop %v3018
      %v3020 = vmul.f32 %v2860, 1.442695
      %v3021 = vpow.pop %v3020
      %v3022 = vmul.f32 %v2861, 1.442695
      %v3023 = vpow.pop %v3022
      %v3024 = vmul.f32 %v2862, 1.442695
      %v3025 = vpow.pop %v3024
      %v3026 = vmul.f32 %v2863, 1.442695
      %v3027 = vpow.pop %v3026
      %v3028 = vmul.f32 %v2864, 1.442695
      %v3029 = vpow.pop %v3028
      %v3030 = vmul.f32 %v2865, 1.442695
      %v3031 = vpow.pop %v3030
      %v3032 = vmul.f32 %v2866, 1.442695
      %v3033 = vpow.pop %v3032
      %v3034 = vmul.f32 %v2867, 1.442695
      %v3035 = vpow.pop %v3034
      %v3036 = vmul.f32 %v2868, 1.442695
      %v3037 = vpow.pop %v3036
      %v3038 = vmul.f32 %v2869, 1.442695
      %v3039 = vpow.pop %v3038
      %v3040 = vmul.f32 %v2870, 1.442695
      %v3041 = vpow.pop %v3040
      %v3042 = vmul.f32 %v2871, 1.442695
      %v3043 = vpow.pop %v3042
      %v3044 = vmul.f32 %v2872, 1.442695
      %v3045 = vpow.pop %v3044
      %v3046 = vmul.f32 %v2873, 1.442695
      %v3047 = vpow.pop %v3046
      %v3048 = vmul.f32 %v2874, 1.442695
      %v3049 = vpow.pop %v3048
      %v3050 = vmul.f32 %v2875, 1.442695
      %v3051 = vpow.pop %v3050
      %v3052 = vmul.f32 %v2876, 1.442695
      %v3053 = vpow.pop %v3052
      %v3054 = vmul.f32 %v2877, 1.442695
      %v3055 = vpow.pop %v3054
      %v3056 = vmul.f32 %v2878, 1.442695
      %v3057 = vpow.pop %v3056
      %v3058 = vmul.f32 %v2879, 1.442695
      %v3059 = vpow.pop %v3058
      %v3060 = vmul.f32 %v2880, 1.442695
      %v3061 = vpow.pop %v3060
      %v3062 = vmul.f32 %v2881, 1.442695
      %v3063 = vpow.pop %v3062
      %v3064 = vmul.f32 %v2882, 1.442695
      %v3065 = vpow.pop %v3064
      %v3066 = vmul.f32 %v2883, 1.442695
      %v3067 = vpow.pop %v3066
      %v3068 = vmul.f32 %v2884, 1.442695
      %v3069 = vpow.pop %v3068
      %v3070 = vmul.f32 %v2885, 1.442695
      %v3071 = vpow.pop %v3070
      %v3072 = vmul.f32 %v2886, 1.442695
      %v3073 = vpow.pop %v3072
      %v3074 = vmul.f32 %v2887, 1.442695
      %v3075 = vpow.pop %v3074
      %v3076 = vmul.f32 %v2888, 1.442695
      %v3077 = vpow.pop %v3076
      %v3078 = vmul.f32 %v2889, 1.442695
      %v3079 = vpow.pop %v3078
      %v3080 = vmul.f32 %v2890, 1.442695
      %v3081 = vpow.pop %v3080
      %v3082 = vmul.f32 %v2891, 1.442695
      %v3083 = vpow.pop %v3082
      %v3084 = vmul.f32 %v2892, 1.442695
      %v3085 = vpow.pop %v3084
      %v3086 = vmul.f32 %v2893, 1.442695
      %v3087 = vpow.pop %v3086
      %v3088 = vmul.f32 %v2894, 1.442695
      %v3089 = vpow.pop %v3088
      %v3090 = vmul.f32 %v2895, 1.442695
      %v3091 = vpow.pop %v3090
      %v3092 = vmul.f32 %v2896, 1.442695
      %v3093 = vpow.pop %v3092
      %v3094 = vmul.f32 %v2897, 1.442695
      %v3095 = vpow.pop %v3094
      %v3096 = vmul.f32 %v2898, 1.442695
      %v3097 = vpow.pop %v3096
      %v3098 = vmul.f32 %v2899, 1.442695
      %v3099 = vpow.pop %v3098
      %v3100 = vmul.f32 %v2900, 1.442695
      %v3101 = vpow.pop %v3100
      %v3102 = vmul.f32 %v2901, 1.442695
      %v3103 = vpow.pop %v3102
      %v3104 = vmul.f32 %v2902, 1.442695
      %v3105 = vpow.pop %v3104
      %v3106 = vmul.f32 %v2903, 1.442695
      %v3107 = vpow.pop %v3106
      %v3108 = vmul.f32 %v2904, 1.442695
      %v3109 = vpow.pop %v3108
      %v3110 = vmul.f32 %v2905, 1.442695
      %v3111 = vpow.pop %v3110
      %v3112 = vmul.f32 %v2906, 1.442695
      %v3113 = vpow.pop %v3112
      %v3114 = vmul.f32 %v2907, 1.442695
      %v3115 = vpow.pop %v3114
      %v3116 = vmul.f32 %v2908, 1.442695
      %v3117 = vpow.pop %v3116
      %v3118 = vmul.f32 %v2909, 1.442695
      %v3119 = vpow.pop %v3118
      %v3120 = vmul.f32 %v2910, 1.442695
      %v3121 = vpow.pop %v3120
      %v3122 = vmul.f32 %v2911, 1.442695
      %v3123 = vpow.pop %v3122
      %v3124 = vmul.f32 %v2912, 1.442695
      %v3125 = vpow.pop %v3124
      %v3126 = vmul.f32 %v2913, 1.442695
      %v3127 = vpow.pop %v3126
      %v3128 = vmul.f32 %v2914, 1.442695
      %v3129 = vpow.pop %v3128
      %v3130 = vmul.f32 %v2915, 1.442695
      %v3131 = vpow.pop %v3130
      %v3132 = vmul.f32 %v2916, 1.442695
      %v3133 = vpow.pop %v3132
      %v3134 = vmul.f32 %v2917, 1.442695
      %v3135 = vpow.pop %v3134
      %v3136 = vmul.f32 %v2918, 1.442695
      %v3137 = vpow.pop %v3136
      %v3138 = vmul.f32 %v2919, 1.442695
      %v3139 = vpow.pop %v3138
      %v3140 = vmul.f32 %v2920, 1.442695
      %v3141 = vpow.pop %v3140
      %v3142 = vmul.f32 %v2921, 1.442695
      %v3143 = vpow.pop %v3142
      %v3144 = vmul.f32 %v2922, 1.442695
      %v3145 = vpow.pop %v3144
      %v3146 = vmul.f32 %v2923, 1.442695
      %v3147 = vpow.pop %v3146
      %v3148 = vmul.f32 %v2924, 1.442695
      %v3149 = vpow.pop %v3148
      %v3150 = vmul.f32 %v2925, 1.442695
      %v3151 = vpow.pop %v3150
      %v3152 = vmul.f32 %v2926, 1.442695
      %v3153 = vpow.pop %v3152
      %v3154 = vmul.f32 %v2927, 1.442695
      %v3155 = vpow.pop %v3154
      %v3156 = vmul.f32 %v2928, 1.442695
      %v3157 = vpow.pop %v3156
      %v3158 = vmul.f32 %v2929, 1.442695
      %v3159 = vpow.pop %v3158
      %v3160 = vmul.f32 %v2930, 1.442695
      %v3161 = vpow.pop %v3160
      %v3162 = vmul.f32 %v2931, 1.442695
      %v3163 = vpow.pop %v3162
      %v3164 = vmul.f32 %v2932, 1.442695
      %v3165 = vpow.pop %v3164
      %v3166 = vmul.f32 %v2933, 1.442695
      %v3167 = vpow.pop %v3166
      %v3168 = vmul.f32 %v2934, 1.442695
      %v3169 = vpow.pop %v3168
      %v3170 = vmul.f32 %v2935, 1.442695
      %v3171 = vpow.pop %v3170
      %v3172 = vmul.f32 %v2936, 1.442695
      %v3173 = vpow.pop %v3172
      %v3174 = vmul.f32 %v2937, 1.442695
      %v3175 = vpow.pop %v3174
      %v3176 = vmul.f32 %v2938, 1.442695
      %v3177 = vpow.pop %v3176
      %v3178 = vmul.f32 %v2939, 1.442695
      %v3179 = vpow.pop %v3178
      %v3180 = vmul.f32 %v2940, 1.442695
      %v3181 = vpow.pop %v3180
      %v3182 = vmul.f32 %v2941, 1.442695
      %v3183 = vpow.pop %v3182
      %v3184 = vmul.f32 %v2942, 1.442695
      %v3185 = vpow.pop %v3184
      %v3186 = vmul.f32 %v2943, 1.442695
      %v3187 = vpow.pop %v3186
      %v3188 = vmul.f32 %v2944, 1.442695
      %v3189 = vpow.pop %v3188
      %v3190 = vmul.f32 %v2945, 1.442695
      %v3191 = vpow.pop %v3190
      %v3192 = vmul.f32 %v2946, 1.442695
      %v3193 = vpow.pop %v3192
      %v3194 = vmul.f32 %v2947, 1.442695
      %v3195 = vpow.pop %v3194
      %v3196 = vmul.f32 %v2948, 1.442695
      %v3197 = vpow.pop %v3196
      %v3198 = vmul.f32 %v2949, 1.442695
      %v3199 = vpow.pop %v3198
      %v3200 = vmul.f32 %v2950, 1.442695
      %v3201 = vpow.pop %v3200
      %v3202 = vmul.f32 %v2951, 1.442695
      %v3203 = vpow.pop %v3202
      %v3204 = vmul.f32 %v2952, 1.442695
      %v3205 = vpow.pop %v3204
      %v3206 = vmul.f32 %v2953, 1.442695
      %v3207 = vpow.pop %v3206
      %v3208 = vmul.f32 %v2954, 1.442695
      %v3209 = vpow.pop %v3208
      %v3210 = vmul.f32 %v2955, 1.442695
      %v3211 = vpow.pop %v3210
      %v3212 = vadd.f32 %v2957, 1.0
      %v3213 = vadd.f32 %v2959, 1.0
      %v3214 = vadd.f32 %v2961, 1.0
      %v3215 = vadd.f32 %v2963, 1.0
      %v3216 = vadd.f32 %v2965, 1.0
      %v3217 = vadd.f32 %v2967, 1.0
      %v3218 = vadd.f32 %v2969, 1.0
      %v3219 = vadd.f32 %v2971, 1.0
      %v3220 = vadd.f32 %v2973, 1.0
      %v3221 = vadd.f32 %v2975, 1.0
      %v3222 = vadd.f32 %v2977, 1.0
      %v3223 = vadd.f32 %v2979, 1.0
      %v3224 = vadd.f32 %v2981, 1.0
      %v3225 = vadd.f32 %v2983, 1.0
      %v3226 = vadd.f32 %v2985, 1.0
      %v3227 = vadd.f32 %v2987, 1.0
      %v3228 = vadd.f32 %v2989, 1.0
      %v3229 = vadd.f32 %v2991, 1.0
      %v3230 = vadd.f32 %v2993, 1.0
      %v3231 = vadd.f32 %v2995, 1.0
      %v3232 = vadd.f32 %v2997, 1.0
      %v3233 = vadd.f32 %v2999, 1.0
      %v3234 = vadd.f32 %v3001, 1.0
      %v3235 = vadd.f32 %v3003, 1.0
      %v3236 = vadd.f32 %v3005, 1.0
      %v3237 = vadd.f32 %v3007, 1.0
      %v3238 = vadd.f32 %v3009, 1.0
      %v3239 = vadd.f32 %v3011, 1.0
      %v3240 = vadd.f32 %v3013, 1.0
      %v3241 = vadd.f32 %v3015, 1.0
      %v3242 = vadd.f32 %v3017, 1.0
      %v3243 = vadd.f32 %v3019, 1.0
      %v3244 = vadd.f32 %v3021, 1.0
      %v3245 = vadd.f32 %v3023, 1.0
      %v3246 = vadd.f32 %v3025, 1.0
      %v3247 = vadd.f32 %v3027, 1.0
      %v3248 = vadd.f32 %v3029, 1.0
      %v3249 = vadd.f32 %v3031, 1.0
      %v3250 = vadd.f32 %v3033, 1.0
      %v3251 = vadd.f32 %v3035, 1.0
      %v3252 = vadd.f32 %v3037, 1.0
      %v3253 = vadd.f32 %v3039, 1.0
      %v3254 = vadd.f32 %v3041, 1.0
      %v3255 = vadd.f32 %v3043, 1.0
      %v3256 = vadd.f32 %v3045, 1.0
      %v3257 = vadd.f32 %v3047, 1.0
      %v3258 = vadd.f32 %v3049, 1.0
      %v3259 = vadd.f32 %v3051, 1.0
      %v3260 = vadd.f32 %v3053, 1.0
      %v3261 = vadd.f32 %v3055, 1.0
      %v3262 = vadd.f32 %v3057, 1.0
      %v3263 = vadd.f32 %v3059, 1.0
      %v3264 = vadd.f32 %v3061, 1.0
      %v3265 = vadd.f32 %v3063, 1.0
      %v3266 = vadd.f32 %v3065, 1.0
      %v3267 = vadd.f32 %v3067, 1.0
      %v3268 = vadd.f32 %v3069, 1.0
      %v3269 = vadd.f32 %v3071, 1.0
      %v3270 = vadd.f32 %v3073, 1.0
      %v3271 = vadd.f32 %v3075, 1.0
      %v3272 = vadd.f32 %v3077, 1.0
      %v3273 = vadd.f32 %v3079, 1.0
      %v3274 = vadd.f32 %v3081, 1.0
      %v3275 = vadd.f32 %v3083, 1.0
      %v3276 = vadd.f32 %v3085, 1.0
      %v3277 = vadd.f32 %v3087, 1.0
      %v3278 = vadd.f32 %v3089, 1.0
      %v3279 = vadd.f32 %v3091, 1.0
      %v3280 = vadd.f32 %v3093, 1.0
      %v3281 = vadd.f32 %v3095, 1.0
      %v3282 = vadd.f32 %v3097, 1.0
      %v3283 = vadd.f32 %v3099, 1.0
      %v3284 = vadd.f32 %v3101, 1.0
      %v3285 = vadd.f32 %v3103, 1.0
      %v3286 = vadd.f32 %v3105, 1.0
      %v3287 = vadd.f32 %v3107, 1.0
      %v3288 = vadd.f32 %v3109, 1.0
      %v3289 = vadd.f32 %v3111, 1.0
      %v3290 = vadd.f32 %v3113, 1.0
      %v3291 = vadd.f32 %v3115, 1.0
      %v3292 = vadd.f32 %v3117, 1.0
      %v3293 = vadd.f32 %v3119, 1.0
      %v3294 = vadd.f32 %v3121, 1.0
      %v3295 = vadd.f32 %v3123, 1.0
      %v3296 = vadd.f32 %v3125, 1.0
      %v3297 = vadd.f32 %v3127, 1.0
      %v3298 = vadd.f32 %v3129, 1.0
      %v3299 = vadd.f32 %v3131, 1.0
      %v3300 = vadd.f32 %v3133, 1.0
      %v3301 = vadd.f32 %v3135, 1.0
      %v3302 = vadd.f32 %v3137, 1.0
      %v3303 = vadd.f32 %v3139, 1.0
      %v3304 = vadd.f32 %v3141, 1.0
      %v3305 = vadd.f32 %v3143, 1.0
      %v3306 = vadd.f32 %v3145, 1.0
      %v3307 = vadd.f32 %v3147, 1.0
      %v3308 = vadd.f32 %v3149, 1.0
      %v3309 = vadd.f32 %v3151, 1.0
      %v3310 = vadd.f32 %v3153, 1.0
      %v3311 = vadd.f32 %v3155, 1.0
      %v3312 = vadd.f32 %v3157, 1.0
      %v3313 = vadd.f32 %v3159, 1.0
      %v3314 = vadd.f32 %v3161, 1.0
      %v3315 = vadd.f32 %v3163, 1.0
      %v3316 = vadd.f32 %v3165, 1.0
      %v3317 = vadd.f32 %v3167, 1.0
      %v3318 = vadd.f32 %v3169, 1.0
      %v3319 = vadd.f32 %v3171, 1.0
      %v3320 = vadd.f32 %v3173, 1.0
      %v3321 = vadd.f32 %v3175, 1.0
      %v3322 = vadd.f32 %v3177, 1.0
      %v3323 = vadd.f32 %v3179, 1.0
      %v3324 = vadd.f32 %v3181, 1.0
      %v3325 = vadd.f32 %v3183, 1.0
      %v3326 = vadd.f32 %v3185, 1.0
      %v3327 = vadd.f32 %v3187, 1.0
      %v3328 = vadd.f32 %v3189, 1.0
      %v3329 = vadd.f32 %v3191, 1.0
      %v3330 = vadd.f32 %v3193, 1.0
      %v3331 = vadd.f32 %v3195, 1.0
      %v3332 = vadd.f32 %v3197, 1.0
      %v3333 = vadd.f32 %v3199, 1.0
      %v3334 = vadd.f32 %v3201, 1.0
      %v3335 = vadd.f32 %v3203, 1.0
      %v3336 = vadd.f32 %v3205, 1.0
      %v3337 = vadd.f32 %v3207, 1.0
      %v3338 = vadd.f32 %v3209, 1.0
      %v3339 = vadd.f32 %v3211, 1.0
      %v3340 = vrcp.pop %v3212
      %v3341 = vmul.f32 1.0, %v3340
      %v3342 = vrcp.pop %v3213
      %v3343 = vmul.f32 1.0, %v3342
      %v3344 = vrcp.pop %v3214
      %v3345 = vmul.f32 1.0, %v3344
      %v3346 = vrcp.pop %v3215
      %v3347 = vmul.f32 1.0, %v3346
      %v3348 = vrcp.pop %v3216
      %v3349 = vmul.f32 1.0, %v3348
      %v3350 = vrcp.pop %v3217
      %v3351 = vmul.f32 1.0, %v3350
      %v3352 = vrcp.pop %v3218
      %v3353 = vmul.f32 1.0, %v3352
      %v3354 = vrcp.pop %v3219
      %v3355 = vmul.f32 1.0, %v3354
      %v3356 = vrcp.pop %v3220
      %v3357 = vmul.f32 1.0, %v3356
      %v3358 = vrcp.pop %v3221
      %v3359 = vmul.f32 1.0, %v3358
      %v3360 = vrcp.pop %v3222
      %v3361 = vmul.f32 1.0, %v3360
      %v3362 = vrcp.pop %v3223
      %v3363 = vmul.f32 1.0, %v3362
      %v3364 = vrcp.pop %v3224
      %v3365 = vmul.f32 1.0, %v3364
      %v3366 = vrcp.pop %v3225
      %v3367 = vmul.f32 1.0, %v3366
      %v3368 = vrcp.pop %v3226
      %v3369 = vmul.f32 1.0, %v3368
      %v3370 = vrcp.pop %v3227
      %v3371 = vmul.f32 1.0, %v3370
      %v3372 = vrcp.pop %v3228
      %v3373 = vmul.f32 1.0, %v3372
      %v3374 = vrcp.pop %v3229
      %v3375 = vmul.f32 1.0, %v3374
      %v3376 = vrcp.pop %v3230
      %v3377 = vmul.f32 1.0, %v3376
      %v3378 = vrcp.pop %v3231
      %v3379 = vmul.f32 1.0, %v3378
      %v3380 = vrcp.pop %v3232
      %v3381 = vmul.f32 1.0, %v3380
      %v3382 = vrcp.pop %v3233
      %v3383 = vmul.f32 1.0, %v3382
      %v3384 = vrcp.pop %v3234
      %v3385 = vmul.f32 1.0, %v3384
      %v3386 = vrcp.pop %v3235
      %v3387 = vmul.f32 1.0, %v3386
      %v3388 = vrcp.pop %v3236
      %v3389 = vmul.f32 1.0, %v3388
      %v3390 = vrcp.pop %v3237
      %v3391 = vmul.f32 1.0, %v3390
      %v3392 = vrcp.pop %v3238
      %v3393 = vmul.f32 1.0, %v3392
      %v3394 = vrcp.pop %v3239
      %v3395 = vmul.f32 1.0, %v3394
      %v3396 = vrcp.pop %v3240
      %v3397 = vmul.f32 1.0, %v3396
      %v3398 = vrcp.pop %v3241
      %v3399 = vmul.f32 1.0, %v3398
      %v3400 = vrcp.pop %v3242
      %v3401 = vmul.f32 1.0, %v3400
      %v3402 = vrcp.pop %v3243
      %v3403 = vmul.f32 1.0, %v3402
      %v3404 = vrcp.pop %v3244
      %v3405 = vmul.f32 1.0, %v3404
      %v3406 = vrcp.pop %v3245
      %v3407 = vmul.f32 1.0, %v3406
      %v3408 = vrcp.pop %v3246
      %v3409 = vmul.f32 1.0, %v3408
      %v3410 = vrcp.pop %v3247
      %v3411 = vmul.f32 1.0, %v3410
      %v3412 = vrcp.pop %v3248
      %v3413 = vmul.f32 1.0, %v3412
      %v3414 = vrcp.pop %v3249
      %v3415 = vmul.f32 1.0, %v3414
      %v3416 = vrcp.pop %v3250
      %v3417 = vmul.f32 1.0, %v3416
      %v3418 = vrcp.pop %v3251
      %v3419 = vmul.f32 1.0, %v3418
      %v3420 = vrcp.pop %v3252
      %v3421 = vmul.f32 1.0, %v3420
      %v3422 = vrcp.pop %v3253
      %v3423 = vmul.f32 1.0, %v3422
      %v3424 = vrcp.pop %v3254
      %v3425 = vmul.f32 1.0, %v3424
      %v3426 = vrcp.pop %v3255
      %v3427 = vmul.f32 1.0, %v3426
      %v3428 = vrcp.pop %v3256
      %v3429 = vmul.f32 1.0, %v3428
      %v3430 = vrcp.pop %v3257
      %v3431 = vmul.f32 1.0, %v3430
      %v3432 = vrcp.pop %v3258
      %v3433 = vmul.f32 1.0, %v3432
      %v3434 = vrcp.pop %v3259
      %v3435 = vmul.f32 1.0, %v3434
      %v3436 = vrcp.pop %v3260
      %v3437 = vmul.f32 1.0, %v3436
      %v3438 = vrcp.pop %v3261
      %v3439 = vmul.f32 1.0, %v3438
      %v3440 = vrcp.pop %v3262
      %v3441 = vmul.f32 1.0, %v3440
      %v3442 = vrcp.pop %v3263
      %v3443 = vmul.f32 1.0, %v3442
      %v3444 = vrcp.pop %v3264
      %v3445 = vmul.f32 1.0, %v3444
      %v3446 = vrcp.pop %v3265
      %v3447 = vmul.f32 1.0, %v3446
      %v3448 = vrcp.pop %v3266
      %v3449 = vmul.f32 1.0, %v3448
      %v3450 = vrcp.pop %v3267
      %v3451 = vmul.f32 1.0, %v3450
      %v3452 = vrcp.pop %v3268
      %v3453 = vmul.f32 1.0, %v3452
      %v3454 = vrcp.pop %v3269
      %v3455 = vmul.f32 1.0, %v3454
      %v3456 = vrcp.pop %v3270
      %v3457 = vmul.f32 1.0, %v3456
      %v3458 = vrcp.pop %v3271
      %v3459 = vmul.f32 1.0, %v3458
      %v3460 = vrcp.pop %v3272
      %v3461 = vmul.f32 1.0, %v3460
      %v3462 = vrcp.pop %v3273
      %v3463 = vmul.f32 1.0, %v3462
      %v3464 = vrcp.pop %v3274
      %v3465 = vmul.f32 1.0, %v3464
      %v3466 = vrcp.pop %v3275
      %v3467 = vmul.f32 1.0, %v3466
      %v3468 = vrcp.pop %v3276
      %v3469 = vmul.f32 1.0, %v3468
      %v3470 = vrcp.pop %v3277
      %v3471 = vmul.f32 1.0, %v3470
      %v3472 = vrcp.pop %v3278
      %v3473 = vmul.f32 1.0, %v3472
      %v3474 = vrcp.pop %v3279
      %v3475 = vmul.f32 1.0, %v3474
      %v3476 = vrcp.pop %v3280
      %v3477 = vmul.f32 1.0, %v3476
      %v3478 = vrcp.pop %v3281
      %v3479 = vmul.f32 1.0, %v3478
      %v3480 = vrcp.pop %v3282
      %v3481 = vmul.f32 1.0, %v3480
      %v3482 = vrcp.pop %v3283
      %v3483 = vmul.f32 1.0, %v3482
      %v3484 = vrcp.pop %v3284
      %v3485 = vmul.f32 1.0, %v3484
      %v3486 = vrcp.pop %v3285
      %v3487 = vmul.f32 1.0, %v3486
      %v3488 = vrcp.pop %v3286
      %v3489 = vmul.f32 1.0, %v3488
      %v3490 = vrcp.pop %v3287
      %v3491 = vmul.f32 1.0, %v3490
      %v3492 = vrcp.pop %v3288
      %v3493 = vmul.f32 1.0, %v3492
      %v3494 = vrcp.pop %v3289
      %v3495 = vmul.f32 1.0, %v3494
      %v3496 = vrcp.pop %v3290
      %v3497 = vmul.f32 1.0, %v3496
      %v3498 = vrcp.pop %v3291
      %v3499 = vmul.f32 1.0, %v3498
      %v3500 = vrcp.pop %v3292
      %v3501 = vmul.f32 1.0, %v3500
      %v3502 = vrcp.pop %v3293
      %v3503 = vmul.f32 1.0, %v3502
      %v3504 = vrcp.pop %v3294
      %v3505 = vmul.f32 1.0, %v3504
      %v3506 = vrcp.pop %v3295
      %v3507 = vmul.f32 1.0, %v3506
      %v3508 = vrcp.pop %v3296
      %v3509 = vmul.f32 1.0, %v3508
      %v3510 = vrcp.pop %v3297
      %v3511 = vmul.f32 1.0, %v3510
      %v3512 = vrcp.pop %v3298
      %v3513 = vmul.f32 1.0, %v3512
      %v3514 = vrcp.pop %v3299
      %v3515 = vmul.f32 1.0, %v3514
      %v3516 = vrcp.pop %v3300
      %v3517 = vmul.f32 1.0, %v3516
      %v3518 = vrcp.pop %v3301
      %v3519 = vmul.f32 1.0, %v3518
      %v3520 = vrcp.pop %v3302
      %v3521 = vmul.f32 1.0, %v3520
      %v3522 = vrcp.pop %v3303
      %v3523 = vmul.f32 1.0, %v3522
      %v3524 = vrcp.pop %v3304
      %v3525 = vmul.f32 1.0, %v3524
      %v3526 = vrcp.pop %v3305
      %v3527 = vmul.f32 1.0, %v3526
      %v3528 = vrcp.pop %v3306
      %v3529 = vmul.f32 1.0, %v3528
      %v3530 = vrcp.pop %v3307
      %v3531 = vmul.f32 1.0, %v3530
      %v3532 = vrcp.pop %v3308
      %v3533 = vmul.f32 1.0, %v3532
      %v3534 = vrcp.pop %v3309
      %v3535 = vmul.f32 1.0, %v3534
      %v3536 = vrcp.pop %v3310
      %v3537 = vmul.f32 1.0, %v3536
      %v3538 = vrcp.pop %v3311
      %v3539 = vmul.f32 1.0, %v3538
      %v3540 = vrcp.pop %v3312
      %v3541 = vmul.f32 1.0, %v3540
      %v3542 = vrcp.pop %v3313
      %v3543 = vmul.f32 1.0, %v3542
      %v3544 = vrcp.pop %v3314
      %v3545 = vmul.f32 1.0, %v3544
      %v3546 = vrcp.pop %v3315
      %v3547 = vmul.f32 1.0, %v3546
      %v3548 = vrcp.pop %v3316
      %v3549 = vmul.f32 1.0, %v3548
      %v3550 = vrcp.pop %v3317
      %v3551 = vmul.f32 1.0, %v3550
      %v3552 = vrcp.pop %v3318
      %v3553 = vmul.f32 1.0, %v3552
      %v3554 = vrcp.pop %v3319
      %v3555 = vmul.f32 1.0, %v3554
      %v3556 = vrcp.pop %v3320
      %v3557 = vmul.f32 1.0, %v3556
      %v3558 = vrcp.pop %v3321
      %v3559 = vmul.f32 1.0, %v3558
      %v3560 = vrcp.pop %v3322
      %v3561 = vmul.f32 1.0, %v3560
      %v3562 = vrcp.pop %v3323
      %v3563 = vmul.f32 1.0, %v3562
      %v3564 = vrcp.pop %v3324
      %v3565 = vmul.f32 1.0, %v3564
      %v3566 = vrcp.pop %v3325
      %v3567 = vmul.f32 1.0, %v3566
      %v3568 = vrcp.pop %v3326
      %v3569 = vmul.f32 1.0, %v3568
      %v3570 = vrcp.pop %v3327
      %v3571 = vmul.f32 1.0, %v3570
      %v3572 = vrcp.pop %v3328
      %v3573 = vmul.f32 1.0, %v3572
      %v3574 = vrcp.pop %v3329
      %v3575 = vmul.f32 1.0, %v3574
      %v3576 = vrcp.pop %v3330
      %v3577 = vmul.f32 1.0, %v3576
      %v3578 = vrcp.pop %v3331
      %v3579 = vmul.f32 1.0, %v3578
      %v3580 = vrcp.pop %v3332
      %v3581 = vmul.f32 1.0, %v3580
      %v3582 = vrcp.pop %v3333
      %v3583 = vmul.f32 1.0, %v3582
      %v3584 = vrcp.pop %v3334
      %v3585 = vmul.f32 1.0, %v3584
      %v3586 = vrcp.pop %v3335
      %v3587 = vmul.f32 1.0, %v3586
      %v3588 = vrcp.pop %v3336
      %v3589 = vmul.f32 1.0, %v3588
      %v3590 = vrcp.pop %v3337
      %v3591 = vmul.f32 1.0, %v3590
      %v3592 = vrcp.pop %v3338
      %v3593 = vmul.f32 1.0, %v3592
      %v3594 = vrcp.pop %v3339
      %v3595 = vmul.f32 1.0, %v3594
      %vm3596 = vcmask 97280
      %3597 = vst.msk [vmem:[%s175] sm:$0xff] %vm3596, %v3341
      %3598 = vst.msk [vmem:[%s175 + $0x8] sm:$0xff] %vm3596, %v3343
      %3599 = vst.msk [vmem:[%s175 + $0x10] sm:$0xff] %vm3596, %v3345
      %3600 = vst.msk [vmem:[%s175 + $0x18] sm:$0xff] %vm3596, %v3347
      %3601 = vst.msk [vmem:[%s175 + $0x20] sm:$0xff] %vm3596, %v3349
      %3602 = vst.msk [vmem:[%s175 + $0x28] sm:$0xff] %vm3596, %v3351
      %3603 = vst.msk [vmem:[%s175 + $0x30] sm:$0xff] %vm3596, %v3353
      %3604 = vst.msk [vmem:[%s175 + $0x38] sm:$0xff] %vm3596, %v3355
      %3605 = vst.msk [vmem:[%s175 + $0x40] sm:$0xff] %vm3596, %v3357
      %3606 = vst.msk [vmem:[%s175 + $0x48] sm:$0xff] %vm3596, %v3359
      %3607 = vst.msk [vmem:[%s175 + $0x50] sm:$0xff] %vm3596, %v3361
      %3608 = vst.msk [vmem:[%s175 + $0x58] sm:$0xff] %vm3596, %v3363
      %3609 = vst.msk [vmem:[%s175 + $0x60] sm:$0xff] %vm3596, %v3365
      %3610 = vst.msk [vmem:[%s175 + $0x68] sm:$0xff] %vm3596, %v3367
      %3611 = vst.msk [vmem:[%s175 + $0x70] sm:$0xff] %vm3596, %v3369
      %3612 = vst.msk [vmem:[%s175 + $0x78] sm:$0xff] %vm3596, %v3371
      %3613 = vst.msk [vmem:[%s175 + $0x80] sm:$0xff] %vm3596, %v3373
      %3614 = vst.msk [vmem:[%s175 + $0x88] sm:$0xff] %vm3596, %v3375
      %3615 = vst.msk [vmem:[%s175 + $0x90] sm:$0xff] %vm3596, %v3377
      %3616 = vst.msk [vmem:[%s175 + $0x98] sm:$0xff] %vm3596, %v3379
      %3617 = vst.msk [vmem:[%s175 + $0xa0] sm:$0xff] %vm3596, %v3381
      %3618 = vst.msk [vmem:[%s175 + $0xa8] sm:$0xff] %vm3596, %v3383
      %3619 = vst.msk [vmem:[%s175 + $0xb0] sm:$0xff] %vm3596, %v3385
      %3620 = vst.msk [vmem:[%s175 + $0xb8] sm:$0xff] %vm3596, %v3387
      %3621 = vst.msk [vmem:[%s175 + $0xc0] sm:$0xff] %vm3596, %v3389
      %3622 = vst.msk [vmem:[%s175 + $0xc8] sm:$0xff] %vm3596, %v3391
      %3623 = vst.msk [vmem:[%s175 + $0xd0] sm:$0xff] %vm3596, %v3393
      %3624 = vst.msk [vmem:[%s175 + $0xd8] sm:$0xff] %vm3596, %v3395
      %3625 = vst.msk [vmem:[%s175 + $0xe0] sm:$0xff] %vm3596, %v3397
      %3626 = vst.msk [vmem:[%s175 + $0xe8] sm:$0xff] %vm3596, %v3399
      %3627 = vst.msk [vmem:[%s175 + $0xf0] sm:$0xff] %vm3596, %v3401
      %3628 = vst.msk [vmem:[%s175 + $0xf8] sm:$0xff] %vm3596, %v3403
      %3629 = vst.msk [vmem:[%s175 + $0x100] sm:$0xff] %vm3596, %v3405
      %3630 = vst.msk [vmem:[%s175 + $0x108] sm:$0xff] %vm3596, %v3407
      %3631 = vst.msk [vmem:[%s175 + $0x110] sm:$0xff] %vm3596, %v3409
      %3632 = vst.msk [vmem:[%s175 + $0x118] sm:$0xff] %vm3596, %v3411
      %3633 = vst.msk [vmem:[%s175 + $0x120] sm:$0xff] %vm3596, %v3413
      %3634 = vst.msk [vmem:[%s175 + $0x128] sm:$0xff] %vm3596, %v3415
      %3635 = vst.msk [vmem:[%s175 + $0x130] sm:$0xff] %vm3596, %v3417
      %3636 = vst.msk [vmem:[%s175 + $0x138] sm:$0xff] %vm3596, %v3419
      %3637 = vst.msk [vmem:[%s175 + $0x140] sm:$0xff] %vm3596, %v3421
      %3638 = vst.msk [vmem:[%s175 + $0x148] sm:$0xff] %vm3596, %v3423
      %3639 = vst.msk [vmem:[%s175 + $0x150] sm:$0xff] %vm3596, %v3425
      %3640 = vst.msk [vmem:[%s175 + $0x158] sm:$0xff] %vm3596, %v3427
      %3641 = vst.msk [vmem:[%s175 + $0x160] sm:$0xff] %vm3596, %v3429
      %3642 = vst.msk [vmem:[%s175 + $0x168] sm:$0xff] %vm3596, %v3431
      %3643 = vst.msk [vmem:[%s175 + $0x170] sm:$0xff] %vm3596, %v3433
      %3644 = vst.msk [vmem:[%s175 + $0x178] sm:$0xff] %vm3596, %v3435
      %3645 = vst.msk [vmem:[%s175 + $0x180] sm:$0xff] %vm3596, %v3437
      %3646 = vst.msk [vmem:[%s175 + $0x188] sm:$0xff] %vm3596, %v3439
      %3647 = vst.msk [vmem:[%s175 + $0x190] sm:$0xff] %vm3596, %v3441
      %3648 = vst.msk [vmem:[%s175 + $0x198] sm:$0xff] %vm3596, %v3443
      %3649 = vst.msk [vmem:[%s175 + $0x1a0] sm:$0xff] %vm3596, %v3445
      %3650 = vst.msk [vmem:[%s175 + $0x1a8] sm:$0xff] %vm3596, %v3447
      %3651 = vst.msk [vmem:[%s175 + $0x1b0] sm:$0xff] %vm3596, %v3449
      %3652 = vst.msk [vmem:[%s175 + $0x1b8] sm:$0xff] %vm3596, %v3451
      %3653 = vst.msk [vmem:[%s175 + $0x1c0] sm:$0xff] %vm3596, %v3453
      %3654 = vst.msk [vmem:[%s175 + $0x1c8] sm:$0xff] %vm3596, %v3455
      %3655 = vst.msk [vmem:[%s175 + $0x1d0] sm:$0xff] %vm3596, %v3457
      %3656 = vst.msk [vmem:[%s175 + $0x1d8] sm:$0xff] %vm3596, %v3459
      %3657 = vst.msk [vmem:[%s175 + $0x1e0] sm:$0xff] %vm3596, %v3461
      %3658 = vst.msk [vmem:[%s175 + $0x1e8] sm:$0xff] %vm3596, %v3463
      %3659 = vst.msk [vmem:[%s175 + $0x1f0] sm:$0xff] %vm3596, %v3465
      %3660 = vst.msk [vmem:[%s175 + $0x1f8] sm:$0xff] %vm3596, %v3467
      %3661 = vst.msk [vmem:[%s175 + $0x200] sm:$0xff] %vm3596, %v3469
      %3662 = vst.msk [vmem:[%s175 + $0x208] sm:$0xff] %vm3596, %v3471
      %3663 = vst.msk [vmem:[%s175 + $0x210] sm:$0xff] %vm3596, %v3473
      %3664 = vst.msk [vmem:[%s175 + $0x218] sm:$0xff] %vm3596, %v3475
      %3665 = vst.msk [vmem:[%s175 + $0x220] sm:$0xff] %vm3596, %v3477
      %3666 = vst.msk [vmem:[%s175 + $0x228] sm:$0xff] %vm3596, %v3479
      %3667 = vst.msk [vmem:[%s175 + $0x230] sm:$0xff] %vm3596, %v3481
      %3668 = vst.msk [vmem:[%s175 + $0x238] sm:$0xff] %vm3596, %v3483
      %3669 = vst.msk [vmem:[%s175 + $0x240] sm:$0xff] %vm3596, %v3485
      %3670 = vst.msk [vmem:[%s175 + $0x248] sm:$0xff] %vm3596, %v3487
      %3671 = vst.msk [vmem:[%s175 + $0x250] sm:$0xff] %vm3596, %v3489
      %3672 = vst.msk [vmem:[%s175 + $0x258] sm:$0xff] %vm3596, %v3491
      %3673 = vst.msk [vmem:[%s175 + $0x260] sm:$0xff] %vm3596, %v3493
      %3674 = vst.msk [vmem:[%s175 + $0x268] sm:$0xff] %vm3596, %v3495
      %3675 = vst.msk [vmem:[%s175 + $0x270] sm:$0xff] %vm3596, %v3497
      %3676 = vst.msk [vmem:[%s175 + $0x278] sm:$0xff] %vm3596, %v3499
      %3677 = vst.msk [vmem:[%s175 + $0x280] sm:$0xff] %vm3596, %v3501
      %3678 = vst.msk [vmem:[%s175 + $0x288] sm:$0xff] %vm3596, %v3503
      %3679 = vst.msk [vmem:[%s175 + $0x290] sm:$0xff] %vm3596, %v3505
      %3680 = vst.msk [vmem:[%s175 + $0x298] sm:$0xff] %vm3596, %v3507
      %3681 = vst.msk [vmem:[%s175 + $0x2a0] sm:$0xff] %vm3596, %v3509
      %3682 = vst.msk [vmem:[%s175 + $0x2a8] sm:$0xff] %vm3596, %v3511
      %3683 = vst.msk [vmem:[%s175 + $0x2b0] sm:$0xff] %vm3596, %v3513
      %3684 = vst.msk [vmem:[%s175 + $0x2b8] sm:$0xff] %vm3596, %v3515
      %3685 = vst.msk [vmem:[%s175 + $0x2c0] sm:$0xff] %vm3596, %v3517
      %3686 = vst.msk [vmem:[%s175 + $0x2c8] sm:$0xff] %vm3596, %v3519
      %3687 = vst.msk [vmem:[%s175 + $0x2d0] sm:$0xff] %vm3596, %v3521
      %3688 = vst.msk [vmem:[%s175 + $0x2d8] sm:$0xff] %vm3596, %v3523
      %3689 = vst.msk [vmem:[%s175 + $0x2e0] sm:$0xff] %vm3596, %v3525
      %3690 = vst.msk [vmem:[%s175 + $0x2e8] sm:$0xff] %vm3596, %v3527
      %3691 = vst.msk [vmem:[%s175 + $0x2f0] sm:$0xff] %vm3596, %v3529
      %3692 = vst.msk [vmem:[%s175 + $0x2f8] sm:$0xff] %vm3596, %v3531
      %3693 = vst.msk [vmem:[%s175 + $0x300] sm:$0xff] %vm3596, %v3533
      %3694 = vst.msk [vmem:[%s175 + $0x308] sm:$0xff] %vm3596, %v3535
      %3695 = vst.msk [vmem:[%s175 + $0x310] sm:$0xff] %vm3596, %v3537
      %3696 = vst.msk [vmem:[%s175 + $0x318] sm:$0xff] %vm3596, %v3539
      %3697 = vst.msk [vmem:[%s175 + $0x320] sm:$0xff] %vm3596, %v3541
      %3698 = vst.msk [vmem:[%s175 + $0x328] sm:$0xff] %vm3596, %v3543
      %3699 = vst.msk [vmem:[%s175 + $0x330] sm:$0xff] %vm3596, %v3545
      %3700 = vst.msk [vmem:[%s175 + $0x338] sm:$0xff] %vm3596, %v3547
      %3701 = vst.msk [vmem:[%s175 + $0x340] sm:$0xff] %vm3596, %v3549
      %3702 = vst.msk [vmem:[%s175 + $0x348] sm:$0xff] %vm3596, %v3551
      %3703 = vst.msk [vmem:[%s175 + $0x350] sm:$0xff] %vm3596, %v3553
      %3704 = vst.msk [vmem:[%s175 + $0x358] sm:$0xff] %vm3596, %v3555
      %3705 = vst.msk [vmem:[%s175 + $0x360] sm:$0xff] %vm3596, %v3557
      %3706 = vst.msk [vmem:[%s175 + $0x368] sm:$0xff] %vm3596, %v3559
      %3707 = vst.msk [vmem:[%s175 + $0x370] sm:$0xff] %vm3596, %v3561
      %3708 = vst.msk [vmem:[%s175 + $0x378] sm:$0xff] %vm3596, %v3563
      %3709 = vst.msk [vmem:[%s175 + $0x380] sm:$0xff] %vm3596, %v3565
      %3710 = vst.msk [vmem:[%s175 + $0x388] sm:$0xff] %vm3596, %v3567
      %3711 = vst.msk [vmem:[%s175 + $0x390] sm:$0xff] %vm3596, %v3569
      %3712 = vst.msk [vmem:[%s175 + $0x398] sm:$0xff] %vm3596, %v3571
      %3713 = vst.msk [vmem:[%s175 + $0x3a0] sm:$0xff] %vm3596, %v3573
      %3714 = vst.msk [vmem:[%s175 + $0x3a8] sm:$0xff] %vm3596, %v3575
      %3715 = vst.msk [vmem:[%s175 + $0x3b0] sm:$0xff] %vm3596, %v3577
      %3716 = vst.msk [vmem:[%s175 + $0x3b8] sm:$0xff] %vm3596, %v3579
      %3717 = vst.msk [vmem:[%s175 + $0x3c0] sm:$0xff] %vm3596, %v3581
      %3718 = vst.msk [vmem:[%s175 + $0x3c8] sm:$0xff] %vm3596, %v3583
      %3719 = vst.msk [vmem:[%s175 + $0x3d0] sm:$0xff] %vm3596, %v3585
      %3720 = vst.msk [vmem:[%s175 + $0x3d8] sm:$0xff] %vm3596, %v3587
      %3721 = vst.msk [vmem:[%s175 + $0x3e0] sm:$0xff] %vm3596, %v3589
      %3722 = vst.msk [vmem:[%s175 + $0x3e8] sm:$0xff] %vm3596, %v3591
      %3723 = vst.msk [vmem:[%s175 + $0x3f0] sm:$0xff] %vm3596, %v3593
      %3724 = vst.msk [vmem:[%s175 + $0x3f8] sm:$0xff] %vm3596, %v3595
      %s3725 = smul.u32 128, %s14
      %p3726 = scmp.lt.s32.totalorder %s3725, 255
      %s3727 = scalar_select %p3726, %s3725, 255
      %s3728 = smul.addr %s3727, 8
      %s3729 = scalar_lea.vmem %s3, %s3728
      // Predicated region
      $region33: #{conv_decoder_forward.9} parent=31 // pred_check
        %p3730 = pneg %p100
      $region34: #{conv_decoder_forward.9} parent=31 // pred_check_branch
        %3732 = sbr.rel (%p3730) target = $region36
      $region35: #{conv_decoder_forward.9} parent=31 // pred_region
        %s3733 = smul.u32 128, %s14
      $region36: #{conv_decoder_forward.9} parent=31 // pred_fallthru
        _
    $region32: #{conv_decoder_forward.9} parent=5 // pred_fallthru
      _
    %p3734 = scmp.le.s32.totalorder 2, %s9
    // Predicated region
    $region37: #{conv_decoder_forward.9} parent=5 // pred_check
      %p3735 = pneg %p3734
    $region38: #{conv_decoder_forward.9} parent=5 // pred_check_branch
      %3737 = sbr.rel (%p3735) target = $region40
    $region39: #{conv_decoder_forward.9} parent=5 // pred_region
      %s3738 = ssub.s32 %s9, 2
      // Predicated region
      $region41: #{conv_decoder_forward.9} parent=39 // pred_check
        %p3739 = pneg %p106
      $region42: #{conv_decoder_forward.9} parent=39 // pred_check_branch
        %3741 = sbr.rel (%p3739) target = $region44
      $region43: #{conv_decoder_forward.9} parent=39 // pred_region
        %s3742 = smul.u32 128, %s15
        %p3743 = scmp.lt.s32.totalorder %s3742, 255
        %s3744 = scalar_select %p3743, %s3742, 255
        %s3745 = smul.addr %s3744, 8
        %s3746 = scalar_lea.vmem %s3, %s3745
      $region44: #{conv_decoder_forward.9} parent=39 // pred_fallthru
        _
    $region40: #{conv_decoder_forward.9} parent=5 // pred_fallthru
      _
  $region6: #{conv_decoder_forward.9} parent=0 // loop_footer
    %s13 = sadd.s32 1, %s9
  $region7: #{conv_decoder_forward.9} parent=0 // loop_footer_branch
    %8 = sbr.rel target = $region3
  $region8: #{conv_decoder_forward.9} parent=0 // loop_exit
    _

</llo_original>
